<compile_context>
chip_gen: v6e
topology: v6e:2x2x1
jax: 0.10.0
libtpu: 0.0.40
codegen_flags: <defaults>
</compile_context>

<pallas_src>
import numpy as np
import jax
import jax.numpy as jnp
from jax.experimental import pallas as pl
from jax.experimental.pallas import tpu as pltpu

LRELU_SLOPE = 0.01  # nn.LeakyReLU default
BN_EPS = 1e-5       # nn.BatchNorm2d default


# ------------------------------ Pallas kernel --------------------------------

def _convpool_kernel(x_ref, w1_ref, s1_ref, t1_ref, w2_ref, s2_ref, t2_ref,
                     o_ref, xp1_ref, xp2_ref):
    """One batch sample per grid step; everything stays VMEM-resident.

    x_ref : (1, H, W, Cin)        f32   input sample
    w1_ref: (9, Cin, Cp)          bf16  conv1 weights (tap-major), Cout zero-padded to Cp
    w2_ref: (9, Cp, Cp)           bf16  conv2 weights (tap-major), in/out zero-padded
    s*_ref/t*_ref: (1, Cp)        f32   folded BN scale / shift (conv bias included)
    o_ref : (1, HO, WO, Cp)       f32   pooled output (padded channels are zero)
    xp1_ref: (H+2, W+2, Cin)      bf16  zero-padded conv1 input scratch
    xp2_ref: (H+2, W+2, Cp)       bf16  zero-padded conv2 input scratch
    """
    _, H, W, Cin = x_ref.shape
    Cp = w1_ref.shape[2]
    _, HO, WO, _ = o_ref.shape
    M = H * W

    # ---- conv1 (+ folded BN + LeakyReLU): in-kernel im2col via 9 shifted slices ----
    xp1_ref[...] = jnp.zeros_like(xp1_ref)
    xp1_ref[1:H + 1, 1:W + 1, :] = x_ref[0].astype(jnp.bfloat16)

    acc = jnp.zeros((M, Cp), jnp.float32)
    for k in range(9):
        di, dj = k // 3, k % 3
        patch = xp1_ref[di:di + H, dj:dj + W, :].reshape(M, Cin)
        acc += jnp.dot(patch, w1_ref[k], preferred_element_type=jnp.float32)
    y = acc * s1_ref[...] + t1_ref[...]
    y = jnp.where(y > 0, y, LRELU_SLOPE * y)

    # ---- conv2 (+ folded BN + LeakyReLU) ----
    xp2_ref[...] = jnp.zeros_like(xp2_ref)
    xp2_ref[1:H + 1, 1:W + 1, :] = y.reshape(H, W, Cp).astype(jnp.bfloat16)

    acc2 = jnp.zeros((M, Cp), jnp.float32)
    for k in range(9):
        di, dj = k // 3, k % 3
        patch = xp2_ref[di:di + H, dj:dj + W, :].reshape(M, Cp)
        acc2 += jnp.dot(patch, w2_ref[k], preferred_element_type=jnp.float32)
    y2 = acc2 * s2_ref[...] + t2_ref[...]
    y2 = jnp.where(y2 > 0, y2, LRELU_SLOPE * y2)

    # ---- MaxPool2d(2, 2), floor mode: even/odd maxima, lane dim (Cp) untouched ----
    y2 = y2.reshape(H, W, Cp)[:2 * HO, :2 * WO, :]
    y2 = y2.reshape(2 * HO * WO, 2, Cp)
    y2 = jnp.maximum(y2[:, 0, :], y2[:, 1, :])          # pool along W
    y2 = y2.reshape(HO, 2, WO, Cp)
    o_ref[0] = jnp.maximum(y2[:, 0, :, :], y2[:, 1, :, :])  # pool along H


# -------------------------------- Wrapper -------------------------------------

def _fold_bn(bias, gamma, beta, mean, var):
    s = gamma * jax.lax.rsqrt(var + BN_EPS)
    return s, beta + (bias - mean) * s


def convpool_forward(params, x_nchw):
    """Matches ConvPoolBlock.forward (NCHW in, NCHW out), inference semantics."""
    w1, b1 = params["conv1"]
    w2, b2 = params["conv2"]
    cout, cin, _, _ = w1.shape
    n, _, h, w_sp = x_nchw.shape
    ho, wo = h // 2, w_sp // 2
    cp = ((cout + 127) // 128) * 128  # lane-dense channel padding

    s1, t1 = _fold_bn(b1, *params["bn1"])
    s2, t2 = _fold_bn(b2, *params["bn2"])

    # (Cout, Cin, 3, 3) -> (kh, kw, Cin, Cout) -> (9, Cin, Cp), zero-padded, bf16.
    w1k = jnp.transpose(w1, (2, 3, 1, 0)).reshape(9, cin, cout)
    w1k = jnp.pad(w1k, ((0, 0), (0, 0), (0, cp - cout))).astype(jnp.bfloat16)
    w2k = jnp.transpose(w2, (2, 3, 1, 0)).reshape(9, cout, cout)
    w2k = jnp.pad(w2k, ((0, 0), (0, cp - cout), (0, cp - cout))).astype(jnp.bfloat16)

    def pad_vec(v):
        return jnp.pad(v, (0, cp - cout)).reshape(1, cp).astype(jnp.float32)

    s1p, t1p, s2p, t2p = pad_vec(s1), pad_vec(t1), pad_vec(s2), pad_vec(t2)

    x_nhwc = jnp.transpose(x_nchw, (0, 2, 3, 1)).astype(jnp.float32)

    out_padded = pl.pallas_call(
        _convpool_kernel,
        out_shape=jax.ShapeDtypeStruct((n, ho, wo, cp), jnp.float32),
        grid=(n,),
        in_specs=[
            pl.BlockSpec((1, h, w_sp, cin), lambda i: (i, 0, 0, 0)),
            pl.BlockSpec((9, cin, cp), lambda i: (0, 0, 0)),
            pl.BlockSpec((1, cp), lambda i: (0, 0)),
            pl.BlockSpec((1, cp), lambda i: (0, 0)),
            pl.BlockSpec((9, cp, cp), lambda i: (0, 0, 0)),
            pl.BlockSpec((1, cp), lambda i: (0, 0)),
            pl.BlockSpec((1, cp), lambda i: (0, 0)),
        ],
        out_specs=pl.BlockSpec((1, ho, wo, cp), lambda i: (i, 0, 0, 0)),
        scratch_shapes=[
            pltpu.VMEM((h + 2, w_sp + 2, cin), jnp.bfloat16),
            pltpu.VMEM((h + 2, w_sp + 2, cp), jnp.bfloat16),
        ],
        compiler_params=pltpu.CompilerParams(
            dimension_semantics=("parallel",),
            vmem_limit_bytes=32 * 1024 * 1024,
        ),
    )(x_nhwc, w1k, s1p, t1p, w2k, s2p, t2p)

    out = out_padded[:, :, :, :cout]          # drop zero-padded channels
    return jnp.transpose(out, (0, 3, 1, 2))   # NHWC -> NCHW


# --------------------------- Pure-JAX reference --------------------------------

def reference_forward(params, x_nchw):
    w1, b1 = params["conv1"]
    w2, b2 = params["conv2"]
    x = jnp.transpose(x_nchw, (0, 2, 3, 1)).astype(jnp.float32)

    def conv(z, w, b):
        w_hwio = jnp.transpose(w, (2, 3, 1, 0))
        y = jax.lax.conv_general_dilated(
            z, w_hwio, (1, 1), [(1, 1), (1, 1)],
            dimension_numbers=("NHWC", "HWIO", "NHWC"),
            precision=jax.lax.Precision.HIGHEST)
        return y + b

    def bn(z, p):
        g, be, m, v = p
        return (z - m) * (g * jax.lax.rsqrt(v + BN_EPS)) + be

    def lrelu(z):
        return jnp.where(z > 0, z, LRELU_SLOPE * z)

    x = lrelu(bn(conv(x, w1, b1), params["bn1"]))
    x = lrelu(bn(conv(x, w2, b2), params["bn2"]))
    x = jax.lax.reduce_window(x, -jnp.inf, jax.lax.max,
                              (1, 2, 2, 1), (1, 2, 2, 1), "VALID")
    return jnp.transpose(x, (0, 3, 1, 2))


# ------------------------------- Parameters ------------------------------------

def init_params(key, in_channels, out_channels):
    keys = iter(jax.random.split(key, 16))

    def conv_init(cin, cout, k):
        bound = 1.0 / np.sqrt(cin * k * k)
        w = jax.random.uniform(next(keys), (cout, cin, k, k), jnp.float32, -bound, bound)
        b = jax.random.uniform(next(keys), (cout,), jnp.float32, -bound, bound)
        return w, b

    def bn_init(c):
        gamma = jax.random.uniform(next(keys), (c,), jnp.float32, 0.5, 1.5)
        beta = jax.random.normal(next(keys), (c,), jnp.float32) * 0.1
        mean = jax.random.normal(next(keys), (c,), jnp.float32) * 0.1
        var = jax.random.uniform(next(keys), (c,), jnp.float32, 0.5, 1.5)
        return gamma, beta, mean, var

    return {
        "conv1": conv_init(in_channels, out_channels, 3),
        "bn1": bn_init(out_channels),
        "conv2": conv_init(out_channels, out_channels, 3),
        "bn2": bn_init(out_channels),
    }


# ---------------------------------- Main ----------------------------------------

if __name__ == "__main__":
    key = jax.random.PRNGKey(0)
    pkey, xkey = jax.random.split(key)

    in_channels, out_channels = 4, 32
    batch, spatial = 2, 16

    params = init_params(pkey, in_channels, out_channels)
    x = jax.random.normal(xkey, (batch, in_channels, spatial, spatial), jnp.float32)

    out = jax.block_until_ready(jax.jit(convpool_forward)(params, x))
    assert out.shape == (batch, out_channels, spatial // 2, spatial // 2), out.shape

    ref = jax.block_until_ready(jax.jit(reference_forward)(params, x))
    np.testing.assert_allclose(np.asarray(out), np.asarray(ref), rtol=2e-2, atol=2e-2)

    print("KERNEL_OK")
</pallas_src>

<mosaic_0001>
module attributes {stable_mosaic.version = 11 : i64} {
  func.func @_convpool_kernel(%arg0: i32, %arg1: memref<1x16x16x4xf32, #tpu.memory_space<vmem>>, %arg2: memref<9x4x128xbf16, #tpu.memory_space<vmem>>, %arg3: memref<1x128xf32, #tpu.memory_space<vmem>>, %arg4: memref<1x128xf32, #tpu.memory_space<vmem>>, %arg5: memref<9x128x128xbf16, #tpu.memory_space<vmem>>, %arg6: memref<1x128xf32, #tpu.memory_space<vmem>>, %arg7: memref<1x128xf32, #tpu.memory_space<vmem>>, %arg8: memref<1x8x8x128xf32, #tpu.memory_space<vmem>>, %arg9: memref<18x18x4xbf16, #tpu.memory_space<vmem>>, %arg10: memref<18x18x128xbf16, #tpu.memory_space<vmem>>) attributes {dimension_semantics = [#tpu.dimension_semantics<parallel>], iteration_bounds = array<i64: 2>, scalar_prefetch = 0 : i64, scratch_operands = 2 : i64, tpu.core_type = #tpu.core_type<tc>, window_params = [{transform_indices = @transform_0, window_bounds = array<i64: 1, 16, 16, 4>}, {pipeline_mode = #tpu.pipeline_mode<synchronous>, transform_indices = @transform_1, window_bounds = array<i64: 9, 4, 128>}, {pipeline_mode = #tpu.pipeline_mode<synchronous>, transform_indices = @transform_2, window_bounds = array<i64: 1, 128>}, {pipeline_mode = #tpu.pipeline_mode<synchronous>, transform_indices = @transform_3, window_bounds = array<i64: 1, 128>}, {pipeline_mode = #tpu.pipeline_mode<synchronous>, transform_indices = @transform_4, window_bounds = array<i64: 9, 128, 128>}, {pipeline_mode = #tpu.pipeline_mode<synchronous>, transform_indices = @transform_5, window_bounds = array<i64: 1, 128>}, {pipeline_mode = #tpu.pipeline_mode<synchronous>, transform_indices = @transform_6, window_bounds = array<i64: 1, 128>}, {transform_indices = @transform_7, window_bounds = array<i64: 1, 8, 8, 128>}]} {
    %cst = arith.constant 0.000000e+00 : bf16
    %0 = vector.broadcast %cst : bf16 to vector<18x18x4xbf16>
    %c0 = arith.constant 0 : index
    %c0_0 = arith.constant 0 : index
    %c0_1 = arith.constant 0 : index
    %1 = vector.load %arg9[%c0, %c0_0, %c0_1] : memref<18x18x4xbf16, #tpu.memory_space<vmem>>, vector<18x18x4xbf16>
    tpu.vector_store %arg9[%c0, %c0_0, %c0_1], %0 {strides = array<i32>} : memref<18x18x4xbf16, #tpu.memory_space<vmem>>, vector<18x18x4xbf16>,
    %c0_2 = arith.constant 0 : index
    %c0_3 = arith.constant 0 : index
    %c0_4 = arith.constant 0 : index
    %c0_5 = arith.constant 0 : index
    %2 = vector.load %arg1[%c0_2, %c0_3, %c0_4, %c0_5] : memref<1x16x16x4xf32, #tpu.memory_space<vmem>>, vector<1x16x16x4xf32>
    %3 = vector.shape_cast %2 : vector<1x16x16x4xf32> to vector<16x16x4xf32>
    %4 = arith.truncf %3 : vector<16x16x4xf32> to vector<16x16x4xbf16>
    %c1 = arith.constant 1 : index
    %c1_6 = arith.constant 1 : index
    %c0_7 = arith.constant 0 : index
    %5 = vector.load %arg9[%c1, %c1_6, %c0_7] : memref<18x18x4xbf16, #tpu.memory_space<vmem>>, vector<16x16x4xbf16>
    tpu.vector_store %arg9[%c1, %c1_6, %c0_7], %4 {strides = array<i32>} : memref<18x18x4xbf16, #tpu.memory_space<vmem>>, vector<16x16x4xbf16>,
    %cst_8 = arith.constant 0.000000e+00 : f32
    %6 = vector.broadcast %cst_8 : f32 to vector<256x128xf32>
    %c0_9 = arith.constant 0 : index
    %c0_10 = arith.constant 0 : index
    %c0_11 = arith.constant 0 : index
    %7 = vector.load %arg9[%c0_9, %c0_10, %c0_11] : memref<18x18x4xbf16, #tpu.memory_space<vmem>>, vector<16x16x4xbf16>
    %8 = vector.shape_cast %7 : vector<16x16x4xbf16> to vector<256x4xbf16>
    %c0_12 = arith.constant 0 : index
    %c0_13 = arith.constant 0 : index
    %c0_14 = arith.constant 0 : index
    %9 = vector.load %arg2[%c0_12, %c0_13, %c0_14] : memref<9x4x128xbf16, #tpu.memory_space<vmem>>, vector<1x4x128xbf16>
    %10 = vector.shape_cast %9 : vector<1x4x128xbf16> to vector<4x128xbf16>
    %cst_15 = arith.constant dense<0.000000e+00> : vector<256x128xf32>
    %11 = tpu.matmul %8, %10, %cst_15 {dimension_numbers = #tpu.dot_dimension_numbers<[1], [0], [0], [1], [0, 0, 1, 1], [], []>} : vector<256x4xbf16>, vector<4x128xbf16>, vector<256x128xf32> -> vector<256x128xf32>
    %12 = arith.addf %6, %11 : vector<256x128xf32>
    %c0_16 = arith.constant 0 : index
    %c1_17 = arith.constant 1 : index
    %c0_18 = arith.constant 0 : index
    %13 = vector.load %arg9[%c0_16, %c1_17, %c0_18] : memref<18x18x4xbf16, #tpu.memory_space<vmem>>, vector<16x16x4xbf16>
    %14 = vector.shape_cast %13 : vector<16x16x4xbf16> to vector<256x4xbf16>
    %c1_19 = arith.constant 1 : index
    %c0_20 = arith.constant 0 : index
    %c0_21 = arith.constant 0 : index
    %15 = vector.load %arg2[%c1_19, %c0_20, %c0_21] : memref<9x4x128xbf16, #tpu.memory_space<vmem>>, vector<1x4x128xbf16>
    %16 = vector.shape_cast %15 : vector<1x4x128xbf16> to vector<4x128xbf16>
    %cst_22 = arith.constant dense<0.000000e+00> : vector<256x128xf32>
    %17 = tpu.matmul %14, %16, %cst_22 {dimension_numbers = #tpu.dot_dimension_numbers<[1], [0], [0], [1], [0, 0, 1, 1], [], []>} : vector<256x4xbf16>, vector<4x128xbf16>, vector<256x128xf32> -> vector<256x128xf32>
    %18 = arith.addf %12, %17 : vector<256x128xf32>
    %c0_23 = arith.constant 0 : index
    %c2 = arith.constant 2 : index
    %c0_24 = arith.constant 0 : index
    %19 = vector.load %arg9[%c0_23, %c2, %c0_24] : memref<18x18x4xbf16, #tpu.memory_space<vmem>>, vector<16x16x4xbf16>
    %20 = vector.shape_cast %19 : vector<16x16x4xbf16> to vector<256x4xbf16>
    %c2_25 = arith.constant 2 : index
    %c0_26 = arith.constant 0 : index
    %c0_27 = arith.constant 0 : index
    %21 = vector.load %arg2[%c2_25, %c0_26, %c0_27] : memref<9x4x128xbf16, #tpu.memory_space<vmem>>, vector<1x4x128xbf16>
    %22 = vector.shape_cast %21 : vector<1x4x128xbf16> to vector<4x128xbf16>
    %cst_28 = arith.constant dense<0.000000e+00> : vector<256x128xf32>
    %23 = tpu.matmul %20, %22, %cst_28 {dimension_numbers = #tpu.dot_dimension_numbers<[1], [0], [0], [1], [0, 0, 1, 1], [], []>} : vector<256x4xbf16>, vector<4x128xbf16>, vector<256x128xf32> -> vector<256x128xf32>
    %24 = arith.addf %18, %23 : vector<256x128xf32>
    %c1_29 = arith.constant 1 : index
    %c0_30 = arith.constant 0 : index
    %c0_31 = arith.constant 0 : index
    %25 = vector.load %arg9[%c1_29, %c0_30, %c0_31] : memref<18x18x4xbf16, #tpu.memory_space<vmem>>, vector<16x16x4xbf16>
    %26 = vector.shape_cast %25 : vector<16x16x4xbf16> to vector<256x4xbf16>
    %c3 = arith.constant 3 : index
    %c0_32 = arith.constant 0 : index
    %c0_33 = arith.constant 0 : index
    %27 = vector.load %arg2[%c3, %c0_32, %c0_33] : memref<9x4x128xbf16, #tpu.memory_space<vmem>>, vector<1x4x128xbf16>
    %28 = vector.shape_cast %27 : vector<1x4x128xbf16> to vector<4x128xbf16>
    %cst_34 = arith.constant dense<0.000000e+00> : vector<256x128xf32>
    %29 = tpu.matmul %26, %28, %cst_34 {dimension_numbers = #tpu.dot_dimension_numbers<[1], [0], [0], [1], [0, 0, 1, 1], [], []>} : vector<256x4xbf16>, vector<4x128xbf16>, vector<256x128xf32> -> vector<256x128xf32>
    %30 = arith.addf %24, %29 : vector<256x128xf32>
    %c1_35 = arith.constant 1 : index
    %c1_36 = arith.constant 1 : index
    %c0_37 = arith.constant 0 : index
    %31 = vector.load %arg9[%c1_35, %c1_36, %c0_37] : memref<18x18x4xbf16, #tpu.memory_space<vmem>>, vector<16x16x4xbf16>
    %32 = vector.shape_cast %31 : vector<16x16x4xbf16> to vector<256x4xbf16>
    %c4 = arith.constant 4 : index
    %c0_38 = arith.constant 0 : index
    %c0_39 = arith.constant 0 : index
    %33 = vector.load %arg2[%c4, %c0_38, %c0_39] : memref<9x4x128xbf16, #tpu.memory_space<vmem>>, vector<1x4x128xbf16>
    %34 = vector.shape_cast %33 : vector<1x4x128xbf16> to vector<4x128xbf16>
    %cst_40 = arith.constant dense<0.000000e+00> : vector<256x128xf32>
    %35 = tpu.matmul %32, %34, %cst_40 {dimension_numbers = #tpu.dot_dimension_numbers<[1], [0], [0], [1], [0, 0, 1, 1], [], []>} : vector<256x4xbf16>, vector<4x128xbf16>, vector<256x128xf32> -> vector<256x128xf32>
    %36 = arith.addf %30, %35 : vector<256x128xf32>
    %c1_41 = arith.constant 1 : index
    %c2_42 = arith.constant 2 : index
    %c0_43 = arith.constant 0 : index
    %37 = vector.load %arg9[%c1_41, %c2_42, %c0_43] : memref<18x18x4xbf16, #tpu.memory_space<vmem>>, vector<16x16x4xbf16>
    %38 = vector.shape_cast %37 : vector<16x16x4xbf16> to vector<256x4xbf16>
    %c5 = arith.constant 5 : index
    %c0_44 = arith.constant 0 : index
    %c0_45 = arith.constant 0 : index
    %39 = vector.load %arg2[%c5, %c0_44, %c0_45] : memref<9x4x128xbf16, #tpu.memory_space<vmem>>, vector<1x4x128xbf16>
    %40 = vector.shape_cast %39 : vector<1x4x128xbf16> to vector<4x128xbf16>
    %cst_46 = arith.constant dense<0.000000e+00> : vector<256x128xf32>
    %41 = tpu.matmul %38, %40, %cst_46 {dimension_numbers = #tpu.dot_dimension_numbers<[1], [0], [0], [1], [0, 0, 1, 1], [], []>} : vector<256x4xbf16>, vector<4x128xbf16>, vector<256x128xf32> -> vector<256x128xf32>
    %42 = arith.addf %36, %41 : vector<256x128xf32>
    %c2_47 = arith.constant 2 : index
    %c0_48 = arith.constant 0 : index
    %c0_49 = arith.constant 0 : index
    %43 = vector.load %arg9[%c2_47, %c0_48, %c0_49] : memref<18x18x4xbf16, #tpu.memory_space<vmem>>, vector<16x16x4xbf16>
    %44 = vector.shape_cast %43 : vector<16x16x4xbf16> to vector<256x4xbf16>
    %c6 = arith.constant 6 : index
    %c0_50 = arith.constant 0 : index
    %c0_51 = arith.constant 0 : index
    %45 = vector.load %arg2[%c6, %c0_50, %c0_51] : memref<9x4x128xbf16, #tpu.memory_space<vmem>>, vector<1x4x128xbf16>
    %46 = vector.shape_cast %45 : vector<1x4x128xbf16> to vector<4x128xbf16>
    %cst_52 = arith.constant dense<0.000000e+00> : vector<256x128xf32>
    %47 = tpu.matmul %44, %46, %cst_52 {dimension_numbers = #tpu.dot_dimension_numbers<[1], [0], [0], [1], [0, 0, 1, 1], [], []>} : vector<256x4xbf16>, vector<4x128xbf16>, vector<256x128xf32> -> vector<256x128xf32>
    %48 = arith.addf %42, %47 : vector<256x128xf32>
    %c2_53 = arith.constant 2 : index
    %c1_54 = arith.constant 1 : index
    %c0_55 = arith.constant 0 : index
    %49 = vector.load %arg9[%c2_53, %c1_54, %c0_55] : memref<18x18x4xbf16, #tpu.memory_space<vmem>>, vector<16x16x4xbf16>
    %50 = vector.shape_cast %49 : vector<16x16x4xbf16> to vector<256x4xbf16>
    %c7 = arith.constant 7 : index
    %c0_56 = arith.constant 0 : index
    %c0_57 = arith.constant 0 : index
    %51 = vector.load %arg2[%c7, %c0_56, %c0_57] : memref<9x4x128xbf16, #tpu.memory_space<vmem>>, vector<1x4x128xbf16>
    %52 = vector.shape_cast %51 : vector<1x4x128xbf16> to vector<4x128xbf16>
    %cst_58 = arith.constant dense<0.000000e+00> : vector<256x128xf32>
    %53 = tpu.matmul %50, %52, %cst_58 {dimension_numbers = #tpu.dot_dimension_numbers<[1], [0], [0], [1], [0, 0, 1, 1], [], []>} : vector<256x4xbf16>, vector<4x128xbf16>, vector<256x128xf32> -> vector<256x128xf32>
    %54 = arith.addf %48, %53 : vector<256x128xf32>
    %c2_59 = arith.constant 2 : index
    %c2_60 = arith.constant 2 : index
    %c0_61 = arith.constant 0 : index
    %55 = vector.load %arg9[%c2_59, %c2_60, %c0_61] : memref<18x18x4xbf16, #tpu.memory_space<vmem>>, vector<16x16x4xbf16>
    %56 = vector.shape_cast %55 : vector<16x16x4xbf16> to vector<256x4xbf16>
    %c8 = arith.constant 8 : index
    %c0_62 = arith.constant 0 : index
    %c0_63 = arith.constant 0 : index
    %57 = vector.load %arg2[%c8, %c0_62, %c0_63] : memref<9x4x128xbf16, #tpu.memory_space<vmem>>, vector<1x4x128xbf16>
    %58 = vector.shape_cast %57 : vector<1x4x128xbf16> to vector<4x128xbf16>
    %cst_64 = arith.constant dense<0.000000e+00> : vector<256x128xf32>
    %59 = tpu.matmul %56, %58, %cst_64 {dimension_numbers = #tpu.dot_dimension_numbers<[1], [0], [0], [1], [0, 0, 1, 1], [], []>} : vector<256x4xbf16>, vector<4x128xbf16>, vector<256x128xf32> -> vector<256x128xf32>
    %60 = arith.addf %54, %59 : vector<256x128xf32>
    %c0_65 = arith.constant 0 : index
    %c0_66 = arith.constant 0 : index
    %61 = vector.load %arg3[%c0_65, %c0_66] : memref<1x128xf32, #tpu.memory_space<vmem>>, vector<1x128xf32>
    %62 = vector.broadcast %61 : vector<1x128xf32> to vector<256x128xf32>
    %63 = arith.mulf %60, %62 : vector<256x128xf32>
    %c0_67 = arith.constant 0 : index
    %c0_68 = arith.constant 0 : index
    %64 = vector.load %arg4[%c0_67, %c0_68] : memref<1x128xf32, #tpu.memory_space<vmem>>, vector<1x128xf32>
    %65 = vector.broadcast %64 : vector<1x128xf32> to vector<256x128xf32>
    %66 = arith.addf %63, %65 : vector<256x128xf32>
    %cst_69 = arith.constant 0.000000e+00 : f32
    %67 = vector.broadcast %cst_69 : f32 to vector<256x128xf32>
    %68 = arith.cmpf ogt, %66, %67 : vector<256x128xf32>
    %cst_70 = arith.constant 0.00999999977 : f32
    %69 = vector.broadcast %cst_70 : f32 to vector<256x128xf32>
    %70 = arith.mulf %69, %66 : vector<256x128xf32>
    %71 = arith.select %68, %66, %70 : vector<256x128xi1>, vector<256x128xf32>
    %cst_71 = arith.constant 0.000000e+00 : bf16
    %72 = vector.broadcast %cst_71 : bf16 to vector<18x18x128xbf16>
    %c0_72 = arith.constant 0 : index
    %c0_73 = arith.constant 0 : index
    %c0_74 = arith.constant 0 : index
    %73 = vector.load %arg10[%c0_72, %c0_73, %c0_74] : memref<18x18x128xbf16, #tpu.memory_space<vmem>>, vector<18x18x128xbf16>
    tpu.vector_store %arg10[%c0_72, %c0_73, %c0_74], %72 {strides = array<i32>} : memref<18x18x128xbf16, #tpu.memory_space<vmem>>, vector<18x18x128xbf16>,
    %74 = vector.shape_cast %71 : vector<256x128xf32> to vector<16x16x128xf32>
    %75 = arith.truncf %74 : vector<16x16x128xf32> to vector<16x16x128xbf16>
    %c1_75 = arith.constant 1 : index
    %c1_76 = arith.constant 1 : index
    %c0_77 = arith.constant 0 : index
    %76 = vector.load %arg10[%c1_75, %c1_76, %c0_77] : memref<18x18x128xbf16, #tpu.memory_space<vmem>>, vector<16x16x128xbf16>
    tpu.vector_store %arg10[%c1_75, %c1_76, %c0_77], %75 {strides = array<i32>} : memref<18x18x128xbf16, #tpu.memory_space<vmem>>, vector<16x16x128xbf16>,
    %cst_78 = arith.constant 0.000000e+00 : f32
    %77 = vector.broadcast %cst_78 : f32 to vector<256x128xf32>
    %c0_79 = arith.constant 0 : index
    %c0_80 = arith.constant 0 : index
    %c0_81 = arith.constant 0 : index
    %78 = vector.load %arg10[%c0_79, %c0_80, %c0_81] : memref<18x18x128xbf16, #tpu.memory_space<vmem>>, vector<16x16x128xbf16>
    %79 = vector.shape_cast %78 : vector<16x16x128xbf16> to vector<256x128xbf16>
    %c0_82 = arith.constant 0 : index
    %c0_83 = arith.constant 0 : index
    %c0_84 = arith.constant 0 : index
    %80 = vector.load %arg5[%c0_82, %c0_83, %c0_84] : memref<9x128x128xbf16, #tpu.memory_space<vmem>>, vector<1x128x128xbf16>
    %81 = vector.shape_cast %80 : vector<1x128x128xbf16> to vector<128x128xbf16>
    %cst_85 = arith.constant dense<0.000000e+00> : vector<256x128xf32>
    %82 = tpu.matmul %79, %81, %cst_85 {dimension_numbers = #tpu.dot_dimension_numbers<[1], [0], [0], [1], [0, 0, 1, 1], [], []>} : vector<256x128xbf16>, vector<128x128xbf16>, vector<256x128xf32> -> vector<256x128xf32>
    %83 = arith.addf %77, %82 : vector<256x128xf32>
    %c0_86 = arith.constant 0 : index
    %c1_87 = arith.constant 1 : index
    %c0_88 = arith.constant 0 : index
    %84 = vector.load %arg10[%c0_86, %c1_87, %c0_88] : memref<18x18x128xbf16, #tpu.memory_space<vmem>>, vector<16x16x128xbf16>
    %85 = vector.shape_cast %84 : vector<16x16x128xbf16> to vector<256x128xbf16>
    %c1_89 = arith.constant 1 : index
    %c0_90 = arith.constant 0 : index
    %c0_91 = arith.constant 0 : index
    %86 = vector.load %arg5[%c1_89, %c0_90, %c0_91] : memref<9x128x128xbf16, #tpu.memory_space<vmem>>, vector<1x128x128xbf16>
    %87 = vector.shape_cast %86 : vector<1x128x128xbf16> to vector<128x128xbf16>
    %cst_92 = arith.constant dense<0.000000e+00> : vector<256x128xf32>
    %88 = tpu.matmul %85, %87, %cst_92 {dimension_numbers = #tpu.dot_dimension_numbers<[1], [0], [0], [1], [0, 0, 1, 1], [], []>} : vector<256x128xbf16>, vector<128x128xbf16>, vector<256x128xf32> -> vector<256x128xf32>
    %89 = arith.addf %83, %88 : vector<256x128xf32>
    %c0_93 = arith.constant 0 : index
    %c2_94 = arith.constant 2 : index
    %c0_95 = arith.constant 0 : index
    %90 = vector.load %arg10[%c0_93, %c2_94, %c0_95] : memref<18x18x128xbf16, #tpu.memory_space<vmem>>, vector<16x16x128xbf16>
    %91 = vector.shape_cast %90 : vector<16x16x128xbf16> to vector<256x128xbf16>
    %c2_96 = arith.constant 2 : index
    %c0_97 = arith.constant 0 : index
    %c0_98 = arith.constant 0 : index
    %92 = vector.load %arg5[%c2_96, %c0_97, %c0_98] : memref<9x128x128xbf16, #tpu.memory_space<vmem>>, vector<1x128x128xbf16>
    %93 = vector.shape_cast %92 : vector<1x128x128xbf16> to vector<128x128xbf16>
    %cst_99 = arith.constant dense<0.000000e+00> : vector<256x128xf32>
    %94 = tpu.matmul %91, %93, %cst_99 {dimension_numbers = #tpu.dot_dimension_numbers<[1], [0], [0], [1], [0, 0, 1, 1], [], []>} : vector<256x128xbf16>, vector<128x128xbf16>, vector<256x128xf32> -> vector<256x128xf32>
    %95 = arith.addf %89, %94 : vector<256x128xf32>
    %c1_100 = arith.constant 1 : index
    %c0_101 = arith.constant 0 : index
    %c0_102 = arith.constant 0 : index
    %96 = vector.load %arg10[%c1_100, %c0_101, %c0_102] : memref<18x18x128xbf16, #tpu.memory_space<vmem>>, vector<16x16x128xbf16>
    %97 = vector.shape_cast %96 : vector<16x16x128xbf16> to vector<256x128xbf16>
    %c3_103 = arith.constant 3 : index
    %c0_104 = arith.constant 0 : index
    %c0_105 = arith.constant 0 : index
    %98 = vector.load %arg5[%c3_103, %c0_104, %c0_105] : memref<9x128x128xbf16, #tpu.memory_space<vmem>>, vector<1x128x128xbf16>
    %99 = vector.shape_cast %98 : vector<1x128x128xbf16> to vector<128x128xbf16>
    %cst_106 = arith.constant dense<0.000000e+00> : vector<256x128xf32>
    %100 = tpu.matmul %97, %99, %cst_106 {dimension_numbers = #tpu.dot_dimension_numbers<[1], [0], [0], [1], [0, 0, 1, 1], [], []>} : vector<256x128xbf16>, vector<128x128xbf16>, vector<256x128xf32> -> vector<256x128xf32>
    %101 = arith.addf %95, %100 : vector<256x128xf32>
    %c1_107 = arith.constant 1 : index
    %c1_108 = arith.constant 1 : index
    %c0_109 = arith.constant 0 : index
    %102 = vector.load %arg10[%c1_107, %c1_108, %c0_109] : memref<18x18x128xbf16, #tpu.memory_space<vmem>>, vector<16x16x128xbf16>
    %103 = vector.shape_cast %102 : vector<16x16x128xbf16> to vector<256x128xbf16>
    %c4_110 = arith.constant 4 : index
    %c0_111 = arith.constant 0 : index
    %c0_112 = arith.constant 0 : index
    %104 = vector.load %arg5[%c4_110, %c0_111, %c0_112] : memref<9x128x128xbf16, #tpu.memory_space<vmem>>, vector<1x128x128xbf16>
    %105 = vector.shape_cast %104 : vector<1x128x128xbf16> to vector<128x128xbf16>
    %cst_113 = arith.constant dense<0.000000e+00> : vector<256x128xf32>
    %106 = tpu.matmul %103, %105, %cst_113 {dimension_numbers = #tpu.dot_dimension_numbers<[1], [0], [0], [1], [0, 0, 1, 1], [], []>} : vector<256x128xbf16>, vector<128x128xbf16>, vector<256x128xf32> -> vector<256x128xf32>
    %107 = arith.addf %101, %106 : vector<256x128xf32>
    %c1_114 = arith.constant 1 : index
    %c2_115 = arith.constant 2 : index
    %c0_116 = arith.constant 0 : index
    %108 = vector.load %arg10[%c1_114, %c2_115, %c0_116] : memref<18x18x128xbf16, #tpu.memory_space<vmem>>, vector<16x16x128xbf16>
    %109 = vector.shape_cast %108 : vector<16x16x128xbf16> to vector<256x128xbf16>
    %c5_117 = arith.constant 5 : index
    %c0_118 = arith.constant 0 : index
    %c0_119 = arith.constant 0 : index
    %110 = vector.load %arg5[%c5_117, %c0_118, %c0_119] : memref<9x128x128xbf16, #tpu.memory_space<vmem>>, vector<1x128x128xbf16>
    %111 = vector.shape_cast %110 : vector<1x128x128xbf16> to vector<128x128xbf16>
    %cst_120 = arith.constant dense<0.000000e+00> : vector<256x128xf32>
    %112 = tpu.matmul %109, %111, %cst_120 {dimension_numbers = #tpu.dot_dimension_numbers<[1], [0], [0], [1], [0, 0, 1, 1], [], []>} : vector<256x128xbf16>, vector<128x128xbf16>, vector<256x128xf32> -> vector<256x128xf32>
    %113 = arith.addf %107, %112 : vector<256x128xf32>
    %c2_121 = arith.constant 2 : index
    %c0_122 = arith.constant 0 : index
    %c0_123 = arith.constant 0 : index
    %114 = vector.load %arg10[%c2_121, %c0_122, %c0_123] : memref<18x18x128xbf16, #tpu.memory_space<vmem>>, vector<16x16x128xbf16>
    %115 = vector.shape_cast %114 : vector<16x16x128xbf16> to vector<256x128xbf16>
    %c6_124 = arith.constant 6 : index
    %c0_125 = arith.constant 0 : index
    %c0_126 = arith.constant 0 : index
    %116 = vector.load %arg5[%c6_124, %c0_125, %c0_126] : memref<9x128x128xbf16, #tpu.memory_space<vmem>>, vector<1x128x128xbf16>
    %117 = vector.shape_cast %116 : vector<1x128x128xbf16> to vector<128x128xbf16>
    %cst_127 = arith.constant dense<0.000000e+00> : vector<256x128xf32>
    %118 = tpu.matmul %115, %117, %cst_127 {dimension_numbers = #tpu.dot_dimension_numbers<[1], [0], [0], [1], [0, 0, 1, 1], [], []>} : vector<256x128xbf16>, vector<128x128xbf16>, vector<256x128xf32> -> vector<256x128xf32>
    %119 = arith.addf %113, %118 : vector<256x128xf32>
    %c2_128 = arith.constant 2 : index
    %c1_129 = arith.constant 1 : index
    %c0_130 = arith.constant 0 : index
    %120 = vector.load %arg10[%c2_128, %c1_129, %c0_130] : memref<18x18x128xbf16, #tpu.memory_space<vmem>>, vector<16x16x128xbf16>
    %121 = vector.shape_cast %120 : vector<16x16x128xbf16> to vector<256x128xbf16>
    %c7_131 = arith.constant 7 : index
    %c0_132 = arith.constant 0 : index
    %c0_133 = arith.constant 0 : index
    %122 = vector.load %arg5[%c7_131, %c0_132, %c0_133] : memref<9x128x128xbf16, #tpu.memory_space<vmem>>, vector<1x128x128xbf16>
    %123 = vector.shape_cast %122 : vector<1x128x128xbf16> to vector<128x128xbf16>
    %cst_134 = arith.constant dense<0.000000e+00> : vector<256x128xf32>
    %124 = tpu.matmul %121, %123, %cst_134 {dimension_numbers = #tpu.dot_dimension_numbers<[1], [0], [0], [1], [0, 0, 1, 1], [], []>} : vector<256x128xbf16>, vector<128x128xbf16>, vector<256x128xf32> -> vector<256x128xf32>
    %125 = arith.addf %119, %124 : vector<256x128xf32>
    %c2_135 = arith.constant 2 : index
    %c2_136 = arith.constant 2 : index
    %c0_137 = arith.constant 0 : index
    %126 = vector.load %arg10[%c2_135, %c2_136, %c0_137] : memref<18x18x128xbf16, #tpu.memory_space<vmem>>, vector<16x16x128xbf16>
    %127 = vector.shape_cast %126 : vector<16x16x128xbf16> to vector<256x128xbf16>
    %c8_138 = arith.constant 8 : index
    %c0_139 = arith.constant 0 : index
    %c0_140 = arith.constant 0 : index
    %128 = vector.load %arg5[%c8_138, %c0_139, %c0_140] : memref<9x128x128xbf16, #tpu.memory_space<vmem>>, vector<1x128x128xbf16>
    %129 = vector.shape_cast %128 : vector<1x128x128xbf16> to vector<128x128xbf16>
    %cst_141 = arith.constant dense<0.000000e+00> : vector<256x128xf32>
    %130 = tpu.matmul %127, %129, %cst_141 {dimension_numbers = #tpu.dot_dimension_numbers<[1], [0], [0], [1], [0, 0, 1, 1], [], []>} : vector<256x128xbf16>, vector<128x128xbf16>, vector<256x128xf32> -> vector<256x128xf32>
    %131 = arith.addf %125, %130 : vector<256x128xf32>
    %c0_142 = arith.constant 0 : index
    %c0_143 = arith.constant 0 : index
    %132 = vector.load %arg6[%c0_142, %c0_143] : memref<1x128xf32, #tpu.memory_space<vmem>>, vector<1x128xf32>
    %133 = vector.broadcast %132 : vector<1x128xf32> to vector<256x128xf32>
    %134 = arith.mulf %131, %133 : vector<256x128xf32>
    %c0_144 = arith.constant 0 : index
    %c0_145 = arith.constant 0 : index
    %135 = vector.load %arg7[%c0_144, %c0_145] : memref<1x128xf32, #tpu.memory_space<vmem>>, vector<1x128xf32>
    %136 = vector.broadcast %135 : vector<1x128xf32> to vector<256x128xf32>
    %137 = arith.addf %134, %136 : vector<256x128xf32>
    %cst_146 = arith.constant 0.000000e+00 : f32
    %138 = vector.broadcast %cst_146 : f32 to vector<256x128xf32>
    %139 = arith.cmpf ogt, %137, %138 : vector<256x128xf32>
    %cst_147 = arith.constant 0.00999999977 : f32
    %140 = vector.broadcast %cst_147 : f32 to vector<256x128xf32>
    %141 = arith.mulf %140, %137 : vector<256x128xf32>
    %142 = arith.select %139, %137, %141 : vector<256x128xi1>, vector<256x128xf32>
    %143 = vector.shape_cast %142 : vector<256x128xf32> to vector<16x16x128xf32>
    %144 = vector.shape_cast %143 : vector<16x16x128xf32> to vector<128x2x128xf32>
    %145 = vector.extract_strided_slice %144 {offsets = [0, 0, 0], sizes = [128, 1, 128], strides = [1, 1, 1]} : vector<128x2x128xf32> to vector<128x1x128xf32>
    %146 = vector.shape_cast %145 : vector<128x1x128xf32> to vector<128x128xf32>
    %147 = vector.extract_strided_slice %144 {offsets = [0, 1, 0], sizes = [128, 1, 128], strides = [1, 1, 1]} : vector<128x2x128xf32> to vector<128x1x128xf32>
    %148 = vector.shape_cast %147 : vector<128x1x128xf32> to vector<128x128xf32>
    %149 = arith.maximumf %146, %148 : vector<128x128xf32>
    %150 = vector.shape_cast %149 : vector<128x128xf32> to vector<8x2x8x128xf32>
    %151 = vector.extract_strided_slice %150 {offsets = [0, 0, 0, 0], sizes = [8, 1, 8, 128], strides = [1, 1, 1, 1]} : vector<8x2x8x128xf32> to vector<8x1x8x128xf32>
    %152 = vector.shape_cast %151 : vector<8x1x8x128xf32> to vector<8x8x128xf32>
    %153 = vector.extract_strided_slice %150 {offsets = [0, 1, 0, 0], sizes = [8, 1, 8, 128], strides = [1, 1, 1, 1]} : vector<8x2x8x128xf32> to vector<8x1x8x128xf32>
    %154 = vector.shape_cast %153 : vector<8x1x8x128xf32> to vector<8x8x128xf32>
    %155 = arith.maximumf %152, %154 : vector<8x8x128xf32>
    %c0_148 = arith.constant 0 : index
    %c0_149 = arith.constant 0 : index
    %c0_150 = arith.constant 0 : index
    %c0_151 = arith.constant 0 : index
    %156 = vector.load %arg8[%c0_148, %c0_149, %c0_150, %c0_151] : memref<1x8x8x128xf32, #tpu.memory_space<vmem>>, vector<1x8x8x128xf32>
    %157 = vector.shape_cast %156 : vector<1x8x8x128xf32> to vector<8x8x128xf32>
    %158 = vector.shape_cast %155 : vector<8x8x128xf32> to vector<1x8x8x128xf32>
    tpu.vector_store %arg8[%c0_148, %c0_149, %c0_150, %c0_151], %158 {strides = array<i32>} : memref<1x8x8x128xf32, #tpu.memory_space<vmem>>, vector<1x8x8x128xf32>,
    return
  }
  func.func @transform_0(%arg0: i32) -> (i32, i32, i32, i32) {
    %c0_i32 = arith.constant 0 : i32
    %c0_i32_0 = arith.constant 0 : i32
    %c0_i32_1 = arith.constant 0 : i32
    %c0_i32_2 = arith.constant 0 : i32
    return %arg0, %c0_i32, %c0_i32_0, %c0_i32_1 : i32, i32, i32, i32
  }
  func.func @transform_1(%arg0: i32) -> (i32, i32, i32) {
    %c0_i32 = arith.constant 0 : i32
    %c0_i32_0 = arith.constant 0 : i32
    %c0_i32_1 = arith.constant 0 : i32
    %c0_i32_2 = arith.constant 0 : i32
    return %c0_i32, %c0_i32_0, %c0_i32_1 : i32, i32, i32
  }
  func.func @transform_2(%arg0: i32) -> (i32, i32) {
    %c0_i32 = arith.constant 0 : i32
    %c0_i32_0 = arith.constant 0 : i32
    %c0_i32_1 = arith.constant 0 : i32
    return %c0_i32, %c0_i32_0 : i32, i32
  }
  func.func @transform_3(%arg0: i32) -> (i32, i32) {
    %c0_i32 = arith.constant 0 : i32
    %c0_i32_0 = arith.constant 0 : i32
    %c0_i32_1 = arith.constant 0 : i32
    return %c0_i32, %c0_i32_0 : i32, i32
  }
  func.func @transform_4(%arg0: i32) -> (i32, i32, i32) {
    %c0_i32 = arith.constant 0 : i32
    %c0_i32_0 = arith.constant 0 : i32
    %c0_i32_1 = arith.constant 0 : i32
    %c0_i32_2 = arith.constant 0 : i32
    return %c0_i32, %c0_i32_0, %c0_i32_1 : i32, i32, i32
  }
  func.func @transform_5(%arg0: i32) -> (i32, i32) {
    %c0_i32 = arith.constant 0 : i32
    %c0_i32_0 = arith.constant 0 : i32
    %c0_i32_1 = arith.constant 0 : i32
    return %c0_i32, %c0_i32_0 : i32, i32
  }
  func.func @transform_6(%arg0: i32) -> (i32, i32) {
    %c0_i32 = arith.constant 0 : i32
    %c0_i32_0 = arith.constant 0 : i32
    %c0_i32_1 = arith.constant 0 : i32
    return %c0_i32, %c0_i32_0 : i32, i32
  }
  func.func @transform_7(%arg0: i32) -> (i32, i32, i32, i32) {
    %c0_i32 = arith.constant 0 : i32
    %c0_i32_0 = arith.constant 0 : i32
    %c0_i32_1 = arith.constant 0 : i32
    %c0_i32_2 = arith.constant 0 : i32
    return %arg0, %c0_i32, %c0_i32_0, %c0_i32_1 : i32, i32, i32, i32
  }
}

</mosaic_0001>

<llo_original>
// kernel: convpool_forward.1
$region0: #{convpool_forward.1}
  #allocation0 [shape = 'u32[]', space=smem, size = 0x4, offset = 0x4, fixed_abs, tag = 'smem constant byte address 0x4 - core index']
  #allocation1 [shape = 'u32[144,128]{1,0:T(1,128)}', space=vmem, size = 0x12000, scoped, tag = 'internal scratch']
  #allocation2 [shape = 'bf16[18,18,4]{2,1,0:T(8,128)(2,1)}', space=vmem, size = 0x1b000, scoped, tag = 'scratch operand']
  #allocation3 [shape = 'bf16[18,18,128]{2,1,0:T(8,128)(2,1)}', space=vmem, size = 0x1b000, scoped, tag = 'scratch operand']
  %s0 = inlined_call_operand.vmem [shape: f32[2,16,16,4], index: 0, kind: input, shape index: {}]
  %s1 = inlined_call_operand.vmem [shape: bf16[9,4,128], index: 1, kind: input, shape index: {}]
  %s2 = inlined_call_operand.vmem [shape: f32[1,128], index: 2, kind: input, shape index: {}]
  %s3 = inlined_call_operand.vmem [shape: f32[1,128], index: 3, kind: input, shape index: {}]
  %s4 = inlined_call_operand.vmem [shape: bf16[9,128,128], index: 4, kind: input, shape index: {}]
  %s5 = inlined_call_operand.vmem [shape: f32[1,128], index: 5, kind: input, shape index: {}]
  %s6 = inlined_call_operand.vmem [shape: f32[1,128], index: 6, kind: input, shape index: {}]
  %s7 = inlined_call_operand.vmem [shape: f32[2,8,8,128], index: 7, kind: output, shape index: {}]
  %s8 = sld [smem:[#allocation0]]
  $region61: #{convpool_forward.1} parent=0
    _
  %s10 = ssub.s32 1, %s8
  %s11 = scalar_select 0, %s10, %s8
  loop: start=0, step=1, limit=4
  $region2: #{convpool_forward.1} parent=0 // loop_pre_header
    _
  $region3: #{convpool_forward.1} parent=0 // loop_header
    %s13 = sphi 0, %s17
    %p14 = scmp.ge.s32.totalorder %s13, 4
    %s23 = sphi 0, %s25
    %s26 = sphi 0, %s23
    %s27 = sphi 0, %s26
    %s43 = sphi 0, %s27
    %s47 = sphi 0, %s47
    %s49 = sphi 0, %s47
    %s50 = sphi 0, %s49
    %s64 = sphi 0, %s50
    %s68 = sphi 0, %s68
    %s70 = sphi 0, %s68
    %s71 = sphi 0, %s70
    %s85 = sphi 0, %s71
    %s89 = sphi 0, %s89
    %s91 = sphi 0, %s89
    %s92 = sphi 0, %s91
    %s106 = sphi 0, %s92
    %s110 = sphi 0, %s110
    %s112 = sphi 0, %s110
    %s113 = sphi 0, %s112
    %s127 = sphi 0, %s113
    %s131 = sphi 0, %s131
    %s133 = sphi 0, %s131
    %s134 = sphi 0, %s133
    %s148 = sphi 0, %s134
    %s152 = sphi 0, %s152
    %s154 = sphi 0, %s152
    %s155 = sphi 0, %s154
    %s169 = sphi 0, %s155
    %s175 = sphi 0, %s177
    %s178 = sphi 0, %s175
    %s179 = sphi 0, %s178
    %s195 = sphi 0, %s179
  $region4: #{convpool_forward.1} parent=0 // loop_header_branch
    %16 = sbr.rel (%p14) target = $region8
  $region5: #{convpool_forward.1} parent=0 // loop_body
    %s18 = ssub.s32 %s13, 1
    %s19 = ssub.s32 %s13, 2
    %s20 = sadd.s32 %s13, 1
    %s21 = ssub.s32 %s13, %s20
    %p22 = scmp.eq.s32.totalorder %s21, 0
    %s24 = sadd.s32 %s23, 1
    %s25 = scalar_select %p22, %s23, %s24
    %p28 = pneg %p22
    %p29 = scmp.eq.s32.totalorder %s13, 1
    %p30 = por %p28, %p29
    %p31 = scmp.ne.s32.totalorder %s23, %s26
    %p32 = scmp.eq.s32.totalorder %s13, 0
    %p33 = por %p31, %p32
    %p34 = scmp.ne.s32.totalorder %s23, %s26
    %p35 = scmp.eq.s32.totalorder %s18, 1
    %p36 = por %p34, %p35
    %p37 = scmp.ne.s32.totalorder %s26, %s27
    %p38 = scmp.eq.s32.totalorder %s18, 0
    %p39 = por %p37, %p38
    %p40 = scmp.ne.s32.totalorder %s26, %s27
    %p41 = scmp.eq.s32.totalorder %s19, 1
    %p42 = por %p40, %p41
    %p44 = scmp.ne.s32.totalorder %s27, %s43
    %p45 = scmp.eq.s32.totalorder %s19, 0
    %p46 = por %p44, %p45
    %s48 = sadd.s32 %s47, 1
    %p51 = scmp.eq.s32.totalorder %s13, 1
    %p52 = scmp.ne.s32.totalorder %s47, %s49
    %p53 = scmp.eq.s32.totalorder %s13, 0
    %p54 = por %p52, %p53
    %p55 = scmp.ne.s32.totalorder %s47, %s49
    %p56 = scmp.eq.s32.totalorder %s18, 1
    %p57 = por %p55, %p56
    %p58 = scmp.ne.s32.totalorder %s49, %s50
    %p59 = scmp.eq.s32.totalorder %s18, 0
    %p60 = por %p58, %p59
    %p61 = scmp.ne.s32.totalorder %s49, %s50
    %p62 = scmp.eq.s32.totalorder %s19, 1
    %p63 = por %p61, %p62
    %p65 = scmp.ne.s32.totalorder %s50, %s64
    %p66 = scmp.eq.s32.totalorder %s19, 0
    %p67 = por %p65, %p66
    %s69 = sadd.s32 %s68, 1
    %p72 = scmp.eq.s32.totalorder %s13, 1
    %p73 = scmp.ne.s32.totalorder %s68, %s70
    %p74 = scmp.eq.s32.totalorder %s13, 0
    %p75 = por %p73, %p74
    %p76 = scmp.ne.s32.totalorder %s68, %s70
    %p77 = scmp.eq.s32.totalorder %s18, 1
    %p78 = por %p76, %p77
    %p79 = scmp.ne.s32.totalorder %s70, %s71
    %p80 = scmp.eq.s32.totalorder %s18, 0
    %p81 = por %p79, %p80
    %p82 = scmp.ne.s32.totalorder %s70, %s71
    %p83 = scmp.eq.s32.totalorder %s19, 1
    %p84 = por %p82, %p83
    %p86 = scmp.ne.s32.totalorder %s71, %s85
    %p87 = scmp.eq.s32.totalorder %s19, 0
    %p88 = por %p86, %p87
    %s90 = sadd.s32 %s89, 1
    %p93 = scmp.eq.s32.totalorder %s13, 1
    %p94 = scmp.ne.s32.totalorder %s89, %s91
    %p95 = scmp.eq.s32.totalorder %s13, 0
    %p96 = por %p94, %p95
    %p97 = scmp.ne.s32.totalorder %s89, %s91
    %p98 = scmp.eq.s32.totalorder %s18, 1
    %p99 = por %p97, %p98
    %p100 = scmp.ne.s32.totalorder %s91, %s92
    %p101 = scmp.eq.s32.totalorder %s18, 0
    %p102 = por %p100, %p101
    %p103 = scmp.ne.s32.totalorder %s91, %s92
    %p104 = scmp.eq.s32.totalorder %s19, 1
    %p105 = por %p103, %p104
    %p107 = scmp.ne.s32.totalorder %s92, %s106
    %p108 = scmp.eq.s32.totalorder %s19, 0
    %p109 = por %p107, %p108
    %s111 = sadd.s32 %s110, 1
    %p114 = scmp.eq.s32.totalorder %s13, 1
    %p115 = scmp.ne.s32.totalorder %s110, %s112
    %p116 = scmp.eq.s32.totalorder %s13, 0
    %p117 = por %p115, %p116
    %p118 = scmp.ne.s32.totalorder %s110, %s112
    %p119 = scmp.eq.s32.totalorder %s18, 1
    %p120 = por %p118, %p119
    %p121 = scmp.ne.s32.totalorder %s112, %s113
    %p122 = scmp.eq.s32.totalorder %s18, 0
    %p123 = por %p121, %p122
    %p124 = scmp.ne.s32.totalorder %s112, %s113
    %p125 = scmp.eq.s32.totalorder %s19, 1
    %p126 = por %p124, %p125
    %p128 = scmp.ne.s32.totalorder %s113, %s127
    %p129 = scmp.eq.s32.totalorder %s19, 0
    %p130 = por %p128, %p129
    %s132 = sadd.s32 %s131, 1
    %p135 = scmp.eq.s32.totalorder %s13, 1
    %p136 = scmp.ne.s32.totalorder %s131, %s133
    %p137 = scmp.eq.s32.totalorder %s13, 0
    %p138 = por %p136, %p137
    %p139 = scmp.ne.s32.totalorder %s131, %s133
    %p140 = scmp.eq.s32.totalorder %s18, 1
    %p141 = por %p139, %p140
    %p142 = scmp.ne.s32.totalorder %s133, %s134
    %p143 = scmp.eq.s32.totalorder %s18, 0
    %p144 = por %p142, %p143
    %p145 = scmp.ne.s32.totalorder %s133, %s134
    %p146 = scmp.eq.s32.totalorder %s19, 1
    %p147 = por %p145, %p146
    %p149 = scmp.ne.s32.totalorder %s134, %s148
    %p150 = scmp.eq.s32.totalorder %s19, 0
    %p151 = por %p149, %p150
    %s153 = sadd.s32 %s152, 1
    %p156 = scmp.eq.s32.totalorder %s13, 1
    %p157 = scmp.ne.s32.totalorder %s152, %s154
    %p158 = scmp.eq.s32.totalorder %s13, 0
    %p159 = por %p157, %p158
    %p160 = scmp.ne.s32.totalorder %s152, %s154
    %p161 = scmp.eq.s32.totalorder %s18, 1
    %p162 = por %p160, %p161
    %p163 = scmp.ne.s32.totalorder %s154, %s155
    %p164 = scmp.eq.s32.totalorder %s18, 0
    %p165 = por %p163, %p164
    %p166 = scmp.ne.s32.totalorder %s154, %s155
    %p167 = scmp.eq.s32.totalorder %s19, 1
    %p168 = por %p166, %p167
    %p170 = scmp.ne.s32.totalorder %s155, %s169
    %p171 = scmp.eq.s32.totalorder %s19, 0
    %p172 = por %p170, %p171
    %s173 = ssub.s32 %s13, %s20
    %p174 = scmp.eq.s32.totalorder %s173, 0
    %s176 = sadd.s32 %s175, 1
    %s177 = scalar_select %p174, %s175, %s176
    %p180 = pneg %p174
    %p181 = scmp.eq.s32.totalorder %s13, 1
    %p182 = por %p180, %p181
    %p183 = scmp.ne.s32.totalorder %s175, %s178
    %p184 = scmp.eq.s32.totalorder %s13, 0
    %p185 = por %p183, %p184
    %p186 = scmp.ne.s32.totalorder %s175, %s178
    %p187 = scmp.eq.s32.totalorder %s18, 1
    %p188 = por %p186, %p187
    %p189 = scmp.ne.s32.totalorder %s178, %s179
    %p190 = scmp.eq.s32.totalorder %s18, 0
    %p191 = por %p189, %p190
    %p192 = scmp.ne.s32.totalorder %s178, %s179
    %p193 = scmp.eq.s32.totalorder %s19, 1
    %p194 = por %p192, %p193
    %p196 = scmp.ne.s32.totalorder %s179, %s195
    %p197 = scmp.eq.s32.totalorder %s19, 0
    %p198 = por %p196, %p197
    %p199 = scmp.le.s32.totalorder 1, %s13
    %p200 = scmp.lt.s32.totalorder %s13, 3
    %p201 = pnand %p199, %p200
    %p202 = pneg %p201
    // Predicated region
    $region9: #{convpool_forward.1} parent=5 // pred_check
      _
    $region10: #{convpool_forward.1} parent=5 // pred_check_branch
      %204 = sbr.rel (%p201) target = $region12
    $region11: #{convpool_forward.1} parent=5 // pred_region
      %s205 = ssub.s32 %s13, 1
      // Predicated region
      $region13: #{convpool_forward.1} parent=11 // pred_check
        %p206 = pneg %p60
      $region14: #{convpool_forward.1} parent=11 // pred_check_branch
        %208 = sbr.rel (%p206) target = $region16
      $region15: #{convpool_forward.1} parent=11 // pred_region
        _
      $region16: #{convpool_forward.1} parent=11 // pred_fallthru
        _
      // Predicated region
      $region17: #{convpool_forward.1} parent=11 // pred_check
        %p209 = pneg %p81
      $region18: #{convpool_forward.1} parent=11 // pred_check_branch
        %211 = sbr.rel (%p209) target = $region20
      $region19: #{convpool_forward.1} parent=11 // pred_region
        _
      $region20: #{convpool_forward.1} parent=11 // pred_fallthru
        _
      // Predicated region
      $region21: #{convpool_forward.1} parent=11 // pred_check
        %p212 = pneg %p102
      $region22: #{convpool_forward.1} parent=11 // pred_check_branch
        %214 = sbr.rel (%p212) target = $region24
      $region23: #{convpool_forward.1} parent=11 // pred_region
        _
      $region24: #{convpool_forward.1} parent=11 // pred_fallthru
        _
      // Predicated region
      $region25: #{convpool_forward.1} parent=11 // pred_check
        %p215 = pneg %p123
      $region26: #{convpool_forward.1} parent=11 // pred_check_branch
        %217 = sbr.rel (%p215) target = $region28
      $region27: #{convpool_forward.1} parent=11 // pred_region
        _
      $region28: #{convpool_forward.1} parent=11 // pred_fallthru
        _
      // Predicated region
      $region29: #{convpool_forward.1} parent=11 // pred_check
        %p218 = pneg %p144
      $region30: #{convpool_forward.1} parent=11 // pred_check_branch
        %220 = sbr.rel (%p218) target = $region32
      $region31: #{convpool_forward.1} parent=11 // pred_region
        _
      $region32: #{convpool_forward.1} parent=11 // pred_fallthru
        _
      // Predicated region
      $region33: #{convpool_forward.1} parent=11 // pred_check
        %p221 = pneg %p165
      $region34: #{convpool_forward.1} parent=11 // pred_check_branch
        %223 = sbr.rel (%p221) target = $region36
      $region35: #{convpool_forward.1} parent=11 // pred_region
        _
      $region36: #{convpool_forward.1} parent=11 // pred_fallthru
        _
    $region12: #{convpool_forward.1} parent=5 // pred_fallthru
      _
    %p224 = scmp.lt.s32.totalorder %s13, 2
    // Predicated region
    $region37: #{convpool_forward.1} parent=5 // pred_check
      %p225 = pneg %p224
    $region38: #{convpool_forward.1} parent=5 // pred_check_branch
      %227 = sbr.rel (%p225) target = $region40
    $region39: #{convpool_forward.1} parent=5 // pred_region
      // Predicated region
      $region41: #{convpool_forward.1} parent=39 // pred_check
        %p228 = pneg %p33
      $region42: #{convpool_forward.1} parent=39 // pred_check_branch
        %230 = sbr.rel (%p228) target = $region44
      $region43: #{convpool_forward.1} parent=39 // pred_region
        %p231 = scmp.lt.s32.totalorder %s13, 1
        %s232 = scalar_select %p231, %s13, 1
        %s233 = smul.addr %s232, 32
        %s234 = smul.addr %s233, 8
        %s235 = scalar_lea.vmem %s0, %s234
      $region44: #{convpool_forward.1} parent=39 // pred_fallthru
        _
    $region40: #{convpool_forward.1} parent=5 // pred_fallthru
      _
    %p236 = scmp.le.s32.totalorder 1, %s13
    %p237 = scmp.lt.s32.totalorder %s13, 3
    %p238 = pnand %p236, %p237
    %p239 = pneg %p238
    // Predicated region
    $region45: #{convpool_forward.1} parent=5 // pred_check
      _
    $region46: #{convpool_forward.1} parent=5 // pred_check_branch
      %241 = sbr.rel (%p238) target = $region48
    $region47: #{convpool_forward.1} parent=5 // pred_region
      %s242 = ssub.s32 %s13, 1
      %p243 = scmp.lt.s32.totalorder %s18, 1
      %s244 = scalar_select %p243, %s18, 1
      %s245 = smul.addr %s244, 32
      %s246 = smul.addr %s245, 8
      %s247 = scalar_lea.vmem %s0, %s246
      %p248 = pneg %p39
      %p249 = pneg %p36
      %p250 = pneg %p60
      %p251 = pneg %p57
      %p252 = pneg %p81
      %p253 = pneg %p78
      %p254 = pneg %p102
      %p255 = pneg %p99
      %p256 = pneg %p123
      %p257 = pneg %p120
      %p258 = pneg %p144
      %p259 = pneg %p141
      %p260 = pneg %p165
      %p261 = pneg %p162
      %p262 = pneg %p191
      %p263 = pneg %p188
      %p264 = scmp.lt.s32.totalorder %s18, 1
      %s265 = scalar_select %p264, %s18, 1
      %s266 = smul.addr %s265, 8
      %s267 = smul.addr %s266, 8
      %s268 = scalar_lea.vmem %s7, %s267
      %p269 = scmp.lt.s32.totalorder %s18, 1
      %s270 = scalar_select %p269, %s18, 1
      %s271 = smul.addr %s270, 32
      %s272 = smul.addr %s271, 8
      %s273 = scalar_lea.vmem %s0, %s272
      %p274 = scmp.lt.s32.totalorder %s18, 1
      %s275 = scalar_select %p274, %s18, 1
      %s276 = smul.addr %s275, 8
      %s277 = smul.addr %s276, 8
      %s278 = scalar_lea.vmem %s7, %s277
      %vm280 = vcmask 27648
      %281 = vst.msk [vmem:[#allocation2] sm:$0xf] %vm280, 0
      %282 = vst.msk [vmem:[#allocation2 + $0x4] sm:$0xf] %vm280, 0
      %vm283 = vcmask 24576
      %284 = vst.msk [vmem:[#allocation2 + $0x8] sm:$0x1] %vm283, 0
      %285 = vst.msk [vmem:[#allocation2 + $0xc] sm:$0xf] %vm280, 0
      %286 = vst.msk [vmem:[#allocation2 + $0x10] sm:$0xf] %vm280, 0
      %287 = vst.msk [vmem:[#allocation2 + $0x14] sm:$0x1] %vm283, 0
      %288 = vst.msk [vmem:[#allocation2 + $0x18] sm:$0xf] %vm280, 0
      %289 = vst.msk [vmem:[#allocation2 + $0x1c] sm:$0xf] %vm280, 0
      %290 = vst.msk [vmem:[#allocation2 + $0x20] sm:$0x1] %vm283, 0
      %291 = vst.msk [vmem:[#allocation2 + $0x24] sm:$0xf] %vm280, 0
      %292 = vst.msk [vmem:[#allocation2 + $0x28] sm:$0xf] %vm280, 0
      %293 = vst.msk [vmem:[#allocation2 + $0x2c] sm:$0x1] %vm283, 0
      %294 = vst.msk [vmem:[#allocation2 + $0x30] sm:$0xf] %vm280, 0
      %295 = vst.msk [vmem:[#allocation2 + $0x34] sm:$0xf] %vm280, 0
      %296 = vst.msk [vmem:[#allocation2 + $0x38] sm:$0x1] %vm283, 0
      %297 = vst.msk [vmem:[#allocation2 + $0x3c] sm:$0xf] %vm280, 0
      %298 = vst.msk [vmem:[#allocation2 + $0x40] sm:$0xf] %vm280, 0
      %299 = vst.msk [vmem:[#allocation2 + $0x44] sm:$0x1] %vm283, 0
      %300 = vst.msk [vmem:[#allocation2 + $0x48] sm:$0xf] %vm280, 0
      %301 = vst.msk [vmem:[#allocation2 + $0x4c] sm:$0xf] %vm280, 0
      %302 = vst.msk [vmem:[#allocation2 + $0x50] sm:$0x1] %vm283, 0
      %303 = vst.msk [vmem:[#allocation2 + $0x54] sm:$0xf] %vm280, 0
      %304 = vst.msk [vmem:[#allocation2 + $0x58] sm:$0xf] %vm280, 0
      %305 = vst.msk [vmem:[#allocation2 + $0x5c] sm:$0x1] %vm283, 0
      %306 = vst.msk [vmem:[#allocation2 + $0x60] sm:$0xf] %vm280, 0
      %307 = vst.msk [vmem:[#allocation2 + $0x64] sm:$0xf] %vm280, 0
      %308 = vst.msk [vmem:[#allocation2 + $0x68] sm:$0x1] %vm283, 0
      %309 = vst.msk [vmem:[#allocation2 + $0x6c] sm:$0xf] %vm280, 0
      %310 = vst.msk [vmem:[#allocation2 + $0x70] sm:$0xf] %vm280, 0
      %311 = vst.msk [vmem:[#allocation2 + $0x74] sm:$0x1] %vm283, 0
      %312 = vst.msk [vmem:[#allocation2 + $0x78] sm:$0xf] %vm280, 0
      %313 = vst.msk [vmem:[#allocation2 + $0x7c] sm:$0xf] %vm280, 0
      %314 = vst.msk [vmem:[#allocation2 + $0x80] sm:$0x1] %vm283, 0
      %315 = vst.msk [vmem:[#allocation2 + $0x84] sm:$0xf] %vm280, 0
      %316 = vst.msk [vmem:[#allocation2 + $0x88] sm:$0xf] %vm280, 0
      %317 = vst.msk [vmem:[#allocation2 + $0x8c] sm:$0x1] %vm283, 0
      %318 = vst.msk [vmem:[#allocation2 + $0x90] sm:$0xf] %vm280, 0
      %319 = vst.msk [vmem:[#allocation2 + $0x94] sm:$0xf] %vm280, 0
      %320 = vst.msk [vmem:[#allocation2 + $0x98] sm:$0x1] %vm283, 0
      %321 = vst.msk [vmem:[#allocation2 + $0x9c] sm:$0xf] %vm280, 0
      %322 = vst.msk [vmem:[#allocation2 + $0xa0] sm:$0xf] %vm280, 0
      %323 = vst.msk [vmem:[#allocation2 + $0xa4] sm:$0x1] %vm283, 0
      %324 = vst.msk [vmem:[#allocation2 + $0xa8] sm:$0xf] %vm280, 0
      %325 = vst.msk [vmem:[#allocation2 + $0xac] sm:$0xf] %vm280, 0
      %326 = vst.msk [vmem:[#allocation2 + $0xb0] sm:$0x1] %vm283, 0
      %327 = vst.msk [vmem:[#allocation2 + $0xb4] sm:$0xf] %vm280, 0
      %328 = vst.msk [vmem:[#allocation2 + $0xb8] sm:$0xf] %vm280, 0
      %329 = vst.msk [vmem:[#allocation2 + $0xbc] sm:$0x1] %vm283, 0
      %330 = vst.msk [vmem:[#allocation2 + $0xc0] sm:$0xf] %vm280, 0
      %331 = vst.msk [vmem:[#allocation2 + $0xc4] sm:$0xf] %vm280, 0
      %332 = vst.msk [vmem:[#allocation2 + $0xc8] sm:$0x1] %vm283, 0
      %333 = vst.msk [vmem:[#allocation2 + $0xcc] sm:$0xf] %vm280, 0
      %334 = vst.msk [vmem:[#allocation2 + $0xd0] sm:$0xf] %vm280, 0
      %335 = vst.msk [vmem:[#allocation2 + $0xd4] sm:$0x1] %vm283, 0
      %v336 = vld [vmem:[%s273] sm:$0xff]
      %v337 = vld [vmem:[%s273 + $0x8] sm:$0xff]
      %v338 = vld [vmem:[%s273 + $0x10] sm:$0xff]
      %v339 = vld [vmem:[%s273 + $0x18] sm:$0xff]
      %v340 = vld [vmem:[%s273 + $0x20] sm:$0xff]
      %v341 = vld [vmem:[%s273 + $0x28] sm:$0xff]
      %v342 = vld [vmem:[%s273 + $0x30] sm:$0xff]
      %v343 = vld [vmem:[%s273 + $0x38] sm:$0xff]
      %v344 = vld [vmem:[%s273 + $0x40] sm:$0xff]
      %v345 = vld [vmem:[%s273 + $0x48] sm:$0xff]
      %v346 = vld [vmem:[%s273 + $0x50] sm:$0xff]
      %v347 = vld [vmem:[%s273 + $0x58] sm:$0xff]
      %v348 = vld [vmem:[%s273 + $0x60] sm:$0xff]
      %v349 = vld [vmem:[%s273 + $0x68] sm:$0xff]
      %v350 = vld [vmem:[%s273 + $0x70] sm:$0xff]
      %v351 = vld [vmem:[%s273 + $0x78] sm:$0xff]
      %v352 = vld [vmem:[%s273 + $0x80] sm:$0xff]
      %v353 = vld [vmem:[%s273 + $0x88] sm:$0xff]
      %v354 = vld [vmem:[%s273 + $0x90] sm:$0xff]
      %v355 = vld [vmem:[%s273 + $0x98] sm:$0xff]
      %v356 = vld [vmem:[%s273 + $0xa0] sm:$0xff]
      %v357 = vld [vmem:[%s273 + $0xa8] sm:$0xff]
      %v358 = vld [vmem:[%s273 + $0xb0] sm:$0xff]
      %v359 = vld [vmem:[%s273 + $0xb8] sm:$0xff]
      %v360 = vld [vmem:[%s273 + $0xc0] sm:$0xff]
      %v361 = vld [vmem:[%s273 + $0xc8] sm:$0xff]
      %v362 = vld [vmem:[%s273 + $0xd0] sm:$0xff]
      %v363 = vld [vmem:[%s273 + $0xd8] sm:$0xff]
      %v364 = vld [vmem:[%s273 + $0xe0] sm:$0xff]
      %v365 = vld [vmem:[%s273 + $0xe8] sm:$0xff]
      %v366 = vld [vmem:[%s273 + $0xf0] sm:$0xff]
      %v367 = vld [vmem:[%s273 + $0xf8] sm:$0xff]
      %v368 = vpack.c.bf16 %v337, %v336
      %v369 = vpack.c.bf16 %v339, %v338
      %v370 = vpack.c.bf16 %v341, %v340
      %v371 = vpack.c.bf16 %v343, %v342
      %v372 = vpack.c.bf16 %v345, %v344
      %v373 = vpack.c.bf16 %v347, %v346
      %v374 = vpack.c.bf16 %v349, %v348
      %v375 = vpack.c.bf16 %v351, %v350
      %v376 = vpack.c.bf16 %v353, %v352
      %v377 = vpack.c.bf16 %v355, %v354
      %v378 = vpack.c.bf16 %v357, %v356
      %v379 = vpack.c.bf16 %v359, %v358
      %v380 = vpack.c.bf16 %v361, %v360
      %v381 = vpack.c.bf16 %v363, %v362
      %v382 = vpack.c.bf16 %v365, %v364
      %v383 = vpack.c.bf16 %v367, %v366
      %v400 = vunpack.c.l.b16 %v368
      %v401 = vunpack.c.h.b16 %v368
      %v402 = vunpack.c.l.b16 %v369
      %v403 = vunpack.c.h.b16 %v369
      %v404 = vunpack.c.l.b16 %v370
      %v405 = vunpack.c.h.b16 %v370
      %v406 = vunpack.c.l.b16 %v371
      %v407 = vunpack.c.h.b16 %v371
      %v408 = vunpack.c.l.b16 %v372
      %v409 = vunpack.c.h.b16 %v372
      %v410 = vunpack.c.l.b16 %v373
      %v411 = vunpack.c.h.b16 %v373
      %v412 = vunpack.c.l.b16 %v374
      %v413 = vunpack.c.h.b16 %v374
      %v414 = vunpack.c.l.b16 %v375
      %v415 = vunpack.c.h.b16 %v375
      %v416 = vunpack.c.l.b16 %v376
      %v417 = vunpack.c.h.b16 %v376
      %v418 = vunpack.c.l.b16 %v377
      %v419 = vunpack.c.h.b16 %v377
      %v420 = vunpack.c.l.b16 %v378
      %v421 = vunpack.c.h.b16 %v378
      %v422 = vunpack.c.l.b16 %v379
      %v423 = vunpack.c.h.b16 %v379
      %v424 = vunpack.c.l.b16 %v380
      %v425 = vunpack.c.h.b16 %v380
      %v426 = vunpack.c.l.b16 %v381
      %v427 = vunpack.c.h.b16 %v381
      %v428 = vunpack.c.l.b16 %v382
      %v429 = vunpack.c.h.b16 %v382
      %v430 = vunpack.c.l.b16 %v383
      %v431 = vunpack.c.h.b16 %v383
      %v432 = vpack.c.b16 %v400, %v400
      %v433 = vpack.c.b16 %v401, %v401
      %v434 = vpack.c.b16 %v402, %v402
      %v435 = vpack.c.b16 %v403, %v403
      %v436 = vpack.c.b16 %v404, %v404
      %v437 = vpack.c.b16 %v405, %v405
      %v438 = vpack.c.b16 %v406, %v406
      %v439 = vpack.c.b16 %v407, %v407
      %v440 = vpack.c.b16 %v408, %v408
      %v441 = vpack.c.b16 %v409, %v409
      %v442 = vpack.c.b16 %v410, %v410
      %v443 = vpack.c.b16 %v411, %v411
      %v444 = vpack.c.b16 %v412, %v412
      %v445 = vpack.c.b16 %v413, %v413
      %v446 = vpack.c.b16 %v414, %v414
      %v447 = vpack.c.b16 %v415, %v415
      %v448 = vpack.c.b16 %v416, %v416
      %v449 = vpack.c.b16 %v417, %v417
      %v450 = vpack.c.b16 %v418, %v418
      %v451 = vpack.c.b16 %v419, %v419
      %v452 = vpack.c.b16 %v420, %v420
      %v453 = vpack.c.b16 %v421, %v421
      %v454 = vpack.c.b16 %v422, %v422
      %v455 = vpack.c.b16 %v423, %v423
      %v456 = vpack.c.b16 %v424, %v424
      %v457 = vpack.c.b16 %v425, %v425
      %v458 = vpack.c.b16 %v426, %v426
      %v459 = vpack.c.b16 %v427, %v427
      %v460 = vpack.c.b16 %v428, %v428
      %v461 = vpack.c.b16 %v429, %v429
      %v462 = vpack.c.b16 %v430, %v430
      %v463 = vpack.c.b16 %v431, %v431
      %vm464 = vsmask.f32 256
      %vm465 = vsmask.f32 4368
      %vm466 = vmor %vm464, %vm465
      %v468 = vshrl.u32 %v432, 16
      %v470 = vrot.slane %v468, 7
      %v471 = vshll.u32 %v432, 16
      %v473 = vor.u32 %v470, %v471
      %v474 = vrot.slane %v470, 4
      %v476 = vshrl.u32 %v433, 16
      %v478 = vrot.slane %v476, 7
      %v479 = vshll.u32 %v433, 16
      %v481 = vor.u32 %v478, %v479
      %v482 = vsel %vm466, %v474, %v481
      %v483 = vrot.slane %v478, 4
      %v485 = vshrl.u32 %v434, 16
      %v487 = vrot.slane %v485, 7
      %v488 = vshll.u32 %v434, 16
      %v490 = vor.u32 %v487, %v488
      %v491 = vrot.slane %v487, 4
      %v493 = vshrl.u32 %v435, 16
      %v495 = vrot.slane %v493, 7
      %v496 = vshll.u32 %v435, 16
      %v498 = vor.u32 %v495, %v496
      %v499 = vsel %vm466, %v491, %v498
      %v500 = vrot.slane %v495, 4
      %v502 = vshrl.u32 %v436, 16
      %v504 = vrot.slane %v502, 7
      %v505 = vshll.u32 %v436, 16
      %v507 = vor.u32 %v504, %v505
      %v508 = vrot.slane %v504, 4
      %v510 = vshrl.u32 %v437, 16
      %v512 = vrot.slane %v510, 7
      %v513 = vshll.u32 %v437, 16
      %v515 = vor.u32 %v512, %v513
      %v516 = vsel %vm466, %v508, %v515
      %v517 = vrot.slane %v512, 4
      %v519 = vshrl.u32 %v438, 16
      %v521 = vrot.slane %v519, 7
      %v522 = vshll.u32 %v438, 16
      %v524 = vor.u32 %v521, %v522
      %v525 = vrot.slane %v521, 4
      %v527 = vshrl.u32 %v439, 16
      %v529 = vrot.slane %v527, 7
      %v530 = vshll.u32 %v439, 16
      %v532 = vor.u32 %v529, %v530
      %v533 = vsel %vm466, %v525, %v532
      %v534 = vrot.slane %v529, 4
      %v536 = vshrl.u32 %v440, 16
      %v538 = vrot.slane %v536, 7
      %v539 = vshll.u32 %v440, 16
      %v541 = vor.u32 %v538, %v539
      %v542 = vrot.slane %v538, 4
      %v544 = vshrl.u32 %v441, 16
      %v546 = vrot.slane %v544, 7
      %v547 = vshll.u32 %v441, 16
      %v549 = vor.u32 %v546, %v547
      %v550 = vsel %vm466, %v542, %v549
      %v551 = vrot.slane %v546, 4
      %v553 = vshrl.u32 %v442, 16
      %v555 = vrot.slane %v553, 7
      %v556 = vshll.u32 %v442, 16
      %v558 = vor.u32 %v555, %v556
      %v559 = vrot.slane %v555, 4
      %v561 = vshrl.u32 %v443, 16
      %v563 = vrot.slane %v561, 7
      %v564 = vshll.u32 %v443, 16
      %v566 = vor.u32 %v563, %v564
      %v567 = vsel %vm466, %v559, %v566
      %v568 = vrot.slane %v563, 4
      %v570 = vshrl.u32 %v444, 16
      %v572 = vrot.slane %v570, 7
      %v573 = vshll.u32 %v444, 16
      %v575 = vor.u32 %v572, %v573
      %v576 = vrot.slane %v572, 4
      %v578 = vshrl.u32 %v445, 16
      %v580 = vrot.slane %v578, 7
      %v581 = vshll.u32 %v445, 16
      %v583 = vor.u32 %v580, %v581
      %v584 = vsel %vm466, %v576, %v583
      %v585 = vrot.slane %v580, 4
      %v587 = vshrl.u32 %v446, 16
      %v589 = vrot.slane %v587, 7
      %v590 = vshll.u32 %v446, 16
      %v592 = vor.u32 %v589, %v590
      %v593 = vrot.slane %v589, 4
      %v595 = vshrl.u32 %v447, 16
      %v597 = vrot.slane %v595, 7
      %v598 = vshll.u32 %v447, 16
      %v600 = vor.u32 %v597, %v598
      %v601 = vsel %vm466, %v593, %v600
      %v602 = vrot.slane %v597, 4
      %v604 = vshrl.u32 %v448, 16
      %v606 = vrot.slane %v604, 7
      %v607 = vshll.u32 %v448, 16
      %v609 = vor.u32 %v606, %v607
      %v610 = vrot.slane %v606, 4
      %v612 = vshrl.u32 %v449, 16
      %v614 = vrot.slane %v612, 7
      %v615 = vshll.u32 %v449, 16
      %v617 = vor.u32 %v614, %v615
      %v618 = vsel %vm466, %v610, %v617
      %v619 = vrot.slane %v614, 4
      %v621 = vshrl.u32 %v450, 16
      %v623 = vrot.slane %v621, 7
      %v624 = vshll.u32 %v450, 16
      %v626 = vor.u32 %v623, %v624
      %v627 = vrot.slane %v623, 4
      %v629 = vshrl.u32 %v451, 16
      %v631 = vrot.slane %v629, 7
      %v632 = vshll.u32 %v451, 16
      %v634 = vor.u32 %v631, %v632
      %v635 = vsel %vm466, %v627, %v634
      %v636 = vrot.slane %v631, 4
      %v638 = vshrl.u32 %v452, 16
      %v640 = vrot.slane %v638, 7
      %v641 = vshll.u32 %v452, 16
      %v643 = vor.u32 %v640, %v641
      %v644 = vrot.slane %v640, 4
      %v646 = vshrl.u32 %v453, 16
      %v648 = vrot.slane %v646, 7
      %v649 = vshll.u32 %v453, 16
      %v651 = vor.u32 %v648, %v649
      %v652 = vsel %vm466, %v644, %v651
      %v653 = vrot.slane %v648, 4
      %v655 = vshrl.u32 %v454, 16
      %v657 = vrot.slane %v655, 7
      %v658 = vshll.u32 %v454, 16
      %v660 = vor.u32 %v657, %v658
      %v661 = vrot.slane %v657, 4
      %v663 = vshrl.u32 %v455, 16
      %v665 = vrot.slane %v663, 7
      %v666 = vshll.u32 %v455, 16
      %v668 = vor.u32 %v665, %v666
      %v669 = vsel %vm466, %v661, %v668
      %v670 = vrot.slane %v665, 4
      %v672 = vshrl.u32 %v456, 16
      %v674 = vrot.slane %v672, 7
      %v675 = vshll.u32 %v456, 16
      %v677 = vor.u32 %v674, %v675
      %v678 = vrot.slane %v674, 4
      %v680 = vshrl.u32 %v457, 16
      %v682 = vrot.slane %v680, 7
      %v683 = vshll.u32 %v457, 16
      %v685 = vor.u32 %v682, %v683
      %v686 = vsel %vm466, %v678, %v685
      %v687 = vrot.slane %v682, 4
      %v689 = vshrl.u32 %v458, 16
      %v691 = vrot.slane %v689, 7
      %v692 = vshll.u32 %v458, 16
      %v694 = vor.u32 %v691, %v692
      %v695 = vrot.slane %v691, 4
      %v697 = vshrl.u32 %v459, 16
      %v699 = vrot.slane %v697, 7
      %v700 = vshll.u32 %v459, 16
      %v702 = vor.u32 %v699, %v700
      %v703 = vsel %vm466, %v695, %v702
      %v704 = vrot.slane %v699, 4
      %v706 = vshrl.u32 %v460, 16
      %v708 = vrot.slane %v706, 7
      %v709 = vshll.u32 %v460, 16
      %v711 = vor.u32 %v708, %v709
      %v712 = vrot.slane %v708, 4
      %v714 = vshrl.u32 %v461, 16
      %v716 = vrot.slane %v714, 7
      %v717 = vshll.u32 %v461, 16
      %v719 = vor.u32 %v716, %v717
      %v720 = vsel %vm466, %v712, %v719
      %v721 = vrot.slane %v716, 4
      %v723 = vshrl.u32 %v462, 16
      %v725 = vrot.slane %v723, 7
      %v726 = vshll.u32 %v462, 16
      %v728 = vor.u32 %v725, %v726
      %v729 = vrot.slane %v725, 4
      %v731 = vshrl.u32 %v463, 16
      %v733 = vrot.slane %v731, 7
      %v734 = vshll.u32 %v463, 16
      %v736 = vor.u32 %v733, %v734
      %v737 = vsel %vm466, %v729, %v736
      %v738 = vrot.slane %v733, 4
      %s787 = scalar_lea.vmem [#allocation2], 12
      %vm788 = vcmask 27648
      %vm789 = vsmask.f32 7938
      %vm790 = vmand %vm788, %vm789
      %v791 = vld [vmem:[%s787] sm:$0xf]
      %v792 = vsel %vm790, %v473, %v791
      %793 = vst [vmem:[%s787] sm:$0xf] %v792
      %794 = vst.msk [vmem:[%s787 + $0x4] sm:$0xf] %vm280, %v482
      %vm795 = vcmask 24576
      %vm796 = vmand %vm795, %vm464
      %v797 = vld [vmem:[%s787 + $0x8] sm:$0x1]
      %v798 = vsel %vm796, %v483, %v797
      %799 = vst [vmem:[%s787 + $0x8] sm:$0x1] %v798
      %v800 = vld [vmem:[%s787 + $0xc] sm:$0xf]
      %v801 = vsel %vm790, %v490, %v800
      %802 = vst [vmem:[%s787 + $0xc] sm:$0xf] %v801
      %803 = vst.msk [vmem:[%s787 + $0x10] sm:$0xf] %vm280, %v499
      %v804 = vld [vmem:[%s787 + $0x14] sm:$0x1]
      %v805 = vsel %vm796, %v500, %v804
      %806 = vst [vmem:[%s787 + $0x14] sm:$0x1] %v805
      %v807 = vld [vmem:[%s787 + $0x18] sm:$0xf]
      %v808 = vsel %vm790, %v507, %v807
      %809 = vst [vmem:[%s787 + $0x18] sm:$0xf] %v808
      %810 = vst.msk [vmem:[%s787 + $0x1c] sm:$0xf] %vm280, %v516
      %v811 = vld [vmem:[%s787 + $0x20] sm:$0x1]
      %v812 = vsel %vm796, %v517, %v811
      %813 = vst [vmem:[%s787 + $0x20] sm:$0x1] %v812
      %v814 = vld [vmem:[%s787 + $0x24] sm:$0xf]
      %v815 = vsel %vm790, %v524, %v814
      %816 = vst [vmem:[%s787 + $0x24] sm:$0xf] %v815
      %817 = vst.msk [vmem:[%s787 + $0x28] sm:$0xf] %vm280, %v533
      %v818 = vld [vmem:[%s787 + $0x2c] sm:$0x1]
      %v819 = vsel %vm796, %v534, %v818
      %820 = vst [vmem:[%s787 + $0x2c] sm:$0x1] %v819
      %v821 = vld [vmem:[%s787 + $0x30] sm:$0xf]
      %v822 = vsel %vm790, %v541, %v821
      %823 = vst [vmem:[%s787 + $0x30] sm:$0xf] %v822
      %824 = vst.msk [vmem:[%s787 + $0x34] sm:$0xf] %vm280, %v550
      %v825 = vld [vmem:[%s787 + $0x38] sm:$0x1]
      %v826 = vsel %vm796, %v551, %v825
      %827 = vst [vmem:[%s787 + $0x38] sm:$0x1] %v826
      %v828 = vld [vmem:[%s787 + $0x3c] sm:$0xf]
      %v829 = vsel %vm790, %v558, %v828
      %830 = vst [vmem:[%s787 + $0x3c] sm:$0xf] %v829
      %831 = vst.msk [vmem:[%s787 + $0x40] sm:$0xf] %vm280, %v567
      %v832 = vld [vmem:[%s787 + $0x44] sm:$0x1]
      %v833 = vsel %vm796, %v568, %v832
      %834 = vst [vmem:[%s787 + $0x44] sm:$0x1] %v833
      %v835 = vld [vmem:[%s787 + $0x48] sm:$0xf]
      %v836 = vsel %vm790, %v575, %v835
      %837 = vst [vmem:[%s787 + $0x48] sm:$0xf] %v836
      %838 = vst.msk [vmem:[%s787 + $0x4c] sm:$0xf] %vm280, %v584
      %v839 = vld [vmem:[%s787 + $0x50] sm:$0x1]
      %v840 = vsel %vm796, %v585, %v839
      %841 = vst [vmem:[%s787 + $0x50] sm:$0x1] %v840
      %v842 = vld [vmem:[%s787 + $0x54] sm:$0xf]
      %v843 = vsel %vm790, %v592, %v842
      %844 = vst [vmem:[%s787 + $0x54] sm:$0xf] %v843
      %845 = vst.msk [vmem:[%s787 + $0x58] sm:$0xf] %vm280, %v601
      %v846 = vld [vmem:[%s787 + $0x5c] sm:$0x1]
      %v847 = vsel %vm796, %v602, %v846
      %848 = vst [vmem:[%s787 + $0x5c] sm:$0x1] %v847
      %v849 = vld [vmem:[%s787 + $0x60] sm:$0xf]
      %v850 = vsel %vm790, %v609, %v849
      %851 = vst [vmem:[%s787 + $0x60] sm:$0xf] %v850
      %852 = vst.msk [vmem:[%s787 + $0x64] sm:$0xf] %vm280, %v618
      %v853 = vld [vmem:[%s787 + $0x68] sm:$0x1]
      %v854 = vsel %vm796, %v619, %v853
      %855 = vst [vmem:[%s787 + $0x68] sm:$0x1] %v854
      %v856 = vld [vmem:[%s787 + $0x6c] sm:$0xf]
      %v857 = vsel %vm790, %v626, %v856
      %858 = vst [vmem:[%s787 + $0x6c] sm:$0xf] %v857
      %859 = vst.msk [vmem:[%s787 + $0x70] sm:$0xf] %vm280, %v635
      %v860 = vld [vmem:[%s787 + $0x74] sm:$0x1]
      %v861 = vsel %vm796, %v636, %v860
      %862 = vst [vmem:[%s787 + $0x74] sm:$0x1] %v861
      %v863 = vld [vmem:[%s787 + $0x78] sm:$0xf]
      %v864 = vsel %vm790, %v643, %v863
      %865 = vst [vmem:[%s787 + $0x78] sm:$0xf] %v864
      %866 = vst.msk [vmem:[%s787 + $0x7c] sm:$0xf] %vm280, %v652
      %v867 = vld [vmem:[%s787 + $0x80] sm:$0x1]
      %v868 = vsel %vm796, %v653, %v867
      %869 = vst [vmem:[%s787 + $0x80] sm:$0x1] %v868
      %v870 = vld [vmem:[%s787 + $0x84] sm:$0xf]
      %v871 = vsel %vm790, %v660, %v870
      %872 = vst [vmem:[%s787 + $0x84] sm:$0xf] %v871
      %873 = vst.msk [vmem:[%s787 + $0x88] sm:$0xf] %vm280, %v669
      %v874 = vld [vmem:[%s787 + $0x8c] sm:$0x1]
      %v875 = vsel %vm796, %v670, %v874
      %876 = vst [vmem:[%s787 + $0x8c] sm:$0x1] %v875
      %v877 = vld [vmem:[%s787 + $0x90] sm:$0xf]
      %v878 = vsel %vm790, %v677, %v877
      %879 = vst [vmem:[%s787 + $0x90] sm:$0xf] %v878
      %880 = vst.msk [vmem:[%s787 + $0x94] sm:$0xf] %vm280, %v686
      %v881 = vld [vmem:[%s787 + $0x98] sm:$0x1]
      %v882 = vsel %vm796, %v687, %v881
      %883 = vst [vmem:[%s787 + $0x98] sm:$0x1] %v882
      %v884 = vld [vmem:[%s787 + $0x9c] sm:$0xf]
      %v885 = vsel %vm790, %v694, %v884
      %886 = vst [vmem:[%s787 + $0x9c] sm:$0xf] %v885
      %887 = vst.msk [vmem:[%s787 + $0xa0] sm:$0xf] %vm280, %v703
      %v888 = vld [vmem:[%s787 + $0xa4] sm:$0x1]
      %v889 = vsel %vm796, %v704, %v888
      %890 = vst [vmem:[%s787 + $0xa4] sm:$0x1] %v889
      %v891 = vld [vmem:[%s787 + $0xa8] sm:$0xf]
      %v892 = vsel %vm790, %v711, %v891
      %893 = vst [vmem:[%s787 + $0xa8] sm:$0xf] %v892
      %894 = vst.msk [vmem:[%s787 + $0xac] sm:$0xf] %vm280, %v720
      %v895 = vld [vmem:[%s787 + $0xb0] sm:$0x1]
      %v896 = vsel %vm796, %v721, %v895
      %897 = vst [vmem:[%s787 + $0xb0] sm:$0x1] %v896
      %v898 = vld [vmem:[%s787 + $0xb4] sm:$0xf]
      %v899 = vsel %vm790, %v728, %v898
      %900 = vst [vmem:[%s787 + $0xb4] sm:$0xf] %v899
      %901 = vst.msk [vmem:[%s787 + $0xb8] sm:$0xf] %vm280, %v737
      %v902 = vld [vmem:[%s787 + $0xbc] sm:$0x1]
      %v903 = vsel %vm796, %v738, %v902
      %904 = vst [vmem:[%s787 + $0xbc] sm:$0x1] %v903
      %v905 = vld [vmem:[#allocation2] sm:$0xf]
      %v906 = vld [vmem:[#allocation2 + $0x4] sm:$0xf]
      %v907 = vld [vmem:[#allocation2 + $0xc] sm:$0xf]
      %v908 = vld [vmem:[#allocation2 + $0x10] sm:$0xf]
      %v909 = vld [vmem:[#allocation2 + $0x18] sm:$0xf]
      %v910 = vld [vmem:[#allocation2 + $0x1c] sm:$0xf]
      %v911 = vld [vmem:[#allocation2 + $0x24] sm:$0xf]
      %v912 = vld [vmem:[#allocation2 + $0x28] sm:$0xf]
      %v913 = vld [vmem:[#allocation2 + $0x30] sm:$0xf]
      %v914 = vld [vmem:[#allocation2 + $0x34] sm:$0xf]
      %v915 = vld [vmem:[#allocation2 + $0x3c] sm:$0xf]
      %v916 = vld [vmem:[#allocation2 + $0x40] sm:$0xf]
      %v917 = vld [vmem:[#allocation2 + $0x48] sm:$0xf]
      %v918 = vld [vmem:[#allocation2 + $0x4c] sm:$0xf]
      %v919 = vld [vmem:[#allocation2 + $0x54] sm:$0xf]
      %v920 = vld [vmem:[#allocation2 + $0x58] sm:$0xf]
      %v921 = vld [vmem:[#allocation2 + $0x60] sm:$0xf]
      %v922 = vld [vmem:[#allocation2 + $0x64] sm:$0xf]
      %v923 = vld [vmem:[#allocation2 + $0x6c] sm:$0xf]
      %v924 = vld [vmem:[#allocation2 + $0x70] sm:$0xf]
      %v925 = vld [vmem:[#allocation2 + $0x78] sm:$0xf]
      %v926 = vld [vmem:[#allocation2 + $0x7c] sm:$0xf]
      %v927 = vld [vmem:[#allocation2 + $0x84] sm:$0xf]
      %v928 = vld [vmem:[#allocation2 + $0x88] sm:$0xf]
      %v929 = vld [vmem:[#allocation2 + $0x90] sm:$0xf]
      %v930 = vld [vmem:[#allocation2 + $0x94] sm:$0xf]
      %v931 = vld [vmem:[#allocation2 + $0x9c] sm:$0xf]
      %v932 = vld [vmem:[#allocation2 + $0xa0] sm:$0xf]
      %v933 = vld [vmem:[#allocation2 + $0xa8] sm:$0xf]
      %v934 = vld [vmem:[#allocation2 + $0xac] sm:$0xf]
      %v935 = vld [vmem:[#allocation2 + $0xb4] sm:$0xf]
      %v936 = vld [vmem:[#allocation2 + $0xb8] sm:$0xf]
      %v937 = vld [vmem:[%s1] sm:$0x3]
      %v938 = vld [vmem:[#allocation2 + $0x8] sm:$0x1]
      %v939 = vld [vmem:[#allocation2 + $0x14] sm:$0x1]
      %v940 = vld [vmem:[#allocation2 + $0x20] sm:$0x1]
      %v941 = vld [vmem:[#allocation2 + $0x2c] sm:$0x1]
      %v942 = vld [vmem:[#allocation2 + $0x38] sm:$0x1]
      %v943 = vld [vmem:[#allocation2 + $0x44] sm:$0x1]
      %v944 = vld [vmem:[#allocation2 + $0x50] sm:$0x1]
      %v945 = vld [vmem:[#allocation2 + $0x5c] sm:$0x1]
      %v946 = vld [vmem:[#allocation2 + $0x68] sm:$0x1]
      %v947 = vld [vmem:[#allocation2 + $0x74] sm:$0x1]
      %v948 = vld [vmem:[#allocation2 + $0x80] sm:$0x1]
      %v949 = vld [vmem:[#allocation2 + $0x8c] sm:$0x1]
      %v950 = vld [vmem:[#allocation2 + $0x98] sm:$0x1]
      %v951 = vld [vmem:[#allocation2 + $0xa4] sm:$0x1]
      %v952 = vld [vmem:[#allocation2 + $0xb0] sm:$0x1]
      %v953 = vld [vmem:[#allocation2 + $0xbc] sm:$0x1]
      %vm954 = vsmask.f32 3328
      %vm955 = vsmask.f32 7440
      %vm956 = vmor %vm954, %vm955
      %v958 = vshrl.u32 %v905, 16
      %v960 = vrot.slane %v958, 4
      %v961 = vshll.u32 %v905, 16
      %v963 = vrot.slane %v961, 5
      %v964 = vor.u32 %v960, %v963
      %v965 = vrot.slane %v964, 4
      %v967 = vshll.u32 %v906, 16
      %v969 = vrot.slane %v967, 5
      %v970 = vsel %vm956, %v965, %v969
      %v971 = vshrl.u32 %v906, 16
      %v973 = vrot.slane %v971, 4
      %v974 = vor.u32 %v973, %v969
      %v975 = vrot.slane %v974, 4
      %v977 = vshll.u32 %v938, 16
      %v979 = vrot.slane %v977, 5
      %v980 = vsel %vm956, %v975, %v979
      %v982 = vshrl.u32 %v907, 16
      %v984 = vrot.slane %v982, 4
      %v985 = vshll.u32 %v907, 16
      %v987 = vrot.slane %v985, 5
      %v988 = vor.u32 %v984, %v987
      %v989 = vrot.slane %v988, 4
      %v991 = vshll.u32 %v908, 16
      %v993 = vrot.slane %v991, 5
      %v994 = vsel %vm956, %v989, %v993
      %v995 = vshrl.u32 %v908, 16
      %v997 = vrot.slane %v995, 4
      %v998 = vor.u32 %v997, %v993
      %v999 = vrot.slane %v998, 4
      %v1001 = vshll.u32 %v939, 16
      %v1003 = vrot.slane %v1001, 5
      %v1004 = vsel %vm956, %v999, %v1003
      %v1006 = vshrl.u32 %v909, 16
      %v1008 = vrot.slane %v1006, 4
      %v1009 = vshll.u32 %v909, 16
      %v1011 = vrot.slane %v1009, 5
      %v1012 = vor.u32 %v1008, %v1011
      %v1013 = vrot.slane %v1012, 4
      %v1015 = vshll.u32 %v910, 16
      %v1017 = vrot.slane %v1015, 5
      %v1018 = vsel %vm956, %v1013, %v1017
      %v1019 = vshrl.u32 %v910, 16
      %v1021 = vrot.slane %v1019, 4
      %v1022 = vor.u32 %v1021, %v1017
      %v1023 = vrot.slane %v1022, 4
      %v1025 = vshll.u32 %v940, 16
      %v1027 = vrot.slane %v1025, 5
      %v1028 = vsel %vm956, %v1023, %v1027
      %v1030 = vshrl.u32 %v911, 16
      %v1032 = vrot.slane %v1030, 4
      %v1033 = vshll.u32 %v911, 16
      %v1035 = vrot.slane %v1033, 5
      %v1036 = vor.u32 %v1032, %v1035
      %v1037 = vrot.slane %v1036, 4
      %v1039 = vshll.u32 %v912, 16
      %v1041 = vrot.slane %v1039, 5
      %v1042 = vsel %vm956, %v1037, %v1041
      %v1043 = vshrl.u32 %v912, 16
      %v1045 = vrot.slane %v1043, 4
      %v1046 = vor.u32 %v1045, %v1041
      %v1047 = vrot.slane %v1046, 4
      %v1049 = vshll.u32 %v941, 16
      %v1051 = vrot.slane %v1049, 5
      %v1052 = vsel %vm956, %v1047, %v1051
      %v1054 = vshrl.u32 %v913, 16
      %v1056 = vrot.slane %v1054, 4
      %v1057 = vshll.u32 %v913, 16
      %v1059 = vrot.slane %v1057, 5
      %v1060 = vor.u32 %v1056, %v1059
      %v1061 = vrot.slane %v1060, 4
      %v1063 = vshll.u32 %v914, 16
      %v1065 = vrot.slane %v1063, 5
      %v1066 = vsel %vm956, %v1061, %v1065
      %v1067 = vshrl.u32 %v914, 16
      %v1069 = vrot.slane %v1067, 4
      %v1070 = vor.u32 %v1069, %v1065
      %v1071 = vrot.slane %v1070, 4
      %v1073 = vshll.u32 %v942, 16
      %v1075 = vrot.slane %v1073, 5
      %v1076 = vsel %vm956, %v1071, %v1075
      %v1078 = vshrl.u32 %v915, 16
      %v1080 = vrot.slane %v1078, 4
      %v1081 = vshll.u32 %v915, 16
      %v1083 = vrot.slane %v1081, 5
      %v1084 = vor.u32 %v1080, %v1083
      %v1085 = vrot.slane %v1084, 4
      %v1087 = vshll.u32 %v916, 16
      %v1089 = vrot.slane %v1087, 5
      %v1090 = vsel %vm956, %v1085, %v1089
      %v1091 = vshrl.u32 %v916, 16
      %v1093 = vrot.slane %v1091, 4
      %v1094 = vor.u32 %v1093, %v1089
      %v1095 = vrot.slane %v1094, 4
      %v1097 = vshll.u32 %v943, 16
      %v1099 = vrot.slane %v1097, 5
      %v1100 = vsel %vm956, %v1095, %v1099
      %v1102 = vshrl.u32 %v917, 16
      %v1104 = vrot.slane %v1102, 4
      %v1105 = vshll.u32 %v917, 16
      %v1107 = vrot.slane %v1105, 5
      %v1108 = vor.u32 %v1104, %v1107
      %v1109 = vrot.slane %v1108, 4
      %v1111 = vshll.u32 %v918, 16
      %v1113 = vrot.slane %v1111, 5
      %v1114 = vsel %vm956, %v1109, %v1113
      %v1115 = vshrl.u32 %v918, 16
      %v1117 = vrot.slane %v1115, 4
      %v1118 = vor.u32 %v1117, %v1113
      %v1119 = vrot.slane %v1118, 4
      %v1121 = vshll.u32 %v944, 16
      %v1123 = vrot.slane %v1121, 5
      %v1124 = vsel %vm956, %v1119, %v1123
      %v1126 = vshrl.u32 %v919, 16
      %v1128 = vrot.slane %v1126, 4
      %v1129 = vshll.u32 %v919, 16
      %v1131 = vrot.slane %v1129, 5
      %v1132 = vor.u32 %v1128, %v1131
      %v1133 = vrot.slane %v1132, 4
      %v1135 = vshll.u32 %v920, 16
      %v1137 = vrot.slane %v1135, 5
      %v1138 = vsel %vm956, %v1133, %v1137
      %v1139 = vshrl.u32 %v920, 16
      %v1141 = vrot.slane %v1139, 4
      %v1142 = vor.u32 %v1141, %v1137
      %v1143 = vrot.slane %v1142, 4
      %v1145 = vshll.u32 %v945, 16
      %v1147 = vrot.slane %v1145, 5
      %v1148 = vsel %vm956, %v1143, %v1147
      %v1150 = vshrl.u32 %v921, 16
      %v1152 = vrot.slane %v1150, 4
      %v1153 = vshll.u32 %v921, 16
      %v1155 = vrot.slane %v1153, 5
      %v1156 = vor.u32 %v1152, %v1155
      %v1157 = vrot.slane %v1156, 4
      %v1159 = vshll.u32 %v922, 16
      %v1161 = vrot.slane %v1159, 5
      %v1162 = vsel %vm956, %v1157, %v1161
      %v1163 = vshrl.u32 %v922, 16
      %v1165 = vrot.slane %v1163, 4
      %v1166 = vor.u32 %v1165, %v1161
      %v1167 = vrot.slane %v1166, 4
      %v1169 = vshll.u32 %v946, 16
      %v1171 = vrot.slane %v1169, 5
      %v1172 = vsel %vm956, %v1167, %v1171
      %v1174 = vshrl.u32 %v923, 16
      %v1176 = vrot.slane %v1174, 4
      %v1177 = vshll.u32 %v923, 16
      %v1179 = vrot.slane %v1177, 5
      %v1180 = vor.u32 %v1176, %v1179
      %v1181 = vrot.slane %v1180, 4
      %v1183 = vshll.u32 %v924, 16
      %v1185 = vrot.slane %v1183, 5
      %v1186 = vsel %vm956, %v1181, %v1185
      %v1187 = vshrl.u32 %v924, 16
      %v1189 = vrot.slane %v1187, 4
      %v1190 = vor.u32 %v1189, %v1185
      %v1191 = vrot.slane %v1190, 4
      %v1193 = vshll.u32 %v947, 16
      %v1195 = vrot.slane %v1193, 5
      %v1196 = vsel %vm956, %v1191, %v1195
      %v1198 = vshrl.u32 %v925, 16
      %v1200 = vrot.slane %v1198, 4
      %v1201 = vshll.u32 %v925, 16
      %v1203 = vrot.slane %v1201, 5
      %v1204 = vor.u32 %v1200, %v1203
      %v1205 = vrot.slane %v1204, 4
      %v1207 = vshll.u32 %v926, 16
      %v1209 = vrot.slane %v1207, 5
      %v1210 = vsel %vm956, %v1205, %v1209
      %v1211 = vshrl.u32 %v926, 16
      %v1213 = vrot.slane %v1211, 4
      %v1214 = vor.u32 %v1213, %v1209
      %v1215 = vrot.slane %v1214, 4
      %v1217 = vshll.u32 %v948, 16
      %v1219 = vrot.slane %v1217, 5
      %v1220 = vsel %vm956, %v1215, %v1219
      %v1222 = vshrl.u32 %v927, 16
      %v1224 = vrot.slane %v1222, 4
      %v1225 = vshll.u32 %v927, 16
      %v1227 = vrot.slane %v1225, 5
      %v1228 = vor.u32 %v1224, %v1227
      %v1229 = vrot.slane %v1228, 4
      %v1231 = vshll.u32 %v928, 16
      %v1233 = vrot.slane %v1231, 5
      %v1234 = vsel %vm956, %v1229, %v1233
      %v1235 = vshrl.u32 %v928, 16
      %v1237 = vrot.slane %v1235, 4
      %v1238 = vor.u32 %v1237, %v1233
      %v1239 = vrot.slane %v1238, 4
      %v1241 = vshll.u32 %v949, 16
      %v1243 = vrot.slane %v1241, 5
      %v1244 = vsel %vm956, %v1239, %v1243
      %v1246 = vshrl.u32 %v929, 16
      %v1248 = vrot.slane %v1246, 4
      %v1249 = vshll.u32 %v929, 16
      %v1251 = vrot.slane %v1249, 5
      %v1252 = vor.u32 %v1248, %v1251
      %v1253 = vrot.slane %v1252, 4
      %v1255 = vshll.u32 %v930, 16
      %v1257 = vrot.slane %v1255, 5
      %v1258 = vsel %vm956, %v1253, %v1257
      %v1259 = vshrl.u32 %v930, 16
      %v1261 = vrot.slane %v1259, 4
      %v1262 = vor.u32 %v1261, %v1257
      %v1263 = vrot.slane %v1262, 4
      %v1265 = vshll.u32 %v950, 16
      %v1267 = vrot.slane %v1265, 5
      %v1268 = vsel %vm956, %v1263, %v1267
      %v1270 = vshrl.u32 %v931, 16
      %v1272 = vrot.slane %v1270, 4
      %v1273 = vshll.u32 %v931, 16
      %v1275 = vrot.slane %v1273, 5
      %v1276 = vor.u32 %v1272, %v1275
      %v1277 = vrot.slane %v1276, 4
      %v1279 = vshll.u32 %v932, 16
      %v1281 = vrot.slane %v1279, 5
      %v1282 = vsel %vm956, %v1277, %v1281
      %v1283 = vshrl.u32 %v932, 16
      %v1285 = vrot.slane %v1283, 4
      %v1286 = vor.u32 %v1285, %v1281
      %v1287 = vrot.slane %v1286, 4
      %v1289 = vshll.u32 %v951, 16
      %v1291 = vrot.slane %v1289, 5
      %v1292 = vsel %vm956, %v1287, %v1291
      %v1294 = vshrl.u32 %v933, 16
      %v1296 = vrot.slane %v1294, 4
      %v1297 = vshll.u32 %v933, 16
      %v1299 = vrot.slane %v1297, 5
      %v1300 = vor.u32 %v1296, %v1299
      %v1301 = vrot.slane %v1300, 4
      %v1303 = vshll.u32 %v934, 16
      %v1305 = vrot.slane %v1303, 5
      %v1306 = vsel %vm956, %v1301, %v1305
      %v1307 = vshrl.u32 %v934, 16
      %v1309 = vrot.slane %v1307, 4
      %v1310 = vor.u32 %v1309, %v1305
      %v1311 = vrot.slane %v1310, 4
      %v1313 = vshll.u32 %v952, 16
      %v1315 = vrot.slane %v1313, 5
      %v1316 = vsel %vm956, %v1311, %v1315
      %v1318 = vshrl.u32 %v935, 16
      %v1320 = vrot.slane %v1318, 4
      %v1321 = vshll.u32 %v935, 16
      %v1323 = vrot.slane %v1321, 5
      %v1324 = vor.u32 %v1320, %v1323
      %v1325 = vrot.slane %v1324, 4
      %v1327 = vshll.u32 %v936, 16
      %v1329 = vrot.slane %v1327, 5
      %v1330 = vsel %vm956, %v1325, %v1329
      %v1331 = vshrl.u32 %v936, 16
      %v1333 = vrot.slane %v1331, 4
      %v1334 = vor.u32 %v1333, %v1329
      %v1335 = vrot.slane %v1334, 4
      %v1337 = vshll.u32 %v953, 16
      %v1339 = vrot.slane %v1337, 5
      %v1340 = vsel %vm956, %v1335, %v1339
      %s1341 = scalar_lea.vmem %s1, 2
      %v1342 = vld [vmem:[%s1341] sm:$0x3]
      %v1343 = vunpack.c.l.b16 %v970
      %v1344 = vunpack.c.l.b16 %v980
      %v1345 = vunpack.c.l.b16 %v994
      %v1346 = vunpack.c.l.b16 %v1004
      %v1347 = vunpack.c.l.b16 %v1018
      %v1348 = vunpack.c.l.b16 %v1028
      %v1349 = vunpack.c.l.b16 %v1042
      %v1350 = vunpack.c.l.b16 %v1052
      %v1351 = vunpack.c.l.b16 %v1066
      %v1352 = vunpack.c.l.b16 %v1076
      %v1353 = vunpack.c.l.b16 %v1090
      %v1354 = vunpack.c.l.b16 %v1100
      %v1355 = vunpack.c.l.b16 %v1114
      %v1356 = vunpack.c.l.b16 %v1124
      %v1357 = vunpack.c.l.b16 %v1138
      %v1358 = vunpack.c.l.b16 %v1148
      %v1359 = vunpack.c.l.b16 %v1162
      %v1360 = vunpack.c.l.b16 %v1172
      %v1361 = vunpack.c.l.b16 %v1186
      %v1362 = vunpack.c.l.b16 %v1196
      %v1363 = vunpack.c.l.b16 %v1210
      %v1364 = vunpack.c.l.b16 %v1220
      %v1365 = vunpack.c.l.b16 %v1234
      %v1366 = vunpack.c.l.b16 %v1244
      %v1367 = vunpack.c.l.b16 %v1258
      %v1368 = vunpack.c.l.b16 %v1268
      %v1369 = vunpack.c.l.b16 %v1282
      %v1370 = vunpack.c.l.b16 %v1292
      %v1371 = vunpack.c.l.b16 %v1306
      %v1372 = vunpack.c.l.b16 %v1316
      %v1373 = vunpack.c.l.b16 %v1330
      %v1374 = vunpack.c.l.b16 %v1340
      %v1375 = vpack.c.b16 %v1344, %v1343
      %v1376 = vpack.c.b16 %v1346, %v1345
      %v1377 = vpack.c.b16 %v1348, %v1347
      %v1378 = vpack.c.b16 %v1350, %v1349
      %v1379 = vpack.c.b16 %v1352, %v1351
      %v1380 = vpack.c.b16 %v1354, %v1353
      %v1381 = vpack.c.b16 %v1356, %v1355
      %v1382 = vpack.c.b16 %v1358, %v1357
      %v1383 = vpack.c.b16 %v1360, %v1359
      %v1384 = vpack.c.b16 %v1362, %v1361
      %v1385 = vpack.c.b16 %v1364, %v1363
      %v1386 = vpack.c.b16 %v1366, %v1365
      %v1387 = vpack.c.b16 %v1368, %v1367
      %v1388 = vpack.c.b16 %v1370, %v1369
      %v1389 = vpack.c.b16 %v1372, %v1371
      %v1390 = vpack.c.b16 %v1374, %v1373
      %vm1391 = vcmask 31744
      %v1393 = vsel %vm1391, %v1375, 0
      %v1396 = vsel %vm1391, %v1376, 0
      %v1399 = vsel %vm1391, %v1377, 0
      %v1402 = vsel %vm1391, %v1378, 0
      %v1405 = vsel %vm1391, %v1379, 0
      %v1408 = vsel %vm1391, %v1380, 0
      %v1411 = vsel %vm1391, %v1381, 0
      %v1414 = vsel %vm1391, %v1382, 0
      %v1417 = vsel %vm1391, %v1383, 0
      %v1420 = vsel %vm1391, %v1384, 0
      %v1423 = vsel %vm1391, %v1385, 0
      %v1426 = vsel %vm1391, %v1386, 0
      %v1429 = vsel %vm1391, %v1387, 0
      %v1432 = vsel %vm1391, %v1388, 0
      %v1435 = vsel %vm1391, %v1389, 0
      %v1438 = vsel %vm1391, %v1390, 0
      %vm1440 = vcmask 1041408
      %v1442 = vsel %vm1440, %v1342, 0
      %1444 = vmatprep.subr.bf16.mxu0 0
      %1445 = vmatpush1.bf16.msra.mxu0 0
      %1446 = vmatprep.subr.bf16.mxu0 0
      %1447 = vmatpush1.bf16.msra.mxu0 0
      %1448 = vmatprep.subr.bf16.mxu0 0
      %1449 = vmatpush1.bf16.msra.mxu0 0
      %1450 = vmatprep.subr.bf16.mxu0 0
      %1451 = vmatpush1.bf16.msra.mxu0 0
      %1452 = vmatprep.subr.bf16.mxu0 0
      %1453 = vmatpush1.bf16.msra.mxu0 0
      %1454 = vmatprep.subr.bf16.mxu0 0
      %1455 = vmatpush1.bf16.msra.mxu0 0
      %1456 = vmatprep.subr.bf16.mxu0 0
      %1457 = vmatpush1.bf16.msra.mxu0 0
      %1458 = vmatprep.subr.bf16.mxu0 0
      %1459 = vmatpush1.bf16.msra.mxu0 %v1442
      %1460 = vmatprep.subr.bf16.mxu0 0
      %1461 = vmatpush2.bf16.msra.mxu0 0
      %1462 = vmatprep.subr.bf16.mxu0 0
      %1463 = vmatpush2.bf16.msra.mxu0 0
      %1464 = vmatprep.subr.bf16.mxu0 0
      %1465 = vmatpush2.bf16.msra.mxu0 0
      %1466 = vmatprep.subr.bf16.mxu0 0
      %1467 = vmatpush2.bf16.msra.mxu0 0
      %1468 = vmatprep.subr.bf16.mxu0 0
      %1469 = vmatpush2.bf16.msra.mxu0 0
      %1470 = vmatprep.subr.bf16.mxu0 0
      %1471 = vmatpush2.bf16.msra.mxu0 0
      %1472 = vmatprep.subr.bf16.mxu0 0
      %1473 = vmatpush2.bf16.msra.mxu0 0
      %1474 = vmatprep.subr.bf16.mxu0 0
      %1475 = vmatpush2.bf16.msra.mxu0 0
      %1476 = vmatprep.mubr.bf16.mxu0 0
      %1477 = vmatmul.mubr.bf16.gmra.mxu0 %v1393
      %v1478 = vpop.f32.mrf.mxu0
      %v1479 = vadd.f32 0.0, %v1478
      %v1480 = vpop.f32.mrf.mxu0
      %v1481 = vpop.f32.mrf.mxu0
      %v1482 = vadd.f32 0.0, %v1481
      %v1483 = vpop.f32.mrf.mxu0
      %1484 = vmatprep.mubr.bf16.mxu0 0
      %1485 = vmatmul.mubr.bf16.gmra.mxu0 %v1396
      %v1486 = vpop.f32.mrf.mxu0
      %v1487 = vadd.f32 0.0, %v1486
      %v1488 = vpop.f32.mrf.mxu0
      %v1489 = vpop.f32.mrf.mxu0
      %v1490 = vadd.f32 0.0, %v1489
      %v1491 = vpop.f32.mrf.mxu0
      %1492 = vmatprep.mubr.bf16.mxu0 0
      %1493 = vmatmul.mubr.bf16.gmra.mxu0 %v1399
      %v1494 = vpop.f32.mrf.mxu0
      %v1495 = vadd.f32 0.0, %v1494
      %v1496 = vpop.f32.mrf.mxu0
      %v1497 = vpop.f32.mrf.mxu0
      %v1498 = vadd.f32 0.0, %v1497
      %v1499 = vpop.f32.mrf.mxu0
      %1500 = vmatprep.mubr.bf16.mxu0 0
      %1501 = vmatmul.mubr.bf16.gmra.mxu0 %v1402
      %v1502 = vpop.f32.mrf.mxu0
      %v1503 = vadd.f32 0.0, %v1502
      %v1504 = vpop.f32.mrf.mxu0
      %v1505 = vpop.f32.mrf.mxu0
      %v1506 = vadd.f32 0.0, %v1505
      %v1507 = vpop.f32.mrf.mxu0
      %1508 = vmatprep.mubr.bf16.mxu0 0
      %1509 = vmatmul.mubr.bf16.gmra.mxu0 %v1405
      %v1510 = vpop.f32.mrf.mxu0
      %v1511 = vadd.f32 0.0, %v1510
      %v1512 = vpop.f32.mrf.mxu0
      %v1513 = vpop.f32.mrf.mxu0
      %v1514 = vadd.f32 0.0, %v1513
      %v1515 = vpop.f32.mrf.mxu0
      %1516 = vmatprep.mubr.bf16.mxu0 0
      %1517 = vmatmul.mubr.bf16.gmra.mxu0 %v1408
      %v1518 = vpop.f32.mrf.mxu0
      %v1519 = vadd.f32 0.0, %v1518
      %v1520 = vpop.f32.mrf.mxu0
      %v1521 = vpop.f32.mrf.mxu0
      %v1522 = vadd.f32 0.0, %v1521
      %v1523 = vpop.f32.mrf.mxu0
      %1524 = vmatprep.mubr.bf16.mxu0 0
      %1525 = vmatmul.mubr.bf16.gmra.mxu0 %v1411
      %v1526 = vpop.f32.mrf.mxu0
      %v1527 = vadd.f32 0.0, %v1526
      %v1528 = vpop.f32.mrf.mxu0
      %v1529 = vpop.f32.mrf.mxu0
      %v1530 = vadd.f32 0.0, %v1529
      %v1531 = vpop.f32.mrf.mxu0
      %1532 = vmatprep.mubr.bf16.mxu0 0
      %1533 = vmatmul.mubr.bf16.gmra.mxu0 %v1414
      %v1534 = vpop.f32.mrf.mxu0
      %v1535 = vadd.f32 0.0, %v1534
      %v1536 = vpop.f32.mrf.mxu0
      %v1537 = vpop.f32.mrf.mxu0
      %v1538 = vadd.f32 0.0, %v1537
      %v1539 = vpop.f32.mrf.mxu0
      %1540 = vmatprep.mubr.bf16.mxu0 0
      %1541 = vmatmul.mubr.bf16.gmra.mxu0 %v1417
      %v1542 = vpop.f32.mrf.mxu0
      %v1543 = vadd.f32 0.0, %v1542
      %v1544 = vpop.f32.mrf.mxu0
      %v1545 = vpop.f32.mrf.mxu0
      %v1546 = vadd.f32 0.0, %v1545
      %v1547 = vpop.f32.mrf.mxu0
      %1548 = vmatprep.mubr.bf16.mxu0 0
      %1549 = vmatmul.mubr.bf16.gmra.mxu0 %v1420
      %v1550 = vpop.f32.mrf.mxu0
      %v1551 = vadd.f32 0.0, %v1550
      %v1552 = vpop.f32.mrf.mxu0
      %v1553 = vpop.f32.mrf.mxu0
      %v1554 = vadd.f32 0.0, %v1553
      %v1555 = vpop.f32.mrf.mxu0
      %1556 = vmatprep.mubr.bf16.mxu0 0
      %1557 = vmatmul.mubr.bf16.gmra.mxu0 %v1423
      %v1558 = vpop.f32.mrf.mxu0
      %v1559 = vadd.f32 0.0, %v1558
      %v1560 = vpop.f32.mrf.mxu0
      %v1561 = vpop.f32.mrf.mxu0
      %v1562 = vadd.f32 0.0, %v1561
      %v1563 = vpop.f32.mrf.mxu0
      %1564 = vmatprep.mubr.bf16.mxu0 0
      %1565 = vmatmul.mubr.bf16.gmra.mxu0 %v1426
      %v1566 = vpop.f32.mrf.mxu0
      %v1567 = vadd.f32 0.0, %v1566
      %v1568 = vpop.f32.mrf.mxu0
      %v1569 = vpop.f32.mrf.mxu0
      %v1570 = vadd.f32 0.0, %v1569
      %v1571 = vpop.f32.mrf.mxu0
      %1572 = vmatprep.mubr.bf16.mxu0 0
      %1573 = vmatmul.mubr.bf16.gmra.mxu0 %v1429
      %v1574 = vpop.f32.mrf.mxu0
      %v1575 = vadd.f32 0.0, %v1574
      %v1576 = vpop.f32.mrf.mxu0
      %v1577 = vpop.f32.mrf.mxu0
      %v1578 = vadd.f32 0.0, %v1577
      %v1579 = vpop.f32.mrf.mxu0
      %1580 = vmatprep.mubr.bf16.mxu0 0
      %1581 = vmatmul.mubr.bf16.gmra.mxu0 %v1432
      %v1582 = vpop.f32.mrf.mxu0
      %v1583 = vadd.f32 0.0, %v1582
      %v1584 = vpop.f32.mrf.mxu0
      %v1585 = vpop.f32.mrf.mxu0
      %v1586 = vadd.f32 0.0, %v1585
      %v1587 = vpop.f32.mrf.mxu0
      %1588 = vmatprep.mubr.bf16.mxu0 0
      %1589 = vmatmul.mubr.bf16.gmra.mxu0 %v1435
      %v1590 = vpop.f32.mrf.mxu0
      %v1591 = vadd.f32 0.0, %v1590
      %v1592 = vpop.f32.mrf.mxu0
      %v1593 = vpop.f32.mrf.mxu0
      %v1594 = vadd.f32 0.0, %v1593
      %v1595 = vpop.f32.mrf.mxu0
      %1596 = vmatprep.mubr.bf16.mxu0 0
      %1597 = vmatmul.mubr.bf16.gmra.mxu0 %v1438
      %v1598 = vpop.f32.mrf.mxu0
      %v1599 = vadd.f32 0.0, %v1598
      %v1600 = vpop.f32.mrf.mxu0
      %v1601 = vpop.f32.mrf.mxu0
      %v1602 = vadd.f32 0.0, %v1601
      %v1603 = vpop.f32.mrf.mxu0
      %1604 = vdwg.mxu0
      %v1637 = vunpack.c.l.b16 %v905
      %v1638 = vunpack.c.l.b16 %v906
      %v1639 = vunpack.c.l.b16 %v907
      %v1640 = vunpack.c.l.b16 %v908
      %v1641 = vunpack.c.l.b16 %v909
      %v1642 = vunpack.c.l.b16 %v910
      %v1643 = vunpack.c.l.b16 %v911
      %v1644 = vunpack.c.l.b16 %v912
      %v1645 = vunpack.c.l.b16 %v913
      %v1646 = vunpack.c.l.b16 %v914
      %v1647 = vunpack.c.l.b16 %v915
      %v1648 = vunpack.c.l.b16 %v916
      %v1649 = vunpack.c.l.b16 %v917
      %v1650 = vunpack.c.l.b16 %v918
      %v1651 = vunpack.c.l.b16 %v919
      %v1652 = vunpack.c.l.b16 %v920
      %v1653 = vunpack.c.l.b16 %v921
      %v1654 = vunpack.c.l.b16 %v922
      %v1655 = vunpack.c.l.b16 %v923
      %v1656 = vunpack.c.l.b16 %v924
      %v1657 = vunpack.c.l.b16 %v925
      %v1658 = vunpack.c.l.b16 %v926
      %v1659 = vunpack.c.l.b16 %v927
      %v1660 = vunpack.c.l.b16 %v928
      %v1661 = vunpack.c.l.b16 %v929
      %v1662 = vunpack.c.l.b16 %v930
      %v1663 = vunpack.c.l.b16 %v931
      %v1664 = vunpack.c.l.b16 %v932
      %v1665 = vunpack.c.l.b16 %v933
      %v1666 = vunpack.c.l.b16 %v934
      %v1667 = vunpack.c.l.b16 %v935
      %v1668 = vunpack.c.l.b16 %v936
      %v1669 = vpack.c.b16 %v1638, %v1637
      %v1670 = vpack.c.b16 %v1640, %v1639
      %v1671 = vpack.c.b16 %v1642, %v1641
      %v1672 = vpack.c.b16 %v1644, %v1643
      %v1673 = vpack.c.b16 %v1646, %v1645
      %v1674 = vpack.c.b16 %v1648, %v1647
      %v1675 = vpack.c.b16 %v1650, %v1649
      %v1676 = vpack.c.b16 %v1652, %v1651
      %v1677 = vpack.c.b16 %v1654, %v1653
      %v1678 = vpack.c.b16 %v1656, %v1655
      %v1679 = vpack.c.b16 %v1658, %v1657
      %v1680 = vpack.c.b16 %v1660, %v1659
      %v1681 = vpack.c.b16 %v1662, %v1661
      %v1682 = vpack.c.b16 %v1664, %v1663
      %v1683 = vpack.c.b16 %v1666, %v1665
      %v1684 = vpack.c.b16 %v1668, %v1667
      %v1686 = vsel %vm1391, %v1669, 0
      %v1689 = vsel %vm1391, %v1670, 0
      %v1692 = vsel %vm1391, %v1671, 0
      %v1695 = vsel %vm1391, %v1672, 0
      %v1698 = vsel %vm1391, %v1673, 0
      %v1701 = vsel %vm1391, %v1674, 0
      %v1704 = vsel %vm1391, %v1675, 0
      %v1707 = vsel %vm1391, %v1676, 0
      %v1710 = vsel %vm1391, %v1677, 0
      %v1713 = vsel %vm1391, %v1678, 0
      %v1716 = vsel %vm1391, %v1679, 0
      %v1719 = vsel %vm1391, %v1680, 0
      %v1722 = vsel %vm1391, %v1681, 0
      %v1725 = vsel %vm1391, %v1682, 0
      %v1728 = vsel %vm1391, %v1683, 0
      %v1731 = vsel %vm1391, %v1684, 0
      %v1734 = vsel %vm1440, %v937, 0
      %1736 = vmatprep.subr.bf16.mxu0 0
      %1737 = vmatpush1.bf16.msra.mxu0 0
      %1738 = vmatprep.subr.bf16.mxu0 0
      %1739 = vmatpush1.bf16.msra.mxu0 0
      %1740 = vmatprep.subr.bf16.mxu0 0
      %1741 = vmatpush1.bf16.msra.mxu0 0
      %1742 = vmatprep.subr.bf16.mxu0 0
      %1743 = vmatpush1.bf16.msra.mxu0 0
      %1744 = vmatprep.subr.bf16.mxu0 0
      %1745 = vmatpush1.bf16.msra.mxu0 0
      %1746 = vmatprep.subr.bf16.mxu0 0
      %1747 = vmatpush1.bf16.msra.mxu0 0
      %1748 = vmatprep.subr.bf16.mxu0 0
      %1749 = vmatpush1.bf16.msra.mxu0 0
      %1750 = vmatprep.subr.bf16.mxu0 0
      %1751 = vmatpush1.bf16.msra.mxu0 %v1734
      %1752 = vmatprep.subr.bf16.mxu0 0
      %1753 = vmatpush2.bf16.msra.mxu0 0
      %1754 = vmatprep.subr.bf16.mxu0 0
      %1755 = vmatpush2.bf16.msra.mxu0 0
      %1756 = vmatprep.subr.bf16.mxu0 0
      %1757 = vmatpush2.bf16.msra.mxu0 0
      %1758 = vmatprep.subr.bf16.mxu0 0
      %1759 = vmatpush2.bf16.msra.mxu0 0
      %1760 = vmatprep.subr.bf16.mxu0 0
      %1761 = vmatpush2.bf16.msra.mxu0 0
      %1762 = vmatprep.subr.bf16.mxu0 0
      %1763 = vmatpush2.bf16.msra.mxu0 0
      %1764 = vmatprep.subr.bf16.mxu0 0
      %1765 = vmatpush2.bf16.msra.mxu0 0
      %1766 = vmatprep.subr.bf16.mxu0 0
      %1767 = vmatpush2.bf16.msra.mxu0 0
      %1768 = vmatprep.mubr.bf16.mxu0 0
      %1769 = vmatmul.mubr.bf16.gmra.mxu0 %v1686
      %v1770 = vpop.f32.mrf.mxu0
      %v1771 = vadd.f32 %v1479, %v1770
      %v1772 = vpop.f32.mrf.mxu0
      %v1773 = vpop.f32.mrf.mxu0
      %v1774 = vadd.f32 %v1482, %v1773
      %v1775 = vpop.f32.mrf.mxu0
      %1776 = vmatprep.mubr.bf16.mxu0 0
      %1777 = vmatmul.mubr.bf16.gmra.mxu0 %v1689
      %v1778 = vpop.f32.mrf.mxu0
      %v1779 = vadd.f32 %v1487, %v1778
      %v1780 = vpop.f32.mrf.mxu0
      %v1781 = vpop.f32.mrf.mxu0
      %v1782 = vadd.f32 %v1490, %v1781
      %v1783 = vpop.f32.mrf.mxu0
      %1784 = vmatprep.mubr.bf16.mxu0 0
      %1785 = vmatmul.mubr.bf16.gmra.mxu0 %v1692
      %v1786 = vpop.f32.mrf.mxu0
      %v1787 = vadd.f32 %v1495, %v1786
      %v1788 = vpop.f32.mrf.mxu0
      %v1789 = vpop.f32.mrf.mxu0
      %v1790 = vadd.f32 %v1498, %v1789
      %v1791 = vpop.f32.mrf.mxu0
      %1792 = vmatprep.mubr.bf16.mxu0 0
      %1793 = vmatmul.mubr.bf16.gmra.mxu0 %v1695
      %v1794 = vpop.f32.mrf.mxu0
      %v1795 = vadd.f32 %v1503, %v1794
      %v1796 = vpop.f32.mrf.mxu0
      %v1797 = vpop.f32.mrf.mxu0
      %v1798 = vadd.f32 %v1506, %v1797
      %v1799 = vpop.f32.mrf.mxu0
      %1800 = vmatprep.mubr.bf16.mxu0 0
      %1801 = vmatmul.mubr.bf16.gmra.mxu0 %v1698
      %v1802 = vpop.f32.mrf.mxu0
      %v1803 = vadd.f32 %v1511, %v1802
      %v1804 = vpop.f32.mrf.mxu0
      %v1805 = vpop.f32.mrf.mxu0
      %v1806 = vadd.f32 %v1514, %v1805
      %v1807 = vpop.f32.mrf.mxu0
      %1808 = vmatprep.mubr.bf16.mxu0 0
      %1809 = vmatmul.mubr.bf16.gmra.mxu0 %v1701
      %v1810 = vpop.f32.mrf.mxu0
      %v1811 = vadd.f32 %v1519, %v1810
      %v1812 = vpop.f32.mrf.mxu0
      %v1813 = vpop.f32.mrf.mxu0
      %v1814 = vadd.f32 %v1522, %v1813
      %v1815 = vpop.f32.mrf.mxu0
      %1816 = vmatprep.mubr.bf16.mxu0 0
      %1817 = vmatmul.mubr.bf16.gmra.mxu0 %v1704
      %v1818 = vpop.f32.mrf.mxu0
      %v1819 = vadd.f32 %v1527, %v1818
      %v1820 = vpop.f32.mrf.mxu0
      %v1821 = vpop.f32.mrf.mxu0
      %v1822 = vadd.f32 %v1530, %v1821
      %v1823 = vpop.f32.mrf.mxu0
      %1824 = vmatprep.mubr.bf16.mxu0 0
      %1825 = vmatmul.mubr.bf16.gmra.mxu0 %v1707
      %v1826 = vpop.f32.mrf.mxu0
      %v1827 = vadd.f32 %v1535, %v1826
      %v1828 = vpop.f32.mrf.mxu0
      %v1829 = vpop.f32.mrf.mxu0
      %v1830 = vadd.f32 %v1538, %v1829
      %v1831 = vpop.f32.mrf.mxu0
      %1832 = vmatprep.mubr.bf16.mxu0 0
      %1833 = vmatmul.mubr.bf16.gmra.mxu0 %v1710
      %v1834 = vpop.f32.mrf.mxu0
      %v1835 = vadd.f32 %v1543, %v1834
      %v1836 = vpop.f32.mrf.mxu0
      %v1837 = vpop.f32.mrf.mxu0
      %v1838 = vadd.f32 %v1546, %v1837
      %v1839 = vpop.f32.mrf.mxu0
      %1840 = vmatprep.mubr.bf16.mxu0 0
      %1841 = vmatmul.mubr.bf16.gmra.mxu0 %v1713
      %v1842 = vpop.f32.mrf.mxu0
      %v1843 = vadd.f32 %v1551, %v1842
      %v1844 = vpop.f32.mrf.mxu0
      %v1845 = vpop.f32.mrf.mxu0
      %v1846 = vadd.f32 %v1554, %v1845
      %v1847 = vpop.f32.mrf.mxu0
      %1848 = vmatprep.mubr.bf16.mxu0 0
      %1849 = vmatmul.mubr.bf16.gmra.mxu0 %v1716
      %v1850 = vpop.f32.mrf.mxu0
      %v1851 = vadd.f32 %v1559, %v1850
      %v1852 = vpop.f32.mrf.mxu0
      %v1853 = vpop.f32.mrf.mxu0
      %v1854 = vadd.f32 %v1562, %v1853
      %v1855 = vpop.f32.mrf.mxu0
      %1856 = vmatprep.mubr.bf16.mxu0 0
      %1857 = vmatmul.mubr.bf16.gmra.mxu0 %v1719
      %v1858 = vpop.f32.mrf.mxu0
      %v1859 = vadd.f32 %v1567, %v1858
      %v1860 = vpop.f32.mrf.mxu0
      %v1861 = vpop.f32.mrf.mxu0
      %v1862 = vadd.f32 %v1570, %v1861
      %v1863 = vpop.f32.mrf.mxu0
      %1864 = vmatprep.mubr.bf16.mxu0 0
      %1865 = vmatmul.mubr.bf16.gmra.mxu0 %v1722
      %v1866 = vpop.f32.mrf.mxu0
      %v1867 = vadd.f32 %v1575, %v1866
      %v1868 = vpop.f32.mrf.mxu0
      %v1869 = vpop.f32.mrf.mxu0
      %v1870 = vadd.f32 %v1578, %v1869
      %v1871 = vpop.f32.mrf.mxu0
      %1872 = vmatprep.mubr.bf16.mxu0 0
      %1873 = vmatmul.mubr.bf16.gmra.mxu0 %v1725
      %v1874 = vpop.f32.mrf.mxu0
      %v1875 = vadd.f32 %v1583, %v1874
      %v1876 = vpop.f32.mrf.mxu0
      %v1877 = vpop.f32.mrf.mxu0
      %v1878 = vadd.f32 %v1586, %v1877
      %v1879 = vpop.f32.mrf.mxu0
      %1880 = vmatprep.mubr.bf16.mxu0 0
      %1881 = vmatmul.mubr.bf16.gmra.mxu0 %v1728
      %v1882 = vpop.f32.mrf.mxu0
      %v1883 = vadd.f32 %v1591, %v1882
      %v1884 = vpop.f32.mrf.mxu0
      %v1885 = vpop.f32.mrf.mxu0
      %v1886 = vadd.f32 %v1594, %v1885
      %v1887 = vpop.f32.mrf.mxu0
      %1888 = vmatprep.mubr.bf16.mxu0 0
      %1889 = vmatmul.mubr.bf16.gmra.mxu0 %v1731
      %v1890 = vpop.f32.mrf.mxu0
      %v1891 = vadd.f32 %v1599, %v1890
      %v1892 = vpop.f32.mrf.mxu0
      %v1893 = vpop.f32.mrf.mxu0
      %v1894 = vadd.f32 %v1602, %v1893
      %v1895 = vpop.f32.mrf.mxu0
      %1896 = vdwg.mxu0
      %v1897 = vld [vmem:[#allocation2] sm:$0xe]
      %v1898 = vld [vmem:[#allocation2 + $0xc] sm:$0xe]
      %v1899 = vld [vmem:[#allocation2 + $0x18] sm:$0xe]
      %v1900 = vld [vmem:[#allocation2 + $0x24] sm:$0xe]
      %v1901 = vld [vmem:[#allocation2 + $0x30] sm:$0xe]
      %v1902 = vld [vmem:[#allocation2 + $0x3c] sm:$0xe]
      %v1903 = vld [vmem:[#allocation2 + $0x48] sm:$0xe]
      %v1904 = vld [vmem:[#allocation2 + $0x54] sm:$0xe]
      %v1905 = vld [vmem:[#allocation2 + $0x60] sm:$0xe]
      %v1906 = vld [vmem:[#allocation2 + $0x6c] sm:$0xe]
      %v1907 = vld [vmem:[#allocation2 + $0x78] sm:$0xe]
      %v1908 = vld [vmem:[#allocation2 + $0x84] sm:$0xe]
      %v1909 = vld [vmem:[#allocation2 + $0x90] sm:$0xe]
      %v1910 = vld [vmem:[#allocation2 + $0x9c] sm:$0xe]
      %v1911 = vld [vmem:[#allocation2 + $0xa8] sm:$0xe]
      %v1912 = vld [vmem:[#allocation2 + $0xb4] sm:$0xe]
      %vm1945 = vcmask 1042432
      %vm1946 = vcmask 1046532
      %vm1947 = vmor %vm1945, %vm1946
      %v1948 = vrot.slane %v1897, 5
      %v1949 = vrot.slane %v1948, 4
      %v1950 = vrot.slane %v906, 5
      %v1951 = vsel %vm1947, %v1949, %v1950
      %v1952 = vrot.slane %v1950, 4
      %v1953 = vrot.slane %v938, 5
      %v1954 = vsel %vm1947, %v1952, %v1953
      %v1955 = vrot.slane %v1898, 5
      %v1956 = vrot.slane %v1955, 4
      %v1957 = vrot.slane %v908, 5
      %v1958 = vsel %vm1947, %v1956, %v1957
      %v1959 = vrot.slane %v1957, 4
      %v1960 = vrot.slane %v939, 5
      %v1961 = vsel %vm1947, %v1959, %v1960
      %v1962 = vrot.slane %v1899, 5
      %v1963 = vrot.slane %v1962, 4
      %v1964 = vrot.slane %v910, 5
      %v1965 = vsel %vm1947, %v1963, %v1964
      %v1966 = vrot.slane %v1964, 4
      %v1967 = vrot.slane %v940, 5
      %v1968 = vsel %vm1947, %v1966, %v1967
      %v1969 = vrot.slane %v1900, 5
      %v1970 = vrot.slane %v1969, 4
      %v1971 = vrot.slane %v912, 5
      %v1972 = vsel %vm1947, %v1970, %v1971
      %v1973 = vrot.slane %v1971, 4
      %v1974 = vrot.slane %v941, 5
      %v1975 = vsel %vm1947, %v1973, %v1974
      %v1976 = vrot.slane %v1901, 5
      %v1977 = vrot.slane %v1976, 4
      %v1978 = vrot.slane %v914, 5
      %v1979 = vsel %vm1947, %v1977, %v1978
      %v1980 = vrot.slane %v1978, 4
      %v1981 = vrot.slane %v942, 5
      %v1982 = vsel %vm1947, %v1980, %v1981
      %v1983 = vrot.slane %v1902, 5
      %v1984 = vrot.slane %v1983, 4
      %v1985 = vrot.slane %v916, 5
      %v1986 = vsel %vm1947, %v1984, %v1985
      %v1987 = vrot.slane %v1985, 4
      %v1988 = vrot.slane %v943, 5
      %v1989 = vsel %vm1947, %v1987, %v1988
      %v1990 = vrot.slane %v1903, 5
      %v1991 = vrot.slane %v1990, 4
      %v1992 = vrot.slane %v918, 5
      %v1993 = vsel %vm1947, %v1991, %v1992
      %v1994 = vrot.slane %v1992, 4
      %v1995 = vrot.slane %v944, 5
      %v1996 = vsel %vm1947, %v1994, %v1995
      %v1997 = vrot.slane %v1904, 5
      %v1998 = vrot.slane %v1997, 4
      %v1999 = vrot.slane %v920, 5
      %v2000 = vsel %vm1947, %v1998, %v1999
      %v2001 = vrot.slane %v1999, 4
      %v2002 = vrot.slane %v945, 5
      %v2003 = vsel %vm1947, %v2001, %v2002
      %v2004 = vrot.slane %v1905, 5
      %v2005 = vrot.slane %v2004, 4
      %v2006 = vrot.slane %v922, 5
      %v2007 = vsel %vm1947, %v2005, %v2006
      %v2008 = vrot.slane %v2006, 4
      %v2009 = vrot.slane %v946, 5
      %v2010 = vsel %vm1947, %v2008, %v2009
      %v2011 = vrot.slane %v1906, 5
      %v2012 = vrot.slane %v2011, 4
      %v2013 = vrot.slane %v924, 5
      %v2014 = vsel %vm1947, %v2012, %v2013
      %v2015 = vrot.slane %v2013, 4
      %v2016 = vrot.slane %v947, 5
      %v2017 = vsel %vm1947, %v2015, %v2016
      %v2018 = vrot.slane %v1907, 5
      %v2019 = vrot.slane %v2018, 4
      %v2020 = vrot.slane %v926, 5
      %v2021 = vsel %vm1947, %v2019, %v2020
      %v2022 = vrot.slane %v2020, 4
      %v2023 = vrot.slane %v948, 5
      %v2024 = vsel %vm1947, %v2022, %v2023
      %v2025 = vrot.slane %v1908, 5
      %v2026 = vrot.slane %v2025, 4
      %v2027 = vrot.slane %v928, 5
      %v2028 = vsel %vm1947, %v2026, %v2027
      %v2029 = vrot.slane %v2027, 4
      %v2030 = vrot.slane %v949, 5
      %v2031 = vsel %vm1947, %v2029, %v2030
      %v2032 = vrot.slane %v1909, 5
      %v2033 = vrot.slane %v2032, 4
      %v2034 = vrot.slane %v930, 5
      %v2035 = vsel %vm1947, %v2033, %v2034
      %v2036 = vrot.slane %v2034, 4
      %v2037 = vrot.slane %v950, 5
      %v2038 = vsel %vm1947, %v2036, %v2037
      %v2039 = vrot.slane %v1910, 5
      %v2040 = vrot.slane %v2039, 4
      %v2041 = vrot.slane %v932, 5
      %v2042 = vsel %vm1947, %v2040, %v2041
      %v2043 = vrot.slane %v2041, 4
      %v2044 = vrot.slane %v951, 5
      %v2045 = vsel %vm1947, %v2043, %v2044
      %v2046 = vrot.slane %v1911, 5
      %v2047 = vrot.slane %v2046, 4
      %v2048 = vrot.slane %v934, 5
      %v2049 = vsel %vm1947, %v2047, %v2048
      %v2050 = vrot.slane %v2048, 4
      %v2051 = vrot.slane %v952, 5
      %v2052 = vsel %vm1947, %v2050, %v2051
      %v2053 = vrot.slane %v1912, 5
      %v2054 = vrot.slane %v2053, 4
      %v2055 = vrot.slane %v936, 5
      %v2056 = vsel %vm1947, %v2054, %v2055
      %v2057 = vrot.slane %v2055, 4
      %v2058 = vrot.slane %v953, 5
      %v2059 = vsel %vm1947, %v2057, %v2058
      %s2060 = scalar_lea.vmem %s1, 4
      %v2061 = vld [vmem:[%s2060] sm:$0x3]
      %v2062 = vunpack.c.l.b16 %v1951
      %v2063 = vunpack.c.l.b16 %v1954
      %v2064 = vunpack.c.l.b16 %v1958
      %v2065 = vunpack.c.l.b16 %v1961
      %v2066 = vunpack.c.l.b16 %v1965
      %v2067 = vunpack.c.l.b16 %v1968
      %v2068 = vunpack.c.l.b16 %v1972
      %v2069 = vunpack.c.l.b16 %v1975
      %v2070 = vunpack.c.l.b16 %v1979
      %v2071 = vunpack.c.l.b16 %v1982
      %v2072 = vunpack.c.l.b16 %v1986
      %v2073 = vunpack.c.l.b16 %v1989
      %v2074 = vunpack.c.l.b16 %v1993
      %v2075 = vunpack.c.l.b16 %v1996
      %v2076 = vunpack.c.l.b16 %v2000
      %v2077 = vunpack.c.l.b16 %v2003
      %v2078 = vunpack.c.l.b16 %v2007
      %v2079 = vunpack.c.l.b16 %v2010
      %v2080 = vunpack.c.l.b16 %v2014
      %v2081 = vunpack.c.l.b16 %v2017
      %v2082 = vunpack.c.l.b16 %v2021
      %v2083 = vunpack.c.l.b16 %v2024
      %v2084 = vunpack.c.l.b16 %v2028
      %v2085 = vunpack.c.l.b16 %v2031
      %v2086 = vunpack.c.l.b16 %v2035
      %v2087 = vunpack.c.l.b16 %v2038
      %v2088 = vunpack.c.l.b16 %v2042
      %v2089 = vunpack.c.l.b16 %v2045
      %v2090 = vunpack.c.l.b16 %v2049
      %v2091 = vunpack.c.l.b16 %v2052
      %v2092 = vunpack.c.l.b16 %v2056
      %v2093 = vunpack.c.l.b16 %v2059
      %v2094 = vpack.c.b16 %v2063, %v2062
      %v2095 = vpack.c.b16 %v2065, %v2064
      %v2096 = vpack.c.b16 %v2067, %v2066
      %v2097 = vpack.c.b16 %v2069, %v2068
      %v2098 = vpack.c.b16 %v2071, %v2070
      %v2099 = vpack.c.b16 %v2073, %v2072
      %v2100 = vpack.c.b16 %v2075, %v2074
      %v2101 = vpack.c.b16 %v2077, %v2076
      %v2102 = vpack.c.b16 %v2079, %v2078
      %v2103 = vpack.c.b16 %v2081, %v2080
      %v2104 = vpack.c.b16 %v2083, %v2082
      %v2105 = vpack.c.b16 %v2085, %v2084
      %v2106 = vpack.c.b16 %v2087, %v2086
      %v2107 = vpack.c.b16 %v2089, %v2088
      %v2108 = vpack.c.b16 %v2091, %v2090
      %v2109 = vpack.c.b16 %v2093, %v2092
      %v2111 = vsel %vm1391, %v2094, 0
      %v2114 = vsel %vm1391, %v2095, 0
      %v2117 = vsel %vm1391, %v2096, 0
      %v2120 = vsel %vm1391, %v2097, 0
      %v2123 = vsel %vm1391, %v2098, 0
      %v2126 = vsel %vm1391, %v2099, 0
      %v2129 = vsel %vm1391, %v2100, 0
      %v2132 = vsel %vm1391, %v2101, 0
      %v2135 = vsel %vm1391, %v2102, 0
      %v2138 = vsel %vm1391, %v2103, 0
      %v2141 = vsel %vm1391, %v2104, 0
      %v2144 = vsel %vm1391, %v2105, 0
      %v2147 = vsel %vm1391, %v2106, 0
      %v2150 = vsel %vm1391, %v2107, 0
      %v2153 = vsel %vm1391, %v2108, 0
      %v2156 = vsel %vm1391, %v2109, 0
      %v2159 = vsel %vm1440, %v2061, 0
      %2161 = vmatprep.subr.bf16.mxu0 0
      %2162 = vmatpush1.bf16.msra.mxu0 0
      %2163 = vmatprep.subr.bf16.mxu0 0
      %2164 = vmatpush1.bf16.msra.mxu0 0
      %2165 = vmatprep.subr.bf16.mxu0 0
      %2166 = vmatpush1.bf16.msra.mxu0 0
      %2167 = vmatprep.subr.bf16.mxu0 0
      %2168 = vmatpush1.bf16.msra.mxu0 0
      %2169 = vmatprep.subr.bf16.mxu0 0
      %2170 = vmatpush1.bf16.msra.mxu0 0
      %2171 = vmatprep.subr.bf16.mxu0 0
      %2172 = vmatpush1.bf16.msra.mxu0 0
      %2173 = vmatprep.subr.bf16.mxu0 0
      %2174 = vmatpush1.bf16.msra.mxu0 0
      %2175 = vmatprep.subr.bf16.mxu0 0
      %2176 = vmatpush1.bf16.msra.mxu0 %v2159
      %2177 = vmatprep.subr.bf16.mxu0 0
      %2178 = vmatpush2.bf16.msra.mxu0 0
      %2179 = vmatprep.subr.bf16.mxu0 0
      %2180 = vmatpush2.bf16.msra.mxu0 0
      %2181 = vmatprep.subr.bf16.mxu0 0
      %2182 = vmatpush2.bf16.msra.mxu0 0
      %2183 = vmatprep.subr.bf16.mxu0 0
      %2184 = vmatpush2.bf16.msra.mxu0 0
      %2185 = vmatprep.subr.bf16.mxu0 0
      %2186 = vmatpush2.bf16.msra.mxu0 0
      %2187 = vmatprep.subr.bf16.mxu0 0
      %2188 = vmatpush2.bf16.msra.mxu0 0
      %2189 = vmatprep.subr.bf16.mxu0 0
      %2190 = vmatpush2.bf16.msra.mxu0 0
      %2191 = vmatprep.subr.bf16.mxu0 0
      %2192 = vmatpush2.bf16.msra.mxu0 0
      %2193 = vmatprep.mubr.bf16.mxu0 0
      %2194 = vmatmul.mubr.bf16.gmra.mxu0 %v2111
      %v2195 = vpop.f32.mrf.mxu0
      %v2196 = vadd.f32 0.0, %v2195
      %v2197 = vpop.f32.mrf.mxu0
      %v2198 = vpop.f32.mrf.mxu0
      %v2199 = vadd.f32 0.0, %v2198
      %v2200 = vpop.f32.mrf.mxu0
      %2201 = vmatprep.mubr.bf16.mxu0 0
      %2202 = vmatmul.mubr.bf16.gmra.mxu0 %v2114
      %v2203 = vpop.f32.mrf.mxu0
      %v2204 = vadd.f32 0.0, %v2203
      %v2205 = vpop.f32.mrf.mxu0
      %v2206 = vpop.f32.mrf.mxu0
      %v2207 = vadd.f32 0.0, %v2206
      %v2208 = vpop.f32.mrf.mxu0
      %2209 = vmatprep.mubr.bf16.mxu0 0
      %2210 = vmatmul.mubr.bf16.gmra.mxu0 %v2117
      %v2211 = vpop.f32.mrf.mxu0
      %v2212 = vadd.f32 0.0, %v2211
      %v2213 = vpop.f32.mrf.mxu0
      %v2214 = vpop.f32.mrf.mxu0
      %v2215 = vadd.f32 0.0, %v2214
      %v2216 = vpop.f32.mrf.mxu0
      %2217 = vmatprep.mubr.bf16.mxu0 0
      %2218 = vmatmul.mubr.bf16.gmra.mxu0 %v2120
      %v2219 = vpop.f32.mrf.mxu0
      %v2220 = vadd.f32 0.0, %v2219
      %v2221 = vpop.f32.mrf.mxu0
      %v2222 = vpop.f32.mrf.mxu0
      %v2223 = vadd.f32 0.0, %v2222
      %v2224 = vpop.f32.mrf.mxu0
      %2225 = vmatprep.mubr.bf16.mxu0 0
      %2226 = vmatmul.mubr.bf16.gmra.mxu0 %v2123
      %v2227 = vpop.f32.mrf.mxu0
      %v2228 = vadd.f32 0.0, %v2227
      %v2229 = vpop.f32.mrf.mxu0
      %v2230 = vpop.f32.mrf.mxu0
      %v2231 = vadd.f32 0.0, %v2230
      %v2232 = vpop.f32.mrf.mxu0
      %2233 = vmatprep.mubr.bf16.mxu0 0
      %2234 = vmatmul.mubr.bf16.gmra.mxu0 %v2126
      %v2235 = vpop.f32.mrf.mxu0
      %v2236 = vadd.f32 0.0, %v2235
      %v2237 = vpop.f32.mrf.mxu0
      %v2238 = vpop.f32.mrf.mxu0
      %v2239 = vadd.f32 0.0, %v2238
      %v2240 = vpop.f32.mrf.mxu0
      %2241 = vmatprep.mubr.bf16.mxu0 0
      %2242 = vmatmul.mubr.bf16.gmra.mxu0 %v2129
      %v2243 = vpop.f32.mrf.mxu0
      %v2244 = vadd.f32 0.0, %v2243
      %v2245 = vpop.f32.mrf.mxu0
      %v2246 = vpop.f32.mrf.mxu0
      %v2247 = vadd.f32 0.0, %v2246
      %v2248 = vpop.f32.mrf.mxu0
      %2249 = vmatprep.mubr.bf16.mxu0 0
      %2250 = vmatmul.mubr.bf16.gmra.mxu0 %v2132
      %v2251 = vpop.f32.mrf.mxu0
      %v2252 = vadd.f32 0.0, %v2251
      %v2253 = vpop.f32.mrf.mxu0
      %v2254 = vpop.f32.mrf.mxu0
      %v2255 = vadd.f32 0.0, %v2254
      %v2256 = vpop.f32.mrf.mxu0
      %2257 = vmatprep.mubr.bf16.mxu0 0
      %2258 = vmatmul.mubr.bf16.gmra.mxu0 %v2135
      %v2259 = vpop.f32.mrf.mxu0
      %v2260 = vadd.f32 0.0, %v2259
      %v2261 = vpop.f32.mrf.mxu0
      %v2262 = vpop.f32.mrf.mxu0
      %v2263 = vadd.f32 0.0, %v2262
      %v2264 = vpop.f32.mrf.mxu0
      %2265 = vmatprep.mubr.bf16.mxu0 0
      %2266 = vmatmul.mubr.bf16.gmra.mxu0 %v2138
      %v2267 = vpop.f32.mrf.mxu0
      %v2268 = vadd.f32 0.0, %v2267
      %v2269 = vpop.f32.mrf.mxu0
      %v2270 = vpop.f32.mrf.mxu0
      %v2271 = vadd.f32 0.0, %v2270
      %v2272 = vpop.f32.mrf.mxu0
      %2273 = vmatprep.mubr.bf16.mxu0 0
      %2274 = vmatmul.mubr.bf16.gmra.mxu0 %v2141
      %v2275 = vpop.f32.mrf.mxu0
      %v2276 = vadd.f32 0.0, %v2275
      %v2277 = vpop.f32.mrf.mxu0
      %v2278 = vpop.f32.mrf.mxu0
      %v2279 = vadd.f32 0.0, %v2278
      %v2280 = vpop.f32.mrf.mxu0
      %2281 = vmatprep.mubr.bf16.mxu0 0
      %2282 = vmatmul.mubr.bf16.gmra.mxu0 %v2144
      %v2283 = vpop.f32.mrf.mxu0
      %v2284 = vadd.f32 0.0, %v2283
      %v2285 = vpop.f32.mrf.mxu0
      %v2286 = vpop.f32.mrf.mxu0
      %v2287 = vadd.f32 0.0, %v2286
      %v2288 = vpop.f32.mrf.mxu0
      %2289 = vmatprep.mubr.bf16.mxu0 0
      %2290 = vmatmul.mubr.bf16.gmra.mxu0 %v2147
      %v2291 = vpop.f32.mrf.mxu0
      %v2292 = vadd.f32 0.0, %v2291
      %v2293 = vpop.f32.mrf.mxu0
      %v2294 = vpop.f32.mrf.mxu0
      %v2295 = vadd.f32 0.0, %v2294
      %v2296 = vpop.f32.mrf.mxu0
      %2297 = vmatprep.mubr.bf16.mxu0 0
      %2298 = vmatmul.mubr.bf16.gmra.mxu0 %v2150
      %v2299 = vpop.f32.mrf.mxu0
      %v2300 = vadd.f32 0.0, %v2299
      %v2301 = vpop.f32.mrf.mxu0
      %v2302 = vpop.f32.mrf.mxu0
      %v2303 = vadd.f32 0.0, %v2302
      %v2304 = vpop.f32.mrf.mxu0
      %2305 = vmatprep.mubr.bf16.mxu0 0
      %2306 = vmatmul.mubr.bf16.gmra.mxu0 %v2153
      %v2307 = vpop.f32.mrf.mxu0
      %v2308 = vadd.f32 0.0, %v2307
      %v2309 = vpop.f32.mrf.mxu0
      %v2310 = vpop.f32.mrf.mxu0
      %v2311 = vadd.f32 0.0, %v2310
      %v2312 = vpop.f32.mrf.mxu0
      %2313 = vmatprep.mubr.bf16.mxu0 0
      %2314 = vmatmul.mubr.bf16.gmra.mxu0 %v2156
      %v2315 = vpop.f32.mrf.mxu0
      %v2316 = vadd.f32 0.0, %v2315
      %v2317 = vpop.f32.mrf.mxu0
      %v2318 = vpop.f32.mrf.mxu0
      %v2319 = vadd.f32 0.0, %v2318
      %v2320 = vpop.f32.mrf.mxu0
      %2321 = vdwg.mxu0
      %v2322 = vadd.f32 %v1771, %v2196
      %v2323 = vadd.f32 %v1774, %v2199
      %v2324 = vadd.f32 %v1779, %v2204
      %v2325 = vadd.f32 %v1782, %v2207
      %v2326 = vadd.f32 %v1787, %v2212
      %v2327 = vadd.f32 %v1790, %v2215
      %v2328 = vadd.f32 %v1795, %v2220
      %v2329 = vadd.f32 %v1798, %v2223
      %v2330 = vadd.f32 %v1803, %v2228
      %v2331 = vadd.f32 %v1806, %v2231
      %v2332 = vadd.f32 %v1811, %v2236
      %v2333 = vadd.f32 %v1814, %v2239
      %v2334 = vadd.f32 %v1819, %v2244
      %v2335 = vadd.f32 %v1822, %v2247
      %v2336 = vadd.f32 %v1827, %v2252
      %v2337 = vadd.f32 %v1830, %v2255
      %v2338 = vadd.f32 %v1835, %v2260
      %v2339 = vadd.f32 %v1838, %v2263
      %v2340 = vadd.f32 %v1843, %v2268
      %v2341 = vadd.f32 %v1846, %v2271
      %v2342 = vadd.f32 %v1851, %v2276
      %v2343 = vadd.f32 %v1854, %v2279
      %v2344 = vadd.f32 %v1859, %v2284
      %v2345 = vadd.f32 %v1862, %v2287
      %v2346 = vadd.f32 %v1867, %v2292
      %v2347 = vadd.f32 %v1870, %v2295
      %v2348 = vadd.f32 %v1875, %v2300
      %v2349 = vadd.f32 %v1878, %v2303
      %v2350 = vadd.f32 %v1883, %v2308
      %v2351 = vadd.f32 %v1886, %v2311
      %v2352 = vadd.f32 %v1891, %v2316
      %v2353 = vadd.f32 %v1894, %v2319
      %v2354 = vld [vmem:[%s787] sm:$0xf]
      %v2355 = vld [vmem:[%s787 + $0x4] sm:$0xf]
      %v2356 = vld [vmem:[%s787 + $0xc] sm:$0xf]
      %v2357 = vld [vmem:[%s787 + $0x10] sm:$0xf]
      %v2358 = vld [vmem:[%s787 + $0x18] sm:$0xf]
      %v2359 = vld [vmem:[%s787 + $0x1c] sm:$0xf]
      %v2360 = vld [vmem:[%s787 + $0x24] sm:$0xf]
      %v2361 = vld [vmem:[%s787 + $0x28] sm:$0xf]
      %v2362 = vld [vmem:[%s787 + $0x30] sm:$0xf]
      %v2363 = vld [vmem:[%s787 + $0x34] sm:$0xf]
      %v2364 = vld [vmem:[%s787 + $0x3c] sm:$0xf]
      %v2365 = vld [vmem:[%s787 + $0x40] sm:$0xf]
      %v2366 = vld [vmem:[%s787 + $0x48] sm:$0xf]
      %v2367 = vld [vmem:[%s787 + $0x4c] sm:$0xf]
      %v2368 = vld [vmem:[%s787 + $0x54] sm:$0xf]
      %v2369 = vld [vmem:[%s787 + $0x58] sm:$0xf]
      %v2370 = vld [vmem:[%s787 + $0x60] sm:$0xf]
      %v2371 = vld [vmem:[%s787 + $0x64] sm:$0xf]
      %v2372 = vld [vmem:[%s787 + $0x6c] sm:$0xf]
      %v2373 = vld [vmem:[%s787 + $0x70] sm:$0xf]
      %v2374 = vld [vmem:[%s787 + $0x78] sm:$0xf]
      %v2375 = vld [vmem:[%s787 + $0x7c] sm:$0xf]
      %v2376 = vld [vmem:[%s787 + $0x84] sm:$0xf]
      %v2377 = vld [vmem:[%s787 + $0x88] sm:$0xf]
      %v2378 = vld [vmem:[%s787 + $0x90] sm:$0xf]
      %v2379 = vld [vmem:[%s787 + $0x94] sm:$0xf]
      %v2380 = vld [vmem:[%s787 + $0x9c] sm:$0xf]
      %v2381 = vld [vmem:[%s787 + $0xa0] sm:$0xf]
      %v2382 = vld [vmem:[%s787 + $0xa8] sm:$0xf]
      %v2383 = vld [vmem:[%s787 + $0xac] sm:$0xf]
      %v2384 = vld [vmem:[%s787 + $0xb4] sm:$0xf]
      %v2385 = vld [vmem:[%s787 + $0xb8] sm:$0xf]
      %s2386 = scalar_lea.vmem %s1, 6
      %v2387 = vld [vmem:[%s2386] sm:$0x3]
      %v2420 = vunpack.c.l.b16 %v2354
      %v2421 = vunpack.c.l.b16 %v2355
      %v2422 = vunpack.c.l.b16 %v2356
      %v2423 = vunpack.c.l.b16 %v2357
      %v2424 = vunpack.c.l.b16 %v2358
      %v2425 = vunpack.c.l.b16 %v2359
      %v2426 = vunpack.c.l.b16 %v2360
      %v2427 = vunpack.c.l.b16 %v2361
      %v2428 = vunpack.c.l.b16 %v2362
      %v2429 = vunpack.c.l.b16 %v2363
      %v2430 = vunpack.c.l.b16 %v2364
      %v2431 = vunpack.c.l.b16 %v2365
      %v2432 = vunpack.c.l.b16 %v2366
      %v2433 = vunpack.c.l.b16 %v2367
      %v2434 = vunpack.c.l.b16 %v2368
      %v2435 = vunpack.c.l.b16 %v2369
      %v2436 = vunpack.c.l.b16 %v2370
      %v2437 = vunpack.c.l.b16 %v2371
      %v2438 = vunpack.c.l.b16 %v2372
      %v2439 = vunpack.c.l.b16 %v2373
      %v2440 = vunpack.c.l.b16 %v2374
      %v2441 = vunpack.c.l.b16 %v2375
      %v2442 = vunpack.c.l.b16 %v2376
      %v2443 = vunpack.c.l.b16 %v2377
      %v2444 = vunpack.c.l.b16 %v2378
      %v2445 = vunpack.c.l.b16 %v2379
      %v2446 = vunpack.c.l.b16 %v2380
      %v2447 = vunpack.c.l.b16 %v2381
      %v2448 = vunpack.c.l.b16 %v2382
      %v2449 = vunpack.c.l.b16 %v2383
      %v2450 = vunpack.c.l.b16 %v2384
      %v2451 = vunpack.c.l.b16 %v2385
      %v2452 = vpack.c.b16 %v2421, %v2420
      %v2453 = vpack.c.b16 %v2423, %v2422
      %v2454 = vpack.c.b16 %v2425, %v2424
      %v2455 = vpack.c.b16 %v2427, %v2426
      %v2456 = vpack.c.b16 %v2429, %v2428
      %v2457 = vpack.c.b16 %v2431, %v2430
      %v2458 = vpack.c.b16 %v2433, %v2432
      %v2459 = vpack.c.b16 %v2435, %v2434
      %v2460 = vpack.c.b16 %v2437, %v2436
      %v2461 = vpack.c.b16 %v2439, %v2438
      %v2462 = vpack.c.b16 %v2441, %v2440
      %v2463 = vpack.c.b16 %v2443, %v2442
      %v2464 = vpack.c.b16 %v2445, %v2444
      %v2465 = vpack.c.b16 %v2447, %v2446
      %v2466 = vpack.c.b16 %v2449, %v2448
      %v2467 = vpack.c.b16 %v2451, %v2450
      %v2469 = vsel %vm1391, %v2452, 0
      %v2472 = vsel %vm1391, %v2453, 0
      %v2475 = vsel %vm1391, %v2454, 0
      %v2478 = vsel %vm1391, %v2455, 0
      %v2481 = vsel %vm1391, %v2456, 0
      %v2484 = vsel %vm1391, %v2457, 0
      %v2487 = vsel %vm1391, %v2458, 0
      %v2490 = vsel %vm1391, %v2459, 0
      %v2493 = vsel %vm1391, %v2460, 0
      %v2496 = vsel %vm1391, %v2461, 0
      %v2499 = vsel %vm1391, %v2462, 0
      %v2502 = vsel %vm1391, %v2463, 0
      %v2505 = vsel %vm1391, %v2464, 0
      %v2508 = vsel %vm1391, %v2465, 0
      %v2511 = vsel %vm1391, %v2466, 0
      %v2514 = vsel %vm1391, %v2467, 0
      %v2517 = vsel %vm1440, %v2387, 0
      %2519 = vmatprep.subr.bf16.mxu0 0
      %2520 = vmatpush1.bf16.msra.mxu0 0
      %2521 = vmatprep.subr.bf16.mxu0 0
      %2522 = vmatpush1.bf16.msra.mxu0 0
      %2523 = vmatprep.subr.bf16.mxu0 0
      %2524 = vmatpush1.bf16.msra.mxu0 0
      %2525 = vmatprep.subr.bf16.mxu0 0
      %2526 = vmatpush1.bf16.msra.mxu0 0
      %2527 = vmatprep.subr.bf16.mxu0 0
      %2528 = vmatpush1.bf16.msra.mxu0 0
      %2529 = vmatprep.subr.bf16.mxu0 0
      %2530 = vmatpush1.bf16.msra.mxu0 0
      %2531 = vmatprep.subr.bf16.mxu0 0
      %2532 = vmatpush1.bf16.msra.mxu0 0
      %2533 = vmatprep.subr.bf16.mxu0 0
      %2534 = vmatpush1.bf16.msra.mxu0 %v2517
      %2535 = vmatprep.subr.bf16.mxu0 0
      %2536 = vmatpush2.bf16.msra.mxu0 0
      %2537 = vmatprep.subr.bf16.mxu0 0
      %2538 = vmatpush2.bf16.msra.mxu0 0
      %2539 = vmatprep.subr.bf16.mxu0 0
      %2540 = vmatpush2.bf16.msra.mxu0 0
      %2541 = vmatprep.subr.bf16.mxu0 0
      %2542 = vmatpush2.bf16.msra.mxu0 0
      %2543 = vmatprep.subr.bf16.mxu0 0
      %2544 = vmatpush2.bf16.msra.mxu0 0
      %2545 = vmatprep.subr.bf16.mxu0 0
      %2546 = vmatpush2.bf16.msra.mxu0 0
      %2547 = vmatprep.subr.bf16.mxu0 0
      %2548 = vmatpush2.bf16.msra.mxu0 0
      %2549 = vmatprep.subr.bf16.mxu0 0
      %2550 = vmatpush2.bf16.msra.mxu0 0
      %2551 = vmatprep.mubr.bf16.mxu0 0
      %2552 = vmatmul.mubr.bf16.gmra.mxu0 %v2469
      %v2553 = vpop.f32.mrf.mxu0
      %v2554 = vadd.f32 0.0, %v2553
      %v2555 = vpop.f32.mrf.mxu0
      %v2556 = vpop.f32.mrf.mxu0
      %v2557 = vadd.f32 0.0, %v2556
      %v2558 = vpop.f32.mrf.mxu0
      %2559 = vmatprep.mubr.bf16.mxu0 0
      %2560 = vmatmul.mubr.bf16.gmra.mxu0 %v2472
      %v2561 = vpop.f32.mrf.mxu0
      %v2562 = vadd.f32 0.0, %v2561
      %v2563 = vpop.f32.mrf.mxu0
      %v2564 = vpop.f32.mrf.mxu0
      %v2565 = vadd.f32 0.0, %v2564
      %v2566 = vpop.f32.mrf.mxu0
      %2567 = vmatprep.mubr.bf16.mxu0 0
      %2568 = vmatmul.mubr.bf16.gmra.mxu0 %v2475
      %v2569 = vpop.f32.mrf.mxu0
      %v2570 = vadd.f32 0.0, %v2569
      %v2571 = vpop.f32.mrf.mxu0
      %v2572 = vpop.f32.mrf.mxu0
      %v2573 = vadd.f32 0.0, %v2572
      %v2574 = vpop.f32.mrf.mxu0
      %2575 = vmatprep.mubr.bf16.mxu0 0
      %2576 = vmatmul.mubr.bf16.gmra.mxu0 %v2478
      %v2577 = vpop.f32.mrf.mxu0
      %v2578 = vadd.f32 0.0, %v2577
      %v2579 = vpop.f32.mrf.mxu0
      %v2580 = vpop.f32.mrf.mxu0
      %v2581 = vadd.f32 0.0, %v2580
      %v2582 = vpop.f32.mrf.mxu0
      %2583 = vmatprep.mubr.bf16.mxu0 0
      %2584 = vmatmul.mubr.bf16.gmra.mxu0 %v2481
      %v2585 = vpop.f32.mrf.mxu0
      %v2586 = vadd.f32 0.0, %v2585
      %v2587 = vpop.f32.mrf.mxu0
      %v2588 = vpop.f32.mrf.mxu0
      %v2589 = vadd.f32 0.0, %v2588
      %v2590 = vpop.f32.mrf.mxu0
      %2591 = vmatprep.mubr.bf16.mxu0 0
      %2592 = vmatmul.mubr.bf16.gmra.mxu0 %v2484
      %v2593 = vpop.f32.mrf.mxu0
      %v2594 = vadd.f32 0.0, %v2593
      %v2595 = vpop.f32.mrf.mxu0
      %v2596 = vpop.f32.mrf.mxu0
      %v2597 = vadd.f32 0.0, %v2596
      %v2598 = vpop.f32.mrf.mxu0
      %2599 = vmatprep.mubr.bf16.mxu0 0
      %2600 = vmatmul.mubr.bf16.gmra.mxu0 %v2487
      %v2601 = vpop.f32.mrf.mxu0
      %v2602 = vadd.f32 0.0, %v2601
      %v2603 = vpop.f32.mrf.mxu0
      %v2604 = vpop.f32.mrf.mxu0
      %v2605 = vadd.f32 0.0, %v2604
      %v2606 = vpop.f32.mrf.mxu0
      %2607 = vmatprep.mubr.bf16.mxu0 0
      %2608 = vmatmul.mubr.bf16.gmra.mxu0 %v2490
      %v2609 = vpop.f32.mrf.mxu0
      %v2610 = vadd.f32 0.0, %v2609
      %v2611 = vpop.f32.mrf.mxu0
      %v2612 = vpop.f32.mrf.mxu0
      %v2613 = vadd.f32 0.0, %v2612
      %v2614 = vpop.f32.mrf.mxu0
      %2615 = vmatprep.mubr.bf16.mxu0 0
      %2616 = vmatmul.mubr.bf16.gmra.mxu0 %v2493
      %v2617 = vpop.f32.mrf.mxu0
      %v2618 = vadd.f32 0.0, %v2617
      %v2619 = vpop.f32.mrf.mxu0
      %v2620 = vpop.f32.mrf.mxu0
      %v2621 = vadd.f32 0.0, %v2620
      %v2622 = vpop.f32.mrf.mxu0
      %2623 = vmatprep.mubr.bf16.mxu0 0
      %2624 = vmatmul.mubr.bf16.gmra.mxu0 %v2496
      %v2625 = vpop.f32.mrf.mxu0
      %v2626 = vadd.f32 0.0, %v2625
      %v2627 = vpop.f32.mrf.mxu0
      %v2628 = vpop.f32.mrf.mxu0
      %v2629 = vadd.f32 0.0, %v2628
      %v2630 = vpop.f32.mrf.mxu0
      %2631 = vmatprep.mubr.bf16.mxu0 0
      %2632 = vmatmul.mubr.bf16.gmra.mxu0 %v2499
      %v2633 = vpop.f32.mrf.mxu0
      %v2634 = vadd.f32 0.0, %v2633
      %v2635 = vpop.f32.mrf.mxu0
      %v2636 = vpop.f32.mrf.mxu0
      %v2637 = vadd.f32 0.0, %v2636
      %v2638 = vpop.f32.mrf.mxu0
      %2639 = vmatprep.mubr.bf16.mxu0 0
      %2640 = vmatmul.mubr.bf16.gmra.mxu0 %v2502
      %v2641 = vpop.f32.mrf.mxu0
      %v2642 = vadd.f32 0.0, %v2641
      %v2643 = vpop.f32.mrf.mxu0
      %v2644 = vpop.f32.mrf.mxu0
      %v2645 = vadd.f32 0.0, %v2644
      %v2646 = vpop.f32.mrf.mxu0
      %2647 = vmatprep.mubr.bf16.mxu0 0
      %2648 = vmatmul.mubr.bf16.gmra.mxu0 %v2505
      %v2649 = vpop.f32.mrf.mxu0
      %v2650 = vadd.f32 0.0, %v2649
      %v2651 = vpop.f32.mrf.mxu0
      %v2652 = vpop.f32.mrf.mxu0
      %v2653 = vadd.f32 0.0, %v2652
      %v2654 = vpop.f32.mrf.mxu0
      %2655 = vmatprep.mubr.bf16.mxu0 0
      %2656 = vmatmul.mubr.bf16.gmra.mxu0 %v2508
      %v2657 = vpop.f32.mrf.mxu0
      %v2658 = vadd.f32 0.0, %v2657
      %v2659 = vpop.f32.mrf.mxu0
      %v2660 = vpop.f32.mrf.mxu0
      %v2661 = vadd.f32 0.0, %v2660
      %v2662 = vpop.f32.mrf.mxu0
      %2663 = vmatprep.mubr.bf16.mxu0 0
      %2664 = vmatmul.mubr.bf16.gmra.mxu0 %v2511
      %v2665 = vpop.f32.mrf.mxu0
      %v2666 = vadd.f32 0.0, %v2665
      %v2667 = vpop.f32.mrf.mxu0
      %v2668 = vpop.f32.mrf.mxu0
      %v2669 = vadd.f32 0.0, %v2668
      %v2670 = vpop.f32.mrf.mxu0
      %2671 = vmatprep.mubr.bf16.mxu0 0
      %2672 = vmatmul.mubr.bf16.gmra.mxu0 %v2514
      %v2673 = vpop.f32.mrf.mxu0
      %v2674 = vadd.f32 0.0, %v2673
      %v2675 = vpop.f32.mrf.mxu0
      %v2676 = vpop.f32.mrf.mxu0
      %v2677 = vadd.f32 0.0, %v2676
      %v2678 = vpop.f32.mrf.mxu0
      %2679 = vdwg.mxu0
      %v2680 = vadd.f32 %v2322, %v2554
      %v2681 = vadd.f32 %v2323, %v2557
      %v2682 = vadd.f32 %v2324, %v2562
      %v2683 = vadd.f32 %v2325, %v2565
      %v2684 = vadd.f32 %v2326, %v2570
      %v2685 = vadd.f32 %v2327, %v2573
      %v2686 = vadd.f32 %v2328, %v2578
      %v2687 = vadd.f32 %v2329, %v2581
      %v2688 = vadd.f32 %v2330, %v2586
      %v2689 = vadd.f32 %v2331, %v2589
      %v2690 = vadd.f32 %v2332, %v2594
      %v2691 = vadd.f32 %v2333, %v2597
      %v2692 = vadd.f32 %v2334, %v2602
      %v2693 = vadd.f32 %v2335, %v2605
      %v2694 = vadd.f32 %v2336, %v2610
      %v2695 = vadd.f32 %v2337, %v2613
      %v2696 = vadd.f32 %v2338, %v2618
      %v2697 = vadd.f32 %v2339, %v2621
      %v2698 = vadd.f32 %v2340, %v2626
      %v2699 = vadd.f32 %v2341, %v2629
      %v2700 = vadd.f32 %v2342, %v2634
      %v2701 = vadd.f32 %v2343, %v2637
      %v2702 = vadd.f32 %v2344, %v2642
      %v2703 = vadd.f32 %v2345, %v2645
      %v2704 = vadd.f32 %v2346, %v2650
      %v2705 = vadd.f32 %v2347, %v2653
      %v2706 = vadd.f32 %v2348, %v2658
      %v2707 = vadd.f32 %v2349, %v2661
      %v2708 = vadd.f32 %v2350, %v2666
      %v2709 = vadd.f32 %v2351, %v2669
      %v2710 = vadd.f32 %v2352, %v2674
      %v2711 = vadd.f32 %v2353, %v2677
      %v2712 = vld [vmem:[%s787] sm:$0xf]
      %v2713 = vld [vmem:[%s787 + $0x4] sm:$0xf]
      %v2714 = vld [vmem:[%s787 + $0x8] sm:$0x1]
      %v2715 = vld [vmem:[%s787 + $0xc] sm:$0xf]
      %v2716 = vld [vmem:[%s787 + $0x10] sm:$0xf]
      %v2717 = vld [vmem:[%s787 + $0x14] sm:$0x1]
      %v2718 = vld [vmem:[%s787 + $0x18] sm:$0xf]
      %v2719 = vld [vmem:[%s787 + $0x1c] sm:$0xf]
      %v2720 = vld [vmem:[%s787 + $0x20] sm:$0x1]
      %v2721 = vld [vmem:[%s787 + $0x24] sm:$0xf]
      %v2722 = vld [vmem:[%s787 + $0x28] sm:$0xf]
      %v2723 = vld [vmem:[%s787 + $0x2c] sm:$0x1]
      %v2724 = vld [vmem:[%s787 + $0x30] sm:$0xf]
      %v2725 = vld [vmem:[%s787 + $0x34] sm:$0xf]
      %v2726 = vld [vmem:[%s787 + $0x38] sm:$0x1]
      %v2727 = vld [vmem:[%s787 + $0x3c] sm:$0xf]
      %v2728 = vld [vmem:[%s787 + $0x40] sm:$0xf]
      %v2729 = vld [vmem:[%s787 + $0x44] sm:$0x1]
      %v2730 = vld [vmem:[%s787 + $0x48] sm:$0xf]
      %v2731 = vld [vmem:[%s787 + $0x4c] sm:$0xf]
      %v2732 = vld [vmem:[%s787 + $0x50] sm:$0x1]
      %v2733 = vld [vmem:[%s787 + $0x54] sm:$0xf]
      %v2734 = vld [vmem:[%s787 + $0x58] sm:$0xf]
      %v2735 = vld [vmem:[%s787 + $0x5c] sm:$0x1]
      %v2736 = vld [vmem:[%s787 + $0x60] sm:$0xf]
      %v2737 = vld [vmem:[%s787 + $0x64] sm:$0xf]
      %v2738 = vld [vmem:[%s787 + $0x68] sm:$0x1]
      %v2739 = vld [vmem:[%s787 + $0x6c] sm:$0xf]
      %v2740 = vld [vmem:[%s787 + $0x70] sm:$0xf]
      %v2741 = vld [vmem:[%s787 + $0x74] sm:$0x1]
      %v2742 = vld [vmem:[%s787 + $0x78] sm:$0xf]
      %v2743 = vld [vmem:[%s787 + $0x7c] sm:$0xf]
      %v2744 = vld [vmem:[%s787 + $0x80] sm:$0x1]
      %v2745 = vld [vmem:[%s787 + $0x84] sm:$0xf]
      %v2746 = vld [vmem:[%s787 + $0x88] sm:$0xf]
      %v2747 = vld [vmem:[%s787 + $0x8c] sm:$0x1]
      %v2748 = vld [vmem:[%s787 + $0x90] sm:$0xf]
      %v2749 = vld [vmem:[%s787 + $0x94] sm:$0xf]
      %v2750 = vld [vmem:[%s787 + $0x98] sm:$0x1]
      %v2751 = vld [vmem:[%s787 + $0x9c] sm:$0xf]
      %v2752 = vld [vmem:[%s787 + $0xa0] sm:$0xf]
      %v2753 = vld [vmem:[%s787 + $0xa4] sm:$0x1]
      %v2754 = vld [vmem:[%s787 + $0xa8] sm:$0xf]
      %v2755 = vld [vmem:[%s787 + $0xac] sm:$0xf]
      %v2756 = vld [vmem:[%s787 + $0xb0] sm:$0x1]
      %v2757 = vld [vmem:[%s787 + $0xb4] sm:$0xf]
      %v2758 = vld [vmem:[%s787 + $0xb8] sm:$0xf]
      %v2759 = vld [vmem:[%s787 + $0xbc] sm:$0x1]
      %v2761 = vshrl.u32 %v2712, 16
      %v2763 = vrot.slane %v2761, 4
      %v2764 = vshll.u32 %v2712, 16
      %v2766 = vrot.slane %v2764, 5
      %v2767 = vor.u32 %v2763, %v2766
      %v2768 = vrot.slane %v2767, 4
      %v2770 = vshll.u32 %v2713, 16
      %v2772 = vrot.slane %v2770, 5
      %v2773 = vsel %vm956, %v2768, %v2772
      %v2774 = vshrl.u32 %v2713, 16
      %v2776 = vrot.slane %v2774, 4
      %v2777 = vor.u32 %v2776, %v2772
      %v2778 = vrot.slane %v2777, 4
      %v2780 = vshll.u32 %v2714, 16
      %v2782 = vrot.slane %v2780, 5
      %v2783 = vsel %vm956, %v2778, %v2782
      %v2785 = vshrl.u32 %v2715, 16
      %v2787 = vrot.slane %v2785, 4
      %v2788 = vshll.u32 %v2715, 16
      %v2790 = vrot.slane %v2788, 5
      %v2791 = vor.u32 %v2787, %v2790
      %v2792 = vrot.slane %v2791, 4
      %v2794 = vshll.u32 %v2716, 16
      %v2796 = vrot.slane %v2794, 5
      %v2797 = vsel %vm956, %v2792, %v2796
      %v2798 = vshrl.u32 %v2716, 16
      %v2800 = vrot.slane %v2798, 4
      %v2801 = vor.u32 %v2800, %v2796
      %v2802 = vrot.slane %v2801, 4
      %v2804 = vshll.u32 %v2717, 16
      %v2806 = vrot.slane %v2804, 5
      %v2807 = vsel %vm956, %v2802, %v2806
      %v2809 = vshrl.u32 %v2718, 16
      %v2811 = vrot.slane %v2809, 4
      %v2812 = vshll.u32 %v2718, 16
      %v2814 = vrot.slane %v2812, 5
      %v2815 = vor.u32 %v2811, %v2814
      %v2816 = vrot.slane %v2815, 4
      %v2818 = vshll.u32 %v2719, 16
      %v2820 = vrot.slane %v2818, 5
      %v2821 = vsel %vm956, %v2816, %v2820
      %v2822 = vshrl.u32 %v2719, 16
      %v2824 = vrot.slane %v2822, 4
      %v2825 = vor.u32 %v2824, %v2820
      %v2826 = vrot.slane %v2825, 4
      %v2828 = vshll.u32 %v2720, 16
      %v2830 = vrot.slane %v2828, 5
      %v2831 = vsel %vm956, %v2826, %v2830
      %v2833 = vshrl.u32 %v2721, 16
      %v2835 = vrot.slane %v2833, 4
      %v2836 = vshll.u32 %v2721, 16
      %v2838 = vrot.slane %v2836, 5
      %v2839 = vor.u32 %v2835, %v2838
      %v2840 = vrot.slane %v2839, 4
      %v2842 = vshll.u32 %v2722, 16
      %v2844 = vrot.slane %v2842, 5
      %v2845 = vsel %vm956, %v2840, %v2844
      %v2846 = vshrl.u32 %v2722, 16
      %v2848 = vrot.slane %v2846, 4
      %v2849 = vor.u32 %v2848, %v2844
      %v2850 = vrot.slane %v2849, 4
      %v2852 = vshll.u32 %v2723, 16
      %v2854 = vrot.slane %v2852, 5
      %v2855 = vsel %vm956, %v2850, %v2854
      %v2857 = vshrl.u32 %v2724, 16
      %v2859 = vrot.slane %v2857, 4
      %v2860 = vshll.u32 %v2724, 16
      %v2862 = vrot.slane %v2860, 5
      %v2863 = vor.u32 %v2859, %v2862
      %v2864 = vrot.slane %v2863, 4
      %v2866 = vshll.u32 %v2725, 16
      %v2868 = vrot.slane %v2866, 5
      %v2869 = vsel %vm956, %v2864, %v2868
      %v2870 = vshrl.u32 %v2725, 16
      %v2872 = vrot.slane %v2870, 4
      %v2873 = vor.u32 %v2872, %v2868
      %v2874 = vrot.slane %v2873, 4
      %v2876 = vshll.u32 %v2726, 16
      %v2878 = vrot.slane %v2876, 5
      %v2879 = vsel %vm956, %v2874, %v2878
      %v2881 = vshrl.u32 %v2727, 16
      %v2883 = vrot.slane %v2881, 4
      %v2884 = vshll.u32 %v2727, 16
      %v2886 = vrot.slane %v2884, 5
      %v2887 = vor.u32 %v2883, %v2886
      %v2888 = vrot.slane %v2887, 4
      %v2890 = vshll.u32 %v2728, 16
      %v2892 = vrot.slane %v2890, 5
      %v2893 = vsel %vm956, %v2888, %v2892
      %v2894 = vshrl.u32 %v2728, 16
      %v2896 = vrot.slane %v2894, 4
      %v2897 = vor.u32 %v2896, %v2892
      %v2898 = vrot.slane %v2897, 4
      %v2900 = vshll.u32 %v2729, 16
      %v2902 = vrot.slane %v2900, 5
      %v2903 = vsel %vm956, %v2898, %v2902
      %v2905 = vshrl.u32 %v2730, 16
      %v2907 = vrot.slane %v2905, 4
      %v2908 = vshll.u32 %v2730, 16
      %v2910 = vrot.slane %v2908, 5
      %v2911 = vor.u32 %v2907, %v2910
      %v2912 = vrot.slane %v2911, 4
      %v2914 = vshll.u32 %v2731, 16
      %v2916 = vrot.slane %v2914, 5
      %v2917 = vsel %vm956, %v2912, %v2916
      %v2918 = vshrl.u32 %v2731, 16
      %v2920 = vrot.slane %v2918, 4
      %v2921 = vor.u32 %v2920, %v2916
      %v2922 = vrot.slane %v2921, 4
      %v2924 = vshll.u32 %v2732, 16
      %v2926 = vrot.slane %v2924, 5
      %v2927 = vsel %vm956, %v2922, %v2926
      %v2929 = vshrl.u32 %v2733, 16
      %v2931 = vrot.slane %v2929, 4
      %v2932 = vshll.u32 %v2733, 16
      %v2934 = vrot.slane %v2932, 5
      %v2935 = vor.u32 %v2931, %v2934
      %v2936 = vrot.slane %v2935, 4
      %v2938 = vshll.u32 %v2734, 16
      %v2940 = vrot.slane %v2938, 5
      %v2941 = vsel %vm956, %v2936, %v2940
      %v2942 = vshrl.u32 %v2734, 16
      %v2944 = vrot.slane %v2942, 4
      %v2945 = vor.u32 %v2944, %v2940
      %v2946 = vrot.slane %v2945, 4
      %v2948 = vshll.u32 %v2735, 16
      %v2950 = vrot.slane %v2948, 5
      %v2951 = vsel %vm956, %v2946, %v2950
      %v2953 = vshrl.u32 %v2736, 16
      %v2955 = vrot.slane %v2953, 4
      %v2956 = vshll.u32 %v2736, 16
      %v2958 = vrot.slane %v2956, 5
      %v2959 = vor.u32 %v2955, %v2958
      %v2960 = vrot.slane %v2959, 4
      %v2962 = vshll.u32 %v2737, 16
      %v2964 = vrot.slane %v2962, 5
      %v2965 = vsel %vm956, %v2960, %v2964
      %v2966 = vshrl.u32 %v2737, 16
      %v2968 = vrot.slane %v2966, 4
      %v2969 = vor.u32 %v2968, %v2964
      %v2970 = vrot.slane %v2969, 4
      %v2972 = vshll.u32 %v2738, 16
      %v2974 = vrot.slane %v2972, 5
      %v2975 = vsel %vm956, %v2970, %v2974
      %v2977 = vshrl.u32 %v2739, 16
      %v2979 = vrot.slane %v2977, 4
      %v2980 = vshll.u32 %v2739, 16
      %v2982 = vrot.slane %v2980, 5
      %v2983 = vor.u32 %v2979, %v2982
      %v2984 = vrot.slane %v2983, 4
      %v2986 = vshll.u32 %v2740, 16
      %v2988 = vrot.slane %v2986, 5
      %v2989 = vsel %vm956, %v2984, %v2988
      %v2990 = vshrl.u32 %v2740, 16
      %v2992 = vrot.slane %v2990, 4
      %v2993 = vor.u32 %v2992, %v2988
      %v2994 = vrot.slane %v2993, 4
      %v2996 = vshll.u32 %v2741, 16
      %v2998 = vrot.slane %v2996, 5
      %v2999 = vsel %vm956, %v2994, %v2998
      %v3001 = vshrl.u32 %v2742, 16
      %v3003 = vrot.slane %v3001, 4
      %v3004 = vshll.u32 %v2742, 16
      %v3006 = vrot.slane %v3004, 5
      %v3007 = vor.u32 %v3003, %v3006
      %v3008 = vrot.slane %v3007, 4
      %v3010 = vshll.u32 %v2743, 16
      %v3012 = vrot.slane %v3010, 5
      %v3013 = vsel %vm956, %v3008, %v3012
      %v3014 = vshrl.u32 %v2743, 16
      %v3016 = vrot.slane %v3014, 4
      %v3017 = vor.u32 %v3016, %v3012
      %v3018 = vrot.slane %v3017, 4
      %v3020 = vshll.u32 %v2744, 16
      %v3022 = vrot.slane %v3020, 5
      %v3023 = vsel %vm956, %v3018, %v3022
      %v3025 = vshrl.u32 %v2745, 16
      %v3027 = vrot.slane %v3025, 4
      %v3028 = vshll.u32 %v2745, 16
      %v3030 = vrot.slane %v3028, 5
      %v3031 = vor.u32 %v3027, %v3030
      %v3032 = vrot.slane %v3031, 4
      %v3034 = vshll.u32 %v2746, 16
      %v3036 = vrot.slane %v3034, 5
      %v3037 = vsel %vm956, %v3032, %v3036
      %v3038 = vshrl.u32 %v2746, 16
      %v3040 = vrot.slane %v3038, 4
      %v3041 = vor.u32 %v3040, %v3036
      %v3042 = vrot.slane %v3041, 4
      %v3044 = vshll.u32 %v2747, 16
      %v3046 = vrot.slane %v3044, 5
      %v3047 = vsel %vm956, %v3042, %v3046
      %v3049 = vshrl.u32 %v2748, 16
      %v3051 = vrot.slane %v3049, 4
      %v3052 = vshll.u32 %v2748, 16
      %v3054 = vrot.slane %v3052, 5
      %v3055 = vor.u32 %v3051, %v3054
      %v3056 = vrot.slane %v3055, 4
      %v3058 = vshll.u32 %v2749, 16
      %v3060 = vrot.slane %v3058, 5
      %v3061 = vsel %vm956, %v3056, %v3060
      %v3062 = vshrl.u32 %v2749, 16
      %v3064 = vrot.slane %v3062, 4
      %v3065 = vor.u32 %v3064, %v3060
      %v3066 = vrot.slane %v3065, 4
      %v3068 = vshll.u32 %v2750, 16
      %v3070 = vrot.slane %v3068, 5
      %v3071 = vsel %vm956, %v3066, %v3070
      %v3073 = vshrl.u32 %v2751, 16
      %v3075 = vrot.slane %v3073, 4
      %v3076 = vshll.u32 %v2751, 16
      %v3078 = vrot.slane %v3076, 5
      %v3079 = vor.u32 %v3075, %v3078
      %v3080 = vrot.slane %v3079, 4
      %v3082 = vshll.u32 %v2752, 16
      %v3084 = vrot.slane %v3082, 5
      %v3085 = vsel %vm956, %v3080, %v3084
      %v3086 = vshrl.u32 %v2752, 16
      %v3088 = vrot.slane %v3086, 4
      %v3089 = vor.u32 %v3088, %v3084
      %v3090 = vrot.slane %v3089, 4
      %v3092 = vshll.u32 %v2753, 16
      %v3094 = vrot.slane %v3092, 5
      %v3095 = vsel %vm956, %v3090, %v3094
      %v3097 = vshrl.u32 %v2754, 16
      %v3099 = vrot.slane %v3097, 4
      %v3100 = vshll.u32 %v2754, 16
      %v3102 = vrot.slane %v3100, 5
      %v3103 = vor.u32 %v3099, %v3102
      %v3104 = vrot.slane %v3103, 4
      %v3106 = vshll.u32 %v2755, 16
      %v3108 = vrot.slane %v3106, 5
      %v3109 = vsel %vm956, %v3104, %v3108
      %v3110 = vshrl.u32 %v2755, 16
      %v3112 = vrot.slane %v3110, 4
      %v3113 = vor.u32 %v3112, %v3108
      %v3114 = vrot.slane %v3113, 4
      %v3116 = vshll.u32 %v2756, 16
      %v3118 = vrot.slane %v3116, 5
      %v3119 = vsel %vm956, %v3114, %v3118
      %v3121 = vshrl.u32 %v2757, 16
      %v3123 = vrot.slane %v3121, 4
      %v3124 = vshll.u32 %v2757, 16
      %v3126 = vrot.slane %v3124, 5
      %v3127 = vor.u32 %v3123, %v3126
      %v3128 = vrot.slane %v3127, 4
      %v3130 = vshll.u32 %v2758, 16
      %v3132 = vrot.slane %v3130, 5
      %v3133 = vsel %vm956, %v3128, %v3132
      %v3134 = vshrl.u32 %v2758, 16
      %v3136 = vrot.slane %v3134, 4
      %v3137 = vor.u32 %v3136, %v3132
      %v3138 = vrot.slane %v3137, 4
      %v3140 = vshll.u32 %v2759, 16
      %v3142 = vrot.slane %v3140, 5
      %v3143 = vsel %vm956, %v3138, %v3142
      %s3144 = scalar_lea.vmem %s1, 8
      %v3145 = vld [vmem:[%s3144] sm:$0x3]
      %v3146 = vunpack.c.l.b16 %v2773
      %v3147 = vunpack.c.l.b16 %v2783
      %v3148 = vunpack.c.l.b16 %v2797
      %v3149 = vunpack.c.l.b16 %v2807
      %v3150 = vunpack.c.l.b16 %v2821
      %v3151 = vunpack.c.l.b16 %v2831
      %v3152 = vunpack.c.l.b16 %v2845
      %v3153 = vunpack.c.l.b16 %v2855
      %v3154 = vunpack.c.l.b16 %v2869
      %v3155 = vunpack.c.l.b16 %v2879
      %v3156 = vunpack.c.l.b16 %v2893
      %v3157 = vunpack.c.l.b16 %v2903
      %v3158 = vunpack.c.l.b16 %v2917
      %v3159 = vunpack.c.l.b16 %v2927
      %v3160 = vunpack.c.l.b16 %v2941
      %v3161 = vunpack.c.l.b16 %v2951
      %v3162 = vunpack.c.l.b16 %v2965
      %v3163 = vunpack.c.l.b16 %v2975
      %v3164 = vunpack.c.l.b16 %v2989
      %v3165 = vunpack.c.l.b16 %v2999
      %v3166 = vunpack.c.l.b16 %v3013
      %v3167 = vunpack.c.l.b16 %v3023
      %v3168 = vunpack.c.l.b16 %v3037
      %v3169 = vunpack.c.l.b16 %v3047
      %v3170 = vunpack.c.l.b16 %v3061
      %v3171 = vunpack.c.l.b16 %v3071
      %v3172 = vunpack.c.l.b16 %v3085
      %v3173 = vunpack.c.l.b16 %v3095
      %v3174 = vunpack.c.l.b16 %v3109
      %v3175 = vunpack.c.l.b16 %v3119
      %v3176 = vunpack.c.l.b16 %v3133
      %v3177 = vunpack.c.l.b16 %v3143
      %v3178 = vpack.c.b16 %v3147, %v3146
      %v3179 = vpack.c.b16 %v3149, %v3148
      %v3180 = vpack.c.b16 %v3151, %v3150
      %v3181 = vpack.c.b16 %v3153, %v3152
      %v3182 = vpack.c.b16 %v3155, %v3154
      %v3183 = vpack.c.b16 %v3157, %v3156
      %v3184 = vpack.c.b16 %v3159, %v3158
      %v3185 = vpack.c.b16 %v3161, %v3160
      %v3186 = vpack.c.b16 %v3163, %v3162
      %v3187 = vpack.c.b16 %v3165, %v3164
      %v3188 = vpack.c.b16 %v3167, %v3166
      %v3189 = vpack.c.b16 %v3169, %v3168
      %v3190 = vpack.c.b16 %v3171, %v3170
      %v3191 = vpack.c.b16 %v3173, %v3172
      %v3192 = vpack.c.b16 %v3175, %v3174
      %v3193 = vpack.c.b16 %v3177, %v3176
      %v3195 = vsel %vm1391, %v3178, 0
      %v3198 = vsel %vm1391, %v3179, 0
      %v3201 = vsel %vm1391, %v3180, 0
      %v3204 = vsel %vm1391, %v3181, 0
      %v3207 = vsel %vm1391, %v3182, 0
      %v3210 = vsel %vm1391, %v3183, 0
      %v3213 = vsel %vm1391, %v3184, 0
      %v3216 = vsel %vm1391, %v3185, 0
      %v3219 = vsel %vm1391, %v3186, 0
      %v3222 = vsel %vm1391, %v3187, 0
      %v3225 = vsel %vm1391, %v3188, 0
      %v3228 = vsel %vm1391, %v3189, 0
      %v3231 = vsel %vm1391, %v3190, 0
      %v3234 = vsel %vm1391, %v3191, 0
      %v3237 = vsel %vm1391, %v3192, 0
      %v3240 = vsel %vm1391, %v3193, 0
      %v3243 = vsel %vm1440, %v3145, 0
      %3245 = vmatprep.subr.bf16.mxu0 0
      %3246 = vmatpush1.bf16.msra.mxu0 0
      %3247 = vmatprep.subr.bf16.mxu0 0
      %3248 = vmatpush1.bf16.msra.mxu0 0
      %3249 = vmatprep.subr.bf16.mxu0 0
      %3250 = vmatpush1.bf16.msra.mxu0 0
      %3251 = vmatprep.subr.bf16.mxu0 0
      %3252 = vmatpush1.bf16.msra.mxu0 0
      %3253 = vmatprep.subr.bf16.mxu0 0
      %3254 = vmatpush1.bf16.msra.mxu0 0
      %3255 = vmatprep.subr.bf16.mxu0 0
      %3256 = vmatpush1.bf16.msra.mxu0 0
      %3257 = vmatprep.subr.bf16.mxu0 0
      %3258 = vmatpush1.bf16.msra.mxu0 0
      %3259 = vmatprep.subr.bf16.mxu0 0
      %3260 = vmatpush1.bf16.msra.mxu0 %v3243
      %3261 = vmatprep.subr.bf16.mxu0 0
      %3262 = vmatpush2.bf16.msra.mxu0 0
      %3263 = vmatprep.subr.bf16.mxu0 0
      %3264 = vmatpush2.bf16.msra.mxu0 0
      %3265 = vmatprep.subr.bf16.mxu0 0
      %3266 = vmatpush2.bf16.msra.mxu0 0
      %3267 = vmatprep.subr.bf16.mxu0 0
      %3268 = vmatpush2.bf16.msra.mxu0 0
      %3269 = vmatprep.subr.bf16.mxu0 0
      %3270 = vmatpush2.bf16.msra.mxu0 0
      %3271 = vmatprep.subr.bf16.mxu0 0
      %3272 = vmatpush2.bf16.msra.mxu0 0
      %3273 = vmatprep.subr.bf16.mxu0 0
      %3274 = vmatpush2.bf16.msra.mxu0 0
      %3275 = vmatprep.subr.bf16.mxu0 0
      %3276 = vmatpush2.bf16.msra.mxu0 0
      %3277 = vmatprep.mubr.bf16.mxu0 0
      %3278 = vmatmul.mubr.bf16.gmra.mxu0 %v3195
      %v3279 = vpop.f32.mrf.mxu0
      %v3280 = vadd.f32 0.0, %v3279
      %v3281 = vpop.f32.mrf.mxu0
      %v3282 = vpop.f32.mrf.mxu0
      %v3283 = vadd.f32 0.0, %v3282
      %v3284 = vpop.f32.mrf.mxu0
      %3285 = vmatprep.mubr.bf16.mxu0 0
      %3286 = vmatmul.mubr.bf16.gmra.mxu0 %v3198
      %v3287 = vpop.f32.mrf.mxu0
      %v3288 = vadd.f32 0.0, %v3287
      %v3289 = vpop.f32.mrf.mxu0
      %v3290 = vpop.f32.mrf.mxu0
      %v3291 = vadd.f32 0.0, %v3290
      %v3292 = vpop.f32.mrf.mxu0
      %3293 = vmatprep.mubr.bf16.mxu0 0
      %3294 = vmatmul.mubr.bf16.gmra.mxu0 %v3201
      %v3295 = vpop.f32.mrf.mxu0
      %v3296 = vadd.f32 0.0, %v3295
      %v3297 = vpop.f32.mrf.mxu0
      %v3298 = vpop.f32.mrf.mxu0
      %v3299 = vadd.f32 0.0, %v3298
      %v3300 = vpop.f32.mrf.mxu0
      %3301 = vmatprep.mubr.bf16.mxu0 0
      %3302 = vmatmul.mubr.bf16.gmra.mxu0 %v3204
      %v3303 = vpop.f32.mrf.mxu0
      %v3304 = vadd.f32 0.0, %v3303
      %v3305 = vpop.f32.mrf.mxu0
      %v3306 = vpop.f32.mrf.mxu0
      %v3307 = vadd.f32 0.0, %v3306
      %v3308 = vpop.f32.mrf.mxu0
      %3309 = vmatprep.mubr.bf16.mxu0 0
      %3310 = vmatmul.mubr.bf16.gmra.mxu0 %v3207
      %v3311 = vpop.f32.mrf.mxu0
      %v3312 = vadd.f32 0.0, %v3311
      %v3313 = vpop.f32.mrf.mxu0
      %v3314 = vpop.f32.mrf.mxu0
      %v3315 = vadd.f32 0.0, %v3314
      %v3316 = vpop.f32.mrf.mxu0
      %3317 = vmatprep.mubr.bf16.mxu0 0
      %3318 = vmatmul.mubr.bf16.gmra.mxu0 %v3210
      %v3319 = vpop.f32.mrf.mxu0
      %v3320 = vadd.f32 0.0, %v3319
      %v3321 = vpop.f32.mrf.mxu0
      %v3322 = vpop.f32.mrf.mxu0
      %v3323 = vadd.f32 0.0, %v3322
      %v3324 = vpop.f32.mrf.mxu0
      %3325 = vmatprep.mubr.bf16.mxu0 0
      %3326 = vmatmul.mubr.bf16.gmra.mxu0 %v3213
      %v3327 = vpop.f32.mrf.mxu0
      %v3328 = vadd.f32 0.0, %v3327
      %v3329 = vpop.f32.mrf.mxu0
      %v3330 = vpop.f32.mrf.mxu0
      %v3331 = vadd.f32 0.0, %v3330
      %v3332 = vpop.f32.mrf.mxu0
      %3333 = vmatprep.mubr.bf16.mxu0 0
      %3334 = vmatmul.mubr.bf16.gmra.mxu0 %v3216
      %v3335 = vpop.f32.mrf.mxu0
      %v3336 = vadd.f32 0.0, %v3335
      %v3337 = vpop.f32.mrf.mxu0
      %v3338 = vpop.f32.mrf.mxu0
      %v3339 = vadd.f32 0.0, %v3338
      %v3340 = vpop.f32.mrf.mxu0
      %3341 = vmatprep.mubr.bf16.mxu0 0
      %3342 = vmatmul.mubr.bf16.gmra.mxu0 %v3219
      %v3343 = vpop.f32.mrf.mxu0
      %v3344 = vadd.f32 0.0, %v3343
      %v3345 = vpop.f32.mrf.mxu0
      %v3346 = vpop.f32.mrf.mxu0
      %v3347 = vadd.f32 0.0, %v3346
      %v3348 = vpop.f32.mrf.mxu0
      %3349 = vmatprep.mubr.bf16.mxu0 0
      %3350 = vmatmul.mubr.bf16.gmra.mxu0 %v3222
      %v3351 = vpop.f32.mrf.mxu0
      %v3352 = vadd.f32 0.0, %v3351
      %v3353 = vpop.f32.mrf.mxu0
      %v3354 = vpop.f32.mrf.mxu0
      %v3355 = vadd.f32 0.0, %v3354
      %v3356 = vpop.f32.mrf.mxu0
      %3357 = vmatprep.mubr.bf16.mxu0 0
      %3358 = vmatmul.mubr.bf16.gmra.mxu0 %v3225
      %v3359 = vpop.f32.mrf.mxu0
      %v3360 = vadd.f32 0.0, %v3359
      %v3361 = vpop.f32.mrf.mxu0
      %v3362 = vpop.f32.mrf.mxu0
      %v3363 = vadd.f32 0.0, %v3362
      %v3364 = vpop.f32.mrf.mxu0
      %3365 = vmatprep.mubr.bf16.mxu0 0
      %3366 = vmatmul.mubr.bf16.gmra.mxu0 %v3228
      %v3367 = vpop.f32.mrf.mxu0
      %v3368 = vadd.f32 0.0, %v3367
      %v3369 = vpop.f32.mrf.mxu0
      %v3370 = vpop.f32.mrf.mxu0
      %v3371 = vadd.f32 0.0, %v3370
      %v3372 = vpop.f32.mrf.mxu0
      %3373 = vmatprep.mubr.bf16.mxu0 0
      %3374 = vmatmul.mubr.bf16.gmra.mxu0 %v3231
      %v3375 = vpop.f32.mrf.mxu0
      %v3376 = vadd.f32 0.0, %v3375
      %v3377 = vpop.f32.mrf.mxu0
      %v3378 = vpop.f32.mrf.mxu0
      %v3379 = vadd.f32 0.0, %v3378
      %v3380 = vpop.f32.mrf.mxu0
      %3381 = vmatprep.mubr.bf16.mxu0 0
      %3382 = vmatmul.mubr.bf16.gmra.mxu0 %v3234
      %v3383 = vpop.f32.mrf.mxu0
      %v3384 = vadd.f32 0.0, %v3383
      %v3385 = vpop.f32.mrf.mxu0
      %v3386 = vpop.f32.mrf.mxu0
      %v3387 = vadd.f32 0.0, %v3386
      %v3388 = vpop.f32.mrf.mxu0
      %3389 = vmatprep.mubr.bf16.mxu0 0
      %3390 = vmatmul.mubr.bf16.gmra.mxu0 %v3237
      %v3391 = vpop.f32.mrf.mxu0
      %v3392 = vadd.f32 0.0, %v3391
      %v3393 = vpop.f32.mrf.mxu0
      %v3394 = vpop.f32.mrf.mxu0
      %v3395 = vadd.f32 0.0, %v3394
      %v3396 = vpop.f32.mrf.mxu0
      %3397 = vmatprep.mubr.bf16.mxu0 0
      %3398 = vmatmul.mubr.bf16.gmra.mxu0 %v3240
      %v3399 = vpop.f32.mrf.mxu0
      %v3400 = vadd.f32 0.0, %v3399
      %v3401 = vpop.f32.mrf.mxu0
      %v3402 = vpop.f32.mrf.mxu0
      %v3403 = vadd.f32 0.0, %v3402
      %v3404 = vpop.f32.mrf.mxu0
      %3405 = vdwg.mxu0
      %v3406 = vadd.f32 %v2680, %v3280
      %v3407 = vadd.f32 %v2681, %v3283
      %v3408 = vadd.f32 %v2682, %v3288
      %v3409 = vadd.f32 %v2683, %v3291
      %v3410 = vadd.f32 %v2684, %v3296
      %v3411 = vadd.f32 %v2685, %v3299
      %v3412 = vadd.f32 %v2686, %v3304
      %v3413 = vadd.f32 %v2687, %v3307
      %v3414 = vadd.f32 %v2688, %v3312
      %v3415 = vadd.f32 %v2689, %v3315
      %v3416 = vadd.f32 %v2690, %v3320
      %v3417 = vadd.f32 %v2691, %v3323
      %v3418 = vadd.f32 %v2692, %v3328
      %v3419 = vadd.f32 %v2693, %v3331
      %v3420 = vadd.f32 %v2694, %v3336
      %v3421 = vadd.f32 %v2695, %v3339
      %v3422 = vadd.f32 %v2696, %v3344
      %v3423 = vadd.f32 %v2697, %v3347
      %v3424 = vadd.f32 %v2698, %v3352
      %v3425 = vadd.f32 %v2699, %v3355
      %v3426 = vadd.f32 %v2700, %v3360
      %v3427 = vadd.f32 %v2701, %v3363
      %v3428 = vadd.f32 %v2702, %v3368
      %v3429 = vadd.f32 %v2703, %v3371
      %v3430 = vadd.f32 %v2704, %v3376
      %v3431 = vadd.f32 %v2705, %v3379
      %v3432 = vadd.f32 %v2706, %v3384
      %v3433 = vadd.f32 %v2707, %v3387
      %v3434 = vadd.f32 %v2708, %v3392
      %v3435 = vadd.f32 %v2709, %v3395
      %v3436 = vadd.f32 %v2710, %v3400
      %v3437 = vadd.f32 %v2711, %v3403
      %v3438 = vld [vmem:[%s787] sm:$0xe]
      %v3439 = vld [vmem:[%s787 + $0xc] sm:$0xe]
      %v3440 = vld [vmem:[%s787 + $0x18] sm:$0xe]
      %v3441 = vld [vmem:[%s787 + $0x24] sm:$0xe]
      %v3442 = vld [vmem:[%s787 + $0x30] sm:$0xe]
      %v3443 = vld [vmem:[%s787 + $0x3c] sm:$0xe]
      %v3444 = vld [vmem:[%s787 + $0x48] sm:$0xe]
      %v3445 = vld [vmem:[%s787 + $0x54] sm:$0xe]
      %v3446 = vld [vmem:[%s787 + $0x60] sm:$0xe]
      %v3447 = vld [vmem:[%s787 + $0x6c] sm:$0xe]
      %v3448 = vld [vmem:[%s787 + $0x78] sm:$0xe]
      %v3449 = vld [vmem:[%s787 + $0x84] sm:$0xe]
      %v3450 = vld [vmem:[%s787 + $0x90] sm:$0xe]
      %v3451 = vld [vmem:[%s787 + $0x9c] sm:$0xe]
      %v3452 = vld [vmem:[%s787 + $0xa8] sm:$0xe]
      %v3453 = vld [vmem:[%s787 + $0xb4] sm:$0xe]
      %v3502 = vrot.slane %v3438, 5
      %v3503 = vrot.slane %v3502, 4
      %v3504 = vrot.slane %v2713, 5
      %v3505 = vsel %vm1947, %v3503, %v3504
      %v3506 = vrot.slane %v3504, 4
      %v3507 = vrot.slane %v2714, 5
      %v3508 = vsel %vm1947, %v3506, %v3507
      %v3509 = vrot.slane %v3439, 5
      %v3510 = vrot.slane %v3509, 4
      %v3511 = vrot.slane %v2716, 5
      %v3512 = vsel %vm1947, %v3510, %v3511
      %v3513 = vrot.slane %v3511, 4
      %v3514 = vrot.slane %v2717, 5
      %v3515 = vsel %vm1947, %v3513, %v3514
      %v3516 = vrot.slane %v3440, 5
      %v3517 = vrot.slane %v3516, 4
      %v3518 = vrot.slane %v2719, 5
      %v3519 = vsel %vm1947, %v3517, %v3518
      %v3520 = vrot.slane %v3518, 4
      %v3521 = vrot.slane %v2720, 5
      %v3522 = vsel %vm1947, %v3520, %v3521
      %v3523 = vrot.slane %v3441, 5
      %v3524 = vrot.slane %v3523, 4
      %v3525 = vrot.slane %v2722, 5
      %v3526 = vsel %vm1947, %v3524, %v3525
      %v3527 = vrot.slane %v3525, 4
      %v3528 = vrot.slane %v2723, 5
      %v3529 = vsel %vm1947, %v3527, %v3528
      %v3530 = vrot.slane %v3442, 5
      %v3531 = vrot.slane %v3530, 4
      %v3532 = vrot.slane %v2725, 5
      %v3533 = vsel %vm1947, %v3531, %v3532
      %v3534 = vrot.slane %v3532, 4
      %v3535 = vrot.slane %v2726, 5
      %v3536 = vsel %vm1947, %v3534, %v3535
      %v3537 = vrot.slane %v3443, 5
      %v3538 = vrot.slane %v3537, 4
      %v3539 = vrot.slane %v2728, 5
      %v3540 = vsel %vm1947, %v3538, %v3539
      %v3541 = vrot.slane %v3539, 4
      %v3542 = vrot.slane %v2729, 5
      %v3543 = vsel %vm1947, %v3541, %v3542
      %v3544 = vrot.slane %v3444, 5
      %v3545 = vrot.slane %v3544, 4
      %v3546 = vrot.slane %v2731, 5
      %v3547 = vsel %vm1947, %v3545, %v3546
      %v3548 = vrot.slane %v3546, 4
      %v3549 = vrot.slane %v2732, 5
      %v3550 = vsel %vm1947, %v3548, %v3549
      %v3551 = vrot.slane %v3445, 5
      %v3552 = vrot.slane %v3551, 4
      %v3553 = vrot.slane %v2734, 5
      %v3554 = vsel %vm1947, %v3552, %v3553
      %v3555 = vrot.slane %v3553, 4
      %v3556 = vrot.slane %v2735, 5
      %v3557 = vsel %vm1947, %v3555, %v3556
      %v3558 = vrot.slane %v3446, 5
      %v3559 = vrot.slane %v3558, 4
      %v3560 = vrot.slane %v2737, 5
      %v3561 = vsel %vm1947, %v3559, %v3560
      %v3562 = vrot.slane %v3560, 4
      %v3563 = vrot.slane %v2738, 5
      %v3564 = vsel %vm1947, %v3562, %v3563
      %v3565 = vrot.slane %v3447, 5
      %v3566 = vrot.slane %v3565, 4
      %v3567 = vrot.slane %v2740, 5
      %v3568 = vsel %vm1947, %v3566, %v3567
      %v3569 = vrot.slane %v3567, 4
      %v3570 = vrot.slane %v2741, 5
      %v3571 = vsel %vm1947, %v3569, %v3570
      %v3572 = vrot.slane %v3448, 5
      %v3573 = vrot.slane %v3572, 4
      %v3574 = vrot.slane %v2743, 5
      %v3575 = vsel %vm1947, %v3573, %v3574
      %v3576 = vrot.slane %v3574, 4
      %v3577 = vrot.slane %v2744, 5
      %v3578 = vsel %vm1947, %v3576, %v3577
      %v3579 = vrot.slane %v3449, 5
      %v3580 = vrot.slane %v3579, 4
      %v3581 = vrot.slane %v2746, 5
      %v3582 = vsel %vm1947, %v3580, %v3581
      %v3583 = vrot.slane %v3581, 4
      %v3584 = vrot.slane %v2747, 5
      %v3585 = vsel %vm1947, %v3583, %v3584
      %v3586 = vrot.slane %v3450, 5
      %v3587 = vrot.slane %v3586, 4
      %v3588 = vrot.slane %v2749, 5
      %v3589 = vsel %vm1947, %v3587, %v3588
      %v3590 = vrot.slane %v3588, 4
      %v3591 = vrot.slane %v2750, 5
      %v3592 = vsel %vm1947, %v3590, %v3591
      %v3593 = vrot.slane %v3451, 5
      %v3594 = vrot.slane %v3593, 4
      %v3595 = vrot.slane %v2752, 5
      %v3596 = vsel %vm1947, %v3594, %v3595
      %v3597 = vrot.slane %v3595, 4
      %v3598 = vrot.slane %v2753, 5
      %v3599 = vsel %vm1947, %v3597, %v3598
      %v3600 = vrot.slane %v3452, 5
      %v3601 = vrot.slane %v3600, 4
      %v3602 = vrot.slane %v2755, 5
      %v3603 = vsel %vm1947, %v3601, %v3602
      %v3604 = vrot.slane %v3602, 4
      %v3605 = vrot.slane %v2756, 5
      %v3606 = vsel %vm1947, %v3604, %v3605
      %v3607 = vrot.slane %v3453, 5
      %v3608 = vrot.slane %v3607, 4
      %v3609 = vrot.slane %v2758, 5
      %v3610 = vsel %vm1947, %v3608, %v3609
      %v3611 = vrot.slane %v3609, 4
      %v3612 = vrot.slane %v2759, 5
      %v3613 = vsel %vm1947, %v3611, %v3612
      %s3614 = scalar_lea.vmem %s1, 10
      %v3615 = vld [vmem:[%s3614] sm:$0x3]
      %v3616 = vunpack.c.l.b16 %v3505
      %v3617 = vunpack.c.l.b16 %v3508
      %v3618 = vunpack.c.l.b16 %v3512
      %v3619 = vunpack.c.l.b16 %v3515
      %v3620 = vunpack.c.l.b16 %v3519
      %v3621 = vunpack.c.l.b16 %v3522
      %v3622 = vunpack.c.l.b16 %v3526
      %v3623 = vunpack.c.l.b16 %v3529
      %v3624 = vunpack.c.l.b16 %v3533
      %v3625 = vunpack.c.l.b16 %v3536
      %v3626 = vunpack.c.l.b16 %v3540
      %v3627 = vunpack.c.l.b16 %v3543
      %v3628 = vunpack.c.l.b16 %v3547
      %v3629 = vunpack.c.l.b16 %v3550
      %v3630 = vunpack.c.l.b16 %v3554
      %v3631 = vunpack.c.l.b16 %v3557
      %v3632 = vunpack.c.l.b16 %v3561
      %v3633 = vunpack.c.l.b16 %v3564
      %v3634 = vunpack.c.l.b16 %v3568
      %v3635 = vunpack.c.l.b16 %v3571
      %v3636 = vunpack.c.l.b16 %v3575
      %v3637 = vunpack.c.l.b16 %v3578
      %v3638 = vunpack.c.l.b16 %v3582
      %v3639 = vunpack.c.l.b16 %v3585
      %v3640 = vunpack.c.l.b16 %v3589
      %v3641 = vunpack.c.l.b16 %v3592
      %v3642 = vunpack.c.l.b16 %v3596
      %v3643 = vunpack.c.l.b16 %v3599
      %v3644 = vunpack.c.l.b16 %v3603
      %v3645 = vunpack.c.l.b16 %v3606
      %v3646 = vunpack.c.l.b16 %v3610
      %v3647 = vunpack.c.l.b16 %v3613
      %v3648 = vpack.c.b16 %v3617, %v3616
      %v3649 = vpack.c.b16 %v3619, %v3618
      %v3650 = vpack.c.b16 %v3621, %v3620
      %v3651 = vpack.c.b16 %v3623, %v3622
      %v3652 = vpack.c.b16 %v3625, %v3624
      %v3653 = vpack.c.b16 %v3627, %v3626
      %v3654 = vpack.c.b16 %v3629, %v3628
      %v3655 = vpack.c.b16 %v3631, %v3630
      %v3656 = vpack.c.b16 %v3633, %v3632
      %v3657 = vpack.c.b16 %v3635, %v3634
      %v3658 = vpack.c.b16 %v3637, %v3636
      %v3659 = vpack.c.b16 %v3639, %v3638
      %v3660 = vpack.c.b16 %v3641, %v3640
      %v3661 = vpack.c.b16 %v3643, %v3642
      %v3662 = vpack.c.b16 %v3645, %v3644
      %v3663 = vpack.c.b16 %v3647, %v3646
      %v3665 = vsel %vm1391, %v3648, 0
      %v3668 = vsel %vm1391, %v3649, 0
      %v3671 = vsel %vm1391, %v3650, 0
      %v3674 = vsel %vm1391, %v3651, 0
      %v3677 = vsel %vm1391, %v3652, 0
      %v3680 = vsel %vm1391, %v3653, 0
      %v3683 = vsel %vm1391, %v3654, 0
      %v3686 = vsel %vm1391, %v3655, 0
      %v3689 = vsel %vm1391, %v3656, 0
      %v3692 = vsel %vm1391, %v3657, 0
      %v3695 = vsel %vm1391, %v3658, 0
      %v3698 = vsel %vm1391, %v3659, 0
      %v3701 = vsel %vm1391, %v3660, 0
      %v3704 = vsel %vm1391, %v3661, 0
      %v3707 = vsel %vm1391, %v3662, 0
      %v3710 = vsel %vm1391, %v3663, 0
      %v3713 = vsel %vm1440, %v3615, 0
      %3715 = vmatprep.subr.bf16.mxu0 0
      %3716 = vmatpush1.bf16.msra.mxu0 0
      %3717 = vmatprep.subr.bf16.mxu0 0
      %3718 = vmatpush1.bf16.msra.mxu0 0
      %3719 = vmatprep.subr.bf16.mxu0 0
      %3720 = vmatpush1.bf16.msra.mxu0 0
      %3721 = vmatprep.subr.bf16.mxu0 0
      %3722 = vmatpush1.bf16.msra.mxu0 0
      %3723 = vmatprep.subr.bf16.mxu0 0
      %3724 = vmatpush1.bf16.msra.mxu0 0
      %3725 = vmatprep.subr.bf16.mxu0 0
      %3726 = vmatpush1.bf16.msra.mxu0 0
      %3727 = vmatprep.subr.bf16.mxu0 0
      %3728 = vmatpush1.bf16.msra.mxu0 0
      %3729 = vmatprep.subr.bf16.mxu0 0
      %3730 = vmatpush1.bf16.msra.mxu0 %v3713
      %3731 = vmatprep.subr.bf16.mxu0 0
      %3732 = vmatpush2.bf16.msra.mxu0 0
      %3733 = vmatprep.subr.bf16.mxu0 0
      %3734 = vmatpush2.bf16.msra.mxu0 0
      %3735 = vmatprep.subr.bf16.mxu0 0
      %3736 = vmatpush2.bf16.msra.mxu0 0
      %3737 = vmatprep.subr.bf16.mxu0 0
      %3738 = vmatpush2.bf16.msra.mxu0 0
      %3739 = vmatprep.subr.bf16.mxu0 0
      %3740 = vmatpush2.bf16.msra.mxu0 0
      %3741 = vmatprep.subr.bf16.mxu0 0
      %3742 = vmatpush2.bf16.msra.mxu0 0
      %3743 = vmatprep.subr.bf16.mxu0 0
      %3744 = vmatpush2.bf16.msra.mxu0 0
      %3745 = vmatprep.subr.bf16.mxu0 0
      %3746 = vmatpush2.bf16.msra.mxu0 0
      %3747 = vmatprep.mubr.bf16.mxu0 0
      %3748 = vmatmul.mubr.bf16.gmra.mxu0 %v3665
      %v3749 = vpop.f32.mrf.mxu0
      %v3750 = vadd.f32 0.0, %v3749
      %v3751 = vpop.f32.mrf.mxu0
      %v3752 = vpop.f32.mrf.mxu0
      %v3753 = vadd.f32 0.0, %v3752
      %v3754 = vpop.f32.mrf.mxu0
      %3755 = vmatprep.mubr.bf16.mxu0 0
      %3756 = vmatmul.mubr.bf16.gmra.mxu0 %v3668
      %v3757 = vpop.f32.mrf.mxu0
      %v3758 = vadd.f32 0.0, %v3757
      %v3759 = vpop.f32.mrf.mxu0
      %v3760 = vpop.f32.mrf.mxu0
      %v3761 = vadd.f32 0.0, %v3760
      %v3762 = vpop.f32.mrf.mxu0
      %3763 = vmatprep.mubr.bf16.mxu0 0
      %3764 = vmatmul.mubr.bf16.gmra.mxu0 %v3671
      %v3765 = vpop.f32.mrf.mxu0
      %v3766 = vadd.f32 0.0, %v3765
      %v3767 = vpop.f32.mrf.mxu0
      %v3768 = vpop.f32.mrf.mxu0
      %v3769 = vadd.f32 0.0, %v3768
      %v3770 = vpop.f32.mrf.mxu0
      %3771 = vmatprep.mubr.bf16.mxu0 0
      %3772 = vmatmul.mubr.bf16.gmra.mxu0 %v3674
      %v3773 = vpop.f32.mrf.mxu0
      %v3774 = vadd.f32 0.0, %v3773
      %v3775 = vpop.f32.mrf.mxu0
      %v3776 = vpop.f32.mrf.mxu0
      %v3777 = vadd.f32 0.0, %v3776
      %v3778 = vpop.f32.mrf.mxu0
      %3779 = vmatprep.mubr.bf16.mxu0 0
      %3780 = vmatmul.mubr.bf16.gmra.mxu0 %v3677
      %v3781 = vpop.f32.mrf.mxu0
      %v3782 = vadd.f32 0.0, %v3781
      %v3783 = vpop.f32.mrf.mxu0
      %v3784 = vpop.f32.mrf.mxu0
      %v3785 = vadd.f32 0.0, %v3784
      %v3786 = vpop.f32.mrf.mxu0
      %3787 = vmatprep.mubr.bf16.mxu0 0
      %3788 = vmatmul.mubr.bf16.gmra.mxu0 %v3680
      %v3789 = vpop.f32.mrf.mxu0
      %v3790 = vadd.f32 0.0, %v3789
      %v3791 = vpop.f32.mrf.mxu0
      %v3792 = vpop.f32.mrf.mxu0
      %v3793 = vadd.f32 0.0, %v3792
      %v3794 = vpop.f32.mrf.mxu0
      %3795 = vmatprep.mubr.bf16.mxu0 0
      %3796 = vmatmul.mubr.bf16.gmra.mxu0 %v3683
      %v3797 = vpop.f32.mrf.mxu0
      %v3798 = vadd.f32 0.0, %v3797
      %v3799 = vpop.f32.mrf.mxu0
      %v3800 = vpop.f32.mrf.mxu0
      %v3801 = vadd.f32 0.0, %v3800
      %v3802 = vpop.f32.mrf.mxu0
      %3803 = vmatprep.mubr.bf16.mxu0 0
      %3804 = vmatmul.mubr.bf16.gmra.mxu0 %v3686
      %v3805 = vpop.f32.mrf.mxu0
      %v3806 = vadd.f32 0.0, %v3805
      %v3807 = vpop.f32.mrf.mxu0
      %v3808 = vpop.f32.mrf.mxu0
      %v3809 = vadd.f32 0.0, %v3808
      %v3810 = vpop.f32.mrf.mxu0
      %3811 = vmatprep.mubr.bf16.mxu0 0
      %3812 = vmatmul.mubr.bf16.gmra.mxu0 %v3689
      %v3813 = vpop.f32.mrf.mxu0
      %v3814 = vadd.f32 0.0, %v3813
      %v3815 = vpop.f32.mrf.mxu0
      %v3816 = vpop.f32.mrf.mxu0
      %v3817 = vadd.f32 0.0, %v3816
      %v3818 = vpop.f32.mrf.mxu0
      %3819 = vmatprep.mubr.bf16.mxu0 0
      %3820 = vmatmul.mubr.bf16.gmra.mxu0 %v3692
      %v3821 = vpop.f32.mrf.mxu0
      %v3822 = vadd.f32 0.0, %v3821
      %v3823 = vpop.f32.mrf.mxu0
      %v3824 = vpop.f32.mrf.mxu0
      %v3825 = vadd.f32 0.0, %v3824
      %v3826 = vpop.f32.mrf.mxu0
      %3827 = vmatprep.mubr.bf16.mxu0 0
      %3828 = vmatmul.mubr.bf16.gmra.mxu0 %v3695
      %v3829 = vpop.f32.mrf.mxu0
      %v3830 = vadd.f32 0.0, %v3829
      %v3831 = vpop.f32.mrf.mxu0
      %v3832 = vpop.f32.mrf.mxu0
      %v3833 = vadd.f32 0.0, %v3832
      %v3834 = vpop.f32.mrf.mxu0
      %3835 = vmatprep.mubr.bf16.mxu0 0
      %3836 = vmatmul.mubr.bf16.gmra.mxu0 %v3698
      %v3837 = vpop.f32.mrf.mxu0
      %v3838 = vadd.f32 0.0, %v3837
      %v3839 = vpop.f32.mrf.mxu0
      %v3840 = vpop.f32.mrf.mxu0
      %v3841 = vadd.f32 0.0, %v3840
      %v3842 = vpop.f32.mrf.mxu0
      %3843 = vmatprep.mubr.bf16.mxu0 0
      %3844 = vmatmul.mubr.bf16.gmra.mxu0 %v3701
      %v3845 = vpop.f32.mrf.mxu0
      %v3846 = vadd.f32 0.0, %v3845
      %v3847 = vpop.f32.mrf.mxu0
      %v3848 = vpop.f32.mrf.mxu0
      %v3849 = vadd.f32 0.0, %v3848
      %v3850 = vpop.f32.mrf.mxu0
      %3851 = vmatprep.mubr.bf16.mxu0 0
      %3852 = vmatmul.mubr.bf16.gmra.mxu0 %v3704
      %v3853 = vpop.f32.mrf.mxu0
      %v3854 = vadd.f32 0.0, %v3853
      %v3855 = vpop.f32.mrf.mxu0
      %v3856 = vpop.f32.mrf.mxu0
      %v3857 = vadd.f32 0.0, %v3856
      %v3858 = vpop.f32.mrf.mxu0
      %3859 = vmatprep.mubr.bf16.mxu0 0
      %3860 = vmatmul.mubr.bf16.gmra.mxu0 %v3707
      %v3861 = vpop.f32.mrf.mxu0
      %v3862 = vadd.f32 0.0, %v3861
      %v3863 = vpop.f32.mrf.mxu0
      %v3864 = vpop.f32.mrf.mxu0
      %v3865 = vadd.f32 0.0, %v3864
      %v3866 = vpop.f32.mrf.mxu0
      %3867 = vmatprep.mubr.bf16.mxu0 0
      %3868 = vmatmul.mubr.bf16.gmra.mxu0 %v3710
      %v3869 = vpop.f32.mrf.mxu0
      %v3870 = vadd.f32 0.0, %v3869
      %v3871 = vpop.f32.mrf.mxu0
      %v3872 = vpop.f32.mrf.mxu0
      %v3873 = vadd.f32 0.0, %v3872
      %v3874 = vpop.f32.mrf.mxu0
      %3875 = vdwg.mxu0
      %v3876 = vadd.f32 %v3406, %v3750
      %v3877 = vadd.f32 %v3407, %v3753
      %v3878 = vadd.f32 %v3408, %v3758
      %v3879 = vadd.f32 %v3409, %v3761
      %v3880 = vadd.f32 %v3410, %v3766
      %v3881 = vadd.f32 %v3411, %v3769
      %v3882 = vadd.f32 %v3412, %v3774
      %v3883 = vadd.f32 %v3413, %v3777
      %v3884 = vadd.f32 %v3414, %v3782
      %v3885 = vadd.f32 %v3415, %v3785
      %v3886 = vadd.f32 %v3416, %v3790
      %v3887 = vadd.f32 %v3417, %v3793
      %v3888 = vadd.f32 %v3418, %v3798
      %v3889 = vadd.f32 %v3419, %v3801
      %v3890 = vadd.f32 %v3420, %v3806
      %v3891 = vadd.f32 %v3421, %v3809
      %v3892 = vadd.f32 %v3422, %v3814
      %v3893 = vadd.f32 %v3423, %v3817
      %v3894 = vadd.f32 %v3424, %v3822
      %v3895 = vadd.f32 %v3425, %v3825
      %v3896 = vadd.f32 %v3426, %v3830
      %v3897 = vadd.f32 %v3427, %v3833
      %v3898 = vadd.f32 %v3428, %v3838
      %v3899 = vadd.f32 %v3429, %v3841
      %v3900 = vadd.f32 %v3430, %v3846
      %v3901 = vadd.f32 %v3431, %v3849
      %v3902 = vadd.f32 %v3432, %v3854
      %v3903 = vadd.f32 %v3433, %v3857
      %v3904 = vadd.f32 %v3434, %v3862
      %v3905 = vadd.f32 %v3435, %v3865
      %v3906 = vadd.f32 %v3436, %v3870
      %v3907 = vadd.f32 %v3437, %v3873
      %s3908 = scalar_lea.vmem [#allocation2], 24
      %v3909 = vld [vmem:[%s3908] sm:$0xf]
      %v3910 = vld [vmem:[%s3908 + $0x4] sm:$0xf]
      %v3911 = vld [vmem:[%s3908 + $0xc] sm:$0xf]
      %v3912 = vld [vmem:[%s3908 + $0x10] sm:$0xf]
      %v3913 = vld [vmem:[%s3908 + $0x18] sm:$0xf]
      %v3914 = vld [vmem:[%s3908 + $0x1c] sm:$0xf]
      %v3915 = vld [vmem:[%s3908 + $0x24] sm:$0xf]
      %v3916 = vld [vmem:[%s3908 + $0x28] sm:$0xf]
      %v3917 = vld [vmem:[%s3908 + $0x30] sm:$0xf]
      %v3918 = vld [vmem:[%s3908 + $0x34] sm:$0xf]
      %v3919 = vld [vmem:[%s3908 + $0x3c] sm:$0xf]
      %v3920 = vld [vmem:[%s3908 + $0x40] sm:$0xf]
      %v3921 = vld [vmem:[%s3908 + $0x48] sm:$0xf]
      %v3922 = vld [vmem:[%s3908 + $0x4c] sm:$0xf]
      %v3923 = vld [vmem:[%s3908 + $0x54] sm:$0xf]
      %v3924 = vld [vmem:[%s3908 + $0x58] sm:$0xf]
      %v3925 = vld [vmem:[%s3908 + $0x60] sm:$0xf]
      %v3926 = vld [vmem:[%s3908 + $0x64] sm:$0xf]
      %v3927 = vld [vmem:[%s3908 + $0x6c] sm:$0xf]
      %v3928 = vld [vmem:[%s3908 + $0x70] sm:$0xf]
      %v3929 = vld [vmem:[%s3908 + $0x78] sm:$0xf]
      %v3930 = vld [vmem:[%s3908 + $0x7c] sm:$0xf]
      %v3931 = vld [vmem:[%s3908 + $0x84] sm:$0xf]
      %v3932 = vld [vmem:[%s3908 + $0x88] sm:$0xf]
      %v3933 = vld [vmem:[%s3908 + $0x90] sm:$0xf]
      %v3934 = vld [vmem:[%s3908 + $0x94] sm:$0xf]
      %v3935 = vld [vmem:[%s3908 + $0x9c] sm:$0xf]
      %v3936 = vld [vmem:[%s3908 + $0xa0] sm:$0xf]
      %v3937 = vld [vmem:[%s3908 + $0xa8] sm:$0xf]
      %v3938 = vld [vmem:[%s3908 + $0xac] sm:$0xf]
      %v3939 = vld [vmem:[%s3908 + $0xb4] sm:$0xf]
      %v3940 = vld [vmem:[%s3908 + $0xb8] sm:$0xf]
      %s3941 = scalar_lea.vmem %s1, 12
      %v3942 = vld [vmem:[%s3941] sm:$0x3]
      %v3975 = vunpack.c.l.b16 %v3909
      %v3976 = vunpack.c.l.b16 %v3910
      %v3977 = vunpack.c.l.b16 %v3911
      %v3978 = vunpack.c.l.b16 %v3912
      %v3979 = vunpack.c.l.b16 %v3913
      %v3980 = vunpack.c.l.b16 %v3914
      %v3981 = vunpack.c.l.b16 %v3915
      %v3982 = vunpack.c.l.b16 %v3916
      %v3983 = vunpack.c.l.b16 %v3917
      %v3984 = vunpack.c.l.b16 %v3918
      %v3985 = vunpack.c.l.b16 %v3919
      %v3986 = vunpack.c.l.b16 %v3920
      %v3987 = vunpack.c.l.b16 %v3921
      %v3988 = vunpack.c.l.b16 %v3922
      %v3989 = vunpack.c.l.b16 %v3923
      %v3990 = vunpack.c.l.b16 %v3924
      %v3991 = vunpack.c.l.b16 %v3925
      %v3992 = vunpack.c.l.b16 %v3926
      %v3993 = vunpack.c.l.b16 %v3927
      %v3994 = vunpack.c.l.b16 %v3928
      %v3995 = vunpack.c.l.b16 %v3929
      %v3996 = vunpack.c.l.b16 %v3930
      %v3997 = vunpack.c.l.b16 %v3931
      %v3998 = vunpack.c.l.b16 %v3932
      %v3999 = vunpack.c.l.b16 %v3933
      %v4000 = vunpack.c.l.b16 %v3934
      %v4001 = vunpack.c.l.b16 %v3935
      %v4002 = vunpack.c.l.b16 %v3936
      %v4003 = vunpack.c.l.b16 %v3937
      %v4004 = vunpack.c.l.b16 %v3938
      %v4005 = vunpack.c.l.b16 %v3939
      %v4006 = vunpack.c.l.b16 %v3940
      %v4007 = vpack.c.b16 %v3976, %v3975
      %v4008 = vpack.c.b16 %v3978, %v3977
      %v4009 = vpack.c.b16 %v3980, %v3979
      %v4010 = vpack.c.b16 %v3982, %v3981
      %v4011 = vpack.c.b16 %v3984, %v3983
      %v4012 = vpack.c.b16 %v3986, %v3985
      %v4013 = vpack.c.b16 %v3988, %v3987
      %v4014 = vpack.c.b16 %v3990, %v3989
      %v4015 = vpack.c.b16 %v3992, %v3991
      %v4016 = vpack.c.b16 %v3994, %v3993
      %v4017 = vpack.c.b16 %v3996, %v3995
      %v4018 = vpack.c.b16 %v3998, %v3997
      %v4019 = vpack.c.b16 %v4000, %v3999
      %v4020 = vpack.c.b16 %v4002, %v4001
      %v4021 = vpack.c.b16 %v4004, %v4003
      %v4022 = vpack.c.b16 %v4006, %v4005
      %v4024 = vsel %vm1391, %v4007, 0
      %v4027 = vsel %vm1391, %v4008, 0
      %v4030 = vsel %vm1391, %v4009, 0
      %v4033 = vsel %vm1391, %v4010, 0
      %v4036 = vsel %vm1391, %v4011, 0
      %v4039 = vsel %vm1391, %v4012, 0
      %v4042 = vsel %vm1391, %v4013, 0
      %v4045 = vsel %vm1391, %v4014, 0
      %v4048 = vsel %vm1391, %v4015, 0
      %v4051 = vsel %vm1391, %v4016, 0
      %v4054 = vsel %vm1391, %v4017, 0
      %v4057 = vsel %vm1391, %v4018, 0
      %v4060 = vsel %vm1391, %v4019, 0
      %v4063 = vsel %vm1391, %v4020, 0
      %v4066 = vsel %vm1391, %v4021, 0
      %v4069 = vsel %vm1391, %v4022, 0
      %v4072 = vsel %vm1440, %v3942, 0
      %4074 = vmatprep.subr.bf16.mxu0 0
      %4075 = vmatpush1.bf16.msra.mxu0 0
      %4076 = vmatprep.subr.bf16.mxu0 0
      %4077 = vmatpush1.bf16.msra.mxu0 0
      %4078 = vmatprep.subr.bf16.mxu0 0
      %4079 = vmatpush1.bf16.msra.mxu0 0
      %4080 = vmatprep.subr.bf16.mxu0 0
      %4081 = vmatpush1.bf16.msra.mxu0 0
      %4082 = vmatprep.subr.bf16.mxu0 0
      %4083 = vmatpush1.bf16.msra.mxu0 0
      %4084 = vmatprep.subr.bf16.mxu0 0
      %4085 = vmatpush1.bf16.msra.mxu0 0
      %4086 = vmatprep.subr.bf16.mxu0 0
      %4087 = vmatpush1.bf16.msra.mxu0 0
      %4088 = vmatprep.subr.bf16.mxu0 0
      %4089 = vmatpush1.bf16.msra.mxu0 %v4072
      %4090 = vmatprep.subr.bf16.mxu0 0
      %4091 = vmatpush2.bf16.msra.mxu0 0
      %4092 = vmatprep.subr.bf16.mxu0 0
      %4093 = vmatpush2.bf16.msra.mxu0 0
      %4094 = vmatprep.subr.bf16.mxu0 0
      %4095 = vmatpush2.bf16.msra.mxu0 0
      %4096 = vmatprep.subr.bf16.mxu0 0
      %4097 = vmatpush2.bf16.msra.mxu0 0
      %4098 = vmatprep.subr.bf16.mxu0 0
      %4099 = vmatpush2.bf16.msra.mxu0 0
      %4100 = vmatprep.subr.bf16.mxu0 0
      %4101 = vmatpush2.bf16.msra.mxu0 0
      %4102 = vmatprep.subr.bf16.mxu0 0
      %4103 = vmatpush2.bf16.msra.mxu0 0
      %4104 = vmatprep.subr.bf16.mxu0 0
      %4105 = vmatpush2.bf16.msra.mxu0 0
      %4106 = vmatprep.mubr.bf16.mxu0 0
      %4107 = vmatmul.mubr.bf16.gmra.mxu0 %v4024
      %v4108 = vpop.f32.mrf.mxu0
      %v4109 = vadd.f32 0.0, %v4108
      %v4110 = vpop.f32.mrf.mxu0
      %v4111 = vpop.f32.mrf.mxu0
      %v4112 = vadd.f32 0.0, %v4111
      %v4113 = vpop.f32.mrf.mxu0
      %4114 = vmatprep.mubr.bf16.mxu0 0
      %4115 = vmatmul.mubr.bf16.gmra.mxu0 %v4027
      %v4116 = vpop.f32.mrf.mxu0
      %v4117 = vadd.f32 0.0, %v4116
      %v4118 = vpop.f32.mrf.mxu0
      %v4119 = vpop.f32.mrf.mxu0
      %v4120 = vadd.f32 0.0, %v4119
      %v4121 = vpop.f32.mrf.mxu0
      %4122 = vmatprep.mubr.bf16.mxu0 0
      %4123 = vmatmul.mubr.bf16.gmra.mxu0 %v4030
      %v4124 = vpop.f32.mrf.mxu0
      %v4125 = vadd.f32 0.0, %v4124
      %v4126 = vpop.f32.mrf.mxu0
      %v4127 = vpop.f32.mrf.mxu0
      %v4128 = vadd.f32 0.0, %v4127
      %v4129 = vpop.f32.mrf.mxu0
      %4130 = vmatprep.mubr.bf16.mxu0 0
      %4131 = vmatmul.mubr.bf16.gmra.mxu0 %v4033
      %v4132 = vpop.f32.mrf.mxu0
      %v4133 = vadd.f32 0.0, %v4132
      %v4134 = vpop.f32.mrf.mxu0
      %v4135 = vpop.f32.mrf.mxu0
      %v4136 = vadd.f32 0.0, %v4135
      %v4137 = vpop.f32.mrf.mxu0
      %4138 = vmatprep.mubr.bf16.mxu0 0
      %4139 = vmatmul.mubr.bf16.gmra.mxu0 %v4036
      %v4140 = vpop.f32.mrf.mxu0
      %v4141 = vadd.f32 0.0, %v4140
      %v4142 = vpop.f32.mrf.mxu0
      %v4143 = vpop.f32.mrf.mxu0
      %v4144 = vadd.f32 0.0, %v4143
      %v4145 = vpop.f32.mrf.mxu0
      %4146 = vmatprep.mubr.bf16.mxu0 0
      %4147 = vmatmul.mubr.bf16.gmra.mxu0 %v4039
      %v4148 = vpop.f32.mrf.mxu0
      %v4149 = vadd.f32 0.0, %v4148
      %v4150 = vpop.f32.mrf.mxu0
      %v4151 = vpop.f32.mrf.mxu0
      %v4152 = vadd.f32 0.0, %v4151
      %v4153 = vpop.f32.mrf.mxu0
      %4154 = vmatprep.mubr.bf16.mxu0 0
      %4155 = vmatmul.mubr.bf16.gmra.mxu0 %v4042
      %v4156 = vpop.f32.mrf.mxu0
      %v4157 = vadd.f32 0.0, %v4156
      %v4158 = vpop.f32.mrf.mxu0
      %v4159 = vpop.f32.mrf.mxu0
      %v4160 = vadd.f32 0.0, %v4159
      %v4161 = vpop.f32.mrf.mxu0
      %4162 = vmatprep.mubr.bf16.mxu0 0
      %4163 = vmatmul.mubr.bf16.gmra.mxu0 %v4045
      %v4164 = vpop.f32.mrf.mxu0
      %v4165 = vadd.f32 0.0, %v4164
      %v4166 = vpop.f32.mrf.mxu0
      %v4167 = vpop.f32.mrf.mxu0
      %v4168 = vadd.f32 0.0, %v4167
      %v4169 = vpop.f32.mrf.mxu0
      %4170 = vmatprep.mubr.bf16.mxu0 0
      %4171 = vmatmul.mubr.bf16.gmra.mxu0 %v4048
      %v4172 = vpop.f32.mrf.mxu0
      %v4173 = vadd.f32 0.0, %v4172
      %v4174 = vpop.f32.mrf.mxu0
      %v4175 = vpop.f32.mrf.mxu0
      %v4176 = vadd.f32 0.0, %v4175
      %v4177 = vpop.f32.mrf.mxu0
      %4178 = vmatprep.mubr.bf16.mxu0 0
      %4179 = vmatmul.mubr.bf16.gmra.mxu0 %v4051
      %v4180 = vpop.f32.mrf.mxu0
      %v4181 = vadd.f32 0.0, %v4180
      %v4182 = vpop.f32.mrf.mxu0
      %v4183 = vpop.f32.mrf.mxu0
      %v4184 = vadd.f32 0.0, %v4183
      %v4185 = vpop.f32.mrf.mxu0
      %4186 = vmatprep.mubr.bf16.mxu0 0
      %4187 = vmatmul.mubr.bf16.gmra.mxu0 %v4054
      %v4188 = vpop.f32.mrf.mxu0
      %v4189 = vadd.f32 0.0, %v4188
      %v4190 = vpop.f32.mrf.mxu0
      %v4191 = vpop.f32.mrf.mxu0
      %v4192 = vadd.f32 0.0, %v4191
      %v4193 = vpop.f32.mrf.mxu0
      %4194 = vmatprep.mubr.bf16.mxu0 0
      %4195 = vmatmul.mubr.bf16.gmra.mxu0 %v4057
      %v4196 = vpop.f32.mrf.mxu0
      %v4197 = vadd.f32 0.0, %v4196
      %v4198 = vpop.f32.mrf.mxu0
      %v4199 = vpop.f32.mrf.mxu0
      %v4200 = vadd.f32 0.0, %v4199
      %v4201 = vpop.f32.mrf.mxu0
      %4202 = vmatprep.mubr.bf16.mxu0 0
      %4203 = vmatmul.mubr.bf16.gmra.mxu0 %v4060
      %v4204 = vpop.f32.mrf.mxu0
      %v4205 = vadd.f32 0.0, %v4204
      %v4206 = vpop.f32.mrf.mxu0
      %v4207 = vpop.f32.mrf.mxu0
      %v4208 = vadd.f32 0.0, %v4207
      %v4209 = vpop.f32.mrf.mxu0
      %4210 = vmatprep.mubr.bf16.mxu0 0
      %4211 = vmatmul.mubr.bf16.gmra.mxu0 %v4063
      %v4212 = vpop.f32.mrf.mxu0
      %v4213 = vadd.f32 0.0, %v4212
      %v4214 = vpop.f32.mrf.mxu0
      %v4215 = vpop.f32.mrf.mxu0
      %v4216 = vadd.f32 0.0, %v4215
      %v4217 = vpop.f32.mrf.mxu0
      %4218 = vmatprep.mubr.bf16.mxu0 0
      %4219 = vmatmul.mubr.bf16.gmra.mxu0 %v4066
      %v4220 = vpop.f32.mrf.mxu0
      %v4221 = vadd.f32 0.0, %v4220
      %v4222 = vpop.f32.mrf.mxu0
      %v4223 = vpop.f32.mrf.mxu0
      %v4224 = vadd.f32 0.0, %v4223
      %v4225 = vpop.f32.mrf.mxu0
      %4226 = vmatprep.mubr.bf16.mxu0 0
      %4227 = vmatmul.mubr.bf16.gmra.mxu0 %v4069
      %v4228 = vpop.f32.mrf.mxu0
      %v4229 = vadd.f32 0.0, %v4228
      %v4230 = vpop.f32.mrf.mxu0
      %v4231 = vpop.f32.mrf.mxu0
      %v4232 = vadd.f32 0.0, %v4231
      %v4233 = vpop.f32.mrf.mxu0
      %4234 = vdwg.mxu0
      %v4235 = vadd.f32 %v3876, %v4109
      %v4236 = vadd.f32 %v3877, %v4112
      %v4237 = vadd.f32 %v3878, %v4117
      %v4238 = vadd.f32 %v3879, %v4120
      %v4239 = vadd.f32 %v3880, %v4125
      %v4240 = vadd.f32 %v3881, %v4128
      %v4241 = vadd.f32 %v3882, %v4133
      %v4242 = vadd.f32 %v3883, %v4136
      %v4243 = vadd.f32 %v3884, %v4141
      %v4244 = vadd.f32 %v3885, %v4144
      %v4245 = vadd.f32 %v3886, %v4149
      %v4246 = vadd.f32 %v3887, %v4152
      %v4247 = vadd.f32 %v3888, %v4157
      %v4248 = vadd.f32 %v3889, %v4160
      %v4249 = vadd.f32 %v3890, %v4165
      %v4250 = vadd.f32 %v3891, %v4168
      %v4251 = vadd.f32 %v3892, %v4173
      %v4252 = vadd.f32 %v3893, %v4176
      %v4253 = vadd.f32 %v3894, %v4181
      %v4254 = vadd.f32 %v3895, %v4184
      %v4255 = vadd.f32 %v3896, %v4189
      %v4256 = vadd.f32 %v3897, %v4192
      %v4257 = vadd.f32 %v3898, %v4197
      %v4258 = vadd.f32 %v3899, %v4200
      %v4259 = vadd.f32 %v3900, %v4205
      %v4260 = vadd.f32 %v3901, %v4208
      %v4261 = vadd.f32 %v3902, %v4213
      %v4262 = vadd.f32 %v3903, %v4216
      %v4263 = vadd.f32 %v3904, %v4221
      %v4264 = vadd.f32 %v3905, %v4224
      %v4265 = vadd.f32 %v3906, %v4229
      %v4266 = vadd.f32 %v3907, %v4232
      %v4267 = vld [vmem:[%s3908] sm:$0xf]
      %v4268 = vld [vmem:[%s3908 + $0x4] sm:$0xf]
      %v4269 = vld [vmem:[%s3908 + $0x8] sm:$0x1]
      %v4270 = vld [vmem:[%s3908 + $0xc] sm:$0xf]
      %v4271 = vld [vmem:[%s3908 + $0x10] sm:$0xf]
      %v4272 = vld [vmem:[%s3908 + $0x14] sm:$0x1]
      %v4273 = vld [vmem:[%s3908 + $0x18] sm:$0xf]
      %v4274 = vld [vmem:[%s3908 + $0x1c] sm:$0xf]
      %v4275 = vld [vmem:[%s3908 + $0x20] sm:$0x1]
      %v4276 = vld [vmem:[%s3908 + $0x24] sm:$0xf]
      %v4277 = vld [vmem:[%s3908 + $0x28] sm:$0xf]
      %v4278 = vld [vmem:[%s3908 + $0x2c] sm:$0x1]
      %v4279 = vld [vmem:[%s3908 + $0x30] sm:$0xf]
      %v4280 = vld [vmem:[%s3908 + $0x34] sm:$0xf]
      %v4281 = vld [vmem:[%s3908 + $0x38] sm:$0x1]
      %v4282 = vld [vmem:[%s3908 + $0x3c] sm:$0xf]
      %v4283 = vld [vmem:[%s3908 + $0x40] sm:$0xf]
      %v4284 = vld [vmem:[%s3908 + $0x44] sm:$0x1]
      %v4285 = vld [vmem:[%s3908 + $0x48] sm:$0xf]
      %v4286 = vld [vmem:[%s3908 + $0x4c] sm:$0xf]
      %v4287 = vld [vmem:[%s3908 + $0x50] sm:$0x1]
      %v4288 = vld [vmem:[%s3908 + $0x54] sm:$0xf]
      %v4289 = vld [vmem:[%s3908 + $0x58] sm:$0xf]
      %v4290 = vld [vmem:[%s3908 + $0x5c] sm:$0x1]
      %v4291 = vld [vmem:[%s3908 + $0x60] sm:$0xf]
      %v4292 = vld [vmem:[%s3908 + $0x64] sm:$0xf]
      %v4293 = vld [vmem:[%s3908 + $0x68] sm:$0x1]
      %v4294 = vld [vmem:[%s3908 + $0x6c] sm:$0xf]
      %v4295 = vld [vmem:[%s3908 + $0x70] sm:$0xf]
      %v4296 = vld [vmem:[%s3908 + $0x74] sm:$0x1]
      %v4297 = vld [vmem:[%s3908 + $0x78] sm:$0xf]
      %v4298 = vld [vmem:[%s3908 + $0x7c] sm:$0xf]
      %v4299 = vld [vmem:[%s3908 + $0x80] sm:$0x1]
      %v4300 = vld [vmem:[%s3908 + $0x84] sm:$0xf]
      %v4301 = vld [vmem:[%s3908 + $0x88] sm:$0xf]
      %v4302 = vld [vmem:[%s3908 + $0x8c] sm:$0x1]
      %v4303 = vld [vmem:[%s3908 + $0x90] sm:$0xf]
      %v4304 = vld [vmem:[%s3908 + $0x94] sm:$0xf]
      %v4305 = vld [vmem:[%s3908 + $0x98] sm:$0x1]
      %v4306 = vld [vmem:[%s3908 + $0x9c] sm:$0xf]
      %v4307 = vld [vmem:[%s3908 + $0xa0] sm:$0xf]
      %v4308 = vld [vmem:[%s3908 + $0xa4] sm:$0x1]
      %v4309 = vld [vmem:[%s3908 + $0xa8] sm:$0xf]
      %v4310 = vld [vmem:[%s3908 + $0xac] sm:$0xf]
      %v4311 = vld [vmem:[%s3908 + $0xb0] sm:$0x1]
      %v4312 = vld [vmem:[%s3908 + $0xb4] sm:$0xf]
      %v4313 = vld [vmem:[%s3908 + $0xb8] sm:$0xf]
      %v4314 = vld [vmem:[%s3908 + $0xbc] sm:$0x1]
      %v4316 = vshrl.u32 %v4267, 16
      %v4318 = vrot.slane %v4316, 4
      %v4319 = vshll.u32 %v4267, 16
      %v4321 = vrot.slane %v4319, 5
      %v4322 = vor.u32 %v4318, %v4321
      %v4323 = vrot.slane %v4322, 4
      %v4325 = vshll.u32 %v4268, 16
      %v4327 = vrot.slane %v4325, 5
      %v4328 = vsel %vm956, %v4323, %v4327
      %v4329 = vshrl.u32 %v4268, 16
      %v4331 = vrot.slane %v4329, 4
      %v4332 = vor.u32 %v4331, %v4327
      %v4333 = vrot.slane %v4332, 4
      %v4335 = vshll.u32 %v4269, 16
      %v4337 = vrot.slane %v4335, 5
      %v4338 = vsel %vm956, %v4333, %v4337
      %v4340 = vshrl.u32 %v4270, 16
      %v4342 = vrot.slane %v4340, 4
      %v4343 = vshll.u32 %v4270, 16
      %v4345 = vrot.slane %v4343, 5
      %v4346 = vor.u32 %v4342, %v4345
      %v4347 = vrot.slane %v4346, 4
      %v4349 = vshll.u32 %v4271, 16
      %v4351 = vrot.slane %v4349, 5
      %v4352 = vsel %vm956, %v4347, %v4351
      %v4353 = vshrl.u32 %v4271, 16
      %v4355 = vrot.slane %v4353, 4
      %v4356 = vor.u32 %v4355, %v4351
      %v4357 = vrot.slane %v4356, 4
      %v4359 = vshll.u32 %v4272, 16
      %v4361 = vrot.slane %v4359, 5
      %v4362 = vsel %vm956, %v4357, %v4361
      %v4364 = vshrl.u32 %v4273, 16
      %v4366 = vrot.slane %v4364, 4
      %v4367 = vshll.u32 %v4273, 16
      %v4369 = vrot.slane %v4367, 5
      %v4370 = vor.u32 %v4366, %v4369
      %v4371 = vrot.slane %v4370, 4
      %v4373 = vshll.u32 %v4274, 16
      %v4375 = vrot.slane %v4373, 5
      %v4376 = vsel %vm956, %v4371, %v4375
      %v4377 = vshrl.u32 %v4274, 16
      %v4379 = vrot.slane %v4377, 4
      %v4380 = vor.u32 %v4379, %v4375
      %v4381 = vrot.slane %v4380, 4
      %v4383 = vshll.u32 %v4275, 16
      %v4385 = vrot.slane %v4383, 5
      %v4386 = vsel %vm956, %v4381, %v4385
      %v4388 = vshrl.u32 %v4276, 16
      %v4390 = vrot.slane %v4388, 4
      %v4391 = vshll.u32 %v4276, 16
      %v4393 = vrot.slane %v4391, 5
      %v4394 = vor.u32 %v4390, %v4393
      %v4395 = vrot.slane %v4394, 4
      %v4397 = vshll.u32 %v4277, 16
      %v4399 = vrot.slane %v4397, 5
      %v4400 = vsel %vm956, %v4395, %v4399
      %v4401 = vshrl.u32 %v4277, 16
      %v4403 = vrot.slane %v4401, 4
      %v4404 = vor.u32 %v4403, %v4399
      %v4405 = vrot.slane %v4404, 4
      %v4407 = vshll.u32 %v4278, 16
      %v4409 = vrot.slane %v4407, 5
      %v4410 = vsel %vm956, %v4405, %v4409
      %v4412 = vshrl.u32 %v4279, 16
      %v4414 = vrot.slane %v4412, 4
      %v4415 = vshll.u32 %v4279, 16
      %v4417 = vrot.slane %v4415, 5
      %v4418 = vor.u32 %v4414, %v4417
      %v4419 = vrot.slane %v4418, 4
      %v4421 = vshll.u32 %v4280, 16
      %v4423 = vrot.slane %v4421, 5
      %v4424 = vsel %vm956, %v4419, %v4423
      %v4425 = vshrl.u32 %v4280, 16
      %v4427 = vrot.slane %v4425, 4
      %v4428 = vor.u32 %v4427, %v4423
      %v4429 = vrot.slane %v4428, 4
      %v4431 = vshll.u32 %v4281, 16
      %v4433 = vrot.slane %v4431, 5
      %v4434 = vsel %vm956, %v4429, %v4433
      %v4436 = vshrl.u32 %v4282, 16
      %v4438 = vrot.slane %v4436, 4
      %v4439 = vshll.u32 %v4282, 16
      %v4441 = vrot.slane %v4439, 5
      %v4442 = vor.u32 %v4438, %v4441
      %v4443 = vrot.slane %v4442, 4
      %v4445 = vshll.u32 %v4283, 16
      %v4447 = vrot.slane %v4445, 5
      %v4448 = vsel %vm956, %v4443, %v4447
      %v4449 = vshrl.u32 %v4283, 16
      %v4451 = vrot.slane %v4449, 4
      %v4452 = vor.u32 %v4451, %v4447
      %v4453 = vrot.slane %v4452, 4
      %v4455 = vshll.u32 %v4284, 16
      %v4457 = vrot.slane %v4455, 5
      %v4458 = vsel %vm956, %v4453, %v4457
      %v4460 = vshrl.u32 %v4285, 16
      %v4462 = vrot.slane %v4460, 4
      %v4463 = vshll.u32 %v4285, 16
      %v4465 = vrot.slane %v4463, 5
      %v4466 = vor.u32 %v4462, %v4465
      %v4467 = vrot.slane %v4466, 4
      %v4469 = vshll.u32 %v4286, 16
      %v4471 = vrot.slane %v4469, 5
      %v4472 = vsel %vm956, %v4467, %v4471
      %v4473 = vshrl.u32 %v4286, 16
      %v4475 = vrot.slane %v4473, 4
      %v4476 = vor.u32 %v4475, %v4471
      %v4477 = vrot.slane %v4476, 4
      %v4479 = vshll.u32 %v4287, 16
      %v4481 = vrot.slane %v4479, 5
      %v4482 = vsel %vm956, %v4477, %v4481
      %v4484 = vshrl.u32 %v4288, 16
      %v4486 = vrot.slane %v4484, 4
      %v4487 = vshll.u32 %v4288, 16
      %v4489 = vrot.slane %v4487, 5
      %v4490 = vor.u32 %v4486, %v4489
      %v4491 = vrot.slane %v4490, 4
      %v4493 = vshll.u32 %v4289, 16
      %v4495 = vrot.slane %v4493, 5
      %v4496 = vsel %vm956, %v4491, %v4495
      %v4497 = vshrl.u32 %v4289, 16
      %v4499 = vrot.slane %v4497, 4
      %v4500 = vor.u32 %v4499, %v4495
      %v4501 = vrot.slane %v4500, 4
      %v4503 = vshll.u32 %v4290, 16
      %v4505 = vrot.slane %v4503, 5
      %v4506 = vsel %vm956, %v4501, %v4505
      %v4508 = vshrl.u32 %v4291, 16
      %v4510 = vrot.slane %v4508, 4
      %v4511 = vshll.u32 %v4291, 16
      %v4513 = vrot.slane %v4511, 5
      %v4514 = vor.u32 %v4510, %v4513
      %v4515 = vrot.slane %v4514, 4
      %v4517 = vshll.u32 %v4292, 16
      %v4519 = vrot.slane %v4517, 5
      %v4520 = vsel %vm956, %v4515, %v4519
      %v4521 = vshrl.u32 %v4292, 16
      %v4523 = vrot.slane %v4521, 4
      %v4524 = vor.u32 %v4523, %v4519
      %v4525 = vrot.slane %v4524, 4
      %v4527 = vshll.u32 %v4293, 16
      %v4529 = vrot.slane %v4527, 5
      %v4530 = vsel %vm956, %v4525, %v4529
      %v4532 = vshrl.u32 %v4294, 16
      %v4534 = vrot.slane %v4532, 4
      %v4535 = vshll.u32 %v4294, 16
      %v4537 = vrot.slane %v4535, 5
      %v4538 = vor.u32 %v4534, %v4537
      %v4539 = vrot.slane %v4538, 4
      %v4541 = vshll.u32 %v4295, 16
      %v4543 = vrot.slane %v4541, 5
      %v4544 = vsel %vm956, %v4539, %v4543
      %v4545 = vshrl.u32 %v4295, 16
      %v4547 = vrot.slane %v4545, 4
      %v4548 = vor.u32 %v4547, %v4543
      %v4549 = vrot.slane %v4548, 4
      %v4551 = vshll.u32 %v4296, 16
      %v4553 = vrot.slane %v4551, 5
      %v4554 = vsel %vm956, %v4549, %v4553
      %v4556 = vshrl.u32 %v4297, 16
      %v4558 = vrot.slane %v4556, 4
      %v4559 = vshll.u32 %v4297, 16
      %v4561 = vrot.slane %v4559, 5
      %v4562 = vor.u32 %v4558, %v4561
      %v4563 = vrot.slane %v4562, 4
      %v4565 = vshll.u32 %v4298, 16
      %v4567 = vrot.slane %v4565, 5
      %v4568 = vsel %vm956, %v4563, %v4567
      %v4569 = vshrl.u32 %v4298, 16
      %v4571 = vrot.slane %v4569, 4
      %v4572 = vor.u32 %v4571, %v4567
      %v4573 = vrot.slane %v4572, 4
      %v4575 = vshll.u32 %v4299, 16
      %v4577 = vrot.slane %v4575, 5
      %v4578 = vsel %vm956, %v4573, %v4577
      %v4580 = vshrl.u32 %v4300, 16
      %v4582 = vrot.slane %v4580, 4
      %v4583 = vshll.u32 %v4300, 16
      %v4585 = vrot.slane %v4583, 5
      %v4586 = vor.u32 %v4582, %v4585
      %v4587 = vrot.slane %v4586, 4
      %v4589 = vshll.u32 %v4301, 16
      %v4591 = vrot.slane %v4589, 5
      %v4592 = vsel %vm956, %v4587, %v4591
      %v4593 = vshrl.u32 %v4301, 16
      %v4595 = vrot.slane %v4593, 4
      %v4596 = vor.u32 %v4595, %v4591
      %v4597 = vrot.slane %v4596, 4
      %v4599 = vshll.u32 %v4302, 16
      %v4601 = vrot.slane %v4599, 5
      %v4602 = vsel %vm956, %v4597, %v4601
      %v4604 = vshrl.u32 %v4303, 16
      %v4606 = vrot.slane %v4604, 4
      %v4607 = vshll.u32 %v4303, 16
      %v4609 = vrot.slane %v4607, 5
      %v4610 = vor.u32 %v4606, %v4609
      %v4611 = vrot.slane %v4610, 4
      %v4613 = vshll.u32 %v4304, 16
      %v4615 = vrot.slane %v4613, 5
      %v4616 = vsel %vm956, %v4611, %v4615
      %v4617 = vshrl.u32 %v4304, 16
      %v4619 = vrot.slane %v4617, 4
      %v4620 = vor.u32 %v4619, %v4615
      %v4621 = vrot.slane %v4620, 4
      %v4623 = vshll.u32 %v4305, 16
      %v4625 = vrot.slane %v4623, 5
      %v4626 = vsel %vm956, %v4621, %v4625
      %v4628 = vshrl.u32 %v4306, 16
      %v4630 = vrot.slane %v4628, 4
      %v4631 = vshll.u32 %v4306, 16
      %v4633 = vrot.slane %v4631, 5
      %v4634 = vor.u32 %v4630, %v4633
      %v4635 = vrot.slane %v4634, 4
      %v4637 = vshll.u32 %v4307, 16
      %v4639 = vrot.slane %v4637, 5
      %v4640 = vsel %vm956, %v4635, %v4639
      %v4641 = vshrl.u32 %v4307, 16
      %v4643 = vrot.slane %v4641, 4
      %v4644 = vor.u32 %v4643, %v4639
      %v4645 = vrot.slane %v4644, 4
      %v4647 = vshll.u32 %v4308, 16
      %v4649 = vrot.slane %v4647, 5
      %v4650 = vsel %vm956, %v4645, %v4649
      %v4652 = vshrl.u32 %v4309, 16
      %v4654 = vrot.slane %v4652, 4
      %v4655 = vshll.u32 %v4309, 16
      %v4657 = vrot.slane %v4655, 5
      %v4658 = vor.u32 %v4654, %v4657
      %v4659 = vrot.slane %v4658, 4
      %v4661 = vshll.u32 %v4310, 16
      %v4663 = vrot.slane %v4661, 5
      %v4664 = vsel %vm956, %v4659, %v4663
      %v4665 = vshrl.u32 %v4310, 16
      %v4667 = vrot.slane %v4665, 4
      %v4668 = vor.u32 %v4667, %v4663
      %v4669 = vrot.slane %v4668, 4
      %v4671 = vshll.u32 %v4311, 16
      %v4673 = vrot.slane %v4671, 5
      %v4674 = vsel %vm956, %v4669, %v4673
      %v4676 = vshrl.u32 %v4312, 16
      %v4678 = vrot.slane %v4676, 4
      %v4679 = vshll.u32 %v4312, 16
      %v4681 = vrot.slane %v4679, 5
      %v4682 = vor.u32 %v4678, %v4681
      %v4683 = vrot.slane %v4682, 4
      %v4685 = vshll.u32 %v4313, 16
      %v4687 = vrot.slane %v4685, 5
      %v4688 = vsel %vm956, %v4683, %v4687
      %v4689 = vshrl.u32 %v4313, 16
      %v4691 = vrot.slane %v4689, 4
      %v4692 = vor.u32 %v4691, %v4687
      %v4693 = vrot.slane %v4692, 4
      %v4695 = vshll.u32 %v4314, 16
      %v4697 = vrot.slane %v4695, 5
      %v4698 = vsel %vm956, %v4693, %v4697
      %s4699 = scalar_lea.vmem %s1, 14
      %v4700 = vld [vmem:[%s4699] sm:$0x3]
      %v4701 = vunpack.c.l.b16 %v4328
      %v4702 = vunpack.c.l.b16 %v4338
      %v4703 = vunpack.c.l.b16 %v4352
      %v4704 = vunpack.c.l.b16 %v4362
      %v4705 = vunpack.c.l.b16 %v4376
      %v4706 = vunpack.c.l.b16 %v4386
      %v4707 = vunpack.c.l.b16 %v4400
      %v4708 = vunpack.c.l.b16 %v4410
      %v4709 = vunpack.c.l.b16 %v4424
      %v4710 = vunpack.c.l.b16 %v4434
      %v4711 = vunpack.c.l.b16 %v4448
      %v4712 = vunpack.c.l.b16 %v4458
      %v4713 = vunpack.c.l.b16 %v4472
      %v4714 = vunpack.c.l.b16 %v4482
      %v4715 = vunpack.c.l.b16 %v4496
      %v4716 = vunpack.c.l.b16 %v4506
      %v4717 = vunpack.c.l.b16 %v4520
      %v4718 = vunpack.c.l.b16 %v4530
      %v4719 = vunpack.c.l.b16 %v4544
      %v4720 = vunpack.c.l.b16 %v4554
      %v4721 = vunpack.c.l.b16 %v4568
      %v4722 = vunpack.c.l.b16 %v4578
      %v4723 = vunpack.c.l.b16 %v4592
      %v4724 = vunpack.c.l.b16 %v4602
      %v4725 = vunpack.c.l.b16 %v4616
      %v4726 = vunpack.c.l.b16 %v4626
      %v4727 = vunpack.c.l.b16 %v4640
      %v4728 = vunpack.c.l.b16 %v4650
      %v4729 = vunpack.c.l.b16 %v4664
      %v4730 = vunpack.c.l.b16 %v4674
      %v4731 = vunpack.c.l.b16 %v4688
      %v4732 = vunpack.c.l.b16 %v4698
      %v4733 = vpack.c.b16 %v4702, %v4701
      %v4734 = vpack.c.b16 %v4704, %v4703
      %v4735 = vpack.c.b16 %v4706, %v4705
      %v4736 = vpack.c.b16 %v4708, %v4707
      %v4737 = vpack.c.b16 %v4710, %v4709
      %v4738 = vpack.c.b16 %v4712, %v4711
      %v4739 = vpack.c.b16 %v4714, %v4713
      %v4740 = vpack.c.b16 %v4716, %v4715
      %v4741 = vpack.c.b16 %v4718, %v4717
      %v4742 = vpack.c.b16 %v4720, %v4719
      %v4743 = vpack.c.b16 %v4722, %v4721
      %v4744 = vpack.c.b16 %v4724, %v4723
      %v4745 = vpack.c.b16 %v4726, %v4725
      %v4746 = vpack.c.b16 %v4728, %v4727
      %v4747 = vpack.c.b16 %v4730, %v4729
      %v4748 = vpack.c.b16 %v4732, %v4731
      %v4750 = vsel %vm1391, %v4733, 0
      %v4753 = vsel %vm1391, %v4734, 0
      %v4756 = vsel %vm1391, %v4735, 0
      %v4759 = vsel %vm1391, %v4736, 0
      %v4762 = vsel %vm1391, %v4737, 0
      %v4765 = vsel %vm1391, %v4738, 0
      %v4768 = vsel %vm1391, %v4739, 0
      %v4771 = vsel %vm1391, %v4740, 0
      %v4774 = vsel %vm1391, %v4741, 0
      %v4777 = vsel %vm1391, %v4742, 0
      %v4780 = vsel %vm1391, %v4743, 0
      %v4783 = vsel %vm1391, %v4744, 0
      %v4786 = vsel %vm1391, %v4745, 0
      %v4789 = vsel %vm1391, %v4746, 0
      %v4792 = vsel %vm1391, %v4747, 0
      %v4795 = vsel %vm1391, %v4748, 0
      %v4798 = vsel %vm1440, %v4700, 0
      %4800 = vmatprep.subr.bf16.mxu0 0
      %4801 = vmatpush1.bf16.msra.mxu0 0
      %4802 = vmatprep.subr.bf16.mxu0 0
      %4803 = vmatpush1.bf16.msra.mxu0 0
      %4804 = vmatprep.subr.bf16.mxu0 0
      %4805 = vmatpush1.bf16.msra.mxu0 0
      %4806 = vmatprep.subr.bf16.mxu0 0
      %4807 = vmatpush1.bf16.msra.mxu0 0
      %4808 = vmatprep.subr.bf16.mxu0 0
      %4809 = vmatpush1.bf16.msra.mxu0 0
      %4810 = vmatprep.subr.bf16.mxu0 0
      %4811 = vmatpush1.bf16.msra.mxu0 0
      %4812 = vmatprep.subr.bf16.mxu0 0
      %4813 = vmatpush1.bf16.msra.mxu0 0
      %4814 = vmatprep.subr.bf16.mxu0 0
      %4815 = vmatpush1.bf16.msra.mxu0 %v4798
      %4816 = vmatprep.subr.bf16.mxu0 0
      %4817 = vmatpush2.bf16.msra.mxu0 0
      %4818 = vmatprep.subr.bf16.mxu0 0
      %4819 = vmatpush2.bf16.msra.mxu0 0
      %4820 = vmatprep.subr.bf16.mxu0 0
      %4821 = vmatpush2.bf16.msra.mxu0 0
      %4822 = vmatprep.subr.bf16.mxu0 0
      %4823 = vmatpush2.bf16.msra.mxu0 0
      %4824 = vmatprep.subr.bf16.mxu0 0
      %4825 = vmatpush2.bf16.msra.mxu0 0
      %4826 = vmatprep.subr.bf16.mxu0 0
      %4827 = vmatpush2.bf16.msra.mxu0 0
      %4828 = vmatprep.subr.bf16.mxu0 0
      %4829 = vmatpush2.bf16.msra.mxu0 0
      %4830 = vmatprep.subr.bf16.mxu0 0
      %4831 = vmatpush2.bf16.msra.mxu0 0
      %4832 = vmatprep.mubr.bf16.mxu0 0
      %4833 = vmatmul.mubr.bf16.gmra.mxu0 %v4750
      %v4834 = vpop.f32.mrf.mxu0
      %v4835 = vadd.f32 0.0, %v4834
      %v4836 = vpop.f32.mrf.mxu0
      %v4837 = vpop.f32.mrf.mxu0
      %v4838 = vadd.f32 0.0, %v4837
      %v4839 = vpop.f32.mrf.mxu0
      %4840 = vmatprep.mubr.bf16.mxu0 0
      %4841 = vmatmul.mubr.bf16.gmra.mxu0 %v4753
      %v4842 = vpop.f32.mrf.mxu0
      %v4843 = vadd.f32 0.0, %v4842
      %v4844 = vpop.f32.mrf.mxu0
      %v4845 = vpop.f32.mrf.mxu0
      %v4846 = vadd.f32 0.0, %v4845
      %v4847 = vpop.f32.mrf.mxu0
      %4848 = vmatprep.mubr.bf16.mxu0 0
      %4849 = vmatmul.mubr.bf16.gmra.mxu0 %v4756
      %v4850 = vpop.f32.mrf.mxu0
      %v4851 = vadd.f32 0.0, %v4850
      %v4852 = vpop.f32.mrf.mxu0
      %v4853 = vpop.f32.mrf.mxu0
      %v4854 = vadd.f32 0.0, %v4853
      %v4855 = vpop.f32.mrf.mxu0
      %4856 = vmatprep.mubr.bf16.mxu0 0
      %4857 = vmatmul.mubr.bf16.gmra.mxu0 %v4759
      %v4858 = vpop.f32.mrf.mxu0
      %v4859 = vadd.f32 0.0, %v4858
      %v4860 = vpop.f32.mrf.mxu0
      %v4861 = vpop.f32.mrf.mxu0
      %v4862 = vadd.f32 0.0, %v4861
      %v4863 = vpop.f32.mrf.mxu0
      %4864 = vmatprep.mubr.bf16.mxu0 0
      %4865 = vmatmul.mubr.bf16.gmra.mxu0 %v4762
      %v4866 = vpop.f32.mrf.mxu0
      %v4867 = vadd.f32 0.0, %v4866
      %v4868 = vpop.f32.mrf.mxu0
      %v4869 = vpop.f32.mrf.mxu0
      %v4870 = vadd.f32 0.0, %v4869
      %v4871 = vpop.f32.mrf.mxu0
      %4872 = vmatprep.mubr.bf16.mxu0 0
      %4873 = vmatmul.mubr.bf16.gmra.mxu0 %v4765
      %v4874 = vpop.f32.mrf.mxu0
      %v4875 = vadd.f32 0.0, %v4874
      %v4876 = vpop.f32.mrf.mxu0
      %v4877 = vpop.f32.mrf.mxu0
      %v4878 = vadd.f32 0.0, %v4877
      %v4879 = vpop.f32.mrf.mxu0
      %4880 = vmatprep.mubr.bf16.mxu0 0
      %4881 = vmatmul.mubr.bf16.gmra.mxu0 %v4768
      %v4882 = vpop.f32.mrf.mxu0
      %v4883 = vadd.f32 0.0, %v4882
      %v4884 = vpop.f32.mrf.mxu0
      %v4885 = vpop.f32.mrf.mxu0
      %v4886 = vadd.f32 0.0, %v4885
      %v4887 = vpop.f32.mrf.mxu0
      %4888 = vmatprep.mubr.bf16.mxu0 0
      %4889 = vmatmul.mubr.bf16.gmra.mxu0 %v4771
      %v4890 = vpop.f32.mrf.mxu0
      %v4891 = vadd.f32 0.0, %v4890
      %v4892 = vpop.f32.mrf.mxu0
      %v4893 = vpop.f32.mrf.mxu0
      %v4894 = vadd.f32 0.0, %v4893
      %v4895 = vpop.f32.mrf.mxu0
      %4896 = vmatprep.mubr.bf16.mxu0 0
      %4897 = vmatmul.mubr.bf16.gmra.mxu0 %v4774
      %v4898 = vpop.f32.mrf.mxu0
      %v4899 = vadd.f32 0.0, %v4898
      %v4900 = vpop.f32.mrf.mxu0
      %v4901 = vpop.f32.mrf.mxu0
      %v4902 = vadd.f32 0.0, %v4901
      %v4903 = vpop.f32.mrf.mxu0
      %4904 = vmatprep.mubr.bf16.mxu0 0
      %4905 = vmatmul.mubr.bf16.gmra.mxu0 %v4777
      %v4906 = vpop.f32.mrf.mxu0
      %v4907 = vadd.f32 0.0, %v4906
      %v4908 = vpop.f32.mrf.mxu0
      %v4909 = vpop.f32.mrf.mxu0
      %v4910 = vadd.f32 0.0, %v4909
      %v4911 = vpop.f32.mrf.mxu0
      %4912 = vmatprep.mubr.bf16.mxu0 0
      %4913 = vmatmul.mubr.bf16.gmra.mxu0 %v4780
      %v4914 = vpop.f32.mrf.mxu0
      %v4915 = vadd.f32 0.0, %v4914
      %v4916 = vpop.f32.mrf.mxu0
      %v4917 = vpop.f32.mrf.mxu0
      %v4918 = vadd.f32 0.0, %v4917
      %v4919 = vpop.f32.mrf.mxu0
      %4920 = vmatprep.mubr.bf16.mxu0 0
      %4921 = vmatmul.mubr.bf16.gmra.mxu0 %v4783
      %v4922 = vpop.f32.mrf.mxu0
      %v4923 = vadd.f32 0.0, %v4922
      %v4924 = vpop.f32.mrf.mxu0
      %v4925 = vpop.f32.mrf.mxu0
      %v4926 = vadd.f32 0.0, %v4925
      %v4927 = vpop.f32.mrf.mxu0
      %4928 = vmatprep.mubr.bf16.mxu0 0
      %4929 = vmatmul.mubr.bf16.gmra.mxu0 %v4786
      %v4930 = vpop.f32.mrf.mxu0
      %v4931 = vadd.f32 0.0, %v4930
      %v4932 = vpop.f32.mrf.mxu0
      %v4933 = vpop.f32.mrf.mxu0
      %v4934 = vadd.f32 0.0, %v4933
      %v4935 = vpop.f32.mrf.mxu0
      %4936 = vmatprep.mubr.bf16.mxu0 0
      %4937 = vmatmul.mubr.bf16.gmra.mxu0 %v4789
      %v4938 = vpop.f32.mrf.mxu0
      %v4939 = vadd.f32 0.0, %v4938
      %v4940 = vpop.f32.mrf.mxu0
      %v4941 = vpop.f32.mrf.mxu0
      %v4942 = vadd.f32 0.0, %v4941
      %v4943 = vpop.f32.mrf.mxu0
      %4944 = vmatprep.mubr.bf16.mxu0 0
      %4945 = vmatmul.mubr.bf16.gmra.mxu0 %v4792
      %v4946 = vpop.f32.mrf.mxu0
      %v4947 = vadd.f32 0.0, %v4946
      %v4948 = vpop.f32.mrf.mxu0
      %v4949 = vpop.f32.mrf.mxu0
      %v4950 = vadd.f32 0.0, %v4949
      %v4951 = vpop.f32.mrf.mxu0
      %4952 = vmatprep.mubr.bf16.mxu0 0
      %4953 = vmatmul.mubr.bf16.gmra.mxu0 %v4795
      %v4954 = vpop.f32.mrf.mxu0
      %v4955 = vadd.f32 0.0, %v4954
      %v4956 = vpop.f32.mrf.mxu0
      %v4957 = vpop.f32.mrf.mxu0
      %v4958 = vadd.f32 0.0, %v4957
      %v4959 = vpop.f32.mrf.mxu0
      %4960 = vdwg.mxu0
      %v4961 = vadd.f32 %v4235, %v4835
      %v4962 = vadd.f32 %v4236, %v4838
      %v4963 = vadd.f32 %v4237, %v4843
      %v4964 = vadd.f32 %v4238, %v4846
      %v4965 = vadd.f32 %v4239, %v4851
      %v4966 = vadd.f32 %v4240, %v4854
      %v4967 = vadd.f32 %v4241, %v4859
      %v4968 = vadd.f32 %v4242, %v4862
      %v4969 = vadd.f32 %v4243, %v4867
      %v4970 = vadd.f32 %v4244, %v4870
      %v4971 = vadd.f32 %v4245, %v4875
      %v4972 = vadd.f32 %v4246, %v4878
      %v4973 = vadd.f32 %v4247, %v4883
      %v4974 = vadd.f32 %v4248, %v4886
      %v4975 = vadd.f32 %v4249, %v4891
      %v4976 = vadd.f32 %v4250, %v4894
      %v4977 = vadd.f32 %v4251, %v4899
      %v4978 = vadd.f32 %v4252, %v4902
      %v4979 = vadd.f32 %v4253, %v4907
      %v4980 = vadd.f32 %v4254, %v4910
      %v4981 = vadd.f32 %v4255, %v4915
      %v4982 = vadd.f32 %v4256, %v4918
      %v4983 = vadd.f32 %v4257, %v4923
      %v4984 = vadd.f32 %v4258, %v4926
      %v4985 = vadd.f32 %v4259, %v4931
      %v4986 = vadd.f32 %v4260, %v4934
      %v4987 = vadd.f32 %v4261, %v4939
      %v4988 = vadd.f32 %v4262, %v4942
      %v4989 = vadd.f32 %v4263, %v4947
      %v4990 = vadd.f32 %v4264, %v4950
      %v4991 = vadd.f32 %v4265, %v4955
      %v4992 = vadd.f32 %v4266, %v4958
      %v4993 = vld [vmem:[%s3908] sm:$0xe]
      %v4994 = vld [vmem:[%s3908 + $0xc] sm:$0xe]
      %v4995 = vld [vmem:[%s3908 + $0x18] sm:$0xe]
      %v4996 = vld [vmem:[%s3908 + $0x24] sm:$0xe]
      %v4997 = vld [vmem:[%s3908 + $0x30] sm:$0xe]
      %v4998 = vld [vmem:[%s3908 + $0x3c] sm:$0xe]
      %v4999 = vld [vmem:[%s3908 + $0x48] sm:$0xe]
      %v5000 = vld [vmem:[%s3908 + $0x54] sm:$0xe]
      %v5001 = vld [vmem:[%s3908 + $0x60] sm:$0xe]
      %v5002 = vld [vmem:[%s3908 + $0x6c] sm:$0xe]
      %v5003 = vld [vmem:[%s3908 + $0x78] sm:$0xe]
      %v5004 = vld [vmem:[%s3908 + $0x84] sm:$0xe]
      %v5005 = vld [vmem:[%s3908 + $0x90] sm:$0xe]
      %v5006 = vld [vmem:[%s3908 + $0x9c] sm:$0xe]
      %v5007 = vld [vmem:[%s3908 + $0xa8] sm:$0xe]
      %v5008 = vld [vmem:[%s3908 + $0xb4] sm:$0xe]
      %v5057 = vrot.slane %v4993, 5
      %v5058 = vrot.slane %v5057, 4
      %v5059 = vrot.slane %v4268, 5
      %v5060 = vsel %vm1947, %v5058, %v5059
      %v5061 = vrot.slane %v5059, 4
      %v5062 = vrot.slane %v4269, 5
      %v5063 = vsel %vm1947, %v5061, %v5062
      %v5064 = vrot.slane %v4994, 5
      %v5065 = vrot.slane %v5064, 4
      %v5066 = vrot.slane %v4271, 5
      %v5067 = vsel %vm1947, %v5065, %v5066
      %v5068 = vrot.slane %v5066, 4
      %v5069 = vrot.slane %v4272, 5
      %v5070 = vsel %vm1947, %v5068, %v5069
      %v5071 = vrot.slane %v4995, 5
      %v5072 = vrot.slane %v5071, 4
      %v5073 = vrot.slane %v4274, 5
      %v5074 = vsel %vm1947, %v5072, %v5073
      %v5075 = vrot.slane %v5073, 4
      %v5076 = vrot.slane %v4275, 5
      %v5077 = vsel %vm1947, %v5075, %v5076
      %v5078 = vrot.slane %v4996, 5
      %v5079 = vrot.slane %v5078, 4
      %v5080 = vrot.slane %v4277, 5
      %v5081 = vsel %vm1947, %v5079, %v5080
      %v5082 = vrot.slane %v5080, 4
      %v5083 = vrot.slane %v4278, 5
      %v5084 = vsel %vm1947, %v5082, %v5083
      %v5085 = vrot.slane %v4997, 5
      %v5086 = vrot.slane %v5085, 4
      %v5087 = vrot.slane %v4280, 5
      %v5088 = vsel %vm1947, %v5086, %v5087
      %v5089 = vrot.slane %v5087, 4
      %v5090 = vrot.slane %v4281, 5
      %v5091 = vsel %vm1947, %v5089, %v5090
      %v5092 = vrot.slane %v4998, 5
      %v5093 = vrot.slane %v5092, 4
      %v5094 = vrot.slane %v4283, 5
      %v5095 = vsel %vm1947, %v5093, %v5094
      %v5096 = vrot.slane %v5094, 4
      %v5097 = vrot.slane %v4284, 5
      %v5098 = vsel %vm1947, %v5096, %v5097
      %v5099 = vrot.slane %v4999, 5
      %v5100 = vrot.slane %v5099, 4
      %v5101 = vrot.slane %v4286, 5
      %v5102 = vsel %vm1947, %v5100, %v5101
      %v5103 = vrot.slane %v5101, 4
      %v5104 = vrot.slane %v4287, 5
      %v5105 = vsel %vm1947, %v5103, %v5104
      %v5106 = vrot.slane %v5000, 5
      %v5107 = vrot.slane %v5106, 4
      %v5108 = vrot.slane %v4289, 5
      %v5109 = vsel %vm1947, %v5107, %v5108
      %v5110 = vrot.slane %v5108, 4
      %v5111 = vrot.slane %v4290, 5
      %v5112 = vsel %vm1947, %v5110, %v5111
      %v5113 = vrot.slane %v5001, 5
      %v5114 = vrot.slane %v5113, 4
      %v5115 = vrot.slane %v4292, 5
      %v5116 = vsel %vm1947, %v5114, %v5115
      %v5117 = vrot.slane %v5115, 4
      %v5118 = vrot.slane %v4293, 5
      %v5119 = vsel %vm1947, %v5117, %v5118
      %v5120 = vrot.slane %v5002, 5
      %v5121 = vrot.slane %v5120, 4
      %v5122 = vrot.slane %v4295, 5
      %v5123 = vsel %vm1947, %v5121, %v5122
      %v5124 = vrot.slane %v5122, 4
      %v5125 = vrot.slane %v4296, 5
      %v5126 = vsel %vm1947, %v5124, %v5125
      %v5127 = vrot.slane %v5003, 5
      %v5128 = vrot.slane %v5127, 4
      %v5129 = vrot.slane %v4298, 5
      %v5130 = vsel %vm1947, %v5128, %v5129
      %v5131 = vrot.slane %v5129, 4
      %v5132 = vrot.slane %v4299, 5
      %v5133 = vsel %vm1947, %v5131, %v5132
      %v5134 = vrot.slane %v5004, 5
      %v5135 = vrot.slane %v5134, 4
      %v5136 = vrot.slane %v4301, 5
      %v5137 = vsel %vm1947, %v5135, %v5136
      %v5138 = vrot.slane %v5136, 4
      %v5139 = vrot.slane %v4302, 5
      %v5140 = vsel %vm1947, %v5138, %v5139
      %v5141 = vrot.slane %v5005, 5
      %v5142 = vrot.slane %v5141, 4
      %v5143 = vrot.slane %v4304, 5
      %v5144 = vsel %vm1947, %v5142, %v5143
      %v5145 = vrot.slane %v5143, 4
      %v5146 = vrot.slane %v4305, 5
      %v5147 = vsel %vm1947, %v5145, %v5146
      %v5148 = vrot.slane %v5006, 5
      %v5149 = vrot.slane %v5148, 4
      %v5150 = vrot.slane %v4307, 5
      %v5151 = vsel %vm1947, %v5149, %v5150
      %v5152 = vrot.slane %v5150, 4
      %v5153 = vrot.slane %v4308, 5
      %v5154 = vsel %vm1947, %v5152, %v5153
      %v5155 = vrot.slane %v5007, 5
      %v5156 = vrot.slane %v5155, 4
      %v5157 = vrot.slane %v4310, 5
      %v5158 = vsel %vm1947, %v5156, %v5157
      %v5159 = vrot.slane %v5157, 4
      %v5160 = vrot.slane %v4311, 5
      %v5161 = vsel %vm1947, %v5159, %v5160
      %v5162 = vrot.slane %v5008, 5
      %v5163 = vrot.slane %v5162, 4
      %v5164 = vrot.slane %v4313, 5
      %v5165 = vsel %vm1947, %v5163, %v5164
      %v5166 = vrot.slane %v5164, 4
      %v5167 = vrot.slane %v4314, 5
      %v5168 = vsel %vm1947, %v5166, %v5167
      %s5169 = scalar_lea.vmem %s1, 16
      %v5170 = vld [vmem:[%s5169] sm:$0x3]
      %v5171 = vunpack.c.l.b16 %v5060
      %v5172 = vunpack.c.l.b16 %v5063
      %v5173 = vunpack.c.l.b16 %v5067
      %v5174 = vunpack.c.l.b16 %v5070
      %v5175 = vunpack.c.l.b16 %v5074
      %v5176 = vunpack.c.l.b16 %v5077
      %v5177 = vunpack.c.l.b16 %v5081
      %v5178 = vunpack.c.l.b16 %v5084
      %v5179 = vunpack.c.l.b16 %v5088
      %v5180 = vunpack.c.l.b16 %v5091
      %v5181 = vunpack.c.l.b16 %v5095
      %v5182 = vunpack.c.l.b16 %v5098
      %v5183 = vunpack.c.l.b16 %v5102
      %v5184 = vunpack.c.l.b16 %v5105
      %v5185 = vunpack.c.l.b16 %v5109
      %v5186 = vunpack.c.l.b16 %v5112
      %v5187 = vunpack.c.l.b16 %v5116
      %v5188 = vunpack.c.l.b16 %v5119
      %v5189 = vunpack.c.l.b16 %v5123
      %v5190 = vunpack.c.l.b16 %v5126
      %v5191 = vunpack.c.l.b16 %v5130
      %v5192 = vunpack.c.l.b16 %v5133
      %v5193 = vunpack.c.l.b16 %v5137
      %v5194 = vunpack.c.l.b16 %v5140
      %v5195 = vunpack.c.l.b16 %v5144
      %v5196 = vunpack.c.l.b16 %v5147
      %v5197 = vunpack.c.l.b16 %v5151
      %v5198 = vunpack.c.l.b16 %v5154
      %v5199 = vunpack.c.l.b16 %v5158
      %v5200 = vunpack.c.l.b16 %v5161
      %v5201 = vunpack.c.l.b16 %v5165
      %v5202 = vunpack.c.l.b16 %v5168
      %v5203 = vpack.c.b16 %v5172, %v5171
      %v5204 = vpack.c.b16 %v5174, %v5173
      %v5205 = vpack.c.b16 %v5176, %v5175
      %v5206 = vpack.c.b16 %v5178, %v5177
      %v5207 = vpack.c.b16 %v5180, %v5179
      %v5208 = vpack.c.b16 %v5182, %v5181
      %v5209 = vpack.c.b16 %v5184, %v5183
      %v5210 = vpack.c.b16 %v5186, %v5185
      %v5211 = vpack.c.b16 %v5188, %v5187
      %v5212 = vpack.c.b16 %v5190, %v5189
      %v5213 = vpack.c.b16 %v5192, %v5191
      %v5214 = vpack.c.b16 %v5194, %v5193
      %v5215 = vpack.c.b16 %v5196, %v5195
      %v5216 = vpack.c.b16 %v5198, %v5197
      %v5217 = vpack.c.b16 %v5200, %v5199
      %v5218 = vpack.c.b16 %v5202, %v5201
      %v5220 = vsel %vm1391, %v5203, 0
      %v5223 = vsel %vm1391, %v5204, 0
      %v5226 = vsel %vm1391, %v5205, 0
      %v5229 = vsel %vm1391, %v5206, 0
      %v5232 = vsel %vm1391, %v5207, 0
      %v5235 = vsel %vm1391, %v5208, 0
      %v5238 = vsel %vm1391, %v5209, 0
      %v5241 = vsel %vm1391, %v5210, 0
      %v5244 = vsel %vm1391, %v5211, 0
      %v5247 = vsel %vm1391, %v5212, 0
      %v5250 = vsel %vm1391, %v5213, 0
      %v5253 = vsel %vm1391, %v5214, 0
      %v5256 = vsel %vm1391, %v5215, 0
      %v5259 = vsel %vm1391, %v5216, 0
      %v5262 = vsel %vm1391, %v5217, 0
      %v5265 = vsel %vm1391, %v5218, 0
      %v5268 = vsel %vm1440, %v5170, 0
      %5270 = vmatprep.subr.bf16.mxu0 0
      %5271 = vmatpush1.bf16.msra.mxu0 0
      %5272 = vmatprep.subr.bf16.mxu0 0
      %5273 = vmatpush1.bf16.msra.mxu0 0
      %5274 = vmatprep.subr.bf16.mxu0 0
      %5275 = vmatpush1.bf16.msra.mxu0 0
      %5276 = vmatprep.subr.bf16.mxu0 0
      %5277 = vmatpush1.bf16.msra.mxu0 0
      %5278 = vmatprep.subr.bf16.mxu0 0
      %5279 = vmatpush1.bf16.msra.mxu0 0
      %5280 = vmatprep.subr.bf16.mxu0 0
      %5281 = vmatpush1.bf16.msra.mxu0 0
      %5282 = vmatprep.subr.bf16.mxu0 0
      %5283 = vmatpush1.bf16.msra.mxu0 0
      %5284 = vmatprep.subr.bf16.mxu0 0
      %5285 = vmatpush1.bf16.msra.mxu0 %v5268
      %5286 = vmatprep.subr.bf16.mxu0 0
      %5287 = vmatpush2.bf16.msra.mxu0 0
      %5288 = vmatprep.subr.bf16.mxu0 0
      %5289 = vmatpush2.bf16.msra.mxu0 0
      %5290 = vmatprep.subr.bf16.mxu0 0
      %5291 = vmatpush2.bf16.msra.mxu0 0
      %5292 = vmatprep.subr.bf16.mxu0 0
      %5293 = vmatpush2.bf16.msra.mxu0 0
      %5294 = vmatprep.subr.bf16.mxu0 0
      %5295 = vmatpush2.bf16.msra.mxu0 0
      %5296 = vmatprep.subr.bf16.mxu0 0
      %5297 = vmatpush2.bf16.msra.mxu0 0
      %5298 = vmatprep.subr.bf16.mxu0 0
      %5299 = vmatpush2.bf16.msra.mxu0 0
      %5300 = vmatprep.subr.bf16.mxu0 0
      %5301 = vmatpush2.bf16.msra.mxu0 0
      %5302 = vmatprep.mubr.bf16.mxu0 0
      %5303 = vmatmul.mubr.bf16.gmra.mxu0 %v5220
      %v5304 = vpop.f32.mrf.mxu0
      %v5305 = vadd.f32 0.0, %v5304
      %v5306 = vpop.f32.mrf.mxu0
      %v5307 = vpop.f32.mrf.mxu0
      %v5308 = vadd.f32 0.0, %v5307
      %v5309 = vpop.f32.mrf.mxu0
      %5310 = vmatprep.mubr.bf16.mxu0 0
      %5311 = vmatmul.mubr.bf16.gmra.mxu0 %v5223
      %v5312 = vpop.f32.mrf.mxu0
      %v5313 = vadd.f32 0.0, %v5312
      %v5314 = vpop.f32.mrf.mxu0
      %v5315 = vpop.f32.mrf.mxu0
      %v5316 = vadd.f32 0.0, %v5315
      %v5317 = vpop.f32.mrf.mxu0
      %5318 = vmatprep.mubr.bf16.mxu0 0
      %5319 = vmatmul.mubr.bf16.gmra.mxu0 %v5226
      %v5320 = vpop.f32.mrf.mxu0
      %v5321 = vadd.f32 0.0, %v5320
      %v5322 = vpop.f32.mrf.mxu0
      %v5323 = vpop.f32.mrf.mxu0
      %v5324 = vadd.f32 0.0, %v5323
      %v5325 = vpop.f32.mrf.mxu0
      %5326 = vmatprep.mubr.bf16.mxu0 0
      %5327 = vmatmul.mubr.bf16.gmra.mxu0 %v5229
      %v5328 = vpop.f32.mrf.mxu0
      %v5329 = vadd.f32 0.0, %v5328
      %v5330 = vpop.f32.mrf.mxu0
      %v5331 = vpop.f32.mrf.mxu0
      %v5332 = vadd.f32 0.0, %v5331
      %v5333 = vpop.f32.mrf.mxu0
      %5334 = vmatprep.mubr.bf16.mxu0 0
      %5335 = vmatmul.mubr.bf16.gmra.mxu0 %v5232
      %v5336 = vpop.f32.mrf.mxu0
      %v5337 = vadd.f32 0.0, %v5336
      %v5338 = vpop.f32.mrf.mxu0
      %v5339 = vpop.f32.mrf.mxu0
      %v5340 = vadd.f32 0.0, %v5339
      %v5341 = vpop.f32.mrf.mxu0
      %5342 = vmatprep.mubr.bf16.mxu0 0
      %5343 = vmatmul.mubr.bf16.gmra.mxu0 %v5235
      %v5344 = vpop.f32.mrf.mxu0
      %v5345 = vadd.f32 0.0, %v5344
      %v5346 = vpop.f32.mrf.mxu0
      %v5347 = vpop.f32.mrf.mxu0
      %v5348 = vadd.f32 0.0, %v5347
      %v5349 = vpop.f32.mrf.mxu0
      %5350 = vmatprep.mubr.bf16.mxu0 0
      %5351 = vmatmul.mubr.bf16.gmra.mxu0 %v5238
      %v5352 = vpop.f32.mrf.mxu0
      %v5353 = vadd.f32 0.0, %v5352
      %v5354 = vpop.f32.mrf.mxu0
      %v5355 = vpop.f32.mrf.mxu0
      %v5356 = vadd.f32 0.0, %v5355
      %v5357 = vpop.f32.mrf.mxu0
      %5358 = vmatprep.mubr.bf16.mxu0 0
      %5359 = vmatmul.mubr.bf16.gmra.mxu0 %v5241
      %v5360 = vpop.f32.mrf.mxu0
      %v5361 = vadd.f32 0.0, %v5360
      %v5362 = vpop.f32.mrf.mxu0
      %v5363 = vpop.f32.mrf.mxu0
      %v5364 = vadd.f32 0.0, %v5363
      %v5365 = vpop.f32.mrf.mxu0
      %5366 = vmatprep.mubr.bf16.mxu0 0
      %5367 = vmatmul.mubr.bf16.gmra.mxu0 %v5244
      %v5368 = vpop.f32.mrf.mxu0
      %v5369 = vadd.f32 0.0, %v5368
      %v5370 = vpop.f32.mrf.mxu0
      %v5371 = vpop.f32.mrf.mxu0
      %v5372 = vadd.f32 0.0, %v5371
      %v5373 = vpop.f32.mrf.mxu0
      %5374 = vmatprep.mubr.bf16.mxu0 0
      %5375 = vmatmul.mubr.bf16.gmra.mxu0 %v5247
      %v5376 = vpop.f32.mrf.mxu0
      %v5377 = vadd.f32 0.0, %v5376
      %v5378 = vpop.f32.mrf.mxu0
      %v5379 = vpop.f32.mrf.mxu0
      %v5380 = vadd.f32 0.0, %v5379
      %v5381 = vpop.f32.mrf.mxu0
      %5382 = vmatprep.mubr.bf16.mxu0 0
      %5383 = vmatmul.mubr.bf16.gmra.mxu0 %v5250
      %v5384 = vpop.f32.mrf.mxu0
      %v5385 = vadd.f32 0.0, %v5384
      %v5386 = vpop.f32.mrf.mxu0
      %v5387 = vpop.f32.mrf.mxu0
      %v5388 = vadd.f32 0.0, %v5387
      %v5389 = vpop.f32.mrf.mxu0
      %5390 = vmatprep.mubr.bf16.mxu0 0
      %5391 = vmatmul.mubr.bf16.gmra.mxu0 %v5253
      %v5392 = vpop.f32.mrf.mxu0
      %v5393 = vadd.f32 0.0, %v5392
      %v5394 = vpop.f32.mrf.mxu0
      %v5395 = vpop.f32.mrf.mxu0
      %v5396 = vadd.f32 0.0, %v5395
      %v5397 = vpop.f32.mrf.mxu0
      %5398 = vmatprep.mubr.bf16.mxu0 0
      %5399 = vmatmul.mubr.bf16.gmra.mxu0 %v5256
      %v5400 = vpop.f32.mrf.mxu0
      %v5401 = vadd.f32 0.0, %v5400
      %v5402 = vpop.f32.mrf.mxu0
      %v5403 = vpop.f32.mrf.mxu0
      %v5404 = vadd.f32 0.0, %v5403
      %v5405 = vpop.f32.mrf.mxu0
      %5406 = vmatprep.mubr.bf16.mxu0 0
      %5407 = vmatmul.mubr.bf16.gmra.mxu0 %v5259
      %v5408 = vpop.f32.mrf.mxu0
      %v5409 = vadd.f32 0.0, %v5408
      %v5410 = vpop.f32.mrf.mxu0
      %v5411 = vpop.f32.mrf.mxu0
      %v5412 = vadd.f32 0.0, %v5411
      %v5413 = vpop.f32.mrf.mxu0
      %5414 = vmatprep.mubr.bf16.mxu0 0
      %5415 = vmatmul.mubr.bf16.gmra.mxu0 %v5262
      %v5416 = vpop.f32.mrf.mxu0
      %v5417 = vadd.f32 0.0, %v5416
      %v5418 = vpop.f32.mrf.mxu0
      %v5419 = vpop.f32.mrf.mxu0
      %v5420 = vadd.f32 0.0, %v5419
      %v5421 = vpop.f32.mrf.mxu0
      %5422 = vmatprep.mubr.bf16.mxu0 0
      %5423 = vmatmul.mubr.bf16.gmra.mxu0 %v5265
      %v5424 = vpop.f32.mrf.mxu0
      %v5425 = vadd.f32 0.0, %v5424
      %v5426 = vpop.f32.mrf.mxu0
      %v5427 = vpop.f32.mrf.mxu0
      %v5428 = vadd.f32 0.0, %v5427
      %v5429 = vpop.f32.mrf.mxu0
      %5430 = vdwg.mxu0
      %v5431 = vadd.f32 %v4961, %v5305
      %v5432 = vadd.f32 %v4962, %v5308
      %v5433 = vadd.f32 %v4963, %v5313
      %v5434 = vadd.f32 %v4964, %v5316
      %v5435 = vadd.f32 %v4965, %v5321
      %v5436 = vadd.f32 %v4966, %v5324
      %v5437 = vadd.f32 %v4967, %v5329
      %v5438 = vadd.f32 %v4968, %v5332
      %v5439 = vadd.f32 %v4969, %v5337
      %v5440 = vadd.f32 %v4970, %v5340
      %v5441 = vadd.f32 %v4971, %v5345
      %v5442 = vadd.f32 %v4972, %v5348
      %v5443 = vadd.f32 %v4973, %v5353
      %v5444 = vadd.f32 %v4974, %v5356
      %v5445 = vadd.f32 %v4975, %v5361
      %v5446 = vadd.f32 %v4976, %v5364
      %v5447 = vadd.f32 %v4977, %v5369
      %v5448 = vadd.f32 %v4978, %v5372
      %v5449 = vadd.f32 %v4979, %v5377
      %v5450 = vadd.f32 %v4980, %v5380
      %v5451 = vadd.f32 %v4981, %v5385
      %v5452 = vadd.f32 %v4982, %v5388
      %v5453 = vadd.f32 %v4983, %v5393
      %v5454 = vadd.f32 %v4984, %v5396
      %v5455 = vadd.f32 %v4985, %v5401
      %v5456 = vadd.f32 %v4986, %v5404
      %v5457 = vadd.f32 %v4987, %v5409
      %v5458 = vadd.f32 %v4988, %v5412
      %v5459 = vadd.f32 %v4989, %v5417
      %v5460 = vadd.f32 %v4990, %v5420
      %v5461 = vadd.f32 %v4991, %v5425
      %v5462 = vadd.f32 %v4992, %v5428
      %v5463 = vld [vmem:[%s2] sm:$0x1]
      %v5465 = vlaneseq
      %v5466 = vshrl.u32 %v5465, 7
      %v5467 = vsub.s32 0, %v5466
      %v5468 = vrot.slane %v5463, %v5467
      %v5470 = vmul.f32 %v5431, %v5468
      %v5471 = vmul.f32 %v5432, %v5468
      %v5472 = vmul.f32 %v5433, %v5468
      %v5473 = vmul.f32 %v5434, %v5468
      %v5474 = vmul.f32 %v5435, %v5468
      %v5475 = vmul.f32 %v5436, %v5468
      %v5476 = vmul.f32 %v5437, %v5468
      %v5477 = vmul.f32 %v5438, %v5468
      %v5478 = vmul.f32 %v5439, %v5468
      %v5479 = vmul.f32 %v5440, %v5468
      %v5480 = vmul.f32 %v5441, %v5468
      %v5481 = vmul.f32 %v5442, %v5468
      %v5482 = vmul.f32 %v5443, %v5468
      %v5483 = vmul.f32 %v5444, %v5468
      %v5484 = vmul.f32 %v5445, %v5468
      %v5485 = vmul.f32 %v5446, %v5468
      %v5486 = vmul.f32 %v5447, %v5468
      %v5487 = vmul.f32 %v5448, %v5468
      %v5488 = vmul.f32 %v5449, %v5468
      %v5489 = vmul.f32 %v5450, %v5468
      %v5490 = vmul.f32 %v5451, %v5468
      %v5491 = vmul.f32 %v5452, %v5468
      %v5492 = vmul.f32 %v5453, %v5468
      %v5493 = vmul.f32 %v5454, %v5468
      %v5494 = vmul.f32 %v5455, %v5468
      %v5495 = vmul.f32 %v5456, %v5468
      %v5496 = vmul.f32 %v5457, %v5468
      %v5497 = vmul.f32 %v5458, %v5468
      %v5498 = vmul.f32 %v5459, %v5468
      %v5499 = vmul.f32 %v5460, %v5468
      %v5500 = vmul.f32 %v5461, %v5468
      %v5501 = vmul.f32 %v5462, %v5468
      %v5502 = vld [vmem:[%s3] sm:$0x1]
      %v5504 = vlaneseq
      %v5505 = vshrl.u32 %v5504, 7
      %v5506 = vsub.s32 0, %v5505
      %v5507 = vrot.slane %v5502, %v5506
      %v5509 = vadd.f32 %v5470, %v5507
      %v5510 = vadd.f32 %v5471, %v5507
      %v5511 = vadd.f32 %v5472, %v5507
      %v5512 = vadd.f32 %v5473, %v5507
      %v5513 = vadd.f32 %v5474, %v5507
      %v5514 = vadd.f32 %v5475, %v5507
      %v5515 = vadd.f32 %v5476, %v5507
      %v5516 = vadd.f32 %v5477, %v5507
      %v5517 = vadd.f32 %v5478, %v5507
      %v5518 = vadd.f32 %v5479, %v5507
      %v5519 = vadd.f32 %v5480, %v5507
      %v5520 = vadd.f32 %v5481, %v5507
      %v5521 = vadd.f32 %v5482, %v5507
      %v5522 = vadd.f32 %v5483, %v5507
      %v5523 = vadd.f32 %v5484, %v5507
      %v5524 = vadd.f32 %v5485, %v5507
      %v5525 = vadd.f32 %v5486, %v5507
      %v5526 = vadd.f32 %v5487, %v5507
      %v5527 = vadd.f32 %v5488, %v5507
      %v5528 = vadd.f32 %v5489, %v5507
      %v5529 = vadd.f32 %v5490, %v5507
      %v5530 = vadd.f32 %v5491, %v5507
      %v5531 = vadd.f32 %v5492, %v5507
      %v5532 = vadd.f32 %v5493, %v5507
      %v5533 = vadd.f32 %v5494, %v5507
      %v5534 = vadd.f32 %v5495, %v5507
      %v5535 = vadd.f32 %v5496, %v5507
      %v5536 = vadd.f32 %v5497, %v5507
      %v5537 = vadd.f32 %v5498, %v5507
      %v5538 = vadd.f32 %v5499, %v5507
      %v5539 = vadd.f32 %v5500, %v5507
      %v5540 = vadd.f32 %v5501, %v5507
      %vm5541 = vcmp.gt.f32.partialorder %v5509, 0.0
      %vm5542 = vcmp.gt.f32.partialorder %v5510, 0.0
      %vm5543 = vcmp.gt.f32.partialorder %v5511, 0.0
      %vm5544 = vcmp.gt.f32.partialorder %v5512, 0.0
      %vm5545 = vcmp.gt.f32.partialorder %v5513, 0.0
      %vm5546 = vcmp.gt.f32.partialorder %v5514, 0.0
      %vm5547 = vcmp.gt.f32.partialorder %v5515, 0.0
      %vm5548 = vcmp.gt.f32.partialorder %v5516, 0.0
      %vm5549 = vcmp.gt.f32.partialorder %v5517, 0.0
      %vm5550 = vcmp.gt.f32.partialorder %v5518, 0.0
      %vm5551 = vcmp.gt.f32.partialorder %v5519, 0.0
      %vm5552 = vcmp.gt.f32.partialorder %v5520, 0.0
      %vm5553 = vcmp.gt.f32.partialorder %v5521, 0.0
      %vm5554 = vcmp.gt.f32.partialorder %v5522, 0.0
      %vm5555 = vcmp.gt.f32.partialorder %v5523, 0.0
      %vm5556 = vcmp.gt.f32.partialorder %v5524, 0.0
      %vm5557 = vcmp.gt.f32.partialorder %v5525, 0.0
      %vm5558 = vcmp.gt.f32.partialorder %v5526, 0.0
      %vm5559 = vcmp.gt.f32.partialorder %v5527, 0.0
      %vm5560 = vcmp.gt.f32.partialorder %v5528, 0.0
      %vm5561 = vcmp.gt.f32.partialorder %v5529, 0.0
      %vm5562 = vcmp.gt.f32.partialorder %v5530, 0.0
      %vm5563 = vcmp.gt.f32.partialorder %v5531, 0.0
      %vm5564 = vcmp.gt.f32.partialorder %v5532, 0.0
      %vm5565 = vcmp.gt.f32.partialorder %v5533, 0.0
      %vm5566 = vcmp.gt.f32.partialorder %v5534, 0.0
      %vm5567 = vcmp.gt.f32.partialorder %v5535, 0.0
      %vm5568 = vcmp.gt.f32.partialorder %v5536, 0.0
      %vm5569 = vcmp.gt.f32.partialorder %v5537, 0.0
      %vm5570 = vcmp.gt.f32.partialorder %v5538, 0.0
      %vm5571 = vcmp.gt.f32.partialorder %v5539, 0.0
      %vm5572 = vcmp.gt.f32.partialorder %v5540, 0.0
      %v5573 = vmul.f32 %v5509, 0.01
      %v5574 = vmul.f32 %v5510, 0.01
      %v5575 = vmul.f32 %v5511, 0.01
      %v5576 = vmul.f32 %v5512, 0.01
      %v5577 = vmul.f32 %v5513, 0.01
      %v5578 = vmul.f32 %v5514, 0.01
      %v5579 = vmul.f32 %v5515, 0.01
      %v5580 = vmul.f32 %v5516, 0.01
      %v5581 = vmul.f32 %v5517, 0.01
      %v5582 = vmul.f32 %v5518, 0.01
      %v5583 = vmul.f32 %v5519, 0.01
      %v5584 = vmul.f32 %v5520, 0.01
      %v5585 = vmul.f32 %v5521, 0.01
      %v5586 = vmul.f32 %v5522, 0.01
      %v5587 = vmul.f32 %v5523, 0.01
      %v5588 = vmul.f32 %v5524, 0.01
      %v5589 = vmul.f32 %v5525, 0.01
      %v5590 = vmul.f32 %v5526, 0.01
      %v5591 = vmul.f32 %v5527, 0.01
      %v5592 = vmul.f32 %v5528, 0.01
      %v5593 = vmul.f32 %v5529, 0.01
      %v5594 = vmul.f32 %v5530, 0.01
      %v5595 = vmul.f32 %v5531, 0.01
      %v5596 = vmul.f32 %v5532, 0.01
      %v5597 = vmul.f32 %v5533, 0.01
      %v5598 = vmul.f32 %v5534, 0.01
      %v5599 = vmul.f32 %v5535, 0.01
      %v5600 = vmul.f32 %v5536, 0.01
      %v5601 = vmul.f32 %v5537, 0.01
      %v5602 = vmul.f32 %v5538, 0.01
      %v5603 = vmul.f32 %v5539, 0.01
      %v5604 = vmul.f32 %v5540, 0.01
      %v5605 = vsel %vm5541, %v5509, %v5573
      %v5606 = vsel %vm5542, %v5510, %v5574
      %v5607 = vsel %vm5543, %v5511, %v5575
      %v5608 = vsel %vm5544, %v5512, %v5576
      %v5609 = vsel %vm5545, %v5513, %v5577
      %v5610 = vsel %vm5546, %v5514, %v5578
      %v5611 = vsel %vm5547, %v5515, %v5579
      %v5612 = vsel %vm5548, %v5516, %v5580
      %v5613 = vsel %vm5549, %v5517, %v5581
      %v5614 = vsel %vm5550, %v5518, %v5582
      %v5615 = vsel %vm5551, %v5519, %v5583
      %v5616 = vsel %vm5552, %v5520, %v5584
      %v5617 = vsel %vm5553, %v5521, %v5585
      %v5618 = vsel %vm5554, %v5522, %v5586
      %v5619 = vsel %vm5555, %v5523, %v5587
      %v5620 = vsel %vm5556, %v5524, %v5588
      %v5621 = vsel %vm5557, %v5525, %v5589
      %v5622 = vsel %vm5558, %v5526, %v5590
      %v5623 = vsel %vm5559, %v5527, %v5591
      %v5624 = vsel %vm5560, %v5528, %v5592
      %v5625 = vsel %vm5561, %v5529, %v5593
      %v5626 = vsel %vm5562, %v5530, %v5594
      %v5627 = vsel %vm5563, %v5531, %v5595
      %v5628 = vsel %vm5564, %v5532, %v5596
      %v5629 = vsel %vm5565, %v5533, %v5597
      %v5630 = vsel %vm5566, %v5534, %v5598
      %v5631 = vsel %vm5567, %v5535, %v5599
      %v5632 = vsel %vm5568, %v5536, %v5600
      %v5633 = vsel %vm5569, %v5537, %v5601
      %v5634 = vsel %vm5570, %v5538, %v5602
      %v5635 = vsel %vm5571, %v5539, %v5603
      %v5636 = vsel %vm5572, %v5540, %v5604
      %5637 = vst [vmem:[#allocation3] sm:$0xf] 0
      %5638 = vst [vmem:[#allocation3 + $0x4] sm:$0xf] 0
      %5639 = vst [vmem:[#allocation3 + $0x8] sm:$0x1] 0
      %5640 = vst [vmem:[#allocation3 + $0xc] sm:$0xf] 0
      %5641 = vst [vmem:[#allocation3 + $0x10] sm:$0xf] 0
      %5642 = vst [vmem:[#allocation3 + $0x14] sm:$0x1] 0
      %5643 = vst [vmem:[#allocation3 + $0x18] sm:$0xf] 0
      %5644 = vst [vmem:[#allocation3 + $0x1c] sm:$0xf] 0
      %5645 = vst [vmem:[#allocation3 + $0x20] sm:$0x1] 0
      %5646 = vst [vmem:[#allocation3 + $0x24] sm:$0xf] 0
      %5647 = vst [vmem:[#allocation3 + $0x28] sm:$0xf] 0
      %5648 = vst [vmem:[#allocation3 + $0x2c] sm:$0x1] 0
      %5649 = vst [vmem:[#allocation3 + $0x30] sm:$0xf] 0
      %5650 = vst [vmem:[#allocation3 + $0x34] sm:$0xf] 0
      %5651 = vst [vmem:[#allocation3 + $0x38] sm:$0x1] 0
      %5652 = vst [vmem:[#allocation3 + $0x3c] sm:$0xf] 0
      %5653 = vst [vmem:[#allocation3 + $0x40] sm:$0xf] 0
      %5654 = vst [vmem:[#allocation3 + $0x44] sm:$0x1] 0
      %5655 = vst [vmem:[#allocation3 + $0x48] sm:$0xf] 0
      %5656 = vst [vmem:[#allocation3 + $0x4c] sm:$0xf] 0
      %5657 = vst [vmem:[#allocation3 + $0x50] sm:$0x1] 0
      %5658 = vst [vmem:[#allocation3 + $0x54] sm:$0xf] 0
      %5659 = vst [vmem:[#allocation3 + $0x58] sm:$0xf] 0
      %5660 = vst [vmem:[#allocation3 + $0x5c] sm:$0x1] 0
      %5661 = vst [vmem:[#allocation3 + $0x60] sm:$0xf] 0
      %5662 = vst [vmem:[#allocation3 + $0x64] sm:$0xf] 0
      %5663 = vst [vmem:[#allocation3 + $0x68] sm:$0x1] 0
      %5664 = vst [vmem:[#allocation3 + $0x6c] sm:$0xf] 0
      %5665 = vst [vmem:[#allocation3 + $0x70] sm:$0xf] 0
      %5666 = vst [vmem:[#allocation3 + $0x74] sm:$0x1] 0
      %5667 = vst [vmem:[#allocation3 + $0x78] sm:$0xf] 0
      %5668 = vst [vmem:[#allocation3 + $0x7c] sm:$0xf] 0
      %5669 = vst [vmem:[#allocation3 + $0x80] sm:$0x1] 0
      %5670 = vst [vmem:[#allocation3 + $0x84] sm:$0xf] 0
      %5671 = vst [vmem:[#allocation3 + $0x88] sm:$0xf] 0
      %5672 = vst [vmem:[#allocation3 + $0x8c] sm:$0x1] 0
      %5673 = vst [vmem:[#allocation3 + $0x90] sm:$0xf] 0
      %5674 = vst [vmem:[#allocation3 + $0x94] sm:$0xf] 0
      %5675 = vst [vmem:[#allocation3 + $0x98] sm:$0x1] 0
      %5676 = vst [vmem:[#allocation3 + $0x9c] sm:$0xf] 0
      %5677 = vst [vmem:[#allocation3 + $0xa0] sm:$0xf] 0
      %5678 = vst [vmem:[#allocation3 + $0xa4] sm:$0x1] 0
      %5679 = vst [vmem:[#allocation3 + $0xa8] sm:$0xf] 0
      %5680 = vst [vmem:[#allocation3 + $0xac] sm:$0xf] 0
      %5681 = vst [vmem:[#allocation3 + $0xb0] sm:$0x1] 0
      %5682 = vst [vmem:[#allocation3 + $0xb4] sm:$0xf] 0
      %5683 = vst [vmem:[#allocation3 + $0xb8] sm:$0xf] 0
      %5684 = vst [vmem:[#allocation3 + $0xbc] sm:$0x1] 0
      %5685 = vst [vmem:[#allocation3 + $0xc0] sm:$0xf] 0
      %5686 = vst [vmem:[#allocation3 + $0xc4] sm:$0xf] 0
      %5687 = vst [vmem:[#allocation3 + $0xc8] sm:$0x1] 0
      %5688 = vst [vmem:[#allocation3 + $0xcc] sm:$0xf] 0
      %5689 = vst [vmem:[#allocation3 + $0xd0] sm:$0xf] 0
      %5690 = vst [vmem:[#allocation3 + $0xd4] sm:$0x1] 0
      %v5691 = vpack.c.bf16 %v5606, %v5605
      %v5692 = vpack.c.bf16 %v5608, %v5607
      %v5693 = vpack.c.bf16 %v5610, %v5609
      %v5694 = vpack.c.bf16 %v5612, %v5611
      %v5695 = vpack.c.bf16 %v5614, %v5613
      %v5696 = vpack.c.bf16 %v5616, %v5615
      %v5697 = vpack.c.bf16 %v5618, %v5617
      %v5698 = vpack.c.bf16 %v5620, %v5619
      %v5699 = vpack.c.bf16 %v5622, %v5621
      %v5700 = vpack.c.bf16 %v5624, %v5623
      %v5701 = vpack.c.bf16 %v5626, %v5625
      %v5702 = vpack.c.bf16 %v5628, %v5627
      %v5703 = vpack.c.bf16 %v5630, %v5629
      %v5704 = vpack.c.bf16 %v5632, %v5631
      %v5705 = vpack.c.bf16 %v5634, %v5633
      %v5706 = vpack.c.bf16 %v5636, %v5635
      %v5723 = vunpack.c.l.b16 %v5691
      %v5724 = vunpack.c.h.b16 %v5691
      %v5725 = vunpack.c.l.b16 %v5692
      %v5726 = vunpack.c.h.b16 %v5692
      %v5727 = vunpack.c.l.b16 %v5693
      %v5728 = vunpack.c.h.b16 %v5693
      %v5729 = vunpack.c.l.b16 %v5694
      %v5730 = vunpack.c.h.b16 %v5694
      %v5731 = vunpack.c.l.b16 %v5695
      %v5732 = vunpack.c.h.b16 %v5695
      %v5733 = vunpack.c.l.b16 %v5696
      %v5734 = vunpack.c.h.b16 %v5696
      %v5735 = vunpack.c.l.b16 %v5697
      %v5736 = vunpack.c.h.b16 %v5697
      %v5737 = vunpack.c.l.b16 %v5698
      %v5738 = vunpack.c.h.b16 %v5698
      %v5739 = vunpack.c.l.b16 %v5699
      %v5740 = vunpack.c.h.b16 %v5699
      %v5741 = vunpack.c.l.b16 %v5700
      %v5742 = vunpack.c.h.b16 %v5700
      %v5743 = vunpack.c.l.b16 %v5701
      %v5744 = vunpack.c.h.b16 %v5701
      %v5745 = vunpack.c.l.b16 %v5702
      %v5746 = vunpack.c.h.b16 %v5702
      %v5747 = vunpack.c.l.b16 %v5703
      %v5748 = vunpack.c.h.b16 %v5703
      %v5749 = vunpack.c.l.b16 %v5704
      %v5750 = vunpack.c.h.b16 %v5704
      %v5751 = vunpack.c.l.b16 %v5705
      %v5752 = vunpack.c.h.b16 %v5705
      %v5753 = vunpack.c.l.b16 %v5706
      %v5754 = vunpack.c.h.b16 %v5706
      %v5755 = vpack.c.b16 %v5723, %v5723
      %v5756 = vpack.c.b16 %v5724, %v5724
      %v5757 = vpack.c.b16 %v5725, %v5725
      %v5758 = vpack.c.b16 %v5726, %v5726
      %v5759 = vpack.c.b16 %v5727, %v5727
      %v5760 = vpack.c.b16 %v5728, %v5728
      %v5761 = vpack.c.b16 %v5729, %v5729
      %v5762 = vpack.c.b16 %v5730, %v5730
      %v5763 = vpack.c.b16 %v5731, %v5731
      %v5764 = vpack.c.b16 %v5732, %v5732
      %v5765 = vpack.c.b16 %v5733, %v5733
      %v5766 = vpack.c.b16 %v5734, %v5734
      %v5767 = vpack.c.b16 %v5735, %v5735
      %v5768 = vpack.c.b16 %v5736, %v5736
      %v5769 = vpack.c.b16 %v5737, %v5737
      %v5770 = vpack.c.b16 %v5738, %v5738
      %v5771 = vpack.c.b16 %v5739, %v5739
      %v5772 = vpack.c.b16 %v5740, %v5740
      %v5773 = vpack.c.b16 %v5741, %v5741
      %v5774 = vpack.c.b16 %v5742, %v5742
      %v5775 = vpack.c.b16 %v5743, %v5743
      %v5776 = vpack.c.b16 %v5744, %v5744
      %v5777 = vpack.c.b16 %v5745, %v5745
      %v5778 = vpack.c.b16 %v5746, %v5746
      %v5779 = vpack.c.b16 %v5747, %v5747
      %v5780 = vpack.c.b16 %v5748, %v5748
      %v5781 = vpack.c.b16 %v5749, %v5749
      %v5782 = vpack.c.b16 %v5750, %v5750
      %v5783 = vpack.c.b16 %v5751, %v5751
      %v5784 = vpack.c.b16 %v5752, %v5752
      %v5785 = vpack.c.b16 %v5753, %v5753
      %v5786 = vpack.c.b16 %v5754, %v5754
      %v5788 = vshrl.u32 %v5755, 16
      %v5790 = vrot.slane %v5788, 7
      %v5791 = vshll.u32 %v5755, 16
      %v5793 = vor.u32 %v5790, %v5791
      %v5794 = vrot.slane %v5790, 4
      %v5796 = vshrl.u32 %v5756, 16
      %v5798 = vrot.slane %v5796, 7
      %v5799 = vshll.u32 %v5756, 16
      %v5801 = vor.u32 %v5798, %v5799
      %v5802 = vsel %vm466, %v5794, %v5801
      %v5803 = vrot.slane %v5798, 4
      %v5805 = vshrl.u32 %v5757, 16
      %v5807 = vrot.slane %v5805, 7
      %v5808 = vshll.u32 %v5757, 16
      %v5810 = vor.u32 %v5807, %v5808
      %v5811 = vrot.slane %v5807, 4
      %v5813 = vshrl.u32 %v5758, 16
      %v5815 = vrot.slane %v5813, 7
      %v5816 = vshll.u32 %v5758, 16
      %v5818 = vor.u32 %v5815, %v5816
      %v5819 = vsel %vm466, %v5811, %v5818
      %v5820 = vrot.slane %v5815, 4
      %v5822 = vshrl.u32 %v5759, 16
      %v5824 = vrot.slane %v5822, 7
      %v5825 = vshll.u32 %v5759, 16
      %v5827 = vor.u32 %v5824, %v5825
      %v5828 = vrot.slane %v5824, 4
      %v5830 = vshrl.u32 %v5760, 16
      %v5832 = vrot.slane %v5830, 7
      %v5833 = vshll.u32 %v5760, 16
      %v5835 = vor.u32 %v5832, %v5833
      %v5836 = vsel %vm466, %v5828, %v5835
      %v5837 = vrot.slane %v5832, 4
      %v5839 = vshrl.u32 %v5761, 16
      %v5841 = vrot.slane %v5839, 7
      %v5842 = vshll.u32 %v5761, 16
      %v5844 = vor.u32 %v5841, %v5842
      %v5845 = vrot.slane %v5841, 4
      %v5847 = vshrl.u32 %v5762, 16
      %v5849 = vrot.slane %v5847, 7
      %v5850 = vshll.u32 %v5762, 16
      %v5852 = vor.u32 %v5849, %v5850
      %v5853 = vsel %vm466, %v5845, %v5852
      %v5854 = vrot.slane %v5849, 4
      %v5856 = vshrl.u32 %v5763, 16
      %v5858 = vrot.slane %v5856, 7
      %v5859 = vshll.u32 %v5763, 16
      %v5861 = vor.u32 %v5858, %v5859
      %v5862 = vrot.slane %v5858, 4
      %v5864 = vshrl.u32 %v5764, 16
      %v5866 = vrot.slane %v5864, 7
      %v5867 = vshll.u32 %v5764, 16
      %v5869 = vor.u32 %v5866, %v5867
      %v5870 = vsel %vm466, %v5862, %v5869
      %v5871 = vrot.slane %v5866, 4
      %v5873 = vshrl.u32 %v5765, 16
      %v5875 = vrot.slane %v5873, 7
      %v5876 = vshll.u32 %v5765, 16
      %v5878 = vor.u32 %v5875, %v5876
      %v5879 = vrot.slane %v5875, 4
      %v5881 = vshrl.u32 %v5766, 16
      %v5883 = vrot.slane %v5881, 7
      %v5884 = vshll.u32 %v5766, 16
      %v5886 = vor.u32 %v5883, %v5884
      %v5887 = vsel %vm466, %v5879, %v5886
      %v5888 = vrot.slane %v5883, 4
      %v5890 = vshrl.u32 %v5767, 16
      %v5892 = vrot.slane %v5890, 7
      %v5893 = vshll.u32 %v5767, 16
      %v5895 = vor.u32 %v5892, %v5893
      %v5896 = vrot.slane %v5892, 4
      %v5898 = vshrl.u32 %v5768, 16
      %v5900 = vrot.slane %v5898, 7
      %v5901 = vshll.u32 %v5768, 16
      %v5903 = vor.u32 %v5900, %v5901
      %v5904 = vsel %vm466, %v5896, %v5903
      %v5905 = vrot.slane %v5900, 4
      %v5907 = vshrl.u32 %v5769, 16
      %v5909 = vrot.slane %v5907, 7
      %v5910 = vshll.u32 %v5769, 16
      %v5912 = vor.u32 %v5909, %v5910
      %v5913 = vrot.slane %v5909, 4
      %v5915 = vshrl.u32 %v5770, 16
      %v5917 = vrot.slane %v5915, 7
      %v5918 = vshll.u32 %v5770, 16
      %v5920 = vor.u32 %v5917, %v5918
      %v5921 = vsel %vm466, %v5913, %v5920
      %v5922 = vrot.slane %v5917, 4
      %v5924 = vshrl.u32 %v5771, 16
      %v5926 = vrot.slane %v5924, 7
      %v5927 = vshll.u32 %v5771, 16
      %v5929 = vor.u32 %v5926, %v5927
      %v5930 = vrot.slane %v5926, 4
      %v5932 = vshrl.u32 %v5772, 16
      %v5934 = vrot.slane %v5932, 7
      %v5935 = vshll.u32 %v5772, 16
      %v5937 = vor.u32 %v5934, %v5935
      %v5938 = vsel %vm466, %v5930, %v5937
      %v5939 = vrot.slane %v5934, 4
      %v5941 = vshrl.u32 %v5773, 16
      %v5943 = vrot.slane %v5941, 7
      %v5944 = vshll.u32 %v5773, 16
      %v5946 = vor.u32 %v5943, %v5944
      %v5947 = vrot.slane %v5943, 4
      %v5949 = vshrl.u32 %v5774, 16
      %v5951 = vrot.slane %v5949, 7
      %v5952 = vshll.u32 %v5774, 16
      %v5954 = vor.u32 %v5951, %v5952
      %v5955 = vsel %vm466, %v5947, %v5954
      %v5956 = vrot.slane %v5951, 4
      %v5958 = vshrl.u32 %v5775, 16
      %v5960 = vrot.slane %v5958, 7
      %v5961 = vshll.u32 %v5775, 16
      %v5963 = vor.u32 %v5960, %v5961
      %v5964 = vrot.slane %v5960, 4
      %v5966 = vshrl.u32 %v5776, 16
      %v5968 = vrot.slane %v5966, 7
      %v5969 = vshll.u32 %v5776, 16
      %v5971 = vor.u32 %v5968, %v5969
      %v5972 = vsel %vm466, %v5964, %v5971
      %v5973 = vrot.slane %v5968, 4
      %v5975 = vshrl.u32 %v5777, 16
      %v5977 = vrot.slane %v5975, 7
      %v5978 = vshll.u32 %v5777, 16
      %v5980 = vor.u32 %v5977, %v5978
      %v5981 = vrot.slane %v5977, 4
      %v5983 = vshrl.u32 %v5778, 16
      %v5985 = vrot.slane %v5983, 7
      %v5986 = vshll.u32 %v5778, 16
      %v5988 = vor.u32 %v5985, %v5986
      %v5989 = vsel %vm466, %v5981, %v5988
      %v5990 = vrot.slane %v5985, 4
      %v5992 = vshrl.u32 %v5779, 16
      %v5994 = vrot.slane %v5992, 7
      %v5995 = vshll.u32 %v5779, 16
      %v5997 = vor.u32 %v5994, %v5995
      %v5998 = vrot.slane %v5994, 4
      %v6000 = vshrl.u32 %v5780, 16
      %v6002 = vrot.slane %v6000, 7
      %v6003 = vshll.u32 %v5780, 16
      %v6005 = vor.u32 %v6002, %v6003
      %v6006 = vsel %vm466, %v5998, %v6005
      %v6007 = vrot.slane %v6002, 4
      %v6009 = vshrl.u32 %v5781, 16
      %v6011 = vrot.slane %v6009, 7
      %v6012 = vshll.u32 %v5781, 16
      %v6014 = vor.u32 %v6011, %v6012
      %v6015 = vrot.slane %v6011, 4
      %v6017 = vshrl.u32 %v5782, 16
      %v6019 = vrot.slane %v6017, 7
      %v6020 = vshll.u32 %v5782, 16
      %v6022 = vor.u32 %v6019, %v6020
      %v6023 = vsel %vm466, %v6015, %v6022
      %v6024 = vrot.slane %v6019, 4
      %v6026 = vshrl.u32 %v5783, 16
      %v6028 = vrot.slane %v6026, 7
      %v6029 = vshll.u32 %v5783, 16
      %v6031 = vor.u32 %v6028, %v6029
      %v6032 = vrot.slane %v6028, 4
      %v6034 = vshrl.u32 %v5784, 16
      %v6036 = vrot.slane %v6034, 7
      %v6037 = vshll.u32 %v5784, 16
      %v6039 = vor.u32 %v6036, %v6037
      %v6040 = vsel %vm466, %v6032, %v6039
      %v6041 = vrot.slane %v6036, 4
      %v6043 = vshrl.u32 %v5785, 16
      %v6045 = vrot.slane %v6043, 7
      %v6046 = vshll.u32 %v5785, 16
      %v6048 = vor.u32 %v6045, %v6046
      %v6049 = vrot.slane %v6045, 4
      %v6051 = vshrl.u32 %v5786, 16
      %v6053 = vrot.slane %v6051, 7
      %v6054 = vshll.u32 %v5786, 16
      %v6056 = vor.u32 %v6053, %v6054
      %v6057 = vsel %vm466, %v6049, %v6056
      %v6058 = vrot.slane %v6053, 4
      %s6107 = scalar_lea.vmem [#allocation3], 12
      %vm6108 = vcmask 1043456
      %vm6109 = vmand %vm6108, %vm789
      %v6110 = vld [vmem:[%s6107] sm:$0xf]
      %v6111 = vsel %vm6109, %v5793, %v6110
      %6112 = vst [vmem:[%s6107] sm:$0xf] %v6111
      %6113 = vst [vmem:[%s6107 + $0x4] sm:$0xf] %v5802
      %vm6114 = vcmask 1040384
      %vm6115 = vmand %vm6114, %vm464
      %v6116 = vld [vmem:[%s6107 + $0x8] sm:$0x1]
      %v6117 = vsel %vm6115, %v5803, %v6116
      %6118 = vst [vmem:[%s6107 + $0x8] sm:$0x1] %v6117
      %v6119 = vld [vmem:[%s6107 + $0xc] sm:$0xf]
      %v6120 = vsel %vm6109, %v5810, %v6119
      %6121 = vst [vmem:[%s6107 + $0xc] sm:$0xf] %v6120
      %6122 = vst [vmem:[%s6107 + $0x10] sm:$0xf] %v5819
      %v6123 = vld [vmem:[%s6107 + $0x14] sm:$0x1]
      %v6124 = vsel %vm6115, %v5820, %v6123
      %6125 = vst [vmem:[%s6107 + $0x14] sm:$0x1] %v6124
      %v6126 = vld [vmem:[%s6107 + $0x18] sm:$0xf]
      %v6127 = vsel %vm6109, %v5827, %v6126
      %6128 = vst [vmem:[%s6107 + $0x18] sm:$0xf] %v6127
      %6129 = vst [vmem:[%s6107 + $0x1c] sm:$0xf] %v5836
      %v6130 = vld [vmem:[%s6107 + $0x20] sm:$0x1]
      %v6131 = vsel %vm6115, %v5837, %v6130
      %6132 = vst [vmem:[%s6107 + $0x20] sm:$0x1] %v6131
      %v6133 = vld [vmem:[%s6107 + $0x24] sm:$0xf]
      %v6134 = vsel %vm6109, %v5844, %v6133
      %6135 = vst [vmem:[%s6107 + $0x24] sm:$0xf] %v6134
      %6136 = vst [vmem:[%s6107 + $0x28] sm:$0xf] %v5853
      %v6137 = vld [vmem:[%s6107 + $0x2c] sm:$0x1]
      %v6138 = vsel %vm6115, %v5854, %v6137
      %6139 = vst [vmem:[%s6107 + $0x2c] sm:$0x1] %v6138
      %v6140 = vld [vmem:[%s6107 + $0x30] sm:$0xf]
      %v6141 = vsel %vm6109, %v5861, %v6140
      %6142 = vst [vmem:[%s6107 + $0x30] sm:$0xf] %v6141
      %6143 = vst [vmem:[%s6107 + $0x34] sm:$0xf] %v5870
      %v6144 = vld [vmem:[%s6107 + $0x38] sm:$0x1]
      %v6145 = vsel %vm6115, %v5871, %v6144
      %6146 = vst [vmem:[%s6107 + $0x38] sm:$0x1] %v6145
      %v6147 = vld [vmem:[%s6107 + $0x3c] sm:$0xf]
      %v6148 = vsel %vm6109, %v5878, %v6147
      %6149 = vst [vmem:[%s6107 + $0x3c] sm:$0xf] %v6148
      %6150 = vst [vmem:[%s6107 + $0x40] sm:$0xf] %v5887
      %v6151 = vld [vmem:[%s6107 + $0x44] sm:$0x1]
      %v6152 = vsel %vm6115, %v5888, %v6151
      %6153 = vst [vmem:[%s6107 + $0x44] sm:$0x1] %v6152
      %v6154 = vld [vmem:[%s6107 + $0x48] sm:$0xf]
      %v6155 = vsel %vm6109, %v5895, %v6154
      %6156 = vst [vmem:[%s6107 + $0x48] sm:$0xf] %v6155
      %6157 = vst [vmem:[%s6107 + $0x4c] sm:$0xf] %v5904
      %v6158 = vld [vmem:[%s6107 + $0x50] sm:$0x1]
      %v6159 = vsel %vm6115, %v5905, %v6158
      %6160 = vst [vmem:[%s6107 + $0x50] sm:$0x1] %v6159
      %v6161 = vld [vmem:[%s6107 + $0x54] sm:$0xf]
      %v6162 = vsel %vm6109, %v5912, %v6161
      %6163 = vst [vmem:[%s6107 + $0x54] sm:$0xf] %v6162
      %6164 = vst [vmem:[%s6107 + $0x58] sm:$0xf] %v5921
      %v6165 = vld [vmem:[%s6107 + $0x5c] sm:$0x1]
      %v6166 = vsel %vm6115, %v5922, %v6165
      %6167 = vst [vmem:[%s6107 + $0x5c] sm:$0x1] %v6166
      %v6168 = vld [vmem:[%s6107 + $0x60] sm:$0xf]
      %v6169 = vsel %vm6109, %v5929, %v6168
      %6170 = vst [vmem:[%s6107 + $0x60] sm:$0xf] %v6169
      %6171 = vst [vmem:[%s6107 + $0x64] sm:$0xf] %v5938
      %v6172 = vld [vmem:[%s6107 + $0x68] sm:$0x1]
      %v6173 = vsel %vm6115, %v5939, %v6172
      %6174 = vst [vmem:[%s6107 + $0x68] sm:$0x1] %v6173
      %v6175 = vld [vmem:[%s6107 + $0x6c] sm:$0xf]
      %v6176 = vsel %vm6109, %v5946, %v6175
      %6177 = vst [vmem:[%s6107 + $0x6c] sm:$0xf] %v6176
      %6178 = vst [vmem:[%s6107 + $0x70] sm:$0xf] %v5955
      %v6179 = vld [vmem:[%s6107 + $0x74] sm:$0x1]
      %v6180 = vsel %vm6115, %v5956, %v6179
      %6181 = vst [vmem:[%s6107 + $0x74] sm:$0x1] %v6180
      %v6182 = vld [vmem:[%s6107 + $0x78] sm:$0xf]
      %v6183 = vsel %vm6109, %v5963, %v6182
      %6184 = vst [vmem:[%s6107 + $0x78] sm:$0xf] %v6183
      %6185 = vst [vmem:[%s6107 + $0x7c] sm:$0xf] %v5972
      %v6186 = vld [vmem:[%s6107 + $0x80] sm:$0x1]
      %v6187 = vsel %vm6115, %v5973, %v6186
      %6188 = vst [vmem:[%s6107 + $0x80] sm:$0x1] %v6187
      %v6189 = vld [vmem:[%s6107 + $0x84] sm:$0xf]
      %v6190 = vsel %vm6109, %v5980, %v6189
      %6191 = vst [vmem:[%s6107 + $0x84] sm:$0xf] %v6190
      %6192 = vst [vmem:[%s6107 + $0x88] sm:$0xf] %v5989
      %v6193 = vld [vmem:[%s6107 + $0x8c] sm:$0x1]
      %v6194 = vsel %vm6115, %v5990, %v6193
      %6195 = vst [vmem:[%s6107 + $0x8c] sm:$0x1] %v6194
      %v6196 = vld [vmem:[%s6107 + $0x90] sm:$0xf]
      %v6197 = vsel %vm6109, %v5997, %v6196
      %6198 = vst [vmem:[%s6107 + $0x90] sm:$0xf] %v6197
      %6199 = vst [vmem:[%s6107 + $0x94] sm:$0xf] %v6006
      %v6200 = vld [vmem:[%s6107 + $0x98] sm:$0x1]
      %v6201 = vsel %vm6115, %v6007, %v6200
      %6202 = vst [vmem:[%s6107 + $0x98] sm:$0x1] %v6201
      %v6203 = vld [vmem:[%s6107 + $0x9c] sm:$0xf]
      %v6204 = vsel %vm6109, %v6014, %v6203
      %6205 = vst [vmem:[%s6107 + $0x9c] sm:$0xf] %v6204
      %6206 = vst [vmem:[%s6107 + $0xa0] sm:$0xf] %v6023
      %v6207 = vld [vmem:[%s6107 + $0xa4] sm:$0x1]
      %v6208 = vsel %vm6115, %v6024, %v6207
      %6209 = vst [vmem:[%s6107 + $0xa4] sm:$0x1] %v6208
      %v6210 = vld [vmem:[%s6107 + $0xa8] sm:$0xf]
      %v6211 = vsel %vm6109, %v6031, %v6210
      %6212 = vst [vmem:[%s6107 + $0xa8] sm:$0xf] %v6211
      %6213 = vst [vmem:[%s6107 + $0xac] sm:$0xf] %v6040
      %v6214 = vld [vmem:[%s6107 + $0xb0] sm:$0x1]
      %v6215 = vsel %vm6115, %v6041, %v6214
      %6216 = vst [vmem:[%s6107 + $0xb0] sm:$0x1] %v6215
      %v6217 = vld [vmem:[%s6107 + $0xb4] sm:$0xf]
      %v6218 = vsel %vm6109, %v6048, %v6217
      %6219 = vst [vmem:[%s6107 + $0xb4] sm:$0xf] %v6218
      %6220 = vst [vmem:[%s6107 + $0xb8] sm:$0xf] %v6057
      %v6221 = vld [vmem:[%s6107 + $0xbc] sm:$0x1]
      %v6222 = vsel %vm6115, %v6058, %v6221
      %6223 = vst [vmem:[%s6107 + $0xbc] sm:$0x1] %v6222
      %v6224 = vld [vmem:[#allocation3] sm:$0xf]
      %v6225 = vld [vmem:[#allocation3 + $0x4] sm:$0xf]
      %v6226 = vld [vmem:[#allocation3 + $0xc] sm:$0xf]
      %v6227 = vld [vmem:[#allocation3 + $0x10] sm:$0xf]
      %v6228 = vld [vmem:[#allocation3 + $0x18] sm:$0xf]
      %v6229 = vld [vmem:[#allocation3 + $0x1c] sm:$0xf]
      %v6230 = vld [vmem:[#allocation3 + $0x24] sm:$0xf]
      %v6231 = vld [vmem:[#allocation3 + $0x28] sm:$0xf]
      %v6232 = vld [vmem:[#allocation3 + $0x30] sm:$0xf]
      %v6233 = vld [vmem:[#allocation3 + $0x34] sm:$0xf]
      %v6234 = vld [vmem:[#allocation3 + $0x3c] sm:$0xf]
      %v6235 = vld [vmem:[#allocation3 + $0x40] sm:$0xf]
      %v6236 = vld [vmem:[#allocation3 + $0x48] sm:$0xf]
      %v6237 = vld [vmem:[#allocation3 + $0x4c] sm:$0xf]
      %v6238 = vld [vmem:[#allocation3 + $0x54] sm:$0xf]
      %v6239 = vld [vmem:[#allocation3 + $0x58] sm:$0xf]
      %v6240 = vld [vmem:[#allocation3 + $0x60] sm:$0xf]
      %v6241 = vld [vmem:[#allocation3 + $0x64] sm:$0xf]
      %v6242 = vld [vmem:[#allocation3 + $0x6c] sm:$0xf]
      %v6243 = vld [vmem:[#allocation3 + $0x70] sm:$0xf]
      %v6244 = vld [vmem:[#allocation3 + $0x78] sm:$0xf]
      %v6245 = vld [vmem:[#allocation3 + $0x7c] sm:$0xf]
      %v6246 = vld [vmem:[#allocation3 + $0x84] sm:$0xf]
      %v6247 = vld [vmem:[#allocation3 + $0x88] sm:$0xf]
      %v6248 = vld [vmem:[#allocation3 + $0x90] sm:$0xf]
      %v6249 = vld [vmem:[#allocation3 + $0x94] sm:$0xf]
      %v6250 = vld [vmem:[#allocation3 + $0x9c] sm:$0xf]
      %v6251 = vld [vmem:[#allocation3 + $0xa0] sm:$0xf]
      %v6252 = vld [vmem:[#allocation3 + $0xa8] sm:$0xf]
      %v6253 = vld [vmem:[#allocation3 + $0xac] sm:$0xf]
      %v6254 = vld [vmem:[#allocation3 + $0xb4] sm:$0xf]
      %v6255 = vld [vmem:[#allocation3 + $0xb8] sm:$0xf]
      %v6256 = vld [vmem:[%s4] sm:$0xf]
      %v6257 = vld [vmem:[%s4 + $0x4] sm:$0xf]
      %v6258 = vld [vmem:[%s4 + $0x8] sm:$0xf]
      %v6259 = vld [vmem:[%s4 + $0xc] sm:$0xf]
      %v6260 = vld [vmem:[%s4 + $0x10] sm:$0xf]
      %v6261 = vld [vmem:[%s4 + $0x14] sm:$0xf]
      %v6262 = vld [vmem:[%s4 + $0x18] sm:$0xf]
      %v6263 = vld [vmem:[%s4 + $0x1c] sm:$0xf]
      %v6264 = vld [vmem:[%s4 + $0x20] sm:$0xf]
      %v6265 = vld [vmem:[%s4 + $0x24] sm:$0xf]
      %v6266 = vld [vmem:[%s4 + $0x28] sm:$0xf]
      %v6267 = vld [vmem:[%s4 + $0x2c] sm:$0xf]
      %v6268 = vld [vmem:[%s4 + $0x30] sm:$0xf]
      %v6269 = vld [vmem:[%s4 + $0x34] sm:$0xf]
      %v6270 = vld [vmem:[%s4 + $0x38] sm:$0xf]
      %v6271 = vld [vmem:[%s4 + $0x3c] sm:$0xf]
      %v6272 = vld [vmem:[#allocation3 + $0x8] sm:$0x1]
      %v6273 = vld [vmem:[#allocation3 + $0x14] sm:$0x1]
      %v6274 = vld [vmem:[#allocation3 + $0x20] sm:$0x1]
      %v6275 = vld [vmem:[#allocation3 + $0x2c] sm:$0x1]
      %v6276 = vld [vmem:[#allocation3 + $0x38] sm:$0x1]
      %v6277 = vld [vmem:[#allocation3 + $0x44] sm:$0x1]
      %v6278 = vld [vmem:[#allocation3 + $0x50] sm:$0x1]
      %v6279 = vld [vmem:[#allocation3 + $0x5c] sm:$0x1]
      %v6280 = vld [vmem:[#allocation3 + $0x68] sm:$0x1]
      %v6281 = vld [vmem:[#allocation3 + $0x74] sm:$0x1]
      %v6282 = vld [vmem:[#allocation3 + $0x80] sm:$0x1]
      %v6283 = vld [vmem:[#allocation3 + $0x8c] sm:$0x1]
      %v6284 = vld [vmem:[#allocation3 + $0x98] sm:$0x1]
      %v6285 = vld [vmem:[#allocation3 + $0xa4] sm:$0x1]
      %v6286 = vld [vmem:[#allocation3 + $0xb0] sm:$0x1]
      %v6287 = vld [vmem:[#allocation3 + $0xbc] sm:$0x1]
      %v6289 = vshrl.u32 %v6224, 16
      %v6291 = vrot.slane %v6289, 4
      %v6292 = vshll.u32 %v6224, 16
      %v6294 = vrot.slane %v6292, 5
      %v6295 = vor.u32 %v6291, %v6294
      %v6296 = vrot.slane %v6295, 4
      %v6298 = vshll.u32 %v6225, 16
      %v6300 = vrot.slane %v6298, 5
      %v6301 = vsel %vm956, %v6296, %v6300
      %v6302 = vshrl.u32 %v6225, 16
      %v6304 = vrot.slane %v6302, 4
      %v6305 = vor.u32 %v6304, %v6300
      %v6306 = vrot.slane %v6305, 4
      %v6308 = vshll.u32 %v6272, 16
      %v6310 = vrot.slane %v6308, 5
      %v6311 = vsel %vm956, %v6306, %v6310
      %v6313 = vshrl.u32 %v6226, 16
      %v6315 = vrot.slane %v6313, 4
      %v6316 = vshll.u32 %v6226, 16
      %v6318 = vrot.slane %v6316, 5
      %v6319 = vor.u32 %v6315, %v6318
      %v6320 = vrot.slane %v6319, 4
      %v6322 = vshll.u32 %v6227, 16
      %v6324 = vrot.slane %v6322, 5
      %v6325 = vsel %vm956, %v6320, %v6324
      %v6326 = vshrl.u32 %v6227, 16
      %v6328 = vrot.slane %v6326, 4
      %v6329 = vor.u32 %v6328, %v6324
      %v6330 = vrot.slane %v6329, 4
      %v6332 = vshll.u32 %v6273, 16
      %v6334 = vrot.slane %v6332, 5
      %v6335 = vsel %vm956, %v6330, %v6334
      %v6337 = vshrl.u32 %v6228, 16
      %v6339 = vrot.slane %v6337, 4
      %v6340 = vshll.u32 %v6228, 16
      %v6342 = vrot.slane %v6340, 5
      %v6343 = vor.u32 %v6339, %v6342
      %v6344 = vrot.slane %v6343, 4
      %v6346 = vshll.u32 %v6229, 16
      %v6348 = vrot.slane %v6346, 5
      %v6349 = vsel %vm956, %v6344, %v6348
      %v6350 = vshrl.u32 %v6229, 16
      %v6352 = vrot.slane %v6350, 4
      %v6353 = vor.u32 %v6352, %v6348
      %v6354 = vrot.slane %v6353, 4
      %v6356 = vshll.u32 %v6274, 16
      %v6358 = vrot.slane %v6356, 5
      %v6359 = vsel %vm956, %v6354, %v6358
      %v6361 = vshrl.u32 %v6230, 16
      %v6363 = vrot.slane %v6361, 4
      %v6364 = vshll.u32 %v6230, 16
      %v6366 = vrot.slane %v6364, 5
      %v6367 = vor.u32 %v6363, %v6366
      %v6368 = vrot.slane %v6367, 4
      %v6370 = vshll.u32 %v6231, 16
      %v6372 = vrot.slane %v6370, 5
      %v6373 = vsel %vm956, %v6368, %v6372
      %v6374 = vshrl.u32 %v6231, 16
      %v6376 = vrot.slane %v6374, 4
      %v6377 = vor.u32 %v6376, %v6372
      %v6378 = vrot.slane %v6377, 4
      %v6380 = vshll.u32 %v6275, 16
      %v6382 = vrot.slane %v6380, 5
      %v6383 = vsel %vm956, %v6378, %v6382
      %v6385 = vshrl.u32 %v6232, 16
      %v6387 = vrot.slane %v6385, 4
      %v6388 = vshll.u32 %v6232, 16
      %v6390 = vrot.slane %v6388, 5
      %v6391 = vor.u32 %v6387, %v6390
      %v6392 = vrot.slane %v6391, 4
      %v6394 = vshll.u32 %v6233, 16
      %v6396 = vrot.slane %v6394, 5
      %v6397 = vsel %vm956, %v6392, %v6396
      %v6398 = vshrl.u32 %v6233, 16
      %v6400 = vrot.slane %v6398, 4
      %v6401 = vor.u32 %v6400, %v6396
      %v6402 = vrot.slane %v6401, 4
      %v6404 = vshll.u32 %v6276, 16
      %v6406 = vrot.slane %v6404, 5
      %v6407 = vsel %vm956, %v6402, %v6406
      %v6409 = vshrl.u32 %v6234, 16
      %v6411 = vrot.slane %v6409, 4
      %v6412 = vshll.u32 %v6234, 16
      %v6414 = vrot.slane %v6412, 5
      %v6415 = vor.u32 %v6411, %v6414
      %v6416 = vrot.slane %v6415, 4
      %v6418 = vshll.u32 %v6235, 16
      %v6420 = vrot.slane %v6418, 5
      %v6421 = vsel %vm956, %v6416, %v6420
      %v6422 = vshrl.u32 %v6235, 16
      %v6424 = vrot.slane %v6422, 4
      %v6425 = vor.u32 %v6424, %v6420
      %v6426 = vrot.slane %v6425, 4
      %v6428 = vshll.u32 %v6277, 16
      %v6430 = vrot.slane %v6428, 5
      %v6431 = vsel %vm956, %v6426, %v6430
      %v6433 = vshrl.u32 %v6236, 16
      %v6435 = vrot.slane %v6433, 4
      %v6436 = vshll.u32 %v6236, 16
      %v6438 = vrot.slane %v6436, 5
      %v6439 = vor.u32 %v6435, %v6438
      %v6440 = vrot.slane %v6439, 4
      %v6442 = vshll.u32 %v6237, 16
      %v6444 = vrot.slane %v6442, 5
      %v6445 = vsel %vm956, %v6440, %v6444
      %v6446 = vshrl.u32 %v6237, 16
      %v6448 = vrot.slane %v6446, 4
      %v6449 = vor.u32 %v6448, %v6444
      %v6450 = vrot.slane %v6449, 4
      %v6452 = vshll.u32 %v6278, 16
      %v6454 = vrot.slane %v6452, 5
      %v6455 = vsel %vm956, %v6450, %v6454
      %v6457 = vshrl.u32 %v6238, 16
      %v6459 = vrot.slane %v6457, 4
      %v6460 = vshll.u32 %v6238, 16
      %v6462 = vrot.slane %v6460, 5
      %v6463 = vor.u32 %v6459, %v6462
      %v6464 = vrot.slane %v6463, 4
      %v6466 = vshll.u32 %v6239, 16
      %v6468 = vrot.slane %v6466, 5
      %v6469 = vsel %vm956, %v6464, %v6468
      %v6470 = vshrl.u32 %v6239, 16
      %v6472 = vrot.slane %v6470, 4
      %v6473 = vor.u32 %v6472, %v6468
      %v6474 = vrot.slane %v6473, 4
      %v6476 = vshll.u32 %v6279, 16
      %v6478 = vrot.slane %v6476, 5
      %v6479 = vsel %vm956, %v6474, %v6478
      %v6481 = vshrl.u32 %v6240, 16
      %v6483 = vrot.slane %v6481, 4
      %v6484 = vshll.u32 %v6240, 16
      %v6486 = vrot.slane %v6484, 5
      %v6487 = vor.u32 %v6483, %v6486
      %v6488 = vrot.slane %v6487, 4
      %v6490 = vshll.u32 %v6241, 16
      %v6492 = vrot.slane %v6490, 5
      %v6493 = vsel %vm956, %v6488, %v6492
      %v6494 = vshrl.u32 %v6241, 16
      %v6496 = vrot.slane %v6494, 4
      %v6497 = vor.u32 %v6496, %v6492
      %v6498 = vrot.slane %v6497, 4
      %v6500 = vshll.u32 %v6280, 16
      %v6502 = vrot.slane %v6500, 5
      %v6503 = vsel %vm956, %v6498, %v6502
      %v6505 = vshrl.u32 %v6242, 16
      %v6507 = vrot.slane %v6505, 4
      %v6508 = vshll.u32 %v6242, 16
      %v6510 = vrot.slane %v6508, 5
      %v6511 = vor.u32 %v6507, %v6510
      %v6512 = vrot.slane %v6511, 4
      %v6514 = vshll.u32 %v6243, 16
      %v6516 = vrot.slane %v6514, 5
      %v6517 = vsel %vm956, %v6512, %v6516
      %v6518 = vshrl.u32 %v6243, 16
      %v6520 = vrot.slane %v6518, 4
      %v6521 = vor.u32 %v6520, %v6516
      %v6522 = vrot.slane %v6521, 4
      %v6524 = vshll.u32 %v6281, 16
      %v6526 = vrot.slane %v6524, 5
      %v6527 = vsel %vm956, %v6522, %v6526
      %v6529 = vshrl.u32 %v6244, 16
      %v6531 = vrot.slane %v6529, 4
      %v6532 = vshll.u32 %v6244, 16
      %v6534 = vrot.slane %v6532, 5
      %v6535 = vor.u32 %v6531, %v6534
      %v6536 = vrot.slane %v6535, 4
      %v6538 = vshll.u32 %v6245, 16
      %v6540 = vrot.slane %v6538, 5
      %v6541 = vsel %vm956, %v6536, %v6540
      %v6542 = vshrl.u32 %v6245, 16
      %v6544 = vrot.slane %v6542, 4
      %v6545 = vor.u32 %v6544, %v6540
      %v6546 = vrot.slane %v6545, 4
      %v6548 = vshll.u32 %v6282, 16
      %v6550 = vrot.slane %v6548, 5
      %v6551 = vsel %vm956, %v6546, %v6550
      %v6553 = vshrl.u32 %v6246, 16
      %v6555 = vrot.slane %v6553, 4
      %v6556 = vshll.u32 %v6246, 16
      %v6558 = vrot.slane %v6556, 5
      %v6559 = vor.u32 %v6555, %v6558
      %v6560 = vrot.slane %v6559, 4
      %v6562 = vshll.u32 %v6247, 16
      %v6564 = vrot.slane %v6562, 5
      %v6565 = vsel %vm956, %v6560, %v6564
      %v6566 = vshrl.u32 %v6247, 16
      %v6568 = vrot.slane %v6566, 4
      %v6569 = vor.u32 %v6568, %v6564
      %v6570 = vrot.slane %v6569, 4
      %v6572 = vshll.u32 %v6283, 16
      %v6574 = vrot.slane %v6572, 5
      %v6575 = vsel %vm956, %v6570, %v6574
      %v6577 = vshrl.u32 %v6248, 16
      %v6579 = vrot.slane %v6577, 4
      %v6580 = vshll.u32 %v6248, 16
      %v6582 = vrot.slane %v6580, 5
      %v6583 = vor.u32 %v6579, %v6582
      %v6584 = vrot.slane %v6583, 4
      %v6586 = vshll.u32 %v6249, 16
      %v6588 = vrot.slane %v6586, 5
      %v6589 = vsel %vm956, %v6584, %v6588
      %v6590 = vshrl.u32 %v6249, 16
      %v6592 = vrot.slane %v6590, 4
      %v6593 = vor.u32 %v6592, %v6588
      %v6594 = vrot.slane %v6593, 4
      %v6596 = vshll.u32 %v6284, 16
      %v6598 = vrot.slane %v6596, 5
      %v6599 = vsel %vm956, %v6594, %v6598
      %v6601 = vshrl.u32 %v6250, 16
      %v6603 = vrot.slane %v6601, 4
      %v6604 = vshll.u32 %v6250, 16
      %v6606 = vrot.slane %v6604, 5
      %v6607 = vor.u32 %v6603, %v6606
      %v6608 = vrot.slane %v6607, 4
      %v6610 = vshll.u32 %v6251, 16
      %v6612 = vrot.slane %v6610, 5
      %v6613 = vsel %vm956, %v6608, %v6612
      %v6614 = vshrl.u32 %v6251, 16
      %v6616 = vrot.slane %v6614, 4
      %v6617 = vor.u32 %v6616, %v6612
      %v6618 = vrot.slane %v6617, 4
      %v6620 = vshll.u32 %v6285, 16
      %v6622 = vrot.slane %v6620, 5
      %v6623 = vsel %vm956, %v6618, %v6622
      %v6625 = vshrl.u32 %v6252, 16
      %v6627 = vrot.slane %v6625, 4
      %v6628 = vshll.u32 %v6252, 16
      %v6630 = vrot.slane %v6628, 5
      %v6631 = vor.u32 %v6627, %v6630
      %v6632 = vrot.slane %v6631, 4
      %v6634 = vshll.u32 %v6253, 16
      %v6636 = vrot.slane %v6634, 5
      %v6637 = vsel %vm956, %v6632, %v6636
      %v6638 = vshrl.u32 %v6253, 16
      %v6640 = vrot.slane %v6638, 4
      %v6641 = vor.u32 %v6640, %v6636
      %v6642 = vrot.slane %v6641, 4
      %v6644 = vshll.u32 %v6286, 16
      %v6646 = vrot.slane %v6644, 5
      %v6647 = vsel %vm956, %v6642, %v6646
      %v6649 = vshrl.u32 %v6254, 16
      %v6651 = vrot.slane %v6649, 4
      %v6652 = vshll.u32 %v6254, 16
      %v6654 = vrot.slane %v6652, 5
      %v6655 = vor.u32 %v6651, %v6654
      %v6656 = vrot.slane %v6655, 4
      %v6658 = vshll.u32 %v6255, 16
      %v6660 = vrot.slane %v6658, 5
      %v6661 = vsel %vm956, %v6656, %v6660
      %v6662 = vshrl.u32 %v6255, 16
      %v6664 = vrot.slane %v6662, 4
      %v6665 = vor.u32 %v6664, %v6660
      %v6666 = vrot.slane %v6665, 4
      %v6668 = vshll.u32 %v6287, 16
      %v6670 = vrot.slane %v6668, 5
      %v6671 = vsel %vm956, %v6666, %v6670
      %s6672 = scalar_lea.vmem %s4, 64
      %v6673 = vld [vmem:[%s6672] sm:$0xf]
      %v6674 = vld [vmem:[%s6672 + $0x4] sm:$0xf]
      %v6675 = vld [vmem:[%s6672 + $0x8] sm:$0xf]
      %v6676 = vld [vmem:[%s6672 + $0xc] sm:$0xf]
      %v6677 = vld [vmem:[%s6672 + $0x10] sm:$0xf]
      %v6678 = vld [vmem:[%s6672 + $0x14] sm:$0xf]
      %v6679 = vld [vmem:[%s6672 + $0x18] sm:$0xf]
      %v6680 = vld [vmem:[%s6672 + $0x1c] sm:$0xf]
      %v6681 = vld [vmem:[%s6672 + $0x20] sm:$0xf]
      %v6682 = vld [vmem:[%s6672 + $0x24] sm:$0xf]
      %v6683 = vld [vmem:[%s6672 + $0x28] sm:$0xf]
      %v6684 = vld [vmem:[%s6672 + $0x2c] sm:$0xf]
      %v6685 = vld [vmem:[%s6672 + $0x30] sm:$0xf]
      %v6686 = vld [vmem:[%s6672 + $0x34] sm:$0xf]
      %v6687 = vld [vmem:[%s6672 + $0x38] sm:$0xf]
      %v6688 = vld [vmem:[%s6672 + $0x3c] sm:$0xf]
      %v6689 = vunpack.c.l.b16 %v6301
      %v6690 = vunpack.c.l.b16 %v6311
      %v6691 = vunpack.c.l.b16 %v6325
      %v6692 = vunpack.c.l.b16 %v6335
      %v6693 = vunpack.c.l.b16 %v6349
      %v6694 = vunpack.c.l.b16 %v6359
      %v6695 = vunpack.c.l.b16 %v6373
      %v6696 = vunpack.c.l.b16 %v6383
      %v6697 = vunpack.c.l.b16 %v6397
      %v6698 = vunpack.c.l.b16 %v6407
      %v6699 = vunpack.c.l.b16 %v6421
      %v6700 = vunpack.c.l.b16 %v6431
      %v6701 = vunpack.c.l.b16 %v6445
      %v6702 = vunpack.c.l.b16 %v6455
      %v6703 = vunpack.c.l.b16 %v6469
      %v6704 = vunpack.c.l.b16 %v6479
      %v6705 = vunpack.c.l.b16 %v6493
      %v6706 = vunpack.c.l.b16 %v6503
      %v6707 = vunpack.c.l.b16 %v6517
      %v6708 = vunpack.c.l.b16 %v6527
      %v6709 = vunpack.c.l.b16 %v6541
      %v6710 = vunpack.c.l.b16 %v6551
      %v6711 = vunpack.c.l.b16 %v6565
      %v6712 = vunpack.c.l.b16 %v6575
      %v6713 = vunpack.c.l.b16 %v6589
      %v6714 = vunpack.c.l.b16 %v6599
      %v6715 = vunpack.c.l.b16 %v6613
      %v6716 = vunpack.c.l.b16 %v6623
      %v6717 = vunpack.c.l.b16 %v6637
      %v6718 = vunpack.c.l.b16 %v6647
      %v6719 = vunpack.c.l.b16 %v6661
      %v6720 = vunpack.c.l.b16 %v6671
      %v6721 = vpack.c.b16 %v6690, %v6689
      %v6722 = vpack.c.b16 %v6692, %v6691
      %v6723 = vpack.c.b16 %v6694, %v6693
      %v6724 = vpack.c.b16 %v6696, %v6695
      %v6725 = vpack.c.b16 %v6698, %v6697
      %v6726 = vpack.c.b16 %v6700, %v6699
      %v6727 = vpack.c.b16 %v6702, %v6701
      %v6728 = vpack.c.b16 %v6704, %v6703
      %v6729 = vpack.c.b16 %v6706, %v6705
      %v6730 = vpack.c.b16 %v6708, %v6707
      %v6731 = vpack.c.b16 %v6710, %v6709
      %v6732 = vpack.c.b16 %v6712, %v6711
      %v6733 = vpack.c.b16 %v6714, %v6713
      %v6734 = vpack.c.b16 %v6716, %v6715
      %v6735 = vpack.c.b16 %v6718, %v6717
      %v6736 = vpack.c.b16 %v6720, %v6719
      %v6769 = vunpack.c.l.b16 %v6673
      %v6770 = vunpack.c.l.b16 %v6674
      %v6771 = vunpack.c.l.b16 %v6675
      %v6772 = vunpack.c.l.b16 %v6676
      %v6773 = vunpack.c.l.b16 %v6677
      %v6774 = vunpack.c.l.b16 %v6678
      %v6775 = vunpack.c.l.b16 %v6679
      %v6776 = vunpack.c.l.b16 %v6680
      %v6777 = vunpack.c.l.b16 %v6681
      %v6778 = vunpack.c.l.b16 %v6682
      %v6779 = vunpack.c.l.b16 %v6683
      %v6780 = vunpack.c.l.b16 %v6684
      %v6781 = vunpack.c.l.b16 %v6685
      %v6782 = vunpack.c.l.b16 %v6686
      %v6783 = vunpack.c.l.b16 %v6687
      %v6784 = vunpack.c.l.b16 %v6688
      %v6785 = vpack.c.b16 %v6770, %v6769
      %v6786 = vpack.c.b16 %v6772, %v6771
      %v6787 = vpack.c.b16 %v6774, %v6773
      %v6788 = vpack.c.b16 %v6776, %v6775
      %v6789 = vpack.c.b16 %v6778, %v6777
      %v6790 = vpack.c.b16 %v6780, %v6779
      %v6791 = vpack.c.b16 %v6782, %v6781
      %v6792 = vpack.c.b16 %v6784, %v6783
      %6801 = vmatprep.subr.bf16.mxu0 0
      %6802 = vmatpush1.bf16.msra.mxu0 %v6792
      %6803 = vmatprep.subr.bf16.mxu0 0
      %6804 = vmatpush1.bf16.msra.mxu0 %v6791
      %6805 = vmatprep.subr.bf16.mxu0 0
      %6806 = vmatpush1.bf16.msra.mxu0 %v6790
      %6807 = vmatprep.subr.bf16.mxu0 0
      %6808 = vmatpush1.bf16.msra.mxu0 %v6789
      %6809 = vmatprep.subr.bf16.mxu0 0
      %6810 = vmatpush1.bf16.msra.mxu0 %v6788
      %6811 = vmatprep.subr.bf16.mxu0 0
      %6812 = vmatpush1.bf16.msra.mxu0 %v6787
      %6813 = vmatprep.subr.bf16.mxu0 0
      %6814 = vmatpush1.bf16.msra.mxu0 %v6786
      %6815 = vmatprep.subr.bf16.mxu0 0
      %6816 = vmatpush1.bf16.msra.mxu0 %v6785
      %6817 = vmatprep.subr.bf16.mxu0 0
      %6818 = vmatpush2.bf16.msra.mxu0 0
      %6819 = vmatprep.subr.bf16.mxu0 0
      %6820 = vmatpush2.bf16.msra.mxu0 0
      %6821 = vmatprep.subr.bf16.mxu0 0
      %6822 = vmatpush2.bf16.msra.mxu0 0
      %6823 = vmatprep.subr.bf16.mxu0 0
      %6824 = vmatpush2.bf16.msra.mxu0 0
      %6825 = vmatprep.subr.bf16.mxu0 0
      %6826 = vmatpush2.bf16.msra.mxu0 0
      %6827 = vmatprep.subr.bf16.mxu0 0
      %6828 = vmatpush2.bf16.msra.mxu0 0
      %6829 = vmatprep.subr.bf16.mxu0 0
      %6830 = vmatpush2.bf16.msra.mxu0 0
      %6831 = vmatprep.subr.bf16.mxu0 0
      %6832 = vmatpush2.bf16.msra.mxu0 0
      %6833 = vmatprep.mubr.bf16.mxu0 0
      %6834 = vmatmul.mubr.bf16.gmra.mxu0 %v6721
      %v6835 = vpop.f32.mrf.mxu0
      %v6836 = vadd.f32 0.0, %v6835
      %v6837 = vpop.f32.mrf.mxu0
      %v6838 = vpop.f32.mrf.mxu0
      %v6839 = vadd.f32 0.0, %v6838
      %v6840 = vpop.f32.mrf.mxu0
      %6841 = vmatprep.mubr.bf16.mxu0 0
      %6842 = vmatmul.mubr.bf16.gmra.mxu0 %v6722
      %v6843 = vpop.f32.mrf.mxu0
      %v6844 = vadd.f32 0.0, %v6843
      %v6845 = vpop.f32.mrf.mxu0
      %v6846 = vpop.f32.mrf.mxu0
      %v6847 = vadd.f32 0.0, %v6846
      %v6848 = vpop.f32.mrf.mxu0
      %6849 = vmatprep.mubr.bf16.mxu0 0
      %6850 = vmatmul.mubr.bf16.gmra.mxu0 %v6723
      %v6851 = vpop.f32.mrf.mxu0
      %v6852 = vadd.f32 0.0, %v6851
      %v6853 = vpop.f32.mrf.mxu0
      %v6854 = vpop.f32.mrf.mxu0
      %v6855 = vadd.f32 0.0, %v6854
      %v6856 = vpop.f32.mrf.mxu0
      %6857 = vmatprep.mubr.bf16.mxu0 0
      %6858 = vmatmul.mubr.bf16.gmra.mxu0 %v6724
      %v6859 = vpop.f32.mrf.mxu0
      %v6860 = vadd.f32 0.0, %v6859
      %v6861 = vpop.f32.mrf.mxu0
      %v6862 = vpop.f32.mrf.mxu0
      %v6863 = vadd.f32 0.0, %v6862
      %v6864 = vpop.f32.mrf.mxu0
      %6865 = vmatprep.mubr.bf16.mxu0 0
      %6866 = vmatmul.mubr.bf16.gmra.mxu0 %v6725
      %v6867 = vpop.f32.mrf.mxu0
      %v6868 = vadd.f32 0.0, %v6867
      %v6869 = vpop.f32.mrf.mxu0
      %v6870 = vpop.f32.mrf.mxu0
      %v6871 = vadd.f32 0.0, %v6870
      %v6872 = vpop.f32.mrf.mxu0
      %6873 = vmatprep.mubr.bf16.mxu0 0
      %6874 = vmatmul.mubr.bf16.gmra.mxu0 %v6726
      %v6875 = vpop.f32.mrf.mxu0
      %v6876 = vadd.f32 0.0, %v6875
      %v6877 = vpop.f32.mrf.mxu0
      %v6878 = vpop.f32.mrf.mxu0
      %v6879 = vadd.f32 0.0, %v6878
      %v6880 = vpop.f32.mrf.mxu0
      %6881 = vmatprep.mubr.bf16.mxu0 0
      %6882 = vmatmul.mubr.bf16.gmra.mxu0 %v6727
      %v6883 = vpop.f32.mrf.mxu0
      %v6884 = vadd.f32 0.0, %v6883
      %v6885 = vpop.f32.mrf.mxu0
      %v6886 = vpop.f32.mrf.mxu0
      %v6887 = vadd.f32 0.0, %v6886
      %v6888 = vpop.f32.mrf.mxu0
      %6889 = vmatprep.mubr.bf16.mxu0 0
      %6890 = vmatmul.mubr.bf16.gmra.mxu0 %v6728
      %v6891 = vpop.f32.mrf.mxu0
      %v6892 = vadd.f32 0.0, %v6891
      %v6893 = vpop.f32.mrf.mxu0
      %v6894 = vpop.f32.mrf.mxu0
      %v6895 = vadd.f32 0.0, %v6894
      %v6896 = vpop.f32.mrf.mxu0
      %6897 = vmatprep.mubr.bf16.mxu0 0
      %6898 = vmatmul.mubr.bf16.gmra.mxu0 %v6729
      %v6899 = vpop.f32.mrf.mxu0
      %v6900 = vadd.f32 0.0, %v6899
      %v6901 = vpop.f32.mrf.mxu0
      %v6902 = vpop.f32.mrf.mxu0
      %v6903 = vadd.f32 0.0, %v6902
      %v6904 = vpop.f32.mrf.mxu0
      %6905 = vmatprep.mubr.bf16.mxu0 0
      %6906 = vmatmul.mubr.bf16.gmra.mxu0 %v6730
      %v6907 = vpop.f32.mrf.mxu0
      %v6908 = vadd.f32 0.0, %v6907
      %v6909 = vpop.f32.mrf.mxu0
      %v6910 = vpop.f32.mrf.mxu0
      %v6911 = vadd.f32 0.0, %v6910
      %v6912 = vpop.f32.mrf.mxu0
      %6913 = vmatprep.mubr.bf16.mxu0 0
      %6914 = vmatmul.mubr.bf16.gmra.mxu0 %v6731
      %v6915 = vpop.f32.mrf.mxu0
      %v6916 = vadd.f32 0.0, %v6915
      %v6917 = vpop.f32.mrf.mxu0
      %v6918 = vpop.f32.mrf.mxu0
      %v6919 = vadd.f32 0.0, %v6918
      %v6920 = vpop.f32.mrf.mxu0
      %6921 = vmatprep.mubr.bf16.mxu0 0
      %6922 = vmatmul.mubr.bf16.gmra.mxu0 %v6732
      %v6923 = vpop.f32.mrf.mxu0
      %v6924 = vadd.f32 0.0, %v6923
      %v6925 = vpop.f32.mrf.mxu0
      %v6926 = vpop.f32.mrf.mxu0
      %v6927 = vadd.f32 0.0, %v6926
      %v6928 = vpop.f32.mrf.mxu0
      %6929 = vmatprep.mubr.bf16.mxu0 0
      %6930 = vmatmul.mubr.bf16.gmra.mxu0 %v6733
      %v6931 = vpop.f32.mrf.mxu0
      %v6932 = vadd.f32 0.0, %v6931
      %v6933 = vpop.f32.mrf.mxu0
      %v6934 = vpop.f32.mrf.mxu0
      %v6935 = vadd.f32 0.0, %v6934
      %v6936 = vpop.f32.mrf.mxu0
      %6937 = vmatprep.mubr.bf16.mxu0 0
      %6938 = vmatmul.mubr.bf16.gmra.mxu0 %v6734
      %v6939 = vpop.f32.mrf.mxu0
      %v6940 = vadd.f32 0.0, %v6939
      %v6941 = vpop.f32.mrf.mxu0
      %v6942 = vpop.f32.mrf.mxu0
      %v6943 = vadd.f32 0.0, %v6942
      %v6944 = vpop.f32.mrf.mxu0
      %6945 = vmatprep.mubr.bf16.mxu0 0
      %6946 = vmatmul.mubr.bf16.gmra.mxu0 %v6735
      %v6947 = vpop.f32.mrf.mxu0
      %v6948 = vadd.f32 0.0, %v6947
      %v6949 = vpop.f32.mrf.mxu0
      %v6950 = vpop.f32.mrf.mxu0
      %v6951 = vadd.f32 0.0, %v6950
      %v6952 = vpop.f32.mrf.mxu0
      %6953 = vmatprep.mubr.bf16.mxu0 0
      %6954 = vmatmul.mubr.bf16.gmra.mxu0 %v6736
      %v6955 = vpop.f32.mrf.mxu0
      %v6956 = vadd.f32 0.0, %v6955
      %v6957 = vpop.f32.mrf.mxu0
      %v6958 = vpop.f32.mrf.mxu0
      %v6959 = vadd.f32 0.0, %v6958
      %v6960 = vpop.f32.mrf.mxu0
      %6961 = vdwg.mxu0
      %v6994 = vunpack.c.l.b16 %v6224
      %v6995 = vunpack.c.l.b16 %v6225
      %v6996 = vunpack.c.l.b16 %v6226
      %v6997 = vunpack.c.l.b16 %v6227
      %v6998 = vunpack.c.l.b16 %v6228
      %v6999 = vunpack.c.l.b16 %v6229
      %v7000 = vunpack.c.l.b16 %v6230
      %v7001 = vunpack.c.l.b16 %v6231
      %v7002 = vunpack.c.l.b16 %v6232
      %v7003 = vunpack.c.l.b16 %v6233
      %v7004 = vunpack.c.l.b16 %v6234
      %v7005 = vunpack.c.l.b16 %v6235
      %v7006 = vunpack.c.l.b16 %v6236
      %v7007 = vunpack.c.l.b16 %v6237
      %v7008 = vunpack.c.l.b16 %v6238
      %v7009 = vunpack.c.l.b16 %v6239
      %v7010 = vunpack.c.l.b16 %v6240
      %v7011 = vunpack.c.l.b16 %v6241
      %v7012 = vunpack.c.l.b16 %v6242
      %v7013 = vunpack.c.l.b16 %v6243
      %v7014 = vunpack.c.l.b16 %v6244
      %v7015 = vunpack.c.l.b16 %v6245
      %v7016 = vunpack.c.l.b16 %v6246
      %v7017 = vunpack.c.l.b16 %v6247
      %v7018 = vunpack.c.l.b16 %v6248
      %v7019 = vunpack.c.l.b16 %v6249
      %v7020 = vunpack.c.l.b16 %v6250
      %v7021 = vunpack.c.l.b16 %v6251
      %v7022 = vunpack.c.l.b16 %v6252
      %v7023 = vunpack.c.l.b16 %v6253
      %v7024 = vunpack.c.l.b16 %v6254
      %v7025 = vunpack.c.l.b16 %v6255
      %v7026 = vpack.c.b16 %v6995, %v6994
      %v7027 = vpack.c.b16 %v6997, %v6996
      %v7028 = vpack.c.b16 %v6999, %v6998
      %v7029 = vpack.c.b16 %v7001, %v7000
      %v7030 = vpack.c.b16 %v7003, %v7002
      %v7031 = vpack.c.b16 %v7005, %v7004
      %v7032 = vpack.c.b16 %v7007, %v7006
      %v7033 = vpack.c.b16 %v7009, %v7008
      %v7034 = vpack.c.b16 %v7011, %v7010
      %v7035 = vpack.c.b16 %v7013, %v7012
      %v7036 = vpack.c.b16 %v7015, %v7014
      %v7037 = vpack.c.b16 %v7017, %v7016
      %v7038 = vpack.c.b16 %v7019, %v7018
      %v7039 = vpack.c.b16 %v7021, %v7020
      %v7040 = vpack.c.b16 %v7023, %v7022
      %v7041 = vpack.c.b16 %v7025, %v7024
      %v7074 = vunpack.c.l.b16 %v6256
      %v7075 = vunpack.c.l.b16 %v6257
      %v7076 = vunpack.c.l.b16 %v6258
      %v7077 = vunpack.c.l.b16 %v6259
      %v7078 = vunpack.c.l.b16 %v6260
      %v7079 = vunpack.c.l.b16 %v6261
      %v7080 = vunpack.c.l.b16 %v6262
      %v7081 = vunpack.c.l.b16 %v6263
      %v7082 = vunpack.c.l.b16 %v6264
      %v7083 = vunpack.c.l.b16 %v6265
      %v7084 = vunpack.c.l.b16 %v6266
      %v7085 = vunpack.c.l.b16 %v6267
      %v7086 = vunpack.c.l.b16 %v6268
      %v7087 = vunpack.c.l.b16 %v6269
      %v7088 = vunpack.c.l.b16 %v6270
      %v7089 = vunpack.c.l.b16 %v6271
      %v7090 = vpack.c.b16 %v7075, %v7074
      %v7091 = vpack.c.b16 %v7077, %v7076
      %v7092 = vpack.c.b16 %v7079, %v7078
      %v7093 = vpack.c.b16 %v7081, %v7080
      %v7094 = vpack.c.b16 %v7083, %v7082
      %v7095 = vpack.c.b16 %v7085, %v7084
      %v7096 = vpack.c.b16 %v7087, %v7086
      %v7097 = vpack.c.b16 %v7089, %v7088
      %7106 = vmatprep.subr.bf16.mxu0 0
      %7107 = vmatpush1.bf16.msra.mxu0 %v7097
      %7108 = vmatprep.subr.bf16.mxu0 0
      %7109 = vmatpush1.bf16.msra.mxu0 %v7096
      %7110 = vmatprep.subr.bf16.mxu0 0
      %7111 = vmatpush1.bf16.msra.mxu0 %v7095
      %7112 = vmatprep.subr.bf16.mxu0 0
      %7113 = vmatpush1.bf16.msra.mxu0 %v7094
      %7114 = vmatprep.subr.bf16.mxu0 0
      %7115 = vmatpush1.bf16.msra.mxu0 %v7093
      %7116 = vmatprep.subr.bf16.mxu0 0
      %7117 = vmatpush1.bf16.msra.mxu0 %v7092
      %7118 = vmatprep.subr.bf16.mxu0 0
      %7119 = vmatpush1.bf16.msra.mxu0 %v7091
      %7120 = vmatprep.subr.bf16.mxu0 0
      %7121 = vmatpush1.bf16.msra.mxu0 %v7090
      %7122 = vmatprep.subr.bf16.mxu0 0
      %7123 = vmatpush2.bf16.msra.mxu0 0
      %7124 = vmatprep.subr.bf16.mxu0 0
      %7125 = vmatpush2.bf16.msra.mxu0 0
      %7126 = vmatprep.subr.bf16.mxu0 0
      %7127 = vmatpush2.bf16.msra.mxu0 0
      %7128 = vmatprep.subr.bf16.mxu0 0
      %7129 = vmatpush2.bf16.msra.mxu0 0
      %7130 = vmatprep.subr.bf16.mxu0 0
      %7131 = vmatpush2.bf16.msra.mxu0 0
      %7132 = vmatprep.subr.bf16.mxu0 0
      %7133 = vmatpush2.bf16.msra.mxu0 0
      %7134 = vmatprep.subr.bf16.mxu0 0
      %7135 = vmatpush2.bf16.msra.mxu0 0
      %7136 = vmatprep.subr.bf16.mxu0 0
      %7137 = vmatpush2.bf16.msra.mxu0 0
      %7138 = vmatprep.mubr.bf16.mxu0 0
      %7139 = vmatmul.mubr.bf16.gmra.mxu0 %v7026
      %v7140 = vpop.f32.mrf.mxu0
      %v7141 = vadd.f32 %v6836, %v7140
      %v7142 = vpop.f32.mrf.mxu0
      %v7143 = vpop.f32.mrf.mxu0
      %v7144 = vadd.f32 %v6839, %v7143
      %v7145 = vpop.f32.mrf.mxu0
      %7146 = vmatprep.mubr.bf16.mxu0 0
      %7147 = vmatmul.mubr.bf16.gmra.mxu0 %v7027
      %v7148 = vpop.f32.mrf.mxu0
      %v7149 = vadd.f32 %v6844, %v7148
      %v7150 = vpop.f32.mrf.mxu0
      %v7151 = vpop.f32.mrf.mxu0
      %v7152 = vadd.f32 %v6847, %v7151
      %v7153 = vpop.f32.mrf.mxu0
      %7154 = vmatprep.mubr.bf16.mxu0 0
      %7155 = vmatmul.mubr.bf16.gmra.mxu0 %v7028
      %v7156 = vpop.f32.mrf.mxu0
      %v7157 = vadd.f32 %v6852, %v7156
      %v7158 = vpop.f32.mrf.mxu0
      %v7159 = vpop.f32.mrf.mxu0
      %v7160 = vadd.f32 %v6855, %v7159
      %v7161 = vpop.f32.mrf.mxu0
      %7162 = vmatprep.mubr.bf16.mxu0 0
      %7163 = vmatmul.mubr.bf16.gmra.mxu0 %v7029
      %v7164 = vpop.f32.mrf.mxu0
      %v7165 = vadd.f32 %v6860, %v7164
      %v7166 = vpop.f32.mrf.mxu0
      %v7167 = vpop.f32.mrf.mxu0
      %v7168 = vadd.f32 %v6863, %v7167
      %v7169 = vpop.f32.mrf.mxu0
      %7170 = vmatprep.mubr.bf16.mxu0 0
      %7171 = vmatmul.mubr.bf16.gmra.mxu0 %v7030
      %v7172 = vpop.f32.mrf.mxu0
      %v7173 = vadd.f32 %v6868, %v7172
      %v7174 = vpop.f32.mrf.mxu0
      %v7175 = vpop.f32.mrf.mxu0
      %v7176 = vadd.f32 %v6871, %v7175
      %v7177 = vpop.f32.mrf.mxu0
      %7178 = vmatprep.mubr.bf16.mxu0 0
      %7179 = vmatmul.mubr.bf16.gmra.mxu0 %v7031
      %v7180 = vpop.f32.mrf.mxu0
      %v7181 = vadd.f32 %v6876, %v7180
      %v7182 = vpop.f32.mrf.mxu0
      %v7183 = vpop.f32.mrf.mxu0
      %v7184 = vadd.f32 %v6879, %v7183
      %v7185 = vpop.f32.mrf.mxu0
      %7186 = vmatprep.mubr.bf16.mxu0 0
      %7187 = vmatmul.mubr.bf16.gmra.mxu0 %v7032
      %v7188 = vpop.f32.mrf.mxu0
      %v7189 = vadd.f32 %v6884, %v7188
      %v7190 = vpop.f32.mrf.mxu0
      %v7191 = vpop.f32.mrf.mxu0
      %v7192 = vadd.f32 %v6887, %v7191
      %v7193 = vpop.f32.mrf.mxu0
      %7194 = vmatprep.mubr.bf16.mxu0 0
      %7195 = vmatmul.mubr.bf16.gmra.mxu0 %v7033
      %v7196 = vpop.f32.mrf.mxu0
      %v7197 = vadd.f32 %v6892, %v7196
      %v7198 = vpop.f32.mrf.mxu0
      %v7199 = vpop.f32.mrf.mxu0
      %v7200 = vadd.f32 %v6895, %v7199
      %v7201 = vpop.f32.mrf.mxu0
      %7202 = vmatprep.mubr.bf16.mxu0 0
      %7203 = vmatmul.mubr.bf16.gmra.mxu0 %v7034
      %v7204 = vpop.f32.mrf.mxu0
      %v7205 = vadd.f32 %v6900, %v7204
      %v7206 = vpop.f32.mrf.mxu0
      %v7207 = vpop.f32.mrf.mxu0
      %v7208 = vadd.f32 %v6903, %v7207
      %v7209 = vpop.f32.mrf.mxu0
      %7210 = vmatprep.mubr.bf16.mxu0 0
      %7211 = vmatmul.mubr.bf16.gmra.mxu0 %v7035
      %v7212 = vpop.f32.mrf.mxu0
      %v7213 = vadd.f32 %v6908, %v7212
      %v7214 = vpop.f32.mrf.mxu0
      %v7215 = vpop.f32.mrf.mxu0
      %v7216 = vadd.f32 %v6911, %v7215
      %v7217 = vpop.f32.mrf.mxu0
      %7218 = vmatprep.mubr.bf16.mxu0 0
      %7219 = vmatmul.mubr.bf16.gmra.mxu0 %v7036
      %v7220 = vpop.f32.mrf.mxu0
      %v7221 = vadd.f32 %v6916, %v7220
      %v7222 = vpop.f32.mrf.mxu0
      %v7223 = vpop.f32.mrf.mxu0
      %v7224 = vadd.f32 %v6919, %v7223
      %v7225 = vpop.f32.mrf.mxu0
      %7226 = vmatprep.mubr.bf16.mxu0 0
      %7227 = vmatmul.mubr.bf16.gmra.mxu0 %v7037
      %v7228 = vpop.f32.mrf.mxu0
      %v7229 = vadd.f32 %v6924, %v7228
      %v7230 = vpop.f32.mrf.mxu0
      %v7231 = vpop.f32.mrf.mxu0
      %v7232 = vadd.f32 %v6927, %v7231
      %v7233 = vpop.f32.mrf.mxu0
      %7234 = vmatprep.mubr.bf16.mxu0 0
      %7235 = vmatmul.mubr.bf16.gmra.mxu0 %v7038
      %v7236 = vpop.f32.mrf.mxu0
      %v7237 = vadd.f32 %v6932, %v7236
      %v7238 = vpop.f32.mrf.mxu0
      %v7239 = vpop.f32.mrf.mxu0
      %v7240 = vadd.f32 %v6935, %v7239
      %v7241 = vpop.f32.mrf.mxu0
      %7242 = vmatprep.mubr.bf16.mxu0 0
      %7243 = vmatmul.mubr.bf16.gmra.mxu0 %v7039
      %v7244 = vpop.f32.mrf.mxu0
      %v7245 = vadd.f32 %v6940, %v7244
      %v7246 = vpop.f32.mrf.mxu0
      %v7247 = vpop.f32.mrf.mxu0
      %v7248 = vadd.f32 %v6943, %v7247
      %v7249 = vpop.f32.mrf.mxu0
      %7250 = vmatprep.mubr.bf16.mxu0 0
      %7251 = vmatmul.mubr.bf16.gmra.mxu0 %v7040
      %v7252 = vpop.f32.mrf.mxu0
      %v7253 = vadd.f32 %v6948, %v7252
      %v7254 = vpop.f32.mrf.mxu0
      %v7255 = vpop.f32.mrf.mxu0
      %v7256 = vadd.f32 %v6951, %v7255
      %v7257 = vpop.f32.mrf.mxu0
      %7258 = vmatprep.mubr.bf16.mxu0 0
      %7259 = vmatmul.mubr.bf16.gmra.mxu0 %v7041
      %v7260 = vpop.f32.mrf.mxu0
      %v7261 = vadd.f32 %v6956, %v7260
      %v7262 = vpop.f32.mrf.mxu0
      %v7263 = vpop.f32.mrf.mxu0
      %v7264 = vadd.f32 %v6959, %v7263
      %v7265 = vpop.f32.mrf.mxu0
      %7266 = vdwg.mxu0
      %v7267 = vld [vmem:[#allocation3] sm:$0xe]
      %v7268 = vld [vmem:[#allocation3 + $0xc] sm:$0xe]
      %v7269 = vld [vmem:[#allocation3 + $0x18] sm:$0xe]
      %v7270 = vld [vmem:[#allocation3 + $0x24] sm:$0xe]
      %v7271 = vld [vmem:[#allocation3 + $0x30] sm:$0xe]
      %v7272 = vld [vmem:[#allocation3 + $0x3c] sm:$0xe]
      %v7273 = vld [vmem:[#allocation3 + $0x48] sm:$0xe]
      %v7274 = vld [vmem:[#allocation3 + $0x54] sm:$0xe]
      %v7275 = vld [vmem:[#allocation3 + $0x60] sm:$0xe]
      %v7276 = vld [vmem:[#allocation3 + $0x6c] sm:$0xe]
      %v7277 = vld [vmem:[#allocation3 + $0x78] sm:$0xe]
      %v7278 = vld [vmem:[#allocation3 + $0x84] sm:$0xe]
      %v7279 = vld [vmem:[#allocation3 + $0x90] sm:$0xe]
      %v7280 = vld [vmem:[#allocation3 + $0x9c] sm:$0xe]
      %v7281 = vld [vmem:[#allocation3 + $0xa8] sm:$0xe]
      %v7282 = vld [vmem:[#allocation3 + $0xb4] sm:$0xe]
      %v7315 = vrot.slane %v7267, 5
      %v7316 = vrot.slane %v7315, 4
      %v7317 = vrot.slane %v6225, 5
      %v7318 = vsel %vm1947, %v7316, %v7317
      %v7319 = vrot.slane %v7317, 4
      %v7320 = vrot.slane %v6272, 5
      %v7321 = vsel %vm1947, %v7319, %v7320
      %v7322 = vrot.slane %v7268, 5
      %v7323 = vrot.slane %v7322, 4
      %v7324 = vrot.slane %v6227, 5
      %v7325 = vsel %vm1947, %v7323, %v7324
      %v7326 = vrot.slane %v7324, 4
      %v7327 = vrot.slane %v6273, 5
      %v7328 = vsel %vm1947, %v7326, %v7327
      %v7329 = vrot.slane %v7269, 5
      %v7330 = vrot.slane %v7329, 4
      %v7331 = vrot.slane %v6229, 5
      %v7332 = vsel %vm1947, %v7330, %v7331
      %v7333 = vrot.slane %v7331, 4
      %v7334 = vrot.slane %v6274, 5
      %v7335 = vsel %vm1947, %v7333, %v7334
      %v7336 = vrot.slane %v7270, 5
      %v7337 = vrot.slane %v7336, 4
      %v7338 = vrot.slane %v6231, 5
      %v7339 = vsel %vm1947, %v7337, %v7338
      %v7340 = vrot.slane %v7338, 4
      %v7341 = vrot.slane %v6275, 5
      %v7342 = vsel %vm1947, %v7340, %v7341
      %v7343 = vrot.slane %v7271, 5
      %v7344 = vrot.slane %v7343, 4
      %v7345 = vrot.slane %v6233, 5
      %v7346 = vsel %vm1947, %v7344, %v7345
      %v7347 = vrot.slane %v7345, 4
      %v7348 = vrot.slane %v6276, 5
      %v7349 = vsel %vm1947, %v7347, %v7348
      %v7350 = vrot.slane %v7272, 5
      %v7351 = vrot.slane %v7350, 4
      %v7352 = vrot.slane %v6235, 5
      %v7353 = vsel %vm1947, %v7351, %v7352
      %v7354 = vrot.slane %v7352, 4
      %v7355 = vrot.slane %v6277, 5
      %v7356 = vsel %vm1947, %v7354, %v7355
      %v7357 = vrot.slane %v7273, 5
      %v7358 = vrot.slane %v7357, 4
      %v7359 = vrot.slane %v6237, 5
      %v7360 = vsel %vm1947, %v7358, %v7359
      %v7361 = vrot.slane %v7359, 4
      %v7362 = vrot.slane %v6278, 5
      %v7363 = vsel %vm1947, %v7361, %v7362
      %v7364 = vrot.slane %v7274, 5
      %v7365 = vrot.slane %v7364, 4
      %v7366 = vrot.slane %v6239, 5
      %v7367 = vsel %vm1947, %v7365, %v7366
      %v7368 = vrot.slane %v7366, 4
      %v7369 = vrot.slane %v6279, 5
      %v7370 = vsel %vm1947, %v7368, %v7369
      %v7371 = vrot.slane %v7275, 5
      %v7372 = vrot.slane %v7371, 4
      %v7373 = vrot.slane %v6241, 5
      %v7374 = vsel %vm1947, %v7372, %v7373
      %v7375 = vrot.slane %v7373, 4
      %v7376 = vrot.slane %v6280, 5
      %v7377 = vsel %vm1947, %v7375, %v7376
      %v7378 = vrot.slane %v7276, 5
      %v7379 = vrot.slane %v7378, 4
      %v7380 = vrot.slane %v6243, 5
      %v7381 = vsel %vm1947, %v7379, %v7380
      %v7382 = vrot.slane %v7380, 4
      %v7383 = vrot.slane %v6281, 5
      %v7384 = vsel %vm1947, %v7382, %v7383
      %v7385 = vrot.slane %v7277, 5
      %v7386 = vrot.slane %v7385, 4
      %v7387 = vrot.slane %v6245, 5
      %v7388 = vsel %vm1947, %v7386, %v7387
      %v7389 = vrot.slane %v7387, 4
      %v7390 = vrot.slane %v6282, 5
      %v7391 = vsel %vm1947, %v7389, %v7390
      %v7392 = vrot.slane %v7278, 5
      %v7393 = vrot.slane %v7392, 4
      %v7394 = vrot.slane %v6247, 5
      %v7395 = vsel %vm1947, %v7393, %v7394
      %v7396 = vrot.slane %v7394, 4
      %v7397 = vrot.slane %v6283, 5
      %v7398 = vsel %vm1947, %v7396, %v7397
      %v7399 = vrot.slane %v7279, 5
      %v7400 = vrot.slane %v7399, 4
      %v7401 = vrot.slane %v6249, 5
      %v7402 = vsel %vm1947, %v7400, %v7401
      %v7403 = vrot.slane %v7401, 4
      %v7404 = vrot.slane %v6284, 5
      %v7405 = vsel %vm1947, %v7403, %v7404
      %v7406 = vrot.slane %v7280, 5
      %v7407 = vrot.slane %v7406, 4
      %v7408 = vrot.slane %v6251, 5
      %v7409 = vsel %vm1947, %v7407, %v7408
      %v7410 = vrot.slane %v7408, 4
      %v7411 = vrot.slane %v6285, 5
      %v7412 = vsel %vm1947, %v7410, %v7411
      %v7413 = vrot.slane %v7281, 5
      %v7414 = vrot.slane %v7413, 4
      %v7415 = vrot.slane %v6253, 5
      %v7416 = vsel %vm1947, %v7414, %v7415
      %v7417 = vrot.slane %v7415, 4
      %v7418 = vrot.slane %v6286, 5
      %v7419 = vsel %vm1947, %v7417, %v7418
      %v7420 = vrot.slane %v7282, 5
      %v7421 = vrot.slane %v7420, 4
      %v7422 = vrot.slane %v6255, 5
      %v7423 = vsel %vm1947, %v7421, %v7422
      %v7424 = vrot.slane %v7422, 4
      %v7425 = vrot.slane %v6287, 5
      %v7426 = vsel %vm1947, %v7424, %v7425
      %s7427 = scalar_lea.vmem %s4, 128
      %v7428 = vld [vmem:[%s7427] sm:$0xf]
      %v7429 = vld [vmem:[%s7427 + $0x4] sm:$0xf]
      %v7430 = vld [vmem:[%s7427 + $0x8] sm:$0xf]
      %v7431 = vld [vmem:[%s7427 + $0xc] sm:$0xf]
      %v7432 = vld [vmem:[%s7427 + $0x10] sm:$0xf]
      %v7433 = vld [vmem:[%s7427 + $0x14] sm:$0xf]
      %v7434 = vld [vmem:[%s7427 + $0x18] sm:$0xf]
      %v7435 = vld [vmem:[%s7427 + $0x1c] sm:$0xf]
      %v7436 = vld [vmem:[%s7427 + $0x20] sm:$0xf]
      %v7437 = vld [vmem:[%s7427 + $0x24] sm:$0xf]
      %v7438 = vld [vmem:[%s7427 + $0x28] sm:$0xf]
      %v7439 = vld [vmem:[%s7427 + $0x2c] sm:$0xf]
      %v7440 = vld [vmem:[%s7427 + $0x30] sm:$0xf]
      %v7441 = vld [vmem:[%s7427 + $0x34] sm:$0xf]
      %v7442 = vld [vmem:[%s7427 + $0x38] sm:$0xf]
      %v7443 = vld [vmem:[%s7427 + $0x3c] sm:$0xf]
      %v7444 = vunpack.c.l.b16 %v7318
      %v7445 = vunpack.c.l.b16 %v7321
      %v7446 = vunpack.c.l.b16 %v7325
      %v7447 = vunpack.c.l.b16 %v7328
      %v7448 = vunpack.c.l.b16 %v7332
      %v7449 = vunpack.c.l.b16 %v7335
      %v7450 = vunpack.c.l.b16 %v7339
      %v7451 = vunpack.c.l.b16 %v7342
      %v7452 = vunpack.c.l.b16 %v7346
      %v7453 = vunpack.c.l.b16 %v7349
      %v7454 = vunpack.c.l.b16 %v7353
      %v7455 = vunpack.c.l.b16 %v7356
      %v7456 = vunpack.c.l.b16 %v7360
      %v7457 = vunpack.c.l.b16 %v7363
      %v7458 = vunpack.c.l.b16 %v7367
      %v7459 = vunpack.c.l.b16 %v7370
      %v7460 = vunpack.c.l.b16 %v7374
      %v7461 = vunpack.c.l.b16 %v7377
      %v7462 = vunpack.c.l.b16 %v7381
      %v7463 = vunpack.c.l.b16 %v7384
      %v7464 = vunpack.c.l.b16 %v7388
      %v7465 = vunpack.c.l.b16 %v7391
      %v7466 = vunpack.c.l.b16 %v7395
      %v7467 = vunpack.c.l.b16 %v7398
      %v7468 = vunpack.c.l.b16 %v7402
      %v7469 = vunpack.c.l.b16 %v7405
      %v7470 = vunpack.c.l.b16 %v7409
      %v7471 = vunpack.c.l.b16 %v7412
      %v7472 = vunpack.c.l.b16 %v7416
      %v7473 = vunpack.c.l.b16 %v7419
      %v7474 = vunpack.c.l.b16 %v7423
      %v7475 = vunpack.c.l.b16 %v7426
      %v7476 = vpack.c.b16 %v7445, %v7444
      %v7477 = vpack.c.b16 %v7447, %v7446
      %v7478 = vpack.c.b16 %v7449, %v7448
      %v7479 = vpack.c.b16 %v7451, %v7450
      %v7480 = vpack.c.b16 %v7453, %v7452
      %v7481 = vpack.c.b16 %v7455, %v7454
      %v7482 = vpack.c.b16 %v7457, %v7456
      %v7483 = vpack.c.b16 %v7459, %v7458
      %v7484 = vpack.c.b16 %v7461, %v7460
      %v7485 = vpack.c.b16 %v7463, %v7462
      %v7486 = vpack.c.b16 %v7465, %v7464
      %v7487 = vpack.c.b16 %v7467, %v7466
      %v7488 = vpack.c.b16 %v7469, %v7468
      %v7489 = vpack.c.b16 %v7471, %v7470
      %v7490 = vpack.c.b16 %v7473, %v7472
      %v7491 = vpack.c.b16 %v7475, %v7474
      %v7524 = vunpack.c.l.b16 %v7428
      %v7525 = vunpack.c.l.b16 %v7429
      %v7526 = vunpack.c.l.b16 %v7430
      %v7527 = vunpack.c.l.b16 %v7431
      %v7528 = vunpack.c.l.b16 %v7432
      %v7529 = vunpack.c.l.b16 %v7433
      %v7530 = vunpack.c.l.b16 %v7434
      %v7531 = vunpack.c.l.b16 %v7435
      %v7532 = vunpack.c.l.b16 %v7436
      %v7533 = vunpack.c.l.b16 %v7437
      %v7534 = vunpack.c.l.b16 %v7438
      %v7535 = vunpack.c.l.b16 %v7439
      %v7536 = vunpack.c.l.b16 %v7440
      %v7537 = vunpack.c.l.b16 %v7441
      %v7538 = vunpack.c.l.b16 %v7442
      %v7539 = vunpack.c.l.b16 %v7443
      %v7540 = vpack.c.b16 %v7525, %v7524
      %v7541 = vpack.c.b16 %v7527, %v7526
      %v7542 = vpack.c.b16 %v7529, %v7528
      %v7543 = vpack.c.b16 %v7531, %v7530
      %v7544 = vpack.c.b16 %v7533, %v7532
      %v7545 = vpack.c.b16 %v7535, %v7534
      %v7546 = vpack.c.b16 %v7537, %v7536
      %v7547 = vpack.c.b16 %v7539, %v7538
      %7556 = vmatprep.subr.bf16.mxu0 0
      %7557 = vmatpush1.bf16.msra.mxu0 %v7547
      %7558 = vmatprep.subr.bf16.mxu0 0
      %7559 = vmatpush1.bf16.msra.mxu0 %v7546
      %7560 = vmatprep.subr.bf16.mxu0 0
      %7561 = vmatpush1.bf16.msra.mxu0 %v7545
      %7562 = vmatprep.subr.bf16.mxu0 0
      %7563 = vmatpush1.bf16.msra.mxu0 %v7544
      %7564 = vmatprep.subr.bf16.mxu0 0
      %7565 = vmatpush1.bf16.msra.mxu0 %v7543
      %7566 = vmatprep.subr.bf16.mxu0 0
      %7567 = vmatpush1.bf16.msra.mxu0 %v7542
      %7568 = vmatprep.subr.bf16.mxu0 0
      %7569 = vmatpush1.bf16.msra.mxu0 %v7541
      %7570 = vmatprep.subr.bf16.mxu0 0
      %7571 = vmatpush1.bf16.msra.mxu0 %v7540
      %7572 = vmatprep.subr.bf16.mxu0 0
      %7573 = vmatpush2.bf16.msra.mxu0 0
      %7574 = vmatprep.subr.bf16.mxu0 0
      %7575 = vmatpush2.bf16.msra.mxu0 0
      %7576 = vmatprep.subr.bf16.mxu0 0
      %7577 = vmatpush2.bf16.msra.mxu0 0
      %7578 = vmatprep.subr.bf16.mxu0 0
      %7579 = vmatpush2.bf16.msra.mxu0 0
      %7580 = vmatprep.subr.bf16.mxu0 0
      %7581 = vmatpush2.bf16.msra.mxu0 0
      %7582 = vmatprep.subr.bf16.mxu0 0
      %7583 = vmatpush2.bf16.msra.mxu0 0
      %7584 = vmatprep.subr.bf16.mxu0 0
      %7585 = vmatpush2.bf16.msra.mxu0 0
      %7586 = vmatprep.subr.bf16.mxu0 0
      %7587 = vmatpush2.bf16.msra.mxu0 0
      %7588 = vmatprep.mubr.bf16.mxu0 0
      %7589 = vmatmul.mubr.bf16.gmra.mxu0 %v7476
      %v7590 = vpop.f32.mrf.mxu0
      %v7591 = vadd.f32 0.0, %v7590
      %v7592 = vpop.f32.mrf.mxu0
      %v7593 = vpop.f32.mrf.mxu0
      %v7594 = vadd.f32 0.0, %v7593
      %v7595 = vpop.f32.mrf.mxu0
      %7596 = vmatprep.mubr.bf16.mxu0 0
      %7597 = vmatmul.mubr.bf16.gmra.mxu0 %v7477
      %v7598 = vpop.f32.mrf.mxu0
      %v7599 = vadd.f32 0.0, %v7598
      %v7600 = vpop.f32.mrf.mxu0
      %v7601 = vpop.f32.mrf.mxu0
      %v7602 = vadd.f32 0.0, %v7601
      %v7603 = vpop.f32.mrf.mxu0
      %7604 = vmatprep.mubr.bf16.mxu0 0
      %7605 = vmatmul.mubr.bf16.gmra.mxu0 %v7478
      %v7606 = vpop.f32.mrf.mxu0
      %v7607 = vadd.f32 0.0, %v7606
      %v7608 = vpop.f32.mrf.mxu0
      %v7609 = vpop.f32.mrf.mxu0
      %v7610 = vadd.f32 0.0, %v7609
      %v7611 = vpop.f32.mrf.mxu0
      %7612 = vmatprep.mubr.bf16.mxu0 0
      %7613 = vmatmul.mubr.bf16.gmra.mxu0 %v7479
      %v7614 = vpop.f32.mrf.mxu0
      %v7615 = vadd.f32 0.0, %v7614
      %v7616 = vpop.f32.mrf.mxu0
      %v7617 = vpop.f32.mrf.mxu0
      %v7618 = vadd.f32 0.0, %v7617
      %v7619 = vpop.f32.mrf.mxu0
      %7620 = vmatprep.mubr.bf16.mxu0 0
      %7621 = vmatmul.mubr.bf16.gmra.mxu0 %v7480
      %v7622 = vpop.f32.mrf.mxu0
      %v7623 = vadd.f32 0.0, %v7622
      %v7624 = vpop.f32.mrf.mxu0
      %v7625 = vpop.f32.mrf.mxu0
      %v7626 = vadd.f32 0.0, %v7625
      %v7627 = vpop.f32.mrf.mxu0
      %7628 = vmatprep.mubr.bf16.mxu0 0
      %7629 = vmatmul.mubr.bf16.gmra.mxu0 %v7481
      %v7630 = vpop.f32.mrf.mxu0
      %v7631 = vadd.f32 0.0, %v7630
      %v7632 = vpop.f32.mrf.mxu0
      %v7633 = vpop.f32.mrf.mxu0
      %v7634 = vadd.f32 0.0, %v7633
      %v7635 = vpop.f32.mrf.mxu0
      %7636 = vmatprep.mubr.bf16.mxu0 0
      %7637 = vmatmul.mubr.bf16.gmra.mxu0 %v7482
      %v7638 = vpop.f32.mrf.mxu0
      %v7639 = vadd.f32 0.0, %v7638
      %v7640 = vpop.f32.mrf.mxu0
      %v7641 = vpop.f32.mrf.mxu0
      %v7642 = vadd.f32 0.0, %v7641
      %v7643 = vpop.f32.mrf.mxu0
      %7644 = vmatprep.mubr.bf16.mxu0 0
      %7645 = vmatmul.mubr.bf16.gmra.mxu0 %v7483
      %v7646 = vpop.f32.mrf.mxu0
      %v7647 = vadd.f32 0.0, %v7646
      %v7648 = vpop.f32.mrf.mxu0
      %v7649 = vpop.f32.mrf.mxu0
      %v7650 = vadd.f32 0.0, %v7649
      %v7651 = vpop.f32.mrf.mxu0
      %7652 = vmatprep.mubr.bf16.mxu0 0
      %7653 = vmatmul.mubr.bf16.gmra.mxu0 %v7484
      %v7654 = vpop.f32.mrf.mxu0
      %v7655 = vadd.f32 0.0, %v7654
      %v7656 = vpop.f32.mrf.mxu0
      %v7657 = vpop.f32.mrf.mxu0
      %v7658 = vadd.f32 0.0, %v7657
      %v7659 = vpop.f32.mrf.mxu0
      %7660 = vmatprep.mubr.bf16.mxu0 0
      %7661 = vmatmul.mubr.bf16.gmra.mxu0 %v7485
      %v7662 = vpop.f32.mrf.mxu0
      %v7663 = vadd.f32 0.0, %v7662
      %v7664 = vpop.f32.mrf.mxu0
      %v7665 = vpop.f32.mrf.mxu0
      %v7666 = vadd.f32 0.0, %v7665
      %v7667 = vpop.f32.mrf.mxu0
      %7668 = vmatprep.mubr.bf16.mxu0 0
      %7669 = vmatmul.mubr.bf16.gmra.mxu0 %v7486
      %v7670 = vpop.f32.mrf.mxu0
      %v7671 = vadd.f32 0.0, %v7670
      %v7672 = vpop.f32.mrf.mxu0
      %v7673 = vpop.f32.mrf.mxu0
      %v7674 = vadd.f32 0.0, %v7673
      %v7675 = vpop.f32.mrf.mxu0
      %7676 = vmatprep.mubr.bf16.mxu0 0
      %7677 = vmatmul.mubr.bf16.gmra.mxu0 %v7487
      %v7678 = vpop.f32.mrf.mxu0
      %v7679 = vadd.f32 0.0, %v7678
      %v7680 = vpop.f32.mrf.mxu0
      %v7681 = vpop.f32.mrf.mxu0
      %v7682 = vadd.f32 0.0, %v7681
      %v7683 = vpop.f32.mrf.mxu0
      %7684 = vmatprep.mubr.bf16.mxu0 0
      %7685 = vmatmul.mubr.bf16.gmra.mxu0 %v7488
      %v7686 = vpop.f32.mrf.mxu0
      %v7687 = vadd.f32 0.0, %v7686
      %v7688 = vpop.f32.mrf.mxu0
      %v7689 = vpop.f32.mrf.mxu0
      %v7690 = vadd.f32 0.0, %v7689
      %v7691 = vpop.f32.mrf.mxu0
      %7692 = vmatprep.mubr.bf16.mxu0 0
      %7693 = vmatmul.mubr.bf16.gmra.mxu0 %v7489
      %v7694 = vpop.f32.mrf.mxu0
      %v7695 = vadd.f32 0.0, %v7694
      %v7696 = vpop.f32.mrf.mxu0
      %v7697 = vpop.f32.mrf.mxu0
      %v7698 = vadd.f32 0.0, %v7697
      %v7699 = vpop.f32.mrf.mxu0
      %7700 = vmatprep.mubr.bf16.mxu0 0
      %7701 = vmatmul.mubr.bf16.gmra.mxu0 %v7490
      %v7702 = vpop.f32.mrf.mxu0
      %v7703 = vadd.f32 0.0, %v7702
      %v7704 = vpop.f32.mrf.mxu0
      %v7705 = vpop.f32.mrf.mxu0
      %v7706 = vadd.f32 0.0, %v7705
      %v7707 = vpop.f32.mrf.mxu0
      %7708 = vmatprep.mubr.bf16.mxu0 0
      %7709 = vmatmul.mubr.bf16.gmra.mxu0 %v7491
      %v7710 = vpop.f32.mrf.mxu0
      %v7711 = vadd.f32 0.0, %v7710
      %v7712 = vpop.f32.mrf.mxu0
      %v7713 = vpop.f32.mrf.mxu0
      %v7714 = vadd.f32 0.0, %v7713
      %v7715 = vpop.f32.mrf.mxu0
      %7716 = vdwg.mxu0
      %v7717 = vadd.f32 %v7141, %v7591
      %v7718 = vadd.f32 %v7144, %v7594
      %v7719 = vadd.f32 %v7149, %v7599
      %v7720 = vadd.f32 %v7152, %v7602
      %v7721 = vadd.f32 %v7157, %v7607
      %v7722 = vadd.f32 %v7160, %v7610
      %v7723 = vadd.f32 %v7165, %v7615
      %v7724 = vadd.f32 %v7168, %v7618
      %v7725 = vadd.f32 %v7173, %v7623
      %v7726 = vadd.f32 %v7176, %v7626
      %v7727 = vadd.f32 %v7181, %v7631
      %v7728 = vadd.f32 %v7184, %v7634
      %v7729 = vadd.f32 %v7189, %v7639
      %v7730 = vadd.f32 %v7192, %v7642
      %v7731 = vadd.f32 %v7197, %v7647
      %v7732 = vadd.f32 %v7200, %v7650
      %v7733 = vadd.f32 %v7205, %v7655
      %v7734 = vadd.f32 %v7208, %v7658
      %v7735 = vadd.f32 %v7213, %v7663
      %v7736 = vadd.f32 %v7216, %v7666
      %v7737 = vadd.f32 %v7221, %v7671
      %v7738 = vadd.f32 %v7224, %v7674
      %v7739 = vadd.f32 %v7229, %v7679
      %v7740 = vadd.f32 %v7232, %v7682
      %v7741 = vadd.f32 %v7237, %v7687
      %v7742 = vadd.f32 %v7240, %v7690
      %v7743 = vadd.f32 %v7245, %v7695
      %v7744 = vadd.f32 %v7248, %v7698
      %v7745 = vadd.f32 %v7253, %v7703
      %v7746 = vadd.f32 %v7256, %v7706
      %v7747 = vadd.f32 %v7261, %v7711
      %v7748 = vadd.f32 %v7264, %v7714
      %v7749 = vld [vmem:[%s6107] sm:$0xf]
      %v7750 = vld [vmem:[%s6107 + $0x4] sm:$0xf]
      %v7751 = vld [vmem:[%s6107 + $0xc] sm:$0xf]
      %v7752 = vld [vmem:[%s6107 + $0x10] sm:$0xf]
      %v7753 = vld [vmem:[%s6107 + $0x18] sm:$0xf]
      %v7754 = vld [vmem:[%s6107 + $0x1c] sm:$0xf]
      %v7755 = vld [vmem:[%s6107 + $0x24] sm:$0xf]
      %v7756 = vld [vmem:[%s6107 + $0x28] sm:$0xf]
      %v7757 = vld [vmem:[%s6107 + $0x30] sm:$0xf]
      %v7758 = vld [vmem:[%s6107 + $0x34] sm:$0xf]
      %v7759 = vld [vmem:[%s6107 + $0x3c] sm:$0xf]
      %v7760 = vld [vmem:[%s6107 + $0x40] sm:$0xf]
      %v7761 = vld [vmem:[%s6107 + $0x48] sm:$0xf]
      %v7762 = vld [vmem:[%s6107 + $0x4c] sm:$0xf]
      %v7763 = vld [vmem:[%s6107 + $0x54] sm:$0xf]
      %v7764 = vld [vmem:[%s6107 + $0x58] sm:$0xf]
      %v7765 = vld [vmem:[%s6107 + $0x60] sm:$0xf]
      %v7766 = vld [vmem:[%s6107 + $0x64] sm:$0xf]
      %v7767 = vld [vmem:[%s6107 + $0x6c] sm:$0xf]
      %v7768 = vld [vmem:[%s6107 + $0x70] sm:$0xf]
      %v7769 = vld [vmem:[%s6107 + $0x78] sm:$0xf]
      %v7770 = vld [vmem:[%s6107 + $0x7c] sm:$0xf]
      %v7771 = vld [vmem:[%s6107 + $0x84] sm:$0xf]
      %v7772 = vld [vmem:[%s6107 + $0x88] sm:$0xf]
      %v7773 = vld [vmem:[%s6107 + $0x90] sm:$0xf]
      %v7774 = vld [vmem:[%s6107 + $0x94] sm:$0xf]
      %v7775 = vld [vmem:[%s6107 + $0x9c] sm:$0xf]
      %v7776 = vld [vmem:[%s6107 + $0xa0] sm:$0xf]
      %v7777 = vld [vmem:[%s6107 + $0xa8] sm:$0xf]
      %v7778 = vld [vmem:[%s6107 + $0xac] sm:$0xf]
      %v7779 = vld [vmem:[%s6107 + $0xb4] sm:$0xf]
      %v7780 = vld [vmem:[%s6107 + $0xb8] sm:$0xf]
      %s7781 = scalar_lea.vmem %s4, 192
      %v7782 = vld [vmem:[%s7781] sm:$0xf]
      %v7783 = vld [vmem:[%s7781 + $0x4] sm:$0xf]
      %v7784 = vld [vmem:[%s7781 + $0x8] sm:$0xf]
      %v7785 = vld [vmem:[%s7781 + $0xc] sm:$0xf]
      %v7786 = vld [vmem:[%s7781 + $0x10] sm:$0xf]
      %v7787 = vld [vmem:[%s7781 + $0x14] sm:$0xf]
      %v7788 = vld [vmem:[%s7781 + $0x18] sm:$0xf]
      %v7789 = vld [vmem:[%s7781 + $0x1c] sm:$0xf]
      %v7790 = vld [vmem:[%s7781 + $0x20] sm:$0xf]
      %v7791 = vld [vmem:[%s7781 + $0x24] sm:$0xf]
      %v7792 = vld [vmem:[%s7781 + $0x28] sm:$0xf]
      %v7793 = vld [vmem:[%s7781 + $0x2c] sm:$0xf]
      %v7794 = vld [vmem:[%s7781 + $0x30] sm:$0xf]
      %v7795 = vld [vmem:[%s7781 + $0x34] sm:$0xf]
      %v7796 = vld [vmem:[%s7781 + $0x38] sm:$0xf]
      %v7797 = vld [vmem:[%s7781 + $0x3c] sm:$0xf]
      %v7830 = vunpack.c.l.b16 %v7749
      %v7831 = vunpack.c.l.b16 %v7750
      %v7832 = vunpack.c.l.b16 %v7751
      %v7833 = vunpack.c.l.b16 %v7752
      %v7834 = vunpack.c.l.b16 %v7753
      %v7835 = vunpack.c.l.b16 %v7754
      %v7836 = vunpack.c.l.b16 %v7755
      %v7837 = vunpack.c.l.b16 %v7756
      %v7838 = vunpack.c.l.b16 %v7757
      %v7839 = vunpack.c.l.b16 %v7758
      %v7840 = vunpack.c.l.b16 %v7759
      %v7841 = vunpack.c.l.b16 %v7760
      %v7842 = vunpack.c.l.b16 %v7761
      %v7843 = vunpack.c.l.b16 %v7762
      %v7844 = vunpack.c.l.b16 %v7763
      %v7845 = vunpack.c.l.b16 %v7764
      %v7846 = vunpack.c.l.b16 %v7765
      %v7847 = vunpack.c.l.b16 %v7766
      %v7848 = vunpack.c.l.b16 %v7767
      %v7849 = vunpack.c.l.b16 %v7768
      %v7850 = vunpack.c.l.b16 %v7769
      %v7851 = vunpack.c.l.b16 %v7770
      %v7852 = vunpack.c.l.b16 %v7771
      %v7853 = vunpack.c.l.b16 %v7772
      %v7854 = vunpack.c.l.b16 %v7773
      %v7855 = vunpack.c.l.b16 %v7774
      %v7856 = vunpack.c.l.b16 %v7775
      %v7857 = vunpack.c.l.b16 %v7776
      %v7858 = vunpack.c.l.b16 %v7777
      %v7859 = vunpack.c.l.b16 %v7778
      %v7860 = vunpack.c.l.b16 %v7779
      %v7861 = vunpack.c.l.b16 %v7780
      %v7862 = vpack.c.b16 %v7831, %v7830
      %v7863 = vpack.c.b16 %v7833, %v7832
      %v7864 = vpack.c.b16 %v7835, %v7834
      %v7865 = vpack.c.b16 %v7837, %v7836
      %v7866 = vpack.c.b16 %v7839, %v7838
      %v7867 = vpack.c.b16 %v7841, %v7840
      %v7868 = vpack.c.b16 %v7843, %v7842
      %v7869 = vpack.c.b16 %v7845, %v7844
      %v7870 = vpack.c.b16 %v7847, %v7846
      %v7871 = vpack.c.b16 %v7849, %v7848
      %v7872 = vpack.c.b16 %v7851, %v7850
      %v7873 = vpack.c.b16 %v7853, %v7852
      %v7874 = vpack.c.b16 %v7855, %v7854
      %v7875 = vpack.c.b16 %v7857, %v7856
      %v7876 = vpack.c.b16 %v7859, %v7858
      %v7877 = vpack.c.b16 %v7861, %v7860
      %v7910 = vunpack.c.l.b16 %v7782
      %v7911 = vunpack.c.l.b16 %v7783
      %v7912 = vunpack.c.l.b16 %v7784
      %v7913 = vunpack.c.l.b16 %v7785
      %v7914 = vunpack.c.l.b16 %v7786
      %v7915 = vunpack.c.l.b16 %v7787
      %v7916 = vunpack.c.l.b16 %v7788
      %v7917 = vunpack.c.l.b16 %v7789
      %v7918 = vunpack.c.l.b16 %v7790
      %v7919 = vunpack.c.l.b16 %v7791
      %v7920 = vunpack.c.l.b16 %v7792
      %v7921 = vunpack.c.l.b16 %v7793
      %v7922 = vunpack.c.l.b16 %v7794
      %v7923 = vunpack.c.l.b16 %v7795
      %v7924 = vunpack.c.l.b16 %v7796
      %v7925 = vunpack.c.l.b16 %v7797
      %v7926 = vpack.c.b16 %v7911, %v7910
      %v7927 = vpack.c.b16 %v7913, %v7912
      %v7928 = vpack.c.b16 %v7915, %v7914
      %v7929 = vpack.c.b16 %v7917, %v7916
      %v7930 = vpack.c.b16 %v7919, %v7918
      %v7931 = vpack.c.b16 %v7921, %v7920
      %v7932 = vpack.c.b16 %v7923, %v7922
      %v7933 = vpack.c.b16 %v7925, %v7924
      %7942 = vmatprep.subr.bf16.mxu0 0
      %7943 = vmatpush1.bf16.msra.mxu0 %v7933
      %7944 = vmatprep.subr.bf16.mxu0 0
      %7945 = vmatpush1.bf16.msra.mxu0 %v7932
      %7946 = vmatprep.subr.bf16.mxu0 0
      %7947 = vmatpush1.bf16.msra.mxu0 %v7931
      %7948 = vmatprep.subr.bf16.mxu0 0
      %7949 = vmatpush1.bf16.msra.mxu0 %v7930
      %7950 = vmatprep.subr.bf16.mxu0 0
      %7951 = vmatpush1.bf16.msra.mxu0 %v7929
      %7952 = vmatprep.subr.bf16.mxu0 0
      %7953 = vmatpush1.bf16.msra.mxu0 %v7928
      %7954 = vmatprep.subr.bf16.mxu0 0
      %7955 = vmatpush1.bf16.msra.mxu0 %v7927
      %7956 = vmatprep.subr.bf16.mxu0 0
      %7957 = vmatpush1.bf16.msra.mxu0 %v7926
      %7958 = vmatprep.subr.bf16.mxu0 0
      %7959 = vmatpush2.bf16.msra.mxu0 0
      %7960 = vmatprep.subr.bf16.mxu0 0
      %7961 = vmatpush2.bf16.msra.mxu0 0
      %7962 = vmatprep.subr.bf16.mxu0 0
      %7963 = vmatpush2.bf16.msra.mxu0 0
      %7964 = vmatprep.subr.bf16.mxu0 0
      %7965 = vmatpush2.bf16.msra.mxu0 0
      %7966 = vmatprep.subr.bf16.mxu0 0
      %7967 = vmatpush2.bf16.msra.mxu0 0
      %7968 = vmatprep.subr.bf16.mxu0 0
      %7969 = vmatpush2.bf16.msra.mxu0 0
      %7970 = vmatprep.subr.bf16.mxu0 0
      %7971 = vmatpush2.bf16.msra.mxu0 0
      %7972 = vmatprep.subr.bf16.mxu0 0
      %7973 = vmatpush2.bf16.msra.mxu0 0
      %7974 = vmatprep.mubr.bf16.mxu0 0
      %7975 = vmatmul.mubr.bf16.gmra.mxu0 %v7862
      %v7976 = vpop.f32.mrf.mxu0
      %v7977 = vadd.f32 0.0, %v7976
      %v7978 = vpop.f32.mrf.mxu0
      %v7979 = vpop.f32.mrf.mxu0
      %v7980 = vadd.f32 0.0, %v7979
      %v7981 = vpop.f32.mrf.mxu0
      %7982 = vmatprep.mubr.bf16.mxu0 0
      %7983 = vmatmul.mubr.bf16.gmra.mxu0 %v7863
      %v7984 = vpop.f32.mrf.mxu0
      %v7985 = vadd.f32 0.0, %v7984
      %v7986 = vpop.f32.mrf.mxu0
      %v7987 = vpop.f32.mrf.mxu0
      %v7988 = vadd.f32 0.0, %v7987
      %v7989 = vpop.f32.mrf.mxu0
      %7990 = vmatprep.mubr.bf16.mxu0 0
      %7991 = vmatmul.mubr.bf16.gmra.mxu0 %v7864
      %v7992 = vpop.f32.mrf.mxu0
      %v7993 = vadd.f32 0.0, %v7992
      %v7994 = vpop.f32.mrf.mxu0
      %v7995 = vpop.f32.mrf.mxu0
      %v7996 = vadd.f32 0.0, %v7995
      %v7997 = vpop.f32.mrf.mxu0
      %7998 = vmatprep.mubr.bf16.mxu0 0
      %7999 = vmatmul.mubr.bf16.gmra.mxu0 %v7865
      %v8000 = vpop.f32.mrf.mxu0
      %v8001 = vadd.f32 0.0, %v8000
      %v8002 = vpop.f32.mrf.mxu0
      %v8003 = vpop.f32.mrf.mxu0
      %v8004 = vadd.f32 0.0, %v8003
      %v8005 = vpop.f32.mrf.mxu0
      %8006 = vmatprep.mubr.bf16.mxu0 0
      %8007 = vmatmul.mubr.bf16.gmra.mxu0 %v7866
      %v8008 = vpop.f32.mrf.mxu0
      %v8009 = vadd.f32 0.0, %v8008
      %v8010 = vpop.f32.mrf.mxu0
      %v8011 = vpop.f32.mrf.mxu0
      %v8012 = vadd.f32 0.0, %v8011
      %v8013 = vpop.f32.mrf.mxu0
      %8014 = vmatprep.mubr.bf16.mxu0 0
      %8015 = vmatmul.mubr.bf16.gmra.mxu0 %v7867
      %v8016 = vpop.f32.mrf.mxu0
      %v8017 = vadd.f32 0.0, %v8016
      %v8018 = vpop.f32.mrf.mxu0
      %v8019 = vpop.f32.mrf.mxu0
      %v8020 = vadd.f32 0.0, %v8019
      %v8021 = vpop.f32.mrf.mxu0
      %8022 = vmatprep.mubr.bf16.mxu0 0
      %8023 = vmatmul.mubr.bf16.gmra.mxu0 %v7868
      %v8024 = vpop.f32.mrf.mxu0
      %v8025 = vadd.f32 0.0, %v8024
      %v8026 = vpop.f32.mrf.mxu0
      %v8027 = vpop.f32.mrf.mxu0
      %v8028 = vadd.f32 0.0, %v8027
      %v8029 = vpop.f32.mrf.mxu0
      %8030 = vmatprep.mubr.bf16.mxu0 0
      %8031 = vmatmul.mubr.bf16.gmra.mxu0 %v7869
      %v8032 = vpop.f32.mrf.mxu0
      %v8033 = vadd.f32 0.0, %v8032
      %v8034 = vpop.f32.mrf.mxu0
      %v8035 = vpop.f32.mrf.mxu0
      %v8036 = vadd.f32 0.0, %v8035
      %v8037 = vpop.f32.mrf.mxu0
      %8038 = vmatprep.mubr.bf16.mxu0 0
      %8039 = vmatmul.mubr.bf16.gmra.mxu0 %v7870
      %v8040 = vpop.f32.mrf.mxu0
      %v8041 = vadd.f32 0.0, %v8040
      %v8042 = vpop.f32.mrf.mxu0
      %v8043 = vpop.f32.mrf.mxu0
      %v8044 = vadd.f32 0.0, %v8043
      %v8045 = vpop.f32.mrf.mxu0
      %8046 = vmatprep.mubr.bf16.mxu0 0
      %8047 = vmatmul.mubr.bf16.gmra.mxu0 %v7871
      %v8048 = vpop.f32.mrf.mxu0
      %v8049 = vadd.f32 0.0, %v8048
      %v8050 = vpop.f32.mrf.mxu0
      %v8051 = vpop.f32.mrf.mxu0
      %v8052 = vadd.f32 0.0, %v8051
      %v8053 = vpop.f32.mrf.mxu0
      %8054 = vmatprep.mubr.bf16.mxu0 0
      %8055 = vmatmul.mubr.bf16.gmra.mxu0 %v7872
      %v8056 = vpop.f32.mrf.mxu0
      %v8057 = vadd.f32 0.0, %v8056
      %v8058 = vpop.f32.mrf.mxu0
      %v8059 = vpop.f32.mrf.mxu0
      %v8060 = vadd.f32 0.0, %v8059
      %v8061 = vpop.f32.mrf.mxu0
      %8062 = vmatprep.mubr.bf16.mxu0 0
      %8063 = vmatmul.mubr.bf16.gmra.mxu0 %v7873
      %v8064 = vpop.f32.mrf.mxu0
      %v8065 = vadd.f32 0.0, %v8064
      %v8066 = vpop.f32.mrf.mxu0
      %v8067 = vpop.f32.mrf.mxu0
      %v8068 = vadd.f32 0.0, %v8067
      %v8069 = vpop.f32.mrf.mxu0
      %8070 = vmatprep.mubr.bf16.mxu0 0
      %8071 = vmatmul.mubr.bf16.gmra.mxu0 %v7874
      %v8072 = vpop.f32.mrf.mxu0
      %v8073 = vadd.f32 0.0, %v8072
      %v8074 = vpop.f32.mrf.mxu0
      %v8075 = vpop.f32.mrf.mxu0
      %v8076 = vadd.f32 0.0, %v8075
      %v8077 = vpop.f32.mrf.mxu0
      %8078 = vmatprep.mubr.bf16.mxu0 0
      %8079 = vmatmul.mubr.bf16.gmra.mxu0 %v7875
      %v8080 = vpop.f32.mrf.mxu0
      %v8081 = vadd.f32 0.0, %v8080
      %v8082 = vpop.f32.mrf.mxu0
      %v8083 = vpop.f32.mrf.mxu0
      %v8084 = vadd.f32 0.0, %v8083
      %v8085 = vpop.f32.mrf.mxu0
      %8086 = vmatprep.mubr.bf16.mxu0 0
      %8087 = vmatmul.mubr.bf16.gmra.mxu0 %v7876
      %v8088 = vpop.f32.mrf.mxu0
      %v8089 = vadd.f32 0.0, %v8088
      %v8090 = vpop.f32.mrf.mxu0
      %v8091 = vpop.f32.mrf.mxu0
      %v8092 = vadd.f32 0.0, %v8091
      %v8093 = vpop.f32.mrf.mxu0
      %8094 = vmatprep.mubr.bf16.mxu0 0
      %8095 = vmatmul.mubr.bf16.gmra.mxu0 %v7877
      %v8096 = vpop.f32.mrf.mxu0
      %v8097 = vadd.f32 0.0, %v8096
      %v8098 = vpop.f32.mrf.mxu0
      %v8099 = vpop.f32.mrf.mxu0
      %v8100 = vadd.f32 0.0, %v8099
      %v8101 = vpop.f32.mrf.mxu0
      %8102 = vdwg.mxu0
      %v8103 = vadd.f32 %v7717, %v7977
      %v8104 = vadd.f32 %v7718, %v7980
      %v8105 = vadd.f32 %v7719, %v7985
      %v8106 = vadd.f32 %v7720, %v7988
      %v8107 = vadd.f32 %v7721, %v7993
      %v8108 = vadd.f32 %v7722, %v7996
      %v8109 = vadd.f32 %v7723, %v8001
      %v8110 = vadd.f32 %v7724, %v8004
      %v8111 = vadd.f32 %v7725, %v8009
      %v8112 = vadd.f32 %v7726, %v8012
      %v8113 = vadd.f32 %v7727, %v8017
      %v8114 = vadd.f32 %v7728, %v8020
      %v8115 = vadd.f32 %v7729, %v8025
      %v8116 = vadd.f32 %v7730, %v8028
      %v8117 = vadd.f32 %v7731, %v8033
      %v8118 = vadd.f32 %v7732, %v8036
      %v8119 = vadd.f32 %v7733, %v8041
      %v8120 = vadd.f32 %v7734, %v8044
      %v8121 = vadd.f32 %v7735, %v8049
      %v8122 = vadd.f32 %v7736, %v8052
      %v8123 = vadd.f32 %v7737, %v8057
      %v8124 = vadd.f32 %v7738, %v8060
      %v8125 = vadd.f32 %v7739, %v8065
      %v8126 = vadd.f32 %v7740, %v8068
      %v8127 = vadd.f32 %v7741, %v8073
      %v8128 = vadd.f32 %v7742, %v8076
      %v8129 = vadd.f32 %v7743, %v8081
      %v8130 = vadd.f32 %v7744, %v8084
      %v8131 = vadd.f32 %v7745, %v8089
      %v8132 = vadd.f32 %v7746, %v8092
      %v8133 = vadd.f32 %v7747, %v8097
      %v8134 = vadd.f32 %v7748, %v8100
      %v8135 = vld [vmem:[%s6107] sm:$0xf]
      %v8136 = vld [vmem:[%s6107 + $0x4] sm:$0xf]
      %v8137 = vld [vmem:[%s6107 + $0x8] sm:$0x1]
      %v8138 = vld [vmem:[%s6107 + $0xc] sm:$0xf]
      %v8139 = vld [vmem:[%s6107 + $0x10] sm:$0xf]
      %v8140 = vld [vmem:[%s6107 + $0x14] sm:$0x1]
      %v8141 = vld [vmem:[%s6107 + $0x18] sm:$0xf]
      %v8142 = vld [vmem:[%s6107 + $0x1c] sm:$0xf]
      %v8143 = vld [vmem:[%s6107 + $0x20] sm:$0x1]
      %v8144 = vld [vmem:[%s6107 + $0x24] sm:$0xf]
      %v8145 = vld [vmem:[%s6107 + $0x28] sm:$0xf]
      %v8146 = vld [vmem:[%s6107 + $0x2c] sm:$0x1]
      %v8147 = vld [vmem:[%s6107 + $0x30] sm:$0xf]
      %v8148 = vld [vmem:[%s6107 + $0x34] sm:$0xf]
      %v8149 = vld [vmem:[%s6107 + $0x38] sm:$0x1]
      %v8150 = vld [vmem:[%s6107 + $0x3c] sm:$0xf]
      %v8151 = vld [vmem:[%s6107 + $0x40] sm:$0xf]
      %v8152 = vld [vmem:[%s6107 + $0x44] sm:$0x1]
      %v8153 = vld [vmem:[%s6107 + $0x48] sm:$0xf]
      %v8154 = vld [vmem:[%s6107 + $0x4c] sm:$0xf]
      %v8155 = vld [vmem:[%s6107 + $0x50] sm:$0x1]
      %v8156 = vld [vmem:[%s6107 + $0x54] sm:$0xf]
      %v8157 = vld [vmem:[%s6107 + $0x58] sm:$0xf]
      %v8158 = vld [vmem:[%s6107 + $0x5c] sm:$0x1]
      %v8159 = vld [vmem:[%s6107 + $0x60] sm:$0xf]
      %v8160 = vld [vmem:[%s6107 + $0x64] sm:$0xf]
      %v8161 = vld [vmem:[%s6107 + $0x68] sm:$0x1]
      %v8162 = vld [vmem:[%s6107 + $0x6c] sm:$0xf]
      %v8163 = vld [vmem:[%s6107 + $0x70] sm:$0xf]
      %v8164 = vld [vmem:[%s6107 + $0x74] sm:$0x1]
      %v8165 = vld [vmem:[%s6107 + $0x78] sm:$0xf]
      %v8166 = vld [vmem:[%s6107 + $0x7c] sm:$0xf]
      %v8167 = vld [vmem:[%s6107 + $0x80] sm:$0x1]
      %v8168 = vld [vmem:[%s6107 + $0x84] sm:$0xf]
      %v8169 = vld [vmem:[%s6107 + $0x88] sm:$0xf]
      %v8170 = vld [vmem:[%s6107 + $0x8c] sm:$0x1]
      %v8171 = vld [vmem:[%s6107 + $0x90] sm:$0xf]
      %v8172 = vld [vmem:[%s6107 + $0x94] sm:$0xf]
      %v8173 = vld [vmem:[%s6107 + $0x98] sm:$0x1]
      %v8174 = vld [vmem:[%s6107 + $0x9c] sm:$0xf]
      %v8175 = vld [vmem:[%s6107 + $0xa0] sm:$0xf]
      %v8176 = vld [vmem:[%s6107 + $0xa4] sm:$0x1]
      %v8177 = vld [vmem:[%s6107 + $0xa8] sm:$0xf]
      %v8178 = vld [vmem:[%s6107 + $0xac] sm:$0xf]
      %v8179 = vld [vmem:[%s6107 + $0xb0] sm:$0x1]
      %v8180 = vld [vmem:[%s6107 + $0xb4] sm:$0xf]
      %v8181 = vld [vmem:[%s6107 + $0xb8] sm:$0xf]
      %v8182 = vld [vmem:[%s6107 + $0xbc] sm:$0x1]
      %v8184 = vshrl.u32 %v8135, 16
      %v8186 = vrot.slane %v8184, 4
      %v8187 = vshll.u32 %v8135, 16
      %v8189 = vrot.slane %v8187, 5
      %v8190 = vor.u32 %v8186, %v8189
      %v8191 = vrot.slane %v8190, 4
      %v8193 = vshll.u32 %v8136, 16
      %v8195 = vrot.slane %v8193, 5
      %v8196 = vsel %vm956, %v8191, %v8195
      %v8197 = vshrl.u32 %v8136, 16
      %v8199 = vrot.slane %v8197, 4
      %v8200 = vor.u32 %v8199, %v8195
      %v8201 = vrot.slane %v8200, 4
      %v8203 = vshll.u32 %v8137, 16
      %v8205 = vrot.slane %v8203, 5
      %v8206 = vsel %vm956, %v8201, %v8205
      %v8208 = vshrl.u32 %v8138, 16
      %v8210 = vrot.slane %v8208, 4
      %v8211 = vshll.u32 %v8138, 16
      %v8213 = vrot.slane %v8211, 5
      %v8214 = vor.u32 %v8210, %v8213
      %v8215 = vrot.slane %v8214, 4
      %v8217 = vshll.u32 %v8139, 16
      %v8219 = vrot.slane %v8217, 5
      %v8220 = vsel %vm956, %v8215, %v8219
      %v8221 = vshrl.u32 %v8139, 16
      %v8223 = vrot.slane %v8221, 4
      %v8224 = vor.u32 %v8223, %v8219
      %v8225 = vrot.slane %v8224, 4
      %v8227 = vshll.u32 %v8140, 16
      %v8229 = vrot.slane %v8227, 5
      %v8230 = vsel %vm956, %v8225, %v8229
      %v8232 = vshrl.u32 %v8141, 16
      %v8234 = vrot.slane %v8232, 4
      %v8235 = vshll.u32 %v8141, 16
      %v8237 = vrot.slane %v8235, 5
      %v8238 = vor.u32 %v8234, %v8237
      %v8239 = vrot.slane %v8238, 4
      %v8241 = vshll.u32 %v8142, 16
      %v8243 = vrot.slane %v8241, 5
      %v8244 = vsel %vm956, %v8239, %v8243
      %v8245 = vshrl.u32 %v8142, 16
      %v8247 = vrot.slane %v8245, 4
      %v8248 = vor.u32 %v8247, %v8243
      %v8249 = vrot.slane %v8248, 4
      %v8251 = vshll.u32 %v8143, 16
      %v8253 = vrot.slane %v8251, 5
      %v8254 = vsel %vm956, %v8249, %v8253
      %v8256 = vshrl.u32 %v8144, 16
      %v8258 = vrot.slane %v8256, 4
      %v8259 = vshll.u32 %v8144, 16
      %v8261 = vrot.slane %v8259, 5
      %v8262 = vor.u32 %v8258, %v8261
      %v8263 = vrot.slane %v8262, 4
      %v8265 = vshll.u32 %v8145, 16
      %v8267 = vrot.slane %v8265, 5
      %v8268 = vsel %vm956, %v8263, %v8267
      %v8269 = vshrl.u32 %v8145, 16
      %v8271 = vrot.slane %v8269, 4
      %v8272 = vor.u32 %v8271, %v8267
      %v8273 = vrot.slane %v8272, 4
      %v8275 = vshll.u32 %v8146, 16
      %v8277 = vrot.slane %v8275, 5
      %v8278 = vsel %vm956, %v8273, %v8277
      %v8280 = vshrl.u32 %v8147, 16
      %v8282 = vrot.slane %v8280, 4
      %v8283 = vshll.u32 %v8147, 16
      %v8285 = vrot.slane %v8283, 5
      %v8286 = vor.u32 %v8282, %v8285
      %v8287 = vrot.slane %v8286, 4
      %v8289 = vshll.u32 %v8148, 16
      %v8291 = vrot.slane %v8289, 5
      %v8292 = vsel %vm956, %v8287, %v8291
      %v8293 = vshrl.u32 %v8148, 16
      %v8295 = vrot.slane %v8293, 4
      %v8296 = vor.u32 %v8295, %v8291
      %v8297 = vrot.slane %v8296, 4
      %v8299 = vshll.u32 %v8149, 16
      %v8301 = vrot.slane %v8299, 5
      %v8302 = vsel %vm956, %v8297, %v8301
      %v8304 = vshrl.u32 %v8150, 16
      %v8306 = vrot.slane %v8304, 4
      %v8307 = vshll.u32 %v8150, 16
      %v8309 = vrot.slane %v8307, 5
      %v8310 = vor.u32 %v8306, %v8309
      %v8311 = vrot.slane %v8310, 4
      %v8313 = vshll.u32 %v8151, 16
      %v8315 = vrot.slane %v8313, 5
      %v8316 = vsel %vm956, %v8311, %v8315
      %v8317 = vshrl.u32 %v8151, 16
      %v8319 = vrot.slane %v8317, 4
      %v8320 = vor.u32 %v8319, %v8315
      %v8321 = vrot.slane %v8320, 4
      %v8323 = vshll.u32 %v8152, 16
      %v8325 = vrot.slane %v8323, 5
      %v8326 = vsel %vm956, %v8321, %v8325
      %v8328 = vshrl.u32 %v8153, 16
      %v8330 = vrot.slane %v8328, 4
      %v8331 = vshll.u32 %v8153, 16
      %v8333 = vrot.slane %v8331, 5
      %v8334 = vor.u32 %v8330, %v8333
      %v8335 = vrot.slane %v8334, 4
      %v8337 = vshll.u32 %v8154, 16
      %v8339 = vrot.slane %v8337, 5
      %v8340 = vsel %vm956, %v8335, %v8339
      %v8341 = vshrl.u32 %v8154, 16
      %v8343 = vrot.slane %v8341, 4
      %v8344 = vor.u32 %v8343, %v8339
      %v8345 = vrot.slane %v8344, 4
      %v8347 = vshll.u32 %v8155, 16
      %v8349 = vrot.slane %v8347, 5
      %v8350 = vsel %vm956, %v8345, %v8349
      %v8352 = vshrl.u32 %v8156, 16
      %v8354 = vrot.slane %v8352, 4
      %v8355 = vshll.u32 %v8156, 16
      %v8357 = vrot.slane %v8355, 5
      %v8358 = vor.u32 %v8354, %v8357
      %v8359 = vrot.slane %v8358, 4
      %v8361 = vshll.u32 %v8157, 16
      %v8363 = vrot.slane %v8361, 5
      %v8364 = vsel %vm956, %v8359, %v8363
      %v8365 = vshrl.u32 %v8157, 16
      %v8367 = vrot.slane %v8365, 4
      %v8368 = vor.u32 %v8367, %v8363
      %v8369 = vrot.slane %v8368, 4
      %v8371 = vshll.u32 %v8158, 16
      %v8373 = vrot.slane %v8371, 5
      %v8374 = vsel %vm956, %v8369, %v8373
      %v8376 = vshrl.u32 %v8159, 16
      %v8378 = vrot.slane %v8376, 4
      %v8379 = vshll.u32 %v8159, 16
      %v8381 = vrot.slane %v8379, 5
      %v8382 = vor.u32 %v8378, %v8381
      %v8383 = vrot.slane %v8382, 4
      %v8385 = vshll.u32 %v8160, 16
      %v8387 = vrot.slane %v8385, 5
      %v8388 = vsel %vm956, %v8383, %v8387
      %v8389 = vshrl.u32 %v8160, 16
      %v8391 = vrot.slane %v8389, 4
      %v8392 = vor.u32 %v8391, %v8387
      %v8393 = vrot.slane %v8392, 4
      %v8395 = vshll.u32 %v8161, 16
      %v8397 = vrot.slane %v8395, 5
      %v8398 = vsel %vm956, %v8393, %v8397
      %v8400 = vshrl.u32 %v8162, 16
      %v8402 = vrot.slane %v8400, 4
      %v8403 = vshll.u32 %v8162, 16
      %v8405 = vrot.slane %v8403, 5
      %v8406 = vor.u32 %v8402, %v8405
      %v8407 = vrot.slane %v8406, 4
      %v8409 = vshll.u32 %v8163, 16
      %v8411 = vrot.slane %v8409, 5
      %v8412 = vsel %vm956, %v8407, %v8411
      %v8413 = vshrl.u32 %v8163, 16
      %v8415 = vrot.slane %v8413, 4
      %v8416 = vor.u32 %v8415, %v8411
      %v8417 = vrot.slane %v8416, 4
      %v8419 = vshll.u32 %v8164, 16
      %v8421 = vrot.slane %v8419, 5
      %v8422 = vsel %vm956, %v8417, %v8421
      %v8424 = vshrl.u32 %v8165, 16
      %v8426 = vrot.slane %v8424, 4
      %v8427 = vshll.u32 %v8165, 16
      %v8429 = vrot.slane %v8427, 5
      %v8430 = vor.u32 %v8426, %v8429
      %v8431 = vrot.slane %v8430, 4
      %v8433 = vshll.u32 %v8166, 16
      %v8435 = vrot.slane %v8433, 5
      %v8436 = vsel %vm956, %v8431, %v8435
      %v8437 = vshrl.u32 %v8166, 16
      %v8439 = vrot.slane %v8437, 4
      %v8440 = vor.u32 %v8439, %v8435
      %v8441 = vrot.slane %v8440, 4
      %v8443 = vshll.u32 %v8167, 16
      %v8445 = vrot.slane %v8443, 5
      %v8446 = vsel %vm956, %v8441, %v8445
      %v8448 = vshrl.u32 %v8168, 16
      %v8450 = vrot.slane %v8448, 4
      %v8451 = vshll.u32 %v8168, 16
      %v8453 = vrot.slane %v8451, 5
      %v8454 = vor.u32 %v8450, %v8453
      %v8455 = vrot.slane %v8454, 4
      %v8457 = vshll.u32 %v8169, 16
      %v8459 = vrot.slane %v8457, 5
      %v8460 = vsel %vm956, %v8455, %v8459
      %v8461 = vshrl.u32 %v8169, 16
      %v8463 = vrot.slane %v8461, 4
      %v8464 = vor.u32 %v8463, %v8459
      %v8465 = vrot.slane %v8464, 4
      %v8467 = vshll.u32 %v8170, 16
      %v8469 = vrot.slane %v8467, 5
      %v8470 = vsel %vm956, %v8465, %v8469
      %v8472 = vshrl.u32 %v8171, 16
      %v8474 = vrot.slane %v8472, 4
      %v8475 = vshll.u32 %v8171, 16
      %v8477 = vrot.slane %v8475, 5
      %v8478 = vor.u32 %v8474, %v8477
      %v8479 = vrot.slane %v8478, 4
      %v8481 = vshll.u32 %v8172, 16
      %v8483 = vrot.slane %v8481, 5
      %v8484 = vsel %vm956, %v8479, %v8483
      %v8485 = vshrl.u32 %v8172, 16
      %v8487 = vrot.slane %v8485, 4
      %v8488 = vor.u32 %v8487, %v8483
      %v8489 = vrot.slane %v8488, 4
      %v8491 = vshll.u32 %v8173, 16
      %v8493 = vrot.slane %v8491, 5
      %v8494 = vsel %vm956, %v8489, %v8493
      %v8496 = vshrl.u32 %v8174, 16
      %v8498 = vrot.slane %v8496, 4
      %v8499 = vshll.u32 %v8174, 16
      %v8501 = vrot.slane %v8499, 5
      %v8502 = vor.u32 %v8498, %v8501
      %v8503 = vrot.slane %v8502, 4
      %v8505 = vshll.u32 %v8175, 16
      %v8507 = vrot.slane %v8505, 5
      %v8508 = vsel %vm956, %v8503, %v8507
      %v8509 = vshrl.u32 %v8175, 16
      %v8511 = vrot.slane %v8509, 4
      %v8512 = vor.u32 %v8511, %v8507
      %v8513 = vrot.slane %v8512, 4
      %v8515 = vshll.u32 %v8176, 16
      %v8517 = vrot.slane %v8515, 5
      %v8518 = vsel %vm956, %v8513, %v8517
      %v8520 = vshrl.u32 %v8177, 16
      %v8522 = vrot.slane %v8520, 4
      %v8523 = vshll.u32 %v8177, 16
      %v8525 = vrot.slane %v8523, 5
      %v8526 = vor.u32 %v8522, %v8525
      %v8527 = vrot.slane %v8526, 4
      %v8529 = vshll.u32 %v8178, 16
      %v8531 = vrot.slane %v8529, 5
      %v8532 = vsel %vm956, %v8527, %v8531
      %v8533 = vshrl.u32 %v8178, 16
      %v8535 = vrot.slane %v8533, 4
      %v8536 = vor.u32 %v8535, %v8531
      %v8537 = vrot.slane %v8536, 4
      %v8539 = vshll.u32 %v8179, 16
      %v8541 = vrot.slane %v8539, 5
      %v8542 = vsel %vm956, %v8537, %v8541
      %v8544 = vshrl.u32 %v8180, 16
      %v8546 = vrot.slane %v8544, 4
      %v8547 = vshll.u32 %v8180, 16
      %v8549 = vrot.slane %v8547, 5
      %v8550 = vor.u32 %v8546, %v8549
      %v8551 = vrot.slane %v8550, 4
      %v8553 = vshll.u32 %v8181, 16
      %v8555 = vrot.slane %v8553, 5
      %v8556 = vsel %vm956, %v8551, %v8555
      %v8557 = vshrl.u32 %v8181, 16
      %v8559 = vrot.slane %v8557, 4
      %v8560 = vor.u32 %v8559, %v8555
      %v8561 = vrot.slane %v8560, 4
      %v8563 = vshll.u32 %v8182, 16
      %v8565 = vrot.slane %v8563, 5
      %v8566 = vsel %vm956, %v8561, %v8565
      %s8567 = scalar_lea.vmem %s4, 256
      %v8568 = vld [vmem:[%s8567] sm:$0xf]
      %v8569 = vld [vmem:[%s8567 + $0x4] sm:$0xf]
      %v8570 = vld [vmem:[%s8567 + $0x8] sm:$0xf]
      %v8571 = vld [vmem:[%s8567 + $0xc] sm:$0xf]
      %v8572 = vld [vmem:[%s8567 + $0x10] sm:$0xf]
      %v8573 = vld [vmem:[%s8567 + $0x14] sm:$0xf]
      %v8574 = vld [vmem:[%s8567 + $0x18] sm:$0xf]
      %v8575 = vld [vmem:[%s8567 + $0x1c] sm:$0xf]
      %v8576 = vld [vmem:[%s8567 + $0x20] sm:$0xf]
      %v8577 = vld [vmem:[%s8567 + $0x24] sm:$0xf]
      %v8578 = vld [vmem:[%s8567 + $0x28] sm:$0xf]
      %v8579 = vld [vmem:[%s8567 + $0x2c] sm:$0xf]
      %v8580 = vld [vmem:[%s8567 + $0x30] sm:$0xf]
      %v8581 = vld [vmem:[%s8567 + $0x34] sm:$0xf]
      %v8582 = vld [vmem:[%s8567 + $0x38] sm:$0xf]
      %v8583 = vld [vmem:[%s8567 + $0x3c] sm:$0xf]
      %v8584 = vunpack.c.l.b16 %v8196
      %v8585 = vunpack.c.l.b16 %v8206
      %v8586 = vunpack.c.l.b16 %v8220
      %v8587 = vunpack.c.l.b16 %v8230
      %v8588 = vunpack.c.l.b16 %v8244
      %v8589 = vunpack.c.l.b16 %v8254
      %v8590 = vunpack.c.l.b16 %v8268
      %v8591 = vunpack.c.l.b16 %v8278
      %v8592 = vunpack.c.l.b16 %v8292
      %v8593 = vunpack.c.l.b16 %v8302
      %v8594 = vunpack.c.l.b16 %v8316
      %v8595 = vunpack.c.l.b16 %v8326
      %v8596 = vunpack.c.l.b16 %v8340
      %v8597 = vunpack.c.l.b16 %v8350
      %v8598 = vunpack.c.l.b16 %v8364
      %v8599 = vunpack.c.l.b16 %v8374
      %v8600 = vunpack.c.l.b16 %v8388
      %v8601 = vunpack.c.l.b16 %v8398
      %v8602 = vunpack.c.l.b16 %v8412
      %v8603 = vunpack.c.l.b16 %v8422
      %v8604 = vunpack.c.l.b16 %v8436
      %v8605 = vunpack.c.l.b16 %v8446
      %v8606 = vunpack.c.l.b16 %v8460
      %v8607 = vunpack.c.l.b16 %v8470
      %v8608 = vunpack.c.l.b16 %v8484
      %v8609 = vunpack.c.l.b16 %v8494
      %v8610 = vunpack.c.l.b16 %v8508
      %v8611 = vunpack.c.l.b16 %v8518
      %v8612 = vunpack.c.l.b16 %v8532
      %v8613 = vunpack.c.l.b16 %v8542
      %v8614 = vunpack.c.l.b16 %v8556
      %v8615 = vunpack.c.l.b16 %v8566
      %v8616 = vpack.c.b16 %v8585, %v8584
      %v8617 = vpack.c.b16 %v8587, %v8586
      %v8618 = vpack.c.b16 %v8589, %v8588
      %v8619 = vpack.c.b16 %v8591, %v8590
      %v8620 = vpack.c.b16 %v8593, %v8592
      %v8621 = vpack.c.b16 %v8595, %v8594
      %v8622 = vpack.c.b16 %v8597, %v8596
      %v8623 = vpack.c.b16 %v8599, %v8598
      %v8624 = vpack.c.b16 %v8601, %v8600
      %v8625 = vpack.c.b16 %v8603, %v8602
      %v8626 = vpack.c.b16 %v8605, %v8604
      %v8627 = vpack.c.b16 %v8607, %v8606
      %v8628 = vpack.c.b16 %v8609, %v8608
      %v8629 = vpack.c.b16 %v8611, %v8610
      %v8630 = vpack.c.b16 %v8613, %v8612
      %v8631 = vpack.c.b16 %v8615, %v8614
      %v8664 = vunpack.c.l.b16 %v8568
      %v8665 = vunpack.c.l.b16 %v8569
      %v8666 = vunpack.c.l.b16 %v8570
      %v8667 = vunpack.c.l.b16 %v8571
      %v8668 = vunpack.c.l.b16 %v8572
      %v8669 = vunpack.c.l.b16 %v8573
      %v8670 = vunpack.c.l.b16 %v8574
      %v8671 = vunpack.c.l.b16 %v8575
      %v8672 = vunpack.c.l.b16 %v8576
      %v8673 = vunpack.c.l.b16 %v8577
      %v8674 = vunpack.c.l.b16 %v8578
      %v8675 = vunpack.c.l.b16 %v8579
      %v8676 = vunpack.c.l.b16 %v8580
      %v8677 = vunpack.c.l.b16 %v8581
      %v8678 = vunpack.c.l.b16 %v8582
      %v8679 = vunpack.c.l.b16 %v8583
      %v8680 = vpack.c.b16 %v8665, %v8664
      %v8681 = vpack.c.b16 %v8667, %v8666
      %v8682 = vpack.c.b16 %v8669, %v8668
      %v8683 = vpack.c.b16 %v8671, %v8670
      %v8684 = vpack.c.b16 %v8673, %v8672
      %v8685 = vpack.c.b16 %v8675, %v8674
      %v8686 = vpack.c.b16 %v8677, %v8676
      %v8687 = vpack.c.b16 %v8679, %v8678
      %8696 = vmatprep.subr.bf16.mxu0 0
      %8697 = vmatpush1.bf16.msra.mxu0 %v8687
      %8698 = vmatprep.subr.bf16.mxu0 0
      %8699 = vmatpush1.bf16.msra.mxu0 %v8686
      %8700 = vmatprep.subr.bf16.mxu0 0
      %8701 = vmatpush1.bf16.msra.mxu0 %v8685
      %8702 = vmatprep.subr.bf16.mxu0 0
      %8703 = vmatpush1.bf16.msra.mxu0 %v8684
      %8704 = vmatprep.subr.bf16.mxu0 0
      %8705 = vmatpush1.bf16.msra.mxu0 %v8683
      %8706 = vmatprep.subr.bf16.mxu0 0
      %8707 = vmatpush1.bf16.msra.mxu0 %v8682
      %8708 = vmatprep.subr.bf16.mxu0 0
      %8709 = vmatpush1.bf16.msra.mxu0 %v8681
      %8710 = vmatprep.subr.bf16.mxu0 0
      %8711 = vmatpush1.bf16.msra.mxu0 %v8680
      %8712 = vmatprep.subr.bf16.mxu0 0
      %8713 = vmatpush2.bf16.msra.mxu0 0
      %8714 = vmatprep.subr.bf16.mxu0 0
      %8715 = vmatpush2.bf16.msra.mxu0 0
      %8716 = vmatprep.subr.bf16.mxu0 0
      %8717 = vmatpush2.bf16.msra.mxu0 0
      %8718 = vmatprep.subr.bf16.mxu0 0
      %8719 = vmatpush2.bf16.msra.mxu0 0
      %8720 = vmatprep.subr.bf16.mxu0 0
      %8721 = vmatpush2.bf16.msra.mxu0 0
      %8722 = vmatprep.subr.bf16.mxu0 0
      %8723 = vmatpush2.bf16.msra.mxu0 0
      %8724 = vmatprep.subr.bf16.mxu0 0
      %8725 = vmatpush2.bf16.msra.mxu0 0
      %8726 = vmatprep.subr.bf16.mxu0 0
      %8727 = vmatpush2.bf16.msra.mxu0 0
      %8728 = vmatprep.mubr.bf16.mxu0 0
      %8729 = vmatmul.mubr.bf16.gmra.mxu0 %v8616
      %v8730 = vpop.f32.mrf.mxu0
      %v8731 = vadd.f32 0.0, %v8730
      %v8732 = vpop.f32.mrf.mxu0
      %v8733 = vpop.f32.mrf.mxu0
      %v8734 = vadd.f32 0.0, %v8733
      %v8735 = vpop.f32.mrf.mxu0
      %8736 = vmatprep.mubr.bf16.mxu0 0
      %8737 = vmatmul.mubr.bf16.gmra.mxu0 %v8617
      %v8738 = vpop.f32.mrf.mxu0
      %v8739 = vadd.f32 0.0, %v8738
      %v8740 = vpop.f32.mrf.mxu0
      %v8741 = vpop.f32.mrf.mxu0
      %v8742 = vadd.f32 0.0, %v8741
      %v8743 = vpop.f32.mrf.mxu0
      %8744 = vmatprep.mubr.bf16.mxu0 0
      %8745 = vmatmul.mubr.bf16.gmra.mxu0 %v8618
      %v8746 = vpop.f32.mrf.mxu0
      %v8747 = vadd.f32 0.0, %v8746
      %v8748 = vpop.f32.mrf.mxu0
      %v8749 = vpop.f32.mrf.mxu0
      %v8750 = vadd.f32 0.0, %v8749
      %v8751 = vpop.f32.mrf.mxu0
      %8752 = vmatprep.mubr.bf16.mxu0 0
      %8753 = vmatmul.mubr.bf16.gmra.mxu0 %v8619
      %v8754 = vpop.f32.mrf.mxu0
      %v8755 = vadd.f32 0.0, %v8754
      %v8756 = vpop.f32.mrf.mxu0
      %v8757 = vpop.f32.mrf.mxu0
      %v8758 = vadd.f32 0.0, %v8757
      %v8759 = vpop.f32.mrf.mxu0
      %8760 = vmatprep.mubr.bf16.mxu0 0
      %8761 = vmatmul.mubr.bf16.gmra.mxu0 %v8620
      %v8762 = vpop.f32.mrf.mxu0
      %v8763 = vadd.f32 0.0, %v8762
      %v8764 = vpop.f32.mrf.mxu0
      %v8765 = vpop.f32.mrf.mxu0
      %v8766 = vadd.f32 0.0, %v8765
      %v8767 = vpop.f32.mrf.mxu0
      %8768 = vmatprep.mubr.bf16.mxu0 0
      %8769 = vmatmul.mubr.bf16.gmra.mxu0 %v8621
      %v8770 = vpop.f32.mrf.mxu0
      %v8771 = vadd.f32 0.0, %v8770
      %v8772 = vpop.f32.mrf.mxu0
      %v8773 = vpop.f32.mrf.mxu0
      %v8774 = vadd.f32 0.0, %v8773
      %v8775 = vpop.f32.mrf.mxu0
      %8776 = vmatprep.mubr.bf16.mxu0 0
      %8777 = vmatmul.mubr.bf16.gmra.mxu0 %v8622
      %v8778 = vpop.f32.mrf.mxu0
      %v8779 = vadd.f32 0.0, %v8778
      %v8780 = vpop.f32.mrf.mxu0
      %v8781 = vpop.f32.mrf.mxu0
      %v8782 = vadd.f32 0.0, %v8781
      %v8783 = vpop.f32.mrf.mxu0
      %8784 = vmatprep.mubr.bf16.mxu0 0
      %8785 = vmatmul.mubr.bf16.gmra.mxu0 %v8623
      %v8786 = vpop.f32.mrf.mxu0
      %v8787 = vadd.f32 0.0, %v8786
      %v8788 = vpop.f32.mrf.mxu0
      %v8789 = vpop.f32.mrf.mxu0
      %v8790 = vadd.f32 0.0, %v8789
      %v8791 = vpop.f32.mrf.mxu0
      %8792 = vmatprep.mubr.bf16.mxu0 0
      %8793 = vmatmul.mubr.bf16.gmra.mxu0 %v8624
      %v8794 = vpop.f32.mrf.mxu0
      %v8795 = vadd.f32 0.0, %v8794
      %v8796 = vpop.f32.mrf.mxu0
      %v8797 = vpop.f32.mrf.mxu0
      %v8798 = vadd.f32 0.0, %v8797
      %v8799 = vpop.f32.mrf.mxu0
      %8800 = vmatprep.mubr.bf16.mxu0 0
      %8801 = vmatmul.mubr.bf16.gmra.mxu0 %v8625
      %v8802 = vpop.f32.mrf.mxu0
      %v8803 = vadd.f32 0.0, %v8802
      %v8804 = vpop.f32.mrf.mxu0
      %v8805 = vpop.f32.mrf.mxu0
      %v8806 = vadd.f32 0.0, %v8805
      %v8807 = vpop.f32.mrf.mxu0
      %8808 = vmatprep.mubr.bf16.mxu0 0
      %8809 = vmatmul.mubr.bf16.gmra.mxu0 %v8626
      %v8810 = vpop.f32.mrf.mxu0
      %v8811 = vadd.f32 0.0, %v8810
      %v8812 = vpop.f32.mrf.mxu0
      %v8813 = vpop.f32.mrf.mxu0
      %v8814 = vadd.f32 0.0, %v8813
      %v8815 = vpop.f32.mrf.mxu0
      %8816 = vmatprep.mubr.bf16.mxu0 0
      %8817 = vmatmul.mubr.bf16.gmra.mxu0 %v8627
      %v8818 = vpop.f32.mrf.mxu0
      %v8819 = vadd.f32 0.0, %v8818
      %v8820 = vpop.f32.mrf.mxu0
      %v8821 = vpop.f32.mrf.mxu0
      %v8822 = vadd.f32 0.0, %v8821
      %v8823 = vpop.f32.mrf.mxu0
      %8824 = vmatprep.mubr.bf16.mxu0 0
      %8825 = vmatmul.mubr.bf16.gmra.mxu0 %v8628
      %v8826 = vpop.f32.mrf.mxu0
      %v8827 = vadd.f32 0.0, %v8826
      %v8828 = vpop.f32.mrf.mxu0
      %v8829 = vpop.f32.mrf.mxu0
      %v8830 = vadd.f32 0.0, %v8829
      %v8831 = vpop.f32.mrf.mxu0
      %8832 = vmatprep.mubr.bf16.mxu0 0
      %8833 = vmatmul.mubr.bf16.gmra.mxu0 %v8629
      %v8834 = vpop.f32.mrf.mxu0
      %v8835 = vadd.f32 0.0, %v8834
      %v8836 = vpop.f32.mrf.mxu0
      %v8837 = vpop.f32.mrf.mxu0
      %v8838 = vadd.f32 0.0, %v8837
      %v8839 = vpop.f32.mrf.mxu0
      %8840 = vmatprep.mubr.bf16.mxu0 0
      %8841 = vmatmul.mubr.bf16.gmra.mxu0 %v8630
      %v8842 = vpop.f32.mrf.mxu0
      %v8843 = vadd.f32 0.0, %v8842
      %v8844 = vpop.f32.mrf.mxu0
      %v8845 = vpop.f32.mrf.mxu0
      %v8846 = vadd.f32 0.0, %v8845
      %v8847 = vpop.f32.mrf.mxu0
      %8848 = vmatprep.mubr.bf16.mxu0 0
      %8849 = vmatmul.mubr.bf16.gmra.mxu0 %v8631
      %v8850 = vpop.f32.mrf.mxu0
      %v8851 = vadd.f32 0.0, %v8850
      %v8852 = vpop.f32.mrf.mxu0
      %v8853 = vpop.f32.mrf.mxu0
      %v8854 = vadd.f32 0.0, %v8853
      %v8855 = vpop.f32.mrf.mxu0
      %8856 = vdwg.mxu0
      %v8857 = vadd.f32 %v8103, %v8731
      %v8858 = vadd.f32 %v8104, %v8734
      %v8859 = vadd.f32 %v8105, %v8739
      %v8860 = vadd.f32 %v8106, %v8742
      %v8861 = vadd.f32 %v8107, %v8747
      %v8862 = vadd.f32 %v8108, %v8750
      %v8863 = vadd.f32 %v8109, %v8755
      %v8864 = vadd.f32 %v8110, %v8758
      %v8865 = vadd.f32 %v8111, %v8763
      %v8866 = vadd.f32 %v8112, %v8766
      %v8867 = vadd.f32 %v8113, %v8771
      %v8868 = vadd.f32 %v8114, %v8774
      %v8869 = vadd.f32 %v8115, %v8779
      %v8870 = vadd.f32 %v8116, %v8782
      %v8871 = vadd.f32 %v8117, %v8787
      %v8872 = vadd.f32 %v8118, %v8790
      %v8873 = vadd.f32 %v8119, %v8795
      %v8874 = vadd.f32 %v8120, %v8798
      %v8875 = vadd.f32 %v8121, %v8803
      %v8876 = vadd.f32 %v8122, %v8806
      %v8877 = vadd.f32 %v8123, %v8811
      %v8878 = vadd.f32 %v8124, %v8814
      %v8879 = vadd.f32 %v8125, %v8819
      %v8880 = vadd.f32 %v8126, %v8822
      %v8881 = vadd.f32 %v8127, %v8827
      %v8882 = vadd.f32 %v8128, %v8830
      %v8883 = vadd.f32 %v8129, %v8835
      %v8884 = vadd.f32 %v8130, %v8838
      %v8885 = vadd.f32 %v8131, %v8843
      %v8886 = vadd.f32 %v8132, %v8846
      %v8887 = vadd.f32 %v8133, %v8851
      %v8888 = vadd.f32 %v8134, %v8854
      %v8889 = vld [vmem:[%s6107] sm:$0xe]
      %v8890 = vld [vmem:[%s6107 + $0xc] sm:$0xe]
      %v8891 = vld [vmem:[%s6107 + $0x18] sm:$0xe]
      %v8892 = vld [vmem:[%s6107 + $0x24] sm:$0xe]
      %v8893 = vld [vmem:[%s6107 + $0x30] sm:$0xe]
      %v8894 = vld [vmem:[%s6107 + $0x3c] sm:$0xe]
      %v8895 = vld [vmem:[%s6107 + $0x48] sm:$0xe]
      %v8896 = vld [vmem:[%s6107 + $0x54] sm:$0xe]
      %v8897 = vld [vmem:[%s6107 + $0x60] sm:$0xe]
      %v8898 = vld [vmem:[%s6107 + $0x6c] sm:$0xe]
      %v8899 = vld [vmem:[%s6107 + $0x78] sm:$0xe]
      %v8900 = vld [vmem:[%s6107 + $0x84] sm:$0xe]
      %v8901 = vld [vmem:[%s6107 + $0x90] sm:$0xe]
      %v8902 = vld [vmem:[%s6107 + $0x9c] sm:$0xe]
      %v8903 = vld [vmem:[%s6107 + $0xa8] sm:$0xe]
      %v8904 = vld [vmem:[%s6107 + $0xb4] sm:$0xe]
      %v8953 = vrot.slane %v8889, 5
      %v8954 = vrot.slane %v8953, 4
      %v8955 = vrot.slane %v8136, 5
      %v8956 = vsel %vm1947, %v8954, %v8955
      %v8957 = vrot.slane %v8955, 4
      %v8958 = vrot.slane %v8137, 5
      %v8959 = vsel %vm1947, %v8957, %v8958
      %v8960 = vrot.slane %v8890, 5
      %v8961 = vrot.slane %v8960, 4
      %v8962 = vrot.slane %v8139, 5
      %v8963 = vsel %vm1947, %v8961, %v8962
      %v8964 = vrot.slane %v8962, 4
      %v8965 = vrot.slane %v8140, 5
      %v8966 = vsel %vm1947, %v8964, %v8965
      %v8967 = vrot.slane %v8891, 5
      %v8968 = vrot.slane %v8967, 4
      %v8969 = vrot.slane %v8142, 5
      %v8970 = vsel %vm1947, %v8968, %v8969
      %v8971 = vrot.slane %v8969, 4
      %v8972 = vrot.slane %v8143, 5
      %v8973 = vsel %vm1947, %v8971, %v8972
      %v8974 = vrot.slane %v8892, 5
      %v8975 = vrot.slane %v8974, 4
      %v8976 = vrot.slane %v8145, 5
      %v8977 = vsel %vm1947, %v8975, %v8976
      %v8978 = vrot.slane %v8976, 4
      %v8979 = vrot.slane %v8146, 5
      %v8980 = vsel %vm1947, %v8978, %v8979
      %v8981 = vrot.slane %v8893, 5
      %v8982 = vrot.slane %v8981, 4
      %v8983 = vrot.slane %v8148, 5
      %v8984 = vsel %vm1947, %v8982, %v8983
      %v8985 = vrot.slane %v8983, 4
      %v8986 = vrot.slane %v8149, 5
      %v8987 = vsel %vm1947, %v8985, %v8986
      %v8988 = vrot.slane %v8894, 5
      %v8989 = vrot.slane %v8988, 4
      %v8990 = vrot.slane %v8151, 5
      %v8991 = vsel %vm1947, %v8989, %v8990
      %v8992 = vrot.slane %v8990, 4
      %v8993 = vrot.slane %v8152, 5
      %v8994 = vsel %vm1947, %v8992, %v8993
      %v8995 = vrot.slane %v8895, 5
      %v8996 = vrot.slane %v8995, 4
      %v8997 = vrot.slane %v8154, 5
      %v8998 = vsel %vm1947, %v8996, %v8997
      %v8999 = vrot.slane %v8997, 4
      %v9000 = vrot.slane %v8155, 5
      %v9001 = vsel %vm1947, %v8999, %v9000
      %v9002 = vrot.slane %v8896, 5
      %v9003 = vrot.slane %v9002, 4
      %v9004 = vrot.slane %v8157, 5
      %v9005 = vsel %vm1947, %v9003, %v9004
      %v9006 = vrot.slane %v9004, 4
      %v9007 = vrot.slane %v8158, 5
      %v9008 = vsel %vm1947, %v9006, %v9007
      %v9009 = vrot.slane %v8897, 5
      %v9010 = vrot.slane %v9009, 4
      %v9011 = vrot.slane %v8160, 5
      %v9012 = vsel %vm1947, %v9010, %v9011
      %v9013 = vrot.slane %v9011, 4
      %v9014 = vrot.slane %v8161, 5
      %v9015 = vsel %vm1947, %v9013, %v9014
      %v9016 = vrot.slane %v8898, 5
      %v9017 = vrot.slane %v9016, 4
      %v9018 = vrot.slane %v8163, 5
      %v9019 = vsel %vm1947, %v9017, %v9018
      %v9020 = vrot.slane %v9018, 4
      %v9021 = vrot.slane %v8164, 5
      %v9022 = vsel %vm1947, %v9020, %v9021
      %v9023 = vrot.slane %v8899, 5
      %v9024 = vrot.slane %v9023, 4
      %v9025 = vrot.slane %v8166, 5
      %v9026 = vsel %vm1947, %v9024, %v9025
      %v9027 = vrot.slane %v9025, 4
      %v9028 = vrot.slane %v8167, 5
      %v9029 = vsel %vm1947, %v9027, %v9028
      %v9030 = vrot.slane %v8900, 5
      %v9031 = vrot.slane %v9030, 4
      %v9032 = vrot.slane %v8169, 5
      %v9033 = vsel %vm1947, %v9031, %v9032
      %v9034 = vrot.slane %v9032, 4
      %v9035 = vrot.slane %v8170, 5
      %v9036 = vsel %vm1947, %v9034, %v9035
      %v9037 = vrot.slane %v8901, 5
      %v9038 = vrot.slane %v9037, 4
      %v9039 = vrot.slane %v8172, 5
      %v9040 = vsel %vm1947, %v9038, %v9039
      %v9041 = vrot.slane %v9039, 4
      %v9042 = vrot.slane %v8173, 5
      %v9043 = vsel %vm1947, %v9041, %v9042
      %v9044 = vrot.slane %v8902, 5
      %v9045 = vrot.slane %v9044, 4
      %v9046 = vrot.slane %v8175, 5
      %v9047 = vsel %vm1947, %v9045, %v9046
      %v9048 = vrot.slane %v9046, 4
      %v9049 = vrot.slane %v8176, 5
      %v9050 = vsel %vm1947, %v9048, %v9049
      %v9051 = vrot.slane %v8903, 5
      %v9052 = vrot.slane %v9051, 4
      %v9053 = vrot.slane %v8178, 5
      %v9054 = vsel %vm1947, %v9052, %v9053
      %v9055 = vrot.slane %v9053, 4
      %v9056 = vrot.slane %v8179, 5
      %v9057 = vsel %vm1947, %v9055, %v9056
      %v9058 = vrot.slane %v8904, 5
      %v9059 = vrot.slane %v9058, 4
      %v9060 = vrot.slane %v8181, 5
      %v9061 = vsel %vm1947, %v9059, %v9060
      %v9062 = vrot.slane %v9060, 4
      %v9063 = vrot.slane %v8182, 5
      %v9064 = vsel %vm1947, %v9062, %v9063
      %s9065 = scalar_lea.vmem %s4, 320
      %v9066 = vld [vmem:[%s9065] sm:$0xf]
      %v9067 = vld [vmem:[%s9065 + $0x4] sm:$0xf]
      %v9068 = vld [vmem:[%s9065 + $0x8] sm:$0xf]
      %v9069 = vld [vmem:[%s9065 + $0xc] sm:$0xf]
      %v9070 = vld [vmem:[%s9065 + $0x10] sm:$0xf]
      %v9071 = vld [vmem:[%s9065 + $0x14] sm:$0xf]
      %v9072 = vld [vmem:[%s9065 + $0x18] sm:$0xf]
      %v9073 = vld [vmem:[%s9065 + $0x1c] sm:$0xf]
      %v9074 = vld [vmem:[%s9065 + $0x20] sm:$0xf]
      %v9075 = vld [vmem:[%s9065 + $0x24] sm:$0xf]
      %v9076 = vld [vmem:[%s9065 + $0x28] sm:$0xf]
      %v9077 = vld [vmem:[%s9065 + $0x2c] sm:$0xf]
      %v9078 = vld [vmem:[%s9065 + $0x30] sm:$0xf]
      %v9079 = vld [vmem:[%s9065 + $0x34] sm:$0xf]
      %v9080 = vld [vmem:[%s9065 + $0x38] sm:$0xf]
      %v9081 = vld [vmem:[%s9065 + $0x3c] sm:$0xf]
      %v9082 = vunpack.c.l.b16 %v8956
      %v9083 = vunpack.c.l.b16 %v8959
      %v9084 = vunpack.c.l.b16 %v8963
      %v9085 = vunpack.c.l.b16 %v8966
      %v9086 = vunpack.c.l.b16 %v8970
      %v9087 = vunpack.c.l.b16 %v8973
      %v9088 = vunpack.c.l.b16 %v8977
      %v9089 = vunpack.c.l.b16 %v8980
      %v9090 = vunpack.c.l.b16 %v8984
      %v9091 = vunpack.c.l.b16 %v8987
      %v9092 = vunpack.c.l.b16 %v8991
      %v9093 = vunpack.c.l.b16 %v8994
      %v9094 = vunpack.c.l.b16 %v8998
      %v9095 = vunpack.c.l.b16 %v9001
      %v9096 = vunpack.c.l.b16 %v9005
      %v9097 = vunpack.c.l.b16 %v9008
      %v9098 = vunpack.c.l.b16 %v9012
      %v9099 = vunpack.c.l.b16 %v9015
      %v9100 = vunpack.c.l.b16 %v9019
      %v9101 = vunpack.c.l.b16 %v9022
      %v9102 = vunpack.c.l.b16 %v9026
      %v9103 = vunpack.c.l.b16 %v9029
      %v9104 = vunpack.c.l.b16 %v9033
      %v9105 = vunpack.c.l.b16 %v9036
      %v9106 = vunpack.c.l.b16 %v9040
      %v9107 = vunpack.c.l.b16 %v9043
      %v9108 = vunpack.c.l.b16 %v9047
      %v9109 = vunpack.c.l.b16 %v9050
      %v9110 = vunpack.c.l.b16 %v9054
      %v9111 = vunpack.c.l.b16 %v9057
      %v9112 = vunpack.c.l.b16 %v9061
      %v9113 = vunpack.c.l.b16 %v9064
      %v9114 = vpack.c.b16 %v9083, %v9082
      %v9115 = vpack.c.b16 %v9085, %v9084
      %v9116 = vpack.c.b16 %v9087, %v9086
      %v9117 = vpack.c.b16 %v9089, %v9088
      %v9118 = vpack.c.b16 %v9091, %v9090
      %v9119 = vpack.c.b16 %v9093, %v9092
      %v9120 = vpack.c.b16 %v9095, %v9094
      %v9121 = vpack.c.b16 %v9097, %v9096
      %v9122 = vpack.c.b16 %v9099, %v9098
      %v9123 = vpack.c.b16 %v9101, %v9100
      %v9124 = vpack.c.b16 %v9103, %v9102
      %v9125 = vpack.c.b16 %v9105, %v9104
      %v9126 = vpack.c.b16 %v9107, %v9106
      %v9127 = vpack.c.b16 %v9109, %v9108
      %v9128 = vpack.c.b16 %v9111, %v9110
      %v9129 = vpack.c.b16 %v9113, %v9112
      %v9162 = vunpack.c.l.b16 %v9066
      %v9163 = vunpack.c.l.b16 %v9067
      %v9164 = vunpack.c.l.b16 %v9068
      %v9165 = vunpack.c.l.b16 %v9069
      %v9166 = vunpack.c.l.b16 %v9070
      %v9167 = vunpack.c.l.b16 %v9071
      %v9168 = vunpack.c.l.b16 %v9072
      %v9169 = vunpack.c.l.b16 %v9073
      %v9170 = vunpack.c.l.b16 %v9074
      %v9171 = vunpack.c.l.b16 %v9075
      %v9172 = vunpack.c.l.b16 %v9076
      %v9173 = vunpack.c.l.b16 %v9077
      %v9174 = vunpack.c.l.b16 %v9078
      %v9175 = vunpack.c.l.b16 %v9079
      %v9176 = vunpack.c.l.b16 %v9080
      %v9177 = vunpack.c.l.b16 %v9081
      %v9178 = vpack.c.b16 %v9163, %v9162
      %v9179 = vpack.c.b16 %v9165, %v9164
      %v9180 = vpack.c.b16 %v9167, %v9166
      %v9181 = vpack.c.b16 %v9169, %v9168
      %v9182 = vpack.c.b16 %v9171, %v9170
      %v9183 = vpack.c.b16 %v9173, %v9172
      %v9184 = vpack.c.b16 %v9175, %v9174
      %v9185 = vpack.c.b16 %v9177, %v9176
      %9194 = vmatprep.subr.bf16.mxu0 0
      %9195 = vmatpush1.bf16.msra.mxu0 %v9185
      %9196 = vmatprep.subr.bf16.mxu0 0
      %9197 = vmatpush1.bf16.msra.mxu0 %v9184
      %9198 = vmatprep.subr.bf16.mxu0 0
      %9199 = vmatpush1.bf16.msra.mxu0 %v9183
      %9200 = vmatprep.subr.bf16.mxu0 0
      %9201 = vmatpush1.bf16.msra.mxu0 %v9182
      %9202 = vmatprep.subr.bf16.mxu0 0
      %9203 = vmatpush1.bf16.msra.mxu0 %v9181
      %9204 = vmatprep.subr.bf16.mxu0 0
      %9205 = vmatpush1.bf16.msra.mxu0 %v9180
      %9206 = vmatprep.subr.bf16.mxu0 0
      %9207 = vmatpush1.bf16.msra.mxu0 %v9179
      %9208 = vmatprep.subr.bf16.mxu0 0
      %9209 = vmatpush1.bf16.msra.mxu0 %v9178
      %9210 = vmatprep.subr.bf16.mxu0 0
      %9211 = vmatpush2.bf16.msra.mxu0 0
      %9212 = vmatprep.subr.bf16.mxu0 0
      %9213 = vmatpush2.bf16.msra.mxu0 0
      %9214 = vmatprep.subr.bf16.mxu0 0
      %9215 = vmatpush2.bf16.msra.mxu0 0
      %9216 = vmatprep.subr.bf16.mxu0 0
      %9217 = vmatpush2.bf16.msra.mxu0 0
      %9218 = vmatprep.subr.bf16.mxu0 0
      %9219 = vmatpush2.bf16.msra.mxu0 0
      %9220 = vmatprep.subr.bf16.mxu0 0
      %9221 = vmatpush2.bf16.msra.mxu0 0
      %9222 = vmatprep.subr.bf16.mxu0 0
      %9223 = vmatpush2.bf16.msra.mxu0 0
      %9224 = vmatprep.subr.bf16.mxu0 0
      %9225 = vmatpush2.bf16.msra.mxu0 0
      %9226 = vmatprep.mubr.bf16.mxu0 0
      %9227 = vmatmul.mubr.bf16.gmra.mxu0 %v9114
      %v9228 = vpop.f32.mrf.mxu0
      %v9229 = vadd.f32 0.0, %v9228
      %v9230 = vpop.f32.mrf.mxu0
      %v9231 = vpop.f32.mrf.mxu0
      %v9232 = vadd.f32 0.0, %v9231
      %v9233 = vpop.f32.mrf.mxu0
      %9234 = vmatprep.mubr.bf16.mxu0 0
      %9235 = vmatmul.mubr.bf16.gmra.mxu0 %v9115
      %v9236 = vpop.f32.mrf.mxu0
      %v9237 = vadd.f32 0.0, %v9236
      %v9238 = vpop.f32.mrf.mxu0
      %v9239 = vpop.f32.mrf.mxu0
      %v9240 = vadd.f32 0.0, %v9239
      %v9241 = vpop.f32.mrf.mxu0
      %9242 = vmatprep.mubr.bf16.mxu0 0
      %9243 = vmatmul.mubr.bf16.gmra.mxu0 %v9116
      %v9244 = vpop.f32.mrf.mxu0
      %v9245 = vadd.f32 0.0, %v9244
      %v9246 = vpop.f32.mrf.mxu0
      %v9247 = vpop.f32.mrf.mxu0
      %v9248 = vadd.f32 0.0, %v9247
      %v9249 = vpop.f32.mrf.mxu0
      %9250 = vmatprep.mubr.bf16.mxu0 0
      %9251 = vmatmul.mubr.bf16.gmra.mxu0 %v9117
      %v9252 = vpop.f32.mrf.mxu0
      %v9253 = vadd.f32 0.0, %v9252
      %v9254 = vpop.f32.mrf.mxu0
      %v9255 = vpop.f32.mrf.mxu0
      %v9256 = vadd.f32 0.0, %v9255
      %v9257 = vpop.f32.mrf.mxu0
      %9258 = vmatprep.mubr.bf16.mxu0 0
      %9259 = vmatmul.mubr.bf16.gmra.mxu0 %v9118
      %v9260 = vpop.f32.mrf.mxu0
      %v9261 = vadd.f32 0.0, %v9260
      %v9262 = vpop.f32.mrf.mxu0
      %v9263 = vpop.f32.mrf.mxu0
      %v9264 = vadd.f32 0.0, %v9263
      %v9265 = vpop.f32.mrf.mxu0
      %9266 = vmatprep.mubr.bf16.mxu0 0
      %9267 = vmatmul.mubr.bf16.gmra.mxu0 %v9119
      %v9268 = vpop.f32.mrf.mxu0
      %v9269 = vadd.f32 0.0, %v9268
      %v9270 = vpop.f32.mrf.mxu0
      %v9271 = vpop.f32.mrf.mxu0
      %v9272 = vadd.f32 0.0, %v9271
      %v9273 = vpop.f32.mrf.mxu0
      %9274 = vmatprep.mubr.bf16.mxu0 0
      %9275 = vmatmul.mubr.bf16.gmra.mxu0 %v9120
      %v9276 = vpop.f32.mrf.mxu0
      %v9277 = vadd.f32 0.0, %v9276
      %v9278 = vpop.f32.mrf.mxu0
      %v9279 = vpop.f32.mrf.mxu0
      %v9280 = vadd.f32 0.0, %v9279
      %v9281 = vpop.f32.mrf.mxu0
      %9282 = vmatprep.mubr.bf16.mxu0 0
      %9283 = vmatmul.mubr.bf16.gmra.mxu0 %v9121
      %v9284 = vpop.f32.mrf.mxu0
      %v9285 = vadd.f32 0.0, %v9284
      %v9286 = vpop.f32.mrf.mxu0
      %v9287 = vpop.f32.mrf.mxu0
      %v9288 = vadd.f32 0.0, %v9287
      %v9289 = vpop.f32.mrf.mxu0
      %9290 = vmatprep.mubr.bf16.mxu0 0
      %9291 = vmatmul.mubr.bf16.gmra.mxu0 %v9122
      %v9292 = vpop.f32.mrf.mxu0
      %v9293 = vadd.f32 0.0, %v9292
      %v9294 = vpop.f32.mrf.mxu0
      %v9295 = vpop.f32.mrf.mxu0
      %v9296 = vadd.f32 0.0, %v9295
      %v9297 = vpop.f32.mrf.mxu0
      %9298 = vmatprep.mubr.bf16.mxu0 0
      %9299 = vmatmul.mubr.bf16.gmra.mxu0 %v9123
      %v9300 = vpop.f32.mrf.mxu0
      %v9301 = vadd.f32 0.0, %v9300
      %v9302 = vpop.f32.mrf.mxu0
      %v9303 = vpop.f32.mrf.mxu0
      %v9304 = vadd.f32 0.0, %v9303
      %v9305 = vpop.f32.mrf.mxu0
      %9306 = vmatprep.mubr.bf16.mxu0 0
      %9307 = vmatmul.mubr.bf16.gmra.mxu0 %v9124
      %v9308 = vpop.f32.mrf.mxu0
      %v9309 = vadd.f32 0.0, %v9308
      %v9310 = vpop.f32.mrf.mxu0
      %v9311 = vpop.f32.mrf.mxu0
      %v9312 = vadd.f32 0.0, %v9311
      %v9313 = vpop.f32.mrf.mxu0
      %9314 = vmatprep.mubr.bf16.mxu0 0
      %9315 = vmatmul.mubr.bf16.gmra.mxu0 %v9125
      %v9316 = vpop.f32.mrf.mxu0
      %v9317 = vadd.f32 0.0, %v9316
      %v9318 = vpop.f32.mrf.mxu0
      %v9319 = vpop.f32.mrf.mxu0
      %v9320 = vadd.f32 0.0, %v9319
      %v9321 = vpop.f32.mrf.mxu0
      %9322 = vmatprep.mubr.bf16.mxu0 0
      %9323 = vmatmul.mubr.bf16.gmra.mxu0 %v9126
      %v9324 = vpop.f32.mrf.mxu0
      %v9325 = vadd.f32 0.0, %v9324
      %v9326 = vpop.f32.mrf.mxu0
      %v9327 = vpop.f32.mrf.mxu0
      %v9328 = vadd.f32 0.0, %v9327
      %v9329 = vpop.f32.mrf.mxu0
      %9330 = vmatprep.mubr.bf16.mxu0 0
      %9331 = vmatmul.mubr.bf16.gmra.mxu0 %v9127
      %v9332 = vpop.f32.mrf.mxu0
      %v9333 = vadd.f32 0.0, %v9332
      %v9334 = vpop.f32.mrf.mxu0
      %v9335 = vpop.f32.mrf.mxu0
      %v9336 = vadd.f32 0.0, %v9335
      %v9337 = vpop.f32.mrf.mxu0
      %9338 = vmatprep.mubr.bf16.mxu0 0
      %9339 = vmatmul.mubr.bf16.gmra.mxu0 %v9128
      %v9340 = vpop.f32.mrf.mxu0
      %v9341 = vadd.f32 0.0, %v9340
      %v9342 = vpop.f32.mrf.mxu0
      %v9343 = vpop.f32.mrf.mxu0
      %v9344 = vadd.f32 0.0, %v9343
      %v9345 = vpop.f32.mrf.mxu0
      %9346 = vmatprep.mubr.bf16.mxu0 0
      %9347 = vmatmul.mubr.bf16.gmra.mxu0 %v9129
      %v9348 = vpop.f32.mrf.mxu0
      %v9349 = vadd.f32 0.0, %v9348
      %v9350 = vpop.f32.mrf.mxu0
      %v9351 = vpop.f32.mrf.mxu0
      %v9352 = vadd.f32 0.0, %v9351
      %v9353 = vpop.f32.mrf.mxu0
      %9354 = vdwg.mxu0
      %v9355 = vadd.f32 %v8857, %v9229
      %v9356 = vadd.f32 %v8858, %v9232
      %v9357 = vadd.f32 %v8859, %v9237
      %v9358 = vadd.f32 %v8860, %v9240
      %v9359 = vadd.f32 %v8861, %v9245
      %v9360 = vadd.f32 %v8862, %v9248
      %v9361 = vadd.f32 %v8863, %v9253
      %v9362 = vadd.f32 %v8864, %v9256
      %v9363 = vadd.f32 %v8865, %v9261
      %v9364 = vadd.f32 %v8866, %v9264
      %v9365 = vadd.f32 %v8867, %v9269
      %v9366 = vadd.f32 %v8868, %v9272
      %v9367 = vadd.f32 %v8869, %v9277
      %v9368 = vadd.f32 %v8870, %v9280
      %v9369 = vadd.f32 %v8871, %v9285
      %v9370 = vadd.f32 %v8872, %v9288
      %v9371 = vadd.f32 %v8873, %v9293
      %v9372 = vadd.f32 %v8874, %v9296
      %v9373 = vadd.f32 %v8875, %v9301
      %v9374 = vadd.f32 %v8876, %v9304
      %v9375 = vadd.f32 %v8877, %v9309
      %v9376 = vadd.f32 %v8878, %v9312
      %v9377 = vadd.f32 %v8879, %v9317
      %v9378 = vadd.f32 %v8880, %v9320
      %v9379 = vadd.f32 %v8881, %v9325
      %v9380 = vadd.f32 %v8882, %v9328
      %v9381 = vadd.f32 %v8883, %v9333
      %v9382 = vadd.f32 %v8884, %v9336
      %v9383 = vadd.f32 %v8885, %v9341
      %v9384 = vadd.f32 %v8886, %v9344
      %v9385 = vadd.f32 %v8887, %v9349
      %v9386 = vadd.f32 %v8888, %v9352
      %s9387 = scalar_lea.vmem [#allocation3], 24
      %v9388 = vld [vmem:[%s9387] sm:$0xf]
      %v9389 = vld [vmem:[%s9387 + $0x4] sm:$0xf]
      %v9390 = vld [vmem:[%s9387 + $0xc] sm:$0xf]
      %v9391 = vld [vmem:[%s9387 + $0x10] sm:$0xf]
      %v9392 = vld [vmem:[%s9387 + $0x18] sm:$0xf]
      %v9393 = vld [vmem:[%s9387 + $0x1c] sm:$0xf]
      %v9394 = vld [vmem:[%s9387 + $0x24] sm:$0xf]
      %v9395 = vld [vmem:[%s9387 + $0x28] sm:$0xf]
      %v9396 = vld [vmem:[%s9387 + $0x30] sm:$0xf]
      %v9397 = vld [vmem:[%s9387 + $0x34] sm:$0xf]
      %v9398 = vld [vmem:[%s9387 + $0x3c] sm:$0xf]
      %v9399 = vld [vmem:[%s9387 + $0x40] sm:$0xf]
      %v9400 = vld [vmem:[%s9387 + $0x48] sm:$0xf]
      %v9401 = vld [vmem:[%s9387 + $0x4c] sm:$0xf]
      %v9402 = vld [vmem:[%s9387 + $0x54] sm:$0xf]
      %v9403 = vld [vmem:[%s9387 + $0x58] sm:$0xf]
      %v9404 = vld [vmem:[%s9387 + $0x60] sm:$0xf]
      %v9405 = vld [vmem:[%s9387 + $0x64] sm:$0xf]
      %v9406 = vld [vmem:[%s9387 + $0x6c] sm:$0xf]
      %v9407 = vld [vmem:[%s9387 + $0x70] sm:$0xf]
      %v9408 = vld [vmem:[%s9387 + $0x78] sm:$0xf]
      %v9409 = vld [vmem:[%s9387 + $0x7c] sm:$0xf]
      %v9410 = vld [vmem:[%s9387 + $0x84] sm:$0xf]
      %v9411 = vld [vmem:[%s9387 + $0x88] sm:$0xf]
      %v9412 = vld [vmem:[%s9387 + $0x90] sm:$0xf]
      %v9413 = vld [vmem:[%s9387 + $0x94] sm:$0xf]
      %v9414 = vld [vmem:[%s9387 + $0x9c] sm:$0xf]
      %v9415 = vld [vmem:[%s9387 + $0xa0] sm:$0xf]
      %v9416 = vld [vmem:[%s9387 + $0xa8] sm:$0xf]
      %v9417 = vld [vmem:[%s9387 + $0xac] sm:$0xf]
      %v9418 = vld [vmem:[%s9387 + $0xb4] sm:$0xf]
      %v9419 = vld [vmem:[%s9387 + $0xb8] sm:$0xf]
      %s9420 = scalar_lea.vmem %s4, 384
      %v9421 = vld [vmem:[%s9420] sm:$0xf]
      %v9422 = vld [vmem:[%s9420 + $0x4] sm:$0xf]
      %v9423 = vld [vmem:[%s9420 + $0x8] sm:$0xf]
      %v9424 = vld [vmem:[%s9420 + $0xc] sm:$0xf]
      %v9425 = vld [vmem:[%s9420 + $0x10] sm:$0xf]
      %v9426 = vld [vmem:[%s9420 + $0x14] sm:$0xf]
      %v9427 = vld [vmem:[%s9420 + $0x18] sm:$0xf]
      %v9428 = vld [vmem:[%s9420 + $0x1c] sm:$0xf]
      %v9429 = vld [vmem:[%s9420 + $0x20] sm:$0xf]
      %v9430 = vld [vmem:[%s9420 + $0x24] sm:$0xf]
      %v9431 = vld [vmem:[%s9420 + $0x28] sm:$0xf]
      %v9432 = vld [vmem:[%s9420 + $0x2c] sm:$0xf]
      %v9433 = vld [vmem:[%s9420 + $0x30] sm:$0xf]
      %v9434 = vld [vmem:[%s9420 + $0x34] sm:$0xf]
      %v9435 = vld [vmem:[%s9420 + $0x38] sm:$0xf]
      %v9436 = vld [vmem:[%s9420 + $0x3c] sm:$0xf]
      %v9469 = vunpack.c.l.b16 %v9388
      %v9470 = vunpack.c.l.b16 %v9389
      %v9471 = vunpack.c.l.b16 %v9390
      %v9472 = vunpack.c.l.b16 %v9391
      %v9473 = vunpack.c.l.b16 %v9392
      %v9474 = vunpack.c.l.b16 %v9393
      %v9475 = vunpack.c.l.b16 %v9394
      %v9476 = vunpack.c.l.b16 %v9395
      %v9477 = vunpack.c.l.b16 %v9396
      %v9478 = vunpack.c.l.b16 %v9397
      %v9479 = vunpack.c.l.b16 %v9398
      %v9480 = vunpack.c.l.b16 %v9399
      %v9481 = vunpack.c.l.b16 %v9400
      %v9482 = vunpack.c.l.b16 %v9401
      %v9483 = vunpack.c.l.b16 %v9402
      %v9484 = vunpack.c.l.b16 %v9403
      %v9485 = vunpack.c.l.b16 %v9404
      %v9486 = vunpack.c.l.b16 %v9405
      %v9487 = vunpack.c.l.b16 %v9406
      %v9488 = vunpack.c.l.b16 %v9407
      %v9489 = vunpack.c.l.b16 %v9408
      %v9490 = vunpack.c.l.b16 %v9409
      %v9491 = vunpack.c.l.b16 %v9410
      %v9492 = vunpack.c.l.b16 %v9411
      %v9493 = vunpack.c.l.b16 %v9412
      %v9494 = vunpack.c.l.b16 %v9413
      %v9495 = vunpack.c.l.b16 %v9414
      %v9496 = vunpack.c.l.b16 %v9415
      %v9497 = vunpack.c.l.b16 %v9416
      %v9498 = vunpack.c.l.b16 %v9417
      %v9499 = vunpack.c.l.b16 %v9418
      %v9500 = vunpack.c.l.b16 %v9419
      %v9501 = vpack.c.b16 %v9470, %v9469
      %v9502 = vpack.c.b16 %v9472, %v9471
      %v9503 = vpack.c.b16 %v9474, %v9473
      %v9504 = vpack.c.b16 %v9476, %v9475
      %v9505 = vpack.c.b16 %v9478, %v9477
      %v9506 = vpack.c.b16 %v9480, %v9479
      %v9507 = vpack.c.b16 %v9482, %v9481
      %v9508 = vpack.c.b16 %v9484, %v9483
      %v9509 = vpack.c.b16 %v9486, %v9485
      %v9510 = vpack.c.b16 %v9488, %v9487
      %v9511 = vpack.c.b16 %v9490, %v9489
      %v9512 = vpack.c.b16 %v9492, %v9491
      %v9513 = vpack.c.b16 %v9494, %v9493
      %v9514 = vpack.c.b16 %v9496, %v9495
      %v9515 = vpack.c.b16 %v9498, %v9497
      %v9516 = vpack.c.b16 %v9500, %v9499
      %v9549 = vunpack.c.l.b16 %v9421
      %v9550 = vunpack.c.l.b16 %v9422
      %v9551 = vunpack.c.l.b16 %v9423
      %v9552 = vunpack.c.l.b16 %v9424
      %v9553 = vunpack.c.l.b16 %v9425
      %v9554 = vunpack.c.l.b16 %v9426
      %v9555 = vunpack.c.l.b16 %v9427
      %v9556 = vunpack.c.l.b16 %v9428
      %v9557 = vunpack.c.l.b16 %v9429
      %v9558 = vunpack.c.l.b16 %v9430
      %v9559 = vunpack.c.l.b16 %v9431
      %v9560 = vunpack.c.l.b16 %v9432
      %v9561 = vunpack.c.l.b16 %v9433
      %v9562 = vunpack.c.l.b16 %v9434
      %v9563 = vunpack.c.l.b16 %v9435
      %v9564 = vunpack.c.l.b16 %v9436
      %v9565 = vpack.c.b16 %v9550, %v9549
      %v9566 = vpack.c.b16 %v9552, %v9551
      %v9567 = vpack.c.b16 %v9554, %v9553
      %v9568 = vpack.c.b16 %v9556, %v9555
      %v9569 = vpack.c.b16 %v9558, %v9557
      %v9570 = vpack.c.b16 %v9560, %v9559
      %v9571 = vpack.c.b16 %v9562, %v9561
      %v9572 = vpack.c.b16 %v9564, %v9563
      %9581 = vmatprep.subr.bf16.mxu0 0
      %9582 = vmatpush1.bf16.msra.mxu0 %v9572
      %9583 = vmatprep.subr.bf16.mxu0 0
      %9584 = vmatpush1.bf16.msra.mxu0 %v9571
      %9585 = vmatprep.subr.bf16.mxu0 0
      %9586 = vmatpush1.bf16.msra.mxu0 %v9570
      %9587 = vmatprep.subr.bf16.mxu0 0
      %9588 = vmatpush1.bf16.msra.mxu0 %v9569
      %9589 = vmatprep.subr.bf16.mxu0 0
      %9590 = vmatpush1.bf16.msra.mxu0 %v9568
      %9591 = vmatprep.subr.bf16.mxu0 0
      %9592 = vmatpush1.bf16.msra.mxu0 %v9567
      %9593 = vmatprep.subr.bf16.mxu0 0
      %9594 = vmatpush1.bf16.msra.mxu0 %v9566
      %9595 = vmatprep.subr.bf16.mxu0 0
      %9596 = vmatpush1.bf16.msra.mxu0 %v9565
      %9597 = vmatprep.subr.bf16.mxu0 0
      %9598 = vmatpush2.bf16.msra.mxu0 0
      %9599 = vmatprep.subr.bf16.mxu0 0
      %9600 = vmatpush2.bf16.msra.mxu0 0
      %9601 = vmatprep.subr.bf16.mxu0 0
      %9602 = vmatpush2.bf16.msra.mxu0 0
      %9603 = vmatprep.subr.bf16.mxu0 0
      %9604 = vmatpush2.bf16.msra.mxu0 0
      %9605 = vmatprep.subr.bf16.mxu0 0
      %9606 = vmatpush2.bf16.msra.mxu0 0
      %9607 = vmatprep.subr.bf16.mxu0 0
      %9608 = vmatpush2.bf16.msra.mxu0 0
      %9609 = vmatprep.subr.bf16.mxu0 0
      %9610 = vmatpush2.bf16.msra.mxu0 0
      %9611 = vmatprep.subr.bf16.mxu0 0
      %9612 = vmatpush2.bf16.msra.mxu0 0
      %9613 = vmatprep.mubr.bf16.mxu0 0
      %9614 = vmatmul.mubr.bf16.gmra.mxu0 %v9501
      %v9615 = vpop.f32.mrf.mxu0
      %v9616 = vadd.f32 0.0, %v9615
      %v9617 = vpop.f32.mrf.mxu0
      %v9618 = vpop.f32.mrf.mxu0
      %v9619 = vadd.f32 0.0, %v9618
      %v9620 = vpop.f32.mrf.mxu0
      %9621 = vmatprep.mubr.bf16.mxu0 0
      %9622 = vmatmul.mubr.bf16.gmra.mxu0 %v9502
      %v9623 = vpop.f32.mrf.mxu0
      %v9624 = vadd.f32 0.0, %v9623
      %v9625 = vpop.f32.mrf.mxu0
      %v9626 = vpop.f32.mrf.mxu0
      %v9627 = vadd.f32 0.0, %v9626
      %v9628 = vpop.f32.mrf.mxu0
      %9629 = vmatprep.mubr.bf16.mxu0 0
      %9630 = vmatmul.mubr.bf16.gmra.mxu0 %v9503
      %v9631 = vpop.f32.mrf.mxu0
      %v9632 = vadd.f32 0.0, %v9631
      %v9633 = vpop.f32.mrf.mxu0
      %v9634 = vpop.f32.mrf.mxu0
      %v9635 = vadd.f32 0.0, %v9634
      %v9636 = vpop.f32.mrf.mxu0
      %9637 = vmatprep.mubr.bf16.mxu0 0
      %9638 = vmatmul.mubr.bf16.gmra.mxu0 %v9504
      %v9639 = vpop.f32.mrf.mxu0
      %v9640 = vadd.f32 0.0, %v9639
      %v9641 = vpop.f32.mrf.mxu0
      %v9642 = vpop.f32.mrf.mxu0
      %v9643 = vadd.f32 0.0, %v9642
      %v9644 = vpop.f32.mrf.mxu0
      %9645 = vmatprep.mubr.bf16.mxu0 0
      %9646 = vmatmul.mubr.bf16.gmra.mxu0 %v9505
      %v9647 = vpop.f32.mrf.mxu0
      %v9648 = vadd.f32 0.0, %v9647
      %v9649 = vpop.f32.mrf.mxu0
      %v9650 = vpop.f32.mrf.mxu0
      %v9651 = vadd.f32 0.0, %v9650
      %v9652 = vpop.f32.mrf.mxu0
      %9653 = vmatprep.mubr.bf16.mxu0 0
      %9654 = vmatmul.mubr.bf16.gmra.mxu0 %v9506
      %v9655 = vpop.f32.mrf.mxu0
      %v9656 = vadd.f32 0.0, %v9655
      %v9657 = vpop.f32.mrf.mxu0
      %v9658 = vpop.f32.mrf.mxu0
      %v9659 = vadd.f32 0.0, %v9658
      %v9660 = vpop.f32.mrf.mxu0
      %9661 = vmatprep.mubr.bf16.mxu0 0
      %9662 = vmatmul.mubr.bf16.gmra.mxu0 %v9507
      %v9663 = vpop.f32.mrf.mxu0
      %v9664 = vadd.f32 0.0, %v9663
      %v9665 = vpop.f32.mrf.mxu0
      %v9666 = vpop.f32.mrf.mxu0
      %v9667 = vadd.f32 0.0, %v9666
      %v9668 = vpop.f32.mrf.mxu0
      %9669 = vmatprep.mubr.bf16.mxu0 0
      %9670 = vmatmul.mubr.bf16.gmra.mxu0 %v9508
      %v9671 = vpop.f32.mrf.mxu0
      %v9672 = vadd.f32 0.0, %v9671
      %v9673 = vpop.f32.mrf.mxu0
      %v9674 = vpop.f32.mrf.mxu0
      %v9675 = vadd.f32 0.0, %v9674
      %v9676 = vpop.f32.mrf.mxu0
      %9677 = vmatprep.mubr.bf16.mxu0 0
      %9678 = vmatmul.mubr.bf16.gmra.mxu0 %v9509
      %v9679 = vpop.f32.mrf.mxu0
      %v9680 = vadd.f32 0.0, %v9679
      %v9681 = vpop.f32.mrf.mxu0
      %v9682 = vpop.f32.mrf.mxu0
      %v9683 = vadd.f32 0.0, %v9682
      %v9684 = vpop.f32.mrf.mxu0
      %9685 = vmatprep.mubr.bf16.mxu0 0
      %9686 = vmatmul.mubr.bf16.gmra.mxu0 %v9510
      %v9687 = vpop.f32.mrf.mxu0
      %v9688 = vadd.f32 0.0, %v9687
      %v9689 = vpop.f32.mrf.mxu0
      %v9690 = vpop.f32.mrf.mxu0
      %v9691 = vadd.f32 0.0, %v9690
      %v9692 = vpop.f32.mrf.mxu0
      %9693 = vmatprep.mubr.bf16.mxu0 0
      %9694 = vmatmul.mubr.bf16.gmra.mxu0 %v9511
      %v9695 = vpop.f32.mrf.mxu0
      %v9696 = vadd.f32 0.0, %v9695
      %v9697 = vpop.f32.mrf.mxu0
      %v9698 = vpop.f32.mrf.mxu0
      %v9699 = vadd.f32 0.0, %v9698
      %v9700 = vpop.f32.mrf.mxu0
      %9701 = vmatprep.mubr.bf16.mxu0 0
      %9702 = vmatmul.mubr.bf16.gmra.mxu0 %v9512
      %v9703 = vpop.f32.mrf.mxu0
      %v9704 = vadd.f32 0.0, %v9703
      %v9705 = vpop.f32.mrf.mxu0
      %v9706 = vpop.f32.mrf.mxu0
      %v9707 = vadd.f32 0.0, %v9706
      %v9708 = vpop.f32.mrf.mxu0
      %9709 = vmatprep.mubr.bf16.mxu0 0
      %9710 = vmatmul.mubr.bf16.gmra.mxu0 %v9513
      %v9711 = vpop.f32.mrf.mxu0
      %v9712 = vadd.f32 0.0, %v9711
      %v9713 = vpop.f32.mrf.mxu0
      %v9714 = vpop.f32.mrf.mxu0
      %v9715 = vadd.f32 0.0, %v9714
      %v9716 = vpop.f32.mrf.mxu0
      %9717 = vmatprep.mubr.bf16.mxu0 0
      %9718 = vmatmul.mubr.bf16.gmra.mxu0 %v9514
      %v9719 = vpop.f32.mrf.mxu0
      %v9720 = vadd.f32 0.0, %v9719
      %v9721 = vpop.f32.mrf.mxu0
      %v9722 = vpop.f32.mrf.mxu0
      %v9723 = vadd.f32 0.0, %v9722
      %v9724 = vpop.f32.mrf.mxu0
      %9725 = vmatprep.mubr.bf16.mxu0 0
      %9726 = vmatmul.mubr.bf16.gmra.mxu0 %v9515
      %v9727 = vpop.f32.mrf.mxu0
      %v9728 = vadd.f32 0.0, %v9727
      %v9729 = vpop.f32.mrf.mxu0
      %v9730 = vpop.f32.mrf.mxu0
      %v9731 = vadd.f32 0.0, %v9730
      %v9732 = vpop.f32.mrf.mxu0
      %9733 = vmatprep.mubr.bf16.mxu0 0
      %9734 = vmatmul.mubr.bf16.gmra.mxu0 %v9516
      %v9735 = vpop.f32.mrf.mxu0
      %v9736 = vadd.f32 0.0, %v9735
      %v9737 = vpop.f32.mrf.mxu0
      %v9738 = vpop.f32.mrf.mxu0
      %v9739 = vadd.f32 0.0, %v9738
      %v9740 = vpop.f32.mrf.mxu0
      %9741 = vdwg.mxu0
      %v9742 = vadd.f32 %v9355, %v9616
      %v9743 = vadd.f32 %v9356, %v9619
      %v9744 = vadd.f32 %v9357, %v9624
      %v9745 = vadd.f32 %v9358, %v9627
      %v9746 = vadd.f32 %v9359, %v9632
      %v9747 = vadd.f32 %v9360, %v9635
      %v9748 = vadd.f32 %v9361, %v9640
      %v9749 = vadd.f32 %v9362, %v9643
      %v9750 = vadd.f32 %v9363, %v9648
      %v9751 = vadd.f32 %v9364, %v9651
      %v9752 = vadd.f32 %v9365, %v9656
      %v9753 = vadd.f32 %v9366, %v9659
      %v9754 = vadd.f32 %v9367, %v9664
      %v9755 = vadd.f32 %v9368, %v9667
      %v9756 = vadd.f32 %v9369, %v9672
      %v9757 = vadd.f32 %v9370, %v9675
      %v9758 = vadd.f32 %v9371, %v9680
      %v9759 = vadd.f32 %v9372, %v9683
      %v9760 = vadd.f32 %v9373, %v9688
      %v9761 = vadd.f32 %v9374, %v9691
      %v9762 = vadd.f32 %v9375, %v9696
      %v9763 = vadd.f32 %v9376, %v9699
      %v9764 = vadd.f32 %v9377, %v9704
      %v9765 = vadd.f32 %v9378, %v9707
      %v9766 = vadd.f32 %v9379, %v9712
      %v9767 = vadd.f32 %v9380, %v9715
      %v9768 = vadd.f32 %v9381, %v9720
      %v9769 = vadd.f32 %v9382, %v9723
      %v9770 = vadd.f32 %v9383, %v9728
      %v9771 = vadd.f32 %v9384, %v9731
      %v9772 = vadd.f32 %v9385, %v9736
      %v9773 = vadd.f32 %v9386, %v9739
      %v9774 = vld [vmem:[%s9387] sm:$0xf]
      %v9775 = vld [vmem:[%s9387 + $0x4] sm:$0xf]
      %v9776 = vld [vmem:[%s9387 + $0x8] sm:$0x1]
      %v9777 = vld [vmem:[%s9387 + $0xc] sm:$0xf]
      %v9778 = vld [vmem:[%s9387 + $0x10] sm:$0xf]
      %v9779 = vld [vmem:[%s9387 + $0x14] sm:$0x1]
      %v9780 = vld [vmem:[%s9387 + $0x18] sm:$0xf]
      %v9781 = vld [vmem:[%s9387 + $0x1c] sm:$0xf]
      %v9782 = vld [vmem:[%s9387 + $0x20] sm:$0x1]
      %v9783 = vld [vmem:[%s9387 + $0x24] sm:$0xf]
      %v9784 = vld [vmem:[%s9387 + $0x28] sm:$0xf]
      %v9785 = vld [vmem:[%s9387 + $0x2c] sm:$0x1]
      %v9786 = vld [vmem:[%s9387 + $0x30] sm:$0xf]
      %v9787 = vld [vmem:[%s9387 + $0x34] sm:$0xf]
      %v9788 = vld [vmem:[%s9387 + $0x38] sm:$0x1]
      %v9789 = vld [vmem:[%s9387 + $0x3c] sm:$0xf]
      %v9790 = vld [vmem:[%s9387 + $0x40] sm:$0xf]
      %v9791 = vld [vmem:[%s9387 + $0x44] sm:$0x1]
      %v9792 = vld [vmem:[%s9387 + $0x48] sm:$0xf]
      %v9793 = vld [vmem:[%s9387 + $0x4c] sm:$0xf]
      %v9794 = vld [vmem:[%s9387 + $0x50] sm:$0x1]
      %v9795 = vld [vmem:[%s9387 + $0x54] sm:$0xf]
      %v9796 = vld [vmem:[%s9387 + $0x58] sm:$0xf]
      %v9797 = vld [vmem:[%s9387 + $0x5c] sm:$0x1]
      %v9798 = vld [vmem:[%s9387 + $0x60] sm:$0xf]
      %v9799 = vld [vmem:[%s9387 + $0x64] sm:$0xf]
      %v9800 = vld [vmem:[%s9387 + $0x68] sm:$0x1]
      %v9801 = vld [vmem:[%s9387 + $0x6c] sm:$0xf]
      %v9802 = vld [vmem:[%s9387 + $0x70] sm:$0xf]
      %v9803 = vld [vmem:[%s9387 + $0x74] sm:$0x1]
      %v9804 = vld [vmem:[%s9387 + $0x78] sm:$0xf]
      %v9805 = vld [vmem:[%s9387 + $0x7c] sm:$0xf]
      %v9806 = vld [vmem:[%s9387 + $0x80] sm:$0x1]
      %v9807 = vld [vmem:[%s9387 + $0x84] sm:$0xf]
      %v9808 = vld [vmem:[%s9387 + $0x88] sm:$0xf]
      %v9809 = vld [vmem:[%s9387 + $0x8c] sm:$0x1]
      %v9810 = vld [vmem:[%s9387 + $0x90] sm:$0xf]
      %v9811 = vld [vmem:[%s9387 + $0x94] sm:$0xf]
      %v9812 = vld [vmem:[%s9387 + $0x98] sm:$0x1]
      %v9813 = vld [vmem:[%s9387 + $0x9c] sm:$0xf]
      %v9814 = vld [vmem:[%s9387 + $0xa0] sm:$0xf]
      %v9815 = vld [vmem:[%s9387 + $0xa4] sm:$0x1]
      %v9816 = vld [vmem:[%s9387 + $0xa8] sm:$0xf]
      %v9817 = vld [vmem:[%s9387 + $0xac] sm:$0xf]
      %v9818 = vld [vmem:[%s9387 + $0xb0] sm:$0x1]
      %v9819 = vld [vmem:[%s9387 + $0xb4] sm:$0xf]
      %v9820 = vld [vmem:[%s9387 + $0xb8] sm:$0xf]
      %v9821 = vld [vmem:[%s9387 + $0xbc] sm:$0x1]
      %v9823 = vshrl.u32 %v9774, 16
      %v9825 = vrot.slane %v9823, 4
      %v9826 = vshll.u32 %v9774, 16
      %v9828 = vrot.slane %v9826, 5
      %v9829 = vor.u32 %v9825, %v9828
      %v9830 = vrot.slane %v9829, 4
      %v9832 = vshll.u32 %v9775, 16
      %v9834 = vrot.slane %v9832, 5
      %v9835 = vsel %vm956, %v9830, %v9834
      %v9836 = vshrl.u32 %v9775, 16
      %v9838 = vrot.slane %v9836, 4
      %v9839 = vor.u32 %v9838, %v9834
      %v9840 = vrot.slane %v9839, 4
      %v9842 = vshll.u32 %v9776, 16
      %v9844 = vrot.slane %v9842, 5
      %v9845 = vsel %vm956, %v9840, %v9844
      %v9847 = vshrl.u32 %v9777, 16
      %v9849 = vrot.slane %v9847, 4
      %v9850 = vshll.u32 %v9777, 16
      %v9852 = vrot.slane %v9850, 5
      %v9853 = vor.u32 %v9849, %v9852
      %v9854 = vrot.slane %v9853, 4
      %v9856 = vshll.u32 %v9778, 16
      %v9858 = vrot.slane %v9856, 5
      %v9859 = vsel %vm956, %v9854, %v9858
      %v9860 = vshrl.u32 %v9778, 16
      %v9862 = vrot.slane %v9860, 4
      %v9863 = vor.u32 %v9862, %v9858
      %v9864 = vrot.slane %v9863, 4
      %v9866 = vshll.u32 %v9779, 16
      %v9868 = vrot.slane %v9866, 5
      %v9869 = vsel %vm956, %v9864, %v9868
      %v9871 = vshrl.u32 %v9780, 16
      %v9873 = vrot.slane %v9871, 4
      %v9874 = vshll.u32 %v9780, 16
      %v9876 = vrot.slane %v9874, 5
      %v9877 = vor.u32 %v9873, %v9876
      %v9878 = vrot.slane %v9877, 4
      %v9880 = vshll.u32 %v9781, 16
      %v9882 = vrot.slane %v9880, 5
      %v9883 = vsel %vm956, %v9878, %v9882
      %v9884 = vshrl.u32 %v9781, 16
      %v9886 = vrot.slane %v9884, 4
      %v9887 = vor.u32 %v9886, %v9882
      %v9888 = vrot.slane %v9887, 4
      %v9890 = vshll.u32 %v9782, 16
      %v9892 = vrot.slane %v9890, 5
      %v9893 = vsel %vm956, %v9888, %v9892
      %v9895 = vshrl.u32 %v9783, 16
      %v9897 = vrot.slane %v9895, 4
      %v9898 = vshll.u32 %v9783, 16
      %v9900 = vrot.slane %v9898, 5
      %v9901 = vor.u32 %v9897, %v9900
      %v9902 = vrot.slane %v9901, 4
      %v9904 = vshll.u32 %v9784, 16
      %v9906 = vrot.slane %v9904, 5
      %v9907 = vsel %vm956, %v9902, %v9906
      %v9908 = vshrl.u32 %v9784, 16
      %v9910 = vrot.slane %v9908, 4
      %v9911 = vor.u32 %v9910, %v9906
      %v9912 = vrot.slane %v9911, 4
      %v9914 = vshll.u32 %v9785, 16
      %v9916 = vrot.slane %v9914, 5
      %v9917 = vsel %vm956, %v9912, %v9916
      %v9919 = vshrl.u32 %v9786, 16
      %v9921 = vrot.slane %v9919, 4
      %v9922 = vshll.u32 %v9786, 16
      %v9924 = vrot.slane %v9922, 5
      %v9925 = vor.u32 %v9921, %v9924
      %v9926 = vrot.slane %v9925, 4
      %v9928 = vshll.u32 %v9787, 16
      %v9930 = vrot.slane %v9928, 5
      %v9931 = vsel %vm956, %v9926, %v9930
      %v9932 = vshrl.u32 %v9787, 16
      %v9934 = vrot.slane %v9932, 4
      %v9935 = vor.u32 %v9934, %v9930
      %v9936 = vrot.slane %v9935, 4
      %v9938 = vshll.u32 %v9788, 16
      %v9940 = vrot.slane %v9938, 5
      %v9941 = vsel %vm956, %v9936, %v9940
      %v9943 = vshrl.u32 %v9789, 16
      %v9945 = vrot.slane %v9943, 4
      %v9946 = vshll.u32 %v9789, 16
      %v9948 = vrot.slane %v9946, 5
      %v9949 = vor.u32 %v9945, %v9948
      %v9950 = vrot.slane %v9949, 4
      %v9952 = vshll.u32 %v9790, 16
      %v9954 = vrot.slane %v9952, 5
      %v9955 = vsel %vm956, %v9950, %v9954
      %v9956 = vshrl.u32 %v9790, 16
      %v9958 = vrot.slane %v9956, 4
      %v9959 = vor.u32 %v9958, %v9954
      %v9960 = vrot.slane %v9959, 4
      %v9962 = vshll.u32 %v9791, 16
      %v9964 = vrot.slane %v9962, 5
      %v9965 = vsel %vm956, %v9960, %v9964
      %v9967 = vshrl.u32 %v9792, 16
      %v9969 = vrot.slane %v9967, 4
      %v9970 = vshll.u32 %v9792, 16
      %v9972 = vrot.slane %v9970, 5
      %v9973 = vor.u32 %v9969, %v9972
      %v9974 = vrot.slane %v9973, 4
      %v9976 = vshll.u32 %v9793, 16
      %v9978 = vrot.slane %v9976, 5
      %v9979 = vsel %vm956, %v9974, %v9978
      %v9980 = vshrl.u32 %v9793, 16
      %v9982 = vrot.slane %v9980, 4
      %v9983 = vor.u32 %v9982, %v9978
      %v9984 = vrot.slane %v9983, 4
      %v9986 = vshll.u32 %v9794, 16
      %v9988 = vrot.slane %v9986, 5
      %v9989 = vsel %vm956, %v9984, %v9988
      %v9991 = vshrl.u32 %v9795, 16
      %v9993 = vrot.slane %v9991, 4
      %v9994 = vshll.u32 %v9795, 16
      %v9996 = vrot.slane %v9994, 5
      %v9997 = vor.u32 %v9993, %v9996
      %v9998 = vrot.slane %v9997, 4
      %v10000 = vshll.u32 %v9796, 16
      %v10002 = vrot.slane %v10000, 5
      %v10003 = vsel %vm956, %v9998, %v10002
      %v10004 = vshrl.u32 %v9796, 16
      %v10006 = vrot.slane %v10004, 4
      %v10007 = vor.u32 %v10006, %v10002
      %v10008 = vrot.slane %v10007, 4
      %v10010 = vshll.u32 %v9797, 16
      %v10012 = vrot.slane %v10010, 5
      %v10013 = vsel %vm956, %v10008, %v10012
      %v10015 = vshrl.u32 %v9798, 16
      %v10017 = vrot.slane %v10015, 4
      %v10018 = vshll.u32 %v9798, 16
      %v10020 = vrot.slane %v10018, 5
      %v10021 = vor.u32 %v10017, %v10020
      %v10022 = vrot.slane %v10021, 4
      %v10024 = vshll.u32 %v9799, 16
      %v10026 = vrot.slane %v10024, 5
      %v10027 = vsel %vm956, %v10022, %v10026
      %v10028 = vshrl.u32 %v9799, 16
      %v10030 = vrot.slane %v10028, 4
      %v10031 = vor.u32 %v10030, %v10026
      %v10032 = vrot.slane %v10031, 4
      %v10034 = vshll.u32 %v9800, 16
      %v10036 = vrot.slane %v10034, 5
      %v10037 = vsel %vm956, %v10032, %v10036
      %v10039 = vshrl.u32 %v9801, 16
      %v10041 = vrot.slane %v10039, 4
      %v10042 = vshll.u32 %v9801, 16
      %v10044 = vrot.slane %v10042, 5
      %v10045 = vor.u32 %v10041, %v10044
      %v10046 = vrot.slane %v10045, 4
      %v10048 = vshll.u32 %v9802, 16
      %v10050 = vrot.slane %v10048, 5
      %v10051 = vsel %vm956, %v10046, %v10050
      %v10052 = vshrl.u32 %v9802, 16
      %v10054 = vrot.slane %v10052, 4
      %v10055 = vor.u32 %v10054, %v10050
      %v10056 = vrot.slane %v10055, 4
      %v10058 = vshll.u32 %v9803, 16
      %v10060 = vrot.slane %v10058, 5
      %v10061 = vsel %vm956, %v10056, %v10060
      %v10063 = vshrl.u32 %v9804, 16
      %v10065 = vrot.slane %v10063, 4
      %v10066 = vshll.u32 %v9804, 16
      %v10068 = vrot.slane %v10066, 5
      %v10069 = vor.u32 %v10065, %v10068
      %v10070 = vrot.slane %v10069, 4
      %v10072 = vshll.u32 %v9805, 16
      %v10074 = vrot.slane %v10072, 5
      %v10075 = vsel %vm956, %v10070, %v10074
      %v10076 = vshrl.u32 %v9805, 16
      %v10078 = vrot.slane %v10076, 4
      %v10079 = vor.u32 %v10078, %v10074
      %v10080 = vrot.slane %v10079, 4
      %v10082 = vshll.u32 %v9806, 16
      %v10084 = vrot.slane %v10082, 5
      %v10085 = vsel %vm956, %v10080, %v10084
      %v10087 = vshrl.u32 %v9807, 16
      %v10089 = vrot.slane %v10087, 4
      %v10090 = vshll.u32 %v9807, 16
      %v10092 = vrot.slane %v10090, 5
      %v10093 = vor.u32 %v10089, %v10092
      %v10094 = vrot.slane %v10093, 4
      %v10096 = vshll.u32 %v9808, 16
      %v10098 = vrot.slane %v10096, 5
      %v10099 = vsel %vm956, %v10094, %v10098
      %v10100 = vshrl.u32 %v9808, 16
      %v10102 = vrot.slane %v10100, 4
      %v10103 = vor.u32 %v10102, %v10098
      %v10104 = vrot.slane %v10103, 4
      %v10106 = vshll.u32 %v9809, 16
      %v10108 = vrot.slane %v10106, 5
      %v10109 = vsel %vm956, %v10104, %v10108
      %v10111 = vshrl.u32 %v9810, 16
      %v10113 = vrot.slane %v10111, 4
      %v10114 = vshll.u32 %v9810, 16
      %v10116 = vrot.slane %v10114, 5
      %v10117 = vor.u32 %v10113, %v10116
      %v10118 = vrot.slane %v10117, 4
      %v10120 = vshll.u32 %v9811, 16
      %v10122 = vrot.slane %v10120, 5
      %v10123 = vsel %vm956, %v10118, %v10122
      %v10124 = vshrl.u32 %v9811, 16
      %v10126 = vrot.slane %v10124, 4
      %v10127 = vor.u32 %v10126, %v10122
      %v10128 = vrot.slane %v10127, 4
      %v10130 = vshll.u32 %v9812, 16
      %v10132 = vrot.slane %v10130, 5
      %v10133 = vsel %vm956, %v10128, %v10132
      %v10135 = vshrl.u32 %v9813, 16
      %v10137 = vrot.slane %v10135, 4
      %v10138 = vshll.u32 %v9813, 16
      %v10140 = vrot.slane %v10138, 5
      %v10141 = vor.u32 %v10137, %v10140
      %v10142 = vrot.slane %v10141, 4
      %v10144 = vshll.u32 %v9814, 16
      %v10146 = vrot.slane %v10144, 5
      %v10147 = vsel %vm956, %v10142, %v10146
      %v10148 = vshrl.u32 %v9814, 16
      %v10150 = vrot.slane %v10148, 4
      %v10151 = vor.u32 %v10150, %v10146
      %v10152 = vrot.slane %v10151, 4
      %v10154 = vshll.u32 %v9815, 16
      %v10156 = vrot.slane %v10154, 5
      %v10157 = vsel %vm956, %v10152, %v10156
      %v10159 = vshrl.u32 %v9816, 16
      %v10161 = vrot.slane %v10159, 4
      %v10162 = vshll.u32 %v9816, 16
      %v10164 = vrot.slane %v10162, 5
      %v10165 = vor.u32 %v10161, %v10164
      %v10166 = vrot.slane %v10165, 4
      %v10168 = vshll.u32 %v9817, 16
      %v10170 = vrot.slane %v10168, 5
      %v10171 = vsel %vm956, %v10166, %v10170
      %v10172 = vshrl.u32 %v9817, 16
      %v10174 = vrot.slane %v10172, 4
      %v10175 = vor.u32 %v10174, %v10170
      %v10176 = vrot.slane %v10175, 4
      %v10178 = vshll.u32 %v9818, 16
      %v10180 = vrot.slane %v10178, 5
      %v10181 = vsel %vm956, %v10176, %v10180
      %v10183 = vshrl.u32 %v9819, 16
      %v10185 = vrot.slane %v10183, 4
      %v10186 = vshll.u32 %v9819, 16
      %v10188 = vrot.slane %v10186, 5
      %v10189 = vor.u32 %v10185, %v10188
      %v10190 = vrot.slane %v10189, 4
      %v10192 = vshll.u32 %v9820, 16
      %v10194 = vrot.slane %v10192, 5
      %v10195 = vsel %vm956, %v10190, %v10194
      %v10196 = vshrl.u32 %v9820, 16
      %v10198 = vrot.slane %v10196, 4
      %v10199 = vor.u32 %v10198, %v10194
      %v10200 = vrot.slane %v10199, 4
      %v10202 = vshll.u32 %v9821, 16
      %v10204 = vrot.slane %v10202, 5
      %v10205 = vsel %vm956, %v10200, %v10204
      %s10206 = scalar_lea.vmem %s4, 448
      %v10207 = vld [vmem:[%s10206] sm:$0xf]
      %v10208 = vld [vmem:[%s10206 + $0x4] sm:$0xf]
      %v10209 = vld [vmem:[%s10206 + $0x8] sm:$0xf]
      %v10210 = vld [vmem:[%s10206 + $0xc] sm:$0xf]
      %v10211 = vld [vmem:[%s10206 + $0x10] sm:$0xf]
      %v10212 = vld [vmem:[%s10206 + $0x14] sm:$0xf]
      %v10213 = vld [vmem:[%s10206 + $0x18] sm:$0xf]
      %v10214 = vld [vmem:[%s10206 + $0x1c] sm:$0xf]
      %v10215 = vld [vmem:[%s10206 + $0x20] sm:$0xf]
      %v10216 = vld [vmem:[%s10206 + $0x24] sm:$0xf]
      %v10217 = vld [vmem:[%s10206 + $0x28] sm:$0xf]
      %v10218 = vld [vmem:[%s10206 + $0x2c] sm:$0xf]
      %v10219 = vld [vmem:[%s10206 + $0x30] sm:$0xf]
      %v10220 = vld [vmem:[%s10206 + $0x34] sm:$0xf]
      %v10221 = vld [vmem:[%s10206 + $0x38] sm:$0xf]
      %v10222 = vld [vmem:[%s10206 + $0x3c] sm:$0xf]
      %v10223 = vunpack.c.l.b16 %v9835
      %v10224 = vunpack.c.l.b16 %v9845
      %v10225 = vunpack.c.l.b16 %v9859
      %v10226 = vunpack.c.l.b16 %v9869
      %v10227 = vunpack.c.l.b16 %v9883
      %v10228 = vunpack.c.l.b16 %v9893
      %v10229 = vunpack.c.l.b16 %v9907
      %v10230 = vunpack.c.l.b16 %v9917
      %v10231 = vunpack.c.l.b16 %v9931
      %v10232 = vunpack.c.l.b16 %v9941
      %v10233 = vunpack.c.l.b16 %v9955
      %v10234 = vunpack.c.l.b16 %v9965
      %v10235 = vunpack.c.l.b16 %v9979
      %v10236 = vunpack.c.l.b16 %v9989
      %v10237 = vunpack.c.l.b16 %v10003
      %v10238 = vunpack.c.l.b16 %v10013
      %v10239 = vunpack.c.l.b16 %v10027
      %v10240 = vunpack.c.l.b16 %v10037
      %v10241 = vunpack.c.l.b16 %v10051
      %v10242 = vunpack.c.l.b16 %v10061
      %v10243 = vunpack.c.l.b16 %v10075
      %v10244 = vunpack.c.l.b16 %v10085
      %v10245 = vunpack.c.l.b16 %v10099
      %v10246 = vunpack.c.l.b16 %v10109
      %v10247 = vunpack.c.l.b16 %v10123
      %v10248 = vunpack.c.l.b16 %v10133
      %v10249 = vunpack.c.l.b16 %v10147
      %v10250 = vunpack.c.l.b16 %v10157
      %v10251 = vunpack.c.l.b16 %v10171
      %v10252 = vunpack.c.l.b16 %v10181
      %v10253 = vunpack.c.l.b16 %v10195
      %v10254 = vunpack.c.l.b16 %v10205
      %v10255 = vpack.c.b16 %v10224, %v10223
      %v10256 = vpack.c.b16 %v10226, %v10225
      %v10257 = vpack.c.b16 %v10228, %v10227
      %v10258 = vpack.c.b16 %v10230, %v10229
      %v10259 = vpack.c.b16 %v10232, %v10231
      %v10260 = vpack.c.b16 %v10234, %v10233
      %v10261 = vpack.c.b16 %v10236, %v10235
      %v10262 = vpack.c.b16 %v10238, %v10237
      %v10263 = vpack.c.b16 %v10240, %v10239
      %v10264 = vpack.c.b16 %v10242, %v10241
      %v10265 = vpack.c.b16 %v10244, %v10243
      %v10266 = vpack.c.b16 %v10246, %v10245
      %v10267 = vpack.c.b16 %v10248, %v10247
      %v10268 = vpack.c.b16 %v10250, %v10249
      %v10269 = vpack.c.b16 %v10252, %v10251
      %v10270 = vpack.c.b16 %v10254, %v10253
      %v10303 = vunpack.c.l.b16 %v10207
      %v10304 = vunpack.c.l.b16 %v10208
      %v10305 = vunpack.c.l.b16 %v10209
      %v10306 = vunpack.c.l.b16 %v10210
      %v10307 = vunpack.c.l.b16 %v10211
      %v10308 = vunpack.c.l.b16 %v10212
      %v10309 = vunpack.c.l.b16 %v10213
      %v10310 = vunpack.c.l.b16 %v10214
      %v10311 = vunpack.c.l.b16 %v10215
      %v10312 = vunpack.c.l.b16 %v10216
      %v10313 = vunpack.c.l.b16 %v10217
      %v10314 = vunpack.c.l.b16 %v10218
      %v10315 = vunpack.c.l.b16 %v10219
      %v10316 = vunpack.c.l.b16 %v10220
      %v10317 = vunpack.c.l.b16 %v10221
      %v10318 = vunpack.c.l.b16 %v10222
      %v10319 = vpack.c.b16 %v10304, %v10303
      %v10320 = vpack.c.b16 %v10306, %v10305
      %v10321 = vpack.c.b16 %v10308, %v10307
      %v10322 = vpack.c.b16 %v10310, %v10309
      %v10323 = vpack.c.b16 %v10312, %v10311
      %v10324 = vpack.c.b16 %v10314, %v10313
      %v10325 = vpack.c.b16 %v10316, %v10315
      %v10326 = vpack.c.b16 %v10318, %v10317
      %10335 = vmatprep.subr.bf16.mxu0 0
      %10336 = vmatpush1.bf16.msra.mxu0 %v10326
      %10337 = vmatprep.subr.bf16.mxu0 0
      %10338 = vmatpush1.bf16.msra.mxu0 %v10325
      %10339 = vmatprep.subr.bf16.mxu0 0
      %10340 = vmatpush1.bf16.msra.mxu0 %v10324
      %10341 = vmatprep.subr.bf16.mxu0 0
      %10342 = vmatpush1.bf16.msra.mxu0 %v10323
      %10343 = vmatprep.subr.bf16.mxu0 0
      %10344 = vmatpush1.bf16.msra.mxu0 %v10322
      %10345 = vmatprep.subr.bf16.mxu0 0
      %10346 = vmatpush1.bf16.msra.mxu0 %v10321
      %10347 = vmatprep.subr.bf16.mxu0 0
      %10348 = vmatpush1.bf16.msra.mxu0 %v10320
      %10349 = vmatprep.subr.bf16.mxu0 0
      %10350 = vmatpush1.bf16.msra.mxu0 %v10319
      %10351 = vmatprep.subr.bf16.mxu0 0
      %10352 = vmatpush2.bf16.msra.mxu0 0
      %10353 = vmatprep.subr.bf16.mxu0 0
      %10354 = vmatpush2.bf16.msra.mxu0 0
      %10355 = vmatprep.subr.bf16.mxu0 0
      %10356 = vmatpush2.bf16.msra.mxu0 0
      %10357 = vmatprep.subr.bf16.mxu0 0
      %10358 = vmatpush2.bf16.msra.mxu0 0
      %10359 = vmatprep.subr.bf16.mxu0 0
      %10360 = vmatpush2.bf16.msra.mxu0 0
      %10361 = vmatprep.subr.bf16.mxu0 0
      %10362 = vmatpush2.bf16.msra.mxu0 0
      %10363 = vmatprep.subr.bf16.mxu0 0
      %10364 = vmatpush2.bf16.msra.mxu0 0
      %10365 = vmatprep.subr.bf16.mxu0 0
      %10366 = vmatpush2.bf16.msra.mxu0 0
      %10367 = vmatprep.mubr.bf16.mxu0 0
      %10368 = vmatmul.mubr.bf16.gmra.mxu0 %v10255
      %v10369 = vpop.f32.mrf.mxu0
      %v10370 = vadd.f32 0.0, %v10369
      %v10371 = vpop.f32.mrf.mxu0
      %v10372 = vpop.f32.mrf.mxu0
      %v10373 = vadd.f32 0.0, %v10372
      %v10374 = vpop.f32.mrf.mxu0
      %10375 = vmatprep.mubr.bf16.mxu0 0
      %10376 = vmatmul.mubr.bf16.gmra.mxu0 %v10256
      %v10377 = vpop.f32.mrf.mxu0
      %v10378 = vadd.f32 0.0, %v10377
      %v10379 = vpop.f32.mrf.mxu0
      %v10380 = vpop.f32.mrf.mxu0
      %v10381 = vadd.f32 0.0, %v10380
      %v10382 = vpop.f32.mrf.mxu0
      %10383 = vmatprep.mubr.bf16.mxu0 0
      %10384 = vmatmul.mubr.bf16.gmra.mxu0 %v10257
      %v10385 = vpop.f32.mrf.mxu0
      %v10386 = vadd.f32 0.0, %v10385
      %v10387 = vpop.f32.mrf.mxu0
      %v10388 = vpop.f32.mrf.mxu0
      %v10389 = vadd.f32 0.0, %v10388
      %v10390 = vpop.f32.mrf.mxu0
      %10391 = vmatprep.mubr.bf16.mxu0 0
      %10392 = vmatmul.mubr.bf16.gmra.mxu0 %v10258
      %v10393 = vpop.f32.mrf.mxu0
      %v10394 = vadd.f32 0.0, %v10393
      %v10395 = vpop.f32.mrf.mxu0
      %v10396 = vpop.f32.mrf.mxu0
      %v10397 = vadd.f32 0.0, %v10396
      %v10398 = vpop.f32.mrf.mxu0
      %10399 = vmatprep.mubr.bf16.mxu0 0
      %10400 = vmatmul.mubr.bf16.gmra.mxu0 %v10259
      %v10401 = vpop.f32.mrf.mxu0
      %v10402 = vadd.f32 0.0, %v10401
      %v10403 = vpop.f32.mrf.mxu0
      %v10404 = vpop.f32.mrf.mxu0
      %v10405 = vadd.f32 0.0, %v10404
      %v10406 = vpop.f32.mrf.mxu0
      %10407 = vmatprep.mubr.bf16.mxu0 0
      %10408 = vmatmul.mubr.bf16.gmra.mxu0 %v10260
      %v10409 = vpop.f32.mrf.mxu0
      %v10410 = vadd.f32 0.0, %v10409
      %v10411 = vpop.f32.mrf.mxu0
      %v10412 = vpop.f32.mrf.mxu0
      %v10413 = vadd.f32 0.0, %v10412
      %v10414 = vpop.f32.mrf.mxu0
      %10415 = vmatprep.mubr.bf16.mxu0 0
      %10416 = vmatmul.mubr.bf16.gmra.mxu0 %v10261
      %v10417 = vpop.f32.mrf.mxu0
      %v10418 = vadd.f32 0.0, %v10417
      %v10419 = vpop.f32.mrf.mxu0
      %v10420 = vpop.f32.mrf.mxu0
      %v10421 = vadd.f32 0.0, %v10420
      %v10422 = vpop.f32.mrf.mxu0
      %10423 = vmatprep.mubr.bf16.mxu0 0
      %10424 = vmatmul.mubr.bf16.gmra.mxu0 %v10262
      %v10425 = vpop.f32.mrf.mxu0
      %v10426 = vadd.f32 0.0, %v10425
      %v10427 = vpop.f32.mrf.mxu0
      %v10428 = vpop.f32.mrf.mxu0
      %v10429 = vadd.f32 0.0, %v10428
      %v10430 = vpop.f32.mrf.mxu0
      %10431 = vmatprep.mubr.bf16.mxu0 0
      %10432 = vmatmul.mubr.bf16.gmra.mxu0 %v10263
      %v10433 = vpop.f32.mrf.mxu0
      %v10434 = vadd.f32 0.0, %v10433
      %v10435 = vpop.f32.mrf.mxu0
      %v10436 = vpop.f32.mrf.mxu0
      %v10437 = vadd.f32 0.0, %v10436
      %v10438 = vpop.f32.mrf.mxu0
      %10439 = vmatprep.mubr.bf16.mxu0 0
      %10440 = vmatmul.mubr.bf16.gmra.mxu0 %v10264
      %v10441 = vpop.f32.mrf.mxu0
      %v10442 = vadd.f32 0.0, %v10441
      %v10443 = vpop.f32.mrf.mxu0
      %v10444 = vpop.f32.mrf.mxu0
      %v10445 = vadd.f32 0.0, %v10444
      %v10446 = vpop.f32.mrf.mxu0
      %10447 = vmatprep.mubr.bf16.mxu0 0
      %10448 = vmatmul.mubr.bf16.gmra.mxu0 %v10265
      %v10449 = vpop.f32.mrf.mxu0
      %v10450 = vadd.f32 0.0, %v10449
      %v10451 = vpop.f32.mrf.mxu0
      %v10452 = vpop.f32.mrf.mxu0
      %v10453 = vadd.f32 0.0, %v10452
      %v10454 = vpop.f32.mrf.mxu0
      %10455 = vmatprep.mubr.bf16.mxu0 0
      %10456 = vmatmul.mubr.bf16.gmra.mxu0 %v10266
      %v10457 = vpop.f32.mrf.mxu0
      %v10458 = vadd.f32 0.0, %v10457
      %v10459 = vpop.f32.mrf.mxu0
      %v10460 = vpop.f32.mrf.mxu0
      %v10461 = vadd.f32 0.0, %v10460
      %v10462 = vpop.f32.mrf.mxu0
      %10463 = vmatprep.mubr.bf16.mxu0 0
      %10464 = vmatmul.mubr.bf16.gmra.mxu0 %v10267
      %v10465 = vpop.f32.mrf.mxu0
      %v10466 = vadd.f32 0.0, %v10465
      %v10467 = vpop.f32.mrf.mxu0
      %v10468 = vpop.f32.mrf.mxu0
      %v10469 = vadd.f32 0.0, %v10468
      %v10470 = vpop.f32.mrf.mxu0
      %10471 = vmatprep.mubr.bf16.mxu0 0
      %10472 = vmatmul.mubr.bf16.gmra.mxu0 %v10268
      %v10473 = vpop.f32.mrf.mxu0
      %v10474 = vadd.f32 0.0, %v10473
      %v10475 = vpop.f32.mrf.mxu0
      %v10476 = vpop.f32.mrf.mxu0
      %v10477 = vadd.f32 0.0, %v10476
      %v10478 = vpop.f32.mrf.mxu0
      %10479 = vmatprep.mubr.bf16.mxu0 0
      %10480 = vmatmul.mubr.bf16.gmra.mxu0 %v10269
      %v10481 = vpop.f32.mrf.mxu0
      %v10482 = vadd.f32 0.0, %v10481
      %v10483 = vpop.f32.mrf.mxu0
      %v10484 = vpop.f32.mrf.mxu0
      %v10485 = vadd.f32 0.0, %v10484
      %v10486 = vpop.f32.mrf.mxu0
      %10487 = vmatprep.mubr.bf16.mxu0 0
      %10488 = vmatmul.mubr.bf16.gmra.mxu0 %v10270
      %v10489 = vpop.f32.mrf.mxu0
      %v10490 = vadd.f32 0.0, %v10489
      %v10491 = vpop.f32.mrf.mxu0
      %v10492 = vpop.f32.mrf.mxu0
      %v10493 = vadd.f32 0.0, %v10492
      %v10494 = vpop.f32.mrf.mxu0
      %10495 = vdwg.mxu0
      %v10496 = vadd.f32 %v9742, %v10370
      %v10497 = vadd.f32 %v9743, %v10373
      %v10498 = vadd.f32 %v9744, %v10378
      %v10499 = vadd.f32 %v9745, %v10381
      %v10500 = vadd.f32 %v9746, %v10386
      %v10501 = vadd.f32 %v9747, %v10389
      %v10502 = vadd.f32 %v9748, %v10394
      %v10503 = vadd.f32 %v9749, %v10397
      %v10504 = vadd.f32 %v9750, %v10402
      %v10505 = vadd.f32 %v9751, %v10405
      %v10506 = vadd.f32 %v9752, %v10410
      %v10507 = vadd.f32 %v9753, %v10413
      %v10508 = vadd.f32 %v9754, %v10418
      %v10509 = vadd.f32 %v9755, %v10421
      %v10510 = vadd.f32 %v9756, %v10426
      %v10511 = vadd.f32 %v9757, %v10429
      %v10512 = vadd.f32 %v9758, %v10434
      %v10513 = vadd.f32 %v9759, %v10437
      %v10514 = vadd.f32 %v9760, %v10442
      %v10515 = vadd.f32 %v9761, %v10445
      %v10516 = vadd.f32 %v9762, %v10450
      %v10517 = vadd.f32 %v9763, %v10453
      %v10518 = vadd.f32 %v9764, %v10458
      %v10519 = vadd.f32 %v9765, %v10461
      %v10520 = vadd.f32 %v9766, %v10466
      %v10521 = vadd.f32 %v9767, %v10469
      %v10522 = vadd.f32 %v9768, %v10474
      %v10523 = vadd.f32 %v9769, %v10477
      %v10524 = vadd.f32 %v9770, %v10482
      %v10525 = vadd.f32 %v9771, %v10485
      %v10526 = vadd.f32 %v9772, %v10490
      %v10527 = vadd.f32 %v9773, %v10493
      %v10528 = vld [vmem:[%s9387] sm:$0xe]
      %v10529 = vld [vmem:[%s9387 + $0xc] sm:$0xe]
      %v10530 = vld [vmem:[%s9387 + $0x18] sm:$0xe]
      %v10531 = vld [vmem:[%s9387 + $0x24] sm:$0xe]
      %v10532 = vld [vmem:[%s9387 + $0x30] sm:$0xe]
      %v10533 = vld [vmem:[%s9387 + $0x3c] sm:$0xe]
      %v10534 = vld [vmem:[%s9387 + $0x48] sm:$0xe]
      %v10535 = vld [vmem:[%s9387 + $0x54] sm:$0xe]
      %v10536 = vld [vmem:[%s9387 + $0x60] sm:$0xe]
      %v10537 = vld [vmem:[%s9387 + $0x6c] sm:$0xe]
      %v10538 = vld [vmem:[%s9387 + $0x78] sm:$0xe]
      %v10539 = vld [vmem:[%s9387 + $0x84] sm:$0xe]
      %v10540 = vld [vmem:[%s9387 + $0x90] sm:$0xe]
      %v10541 = vld [vmem:[%s9387 + $0x9c] sm:$0xe]
      %v10542 = vld [vmem:[%s9387 + $0xa8] sm:$0xe]
      %v10543 = vld [vmem:[%s9387 + $0xb4] sm:$0xe]
      %v10592 = vrot.slane %v10528, 5
      %v10593 = vrot.slane %v10592, 4
      %v10594 = vrot.slane %v9775, 5
      %v10595 = vsel %vm1947, %v10593, %v10594
      %v10596 = vrot.slane %v10594, 4
      %v10597 = vrot.slane %v9776, 5
      %v10598 = vsel %vm1947, %v10596, %v10597
      %v10599 = vrot.slane %v10529, 5
      %v10600 = vrot.slane %v10599, 4
      %v10601 = vrot.slane %v9778, 5
      %v10602 = vsel %vm1947, %v10600, %v10601
      %v10603 = vrot.slane %v10601, 4
      %v10604 = vrot.slane %v9779, 5
      %v10605 = vsel %vm1947, %v10603, %v10604
      %v10606 = vrot.slane %v10530, 5
      %v10607 = vrot.slane %v10606, 4
      %v10608 = vrot.slane %v9781, 5
      %v10609 = vsel %vm1947, %v10607, %v10608
      %v10610 = vrot.slane %v10608, 4
      %v10611 = vrot.slane %v9782, 5
      %v10612 = vsel %vm1947, %v10610, %v10611
      %v10613 = vrot.slane %v10531, 5
      %v10614 = vrot.slane %v10613, 4
      %v10615 = vrot.slane %v9784, 5
      %v10616 = vsel %vm1947, %v10614, %v10615
      %v10617 = vrot.slane %v10615, 4
      %v10618 = vrot.slane %v9785, 5
      %v10619 = vsel %vm1947, %v10617, %v10618
      %v10620 = vrot.slane %v10532, 5
      %v10621 = vrot.slane %v10620, 4
      %v10622 = vrot.slane %v9787, 5
      %v10623 = vsel %vm1947, %v10621, %v10622
      %v10624 = vrot.slane %v10622, 4
      %v10625 = vrot.slane %v9788, 5
      %v10626 = vsel %vm1947, %v10624, %v10625
      %v10627 = vrot.slane %v10533, 5
      %v10628 = vrot.slane %v10627, 4
      %v10629 = vrot.slane %v9790, 5
      %v10630 = vsel %vm1947, %v10628, %v10629
      %v10631 = vrot.slane %v10629, 4
      %v10632 = vrot.slane %v9791, 5
      %v10633 = vsel %vm1947, %v10631, %v10632
      %v10634 = vrot.slane %v10534, 5
      %v10635 = vrot.slane %v10634, 4
      %v10636 = vrot.slane %v9793, 5
      %v10637 = vsel %vm1947, %v10635, %v10636
      %v10638 = vrot.slane %v10636, 4
      %v10639 = vrot.slane %v9794, 5
      %v10640 = vsel %vm1947, %v10638, %v10639
      %v10641 = vrot.slane %v10535, 5
      %v10642 = vrot.slane %v10641, 4
      %v10643 = vrot.slane %v9796, 5
      %v10644 = vsel %vm1947, %v10642, %v10643
      %v10645 = vrot.slane %v10643, 4
      %v10646 = vrot.slane %v9797, 5
      %v10647 = vsel %vm1947, %v10645, %v10646
      %v10648 = vrot.slane %v10536, 5
      %v10649 = vrot.slane %v10648, 4
      %v10650 = vrot.slane %v9799, 5
      %v10651 = vsel %vm1947, %v10649, %v10650
      %v10652 = vrot.slane %v10650, 4
      %v10653 = vrot.slane %v9800, 5
      %v10654 = vsel %vm1947, %v10652, %v10653
      %v10655 = vrot.slane %v10537, 5
      %v10656 = vrot.slane %v10655, 4
      %v10657 = vrot.slane %v9802, 5
      %v10658 = vsel %vm1947, %v10656, %v10657
      %v10659 = vrot.slane %v10657, 4
      %v10660 = vrot.slane %v9803, 5
      %v10661 = vsel %vm1947, %v10659, %v10660
      %v10662 = vrot.slane %v10538, 5
      %v10663 = vrot.slane %v10662, 4
      %v10664 = vrot.slane %v9805, 5
      %v10665 = vsel %vm1947, %v10663, %v10664
      %v10666 = vrot.slane %v10664, 4
      %v10667 = vrot.slane %v9806, 5
      %v10668 = vsel %vm1947, %v10666, %v10667
      %v10669 = vrot.slane %v10539, 5
      %v10670 = vrot.slane %v10669, 4
      %v10671 = vrot.slane %v9808, 5
      %v10672 = vsel %vm1947, %v10670, %v10671
      %v10673 = vrot.slane %v10671, 4
      %v10674 = vrot.slane %v9809, 5
      %v10675 = vsel %vm1947, %v10673, %v10674
      %v10676 = vrot.slane %v10540, 5
      %v10677 = vrot.slane %v10676, 4
      %v10678 = vrot.slane %v9811, 5
      %v10679 = vsel %vm1947, %v10677, %v10678
      %v10680 = vrot.slane %v10678, 4
      %v10681 = vrot.slane %v9812, 5
      %v10682 = vsel %vm1947, %v10680, %v10681
      %v10683 = vrot.slane %v10541, 5
      %v10684 = vrot.slane %v10683, 4
      %v10685 = vrot.slane %v9814, 5
      %v10686 = vsel %vm1947, %v10684, %v10685
      %v10687 = vrot.slane %v10685, 4
      %v10688 = vrot.slane %v9815, 5
      %v10689 = vsel %vm1947, %v10687, %v10688
      %v10690 = vrot.slane %v10542, 5
      %v10691 = vrot.slane %v10690, 4
      %v10692 = vrot.slane %v9817, 5
      %v10693 = vsel %vm1947, %v10691, %v10692
      %v10694 = vrot.slane %v10692, 4
      %v10695 = vrot.slane %v9818, 5
      %v10696 = vsel %vm1947, %v10694, %v10695
      %v10697 = vrot.slane %v10543, 5
      %v10698 = vrot.slane %v10697, 4
      %v10699 = vrot.slane %v9820, 5
      %v10700 = vsel %vm1947, %v10698, %v10699
      %v10701 = vrot.slane %v10699, 4
      %v10702 = vrot.slane %v9821, 5
      %v10703 = vsel %vm1947, %v10701, %v10702
      %s10704 = scalar_lea.vmem %s4, 512
      %v10705 = vld [vmem:[%s10704] sm:$0xf]
      %v10706 = vld [vmem:[%s10704 + $0x4] sm:$0xf]
      %v10707 = vld [vmem:[%s10704 + $0x8] sm:$0xf]
      %v10708 = vld [vmem:[%s10704 + $0xc] sm:$0xf]
      %v10709 = vld [vmem:[%s10704 + $0x10] sm:$0xf]
      %v10710 = vld [vmem:[%s10704 + $0x14] sm:$0xf]
      %v10711 = vld [vmem:[%s10704 + $0x18] sm:$0xf]
      %v10712 = vld [vmem:[%s10704 + $0x1c] sm:$0xf]
      %v10713 = vld [vmem:[%s10704 + $0x20] sm:$0xf]
      %v10714 = vld [vmem:[%s10704 + $0x24] sm:$0xf]
      %v10715 = vld [vmem:[%s10704 + $0x28] sm:$0xf]
      %v10716 = vld [vmem:[%s10704 + $0x2c] sm:$0xf]
      %v10717 = vld [vmem:[%s10704 + $0x30] sm:$0xf]
      %v10718 = vld [vmem:[%s10704 + $0x34] sm:$0xf]
      %v10719 = vld [vmem:[%s10704 + $0x38] sm:$0xf]
      %v10720 = vld [vmem:[%s10704 + $0x3c] sm:$0xf]
      %v10721 = vunpack.c.l.b16 %v10595
      %v10722 = vunpack.c.l.b16 %v10598
      %v10723 = vunpack.c.l.b16 %v10602
      %v10724 = vunpack.c.l.b16 %v10605
      %v10725 = vunpack.c.l.b16 %v10609
      %v10726 = vunpack.c.l.b16 %v10612
      %v10727 = vunpack.c.l.b16 %v10616
      %v10728 = vunpack.c.l.b16 %v10619
      %v10729 = vunpack.c.l.b16 %v10623
      %v10730 = vunpack.c.l.b16 %v10626
      %v10731 = vunpack.c.l.b16 %v10630
      %v10732 = vunpack.c.l.b16 %v10633
      %v10733 = vunpack.c.l.b16 %v10637
      %v10734 = vunpack.c.l.b16 %v10640
      %v10735 = vunpack.c.l.b16 %v10644
      %v10736 = vunpack.c.l.b16 %v10647
      %v10737 = vunpack.c.l.b16 %v10651
      %v10738 = vunpack.c.l.b16 %v10654
      %v10739 = vunpack.c.l.b16 %v10658
      %v10740 = vunpack.c.l.b16 %v10661
      %v10741 = vunpack.c.l.b16 %v10665
      %v10742 = vunpack.c.l.b16 %v10668
      %v10743 = vunpack.c.l.b16 %v10672
      %v10744 = vunpack.c.l.b16 %v10675
      %v10745 = vunpack.c.l.b16 %v10679
      %v10746 = vunpack.c.l.b16 %v10682
      %v10747 = vunpack.c.l.b16 %v10686
      %v10748 = vunpack.c.l.b16 %v10689
      %v10749 = vunpack.c.l.b16 %v10693
      %v10750 = vunpack.c.l.b16 %v10696
      %v10751 = vunpack.c.l.b16 %v10700
      %v10752 = vunpack.c.l.b16 %v10703
      %v10753 = vpack.c.b16 %v10722, %v10721
      %v10754 = vpack.c.b16 %v10724, %v10723
      %v10755 = vpack.c.b16 %v10726, %v10725
      %v10756 = vpack.c.b16 %v10728, %v10727
      %v10757 = vpack.c.b16 %v10730, %v10729
      %v10758 = vpack.c.b16 %v10732, %v10731
      %v10759 = vpack.c.b16 %v10734, %v10733
      %v10760 = vpack.c.b16 %v10736, %v10735
      %v10761 = vpack.c.b16 %v10738, %v10737
      %v10762 = vpack.c.b16 %v10740, %v10739
      %v10763 = vpack.c.b16 %v10742, %v10741
      %v10764 = vpack.c.b16 %v10744, %v10743
      %v10765 = vpack.c.b16 %v10746, %v10745
      %v10766 = vpack.c.b16 %v10748, %v10747
      %v10767 = vpack.c.b16 %v10750, %v10749
      %v10768 = vpack.c.b16 %v10752, %v10751
      %v10801 = vunpack.c.l.b16 %v10705
      %v10802 = vunpack.c.l.b16 %v10706
      %v10803 = vunpack.c.l.b16 %v10707
      %v10804 = vunpack.c.l.b16 %v10708
      %v10805 = vunpack.c.l.b16 %v10709
      %v10806 = vunpack.c.l.b16 %v10710
      %v10807 = vunpack.c.l.b16 %v10711
      %v10808 = vunpack.c.l.b16 %v10712
      %v10809 = vunpack.c.l.b16 %v10713
      %v10810 = vunpack.c.l.b16 %v10714
      %v10811 = vunpack.c.l.b16 %v10715
      %v10812 = vunpack.c.l.b16 %v10716
      %v10813 = vunpack.c.l.b16 %v10717
      %v10814 = vunpack.c.l.b16 %v10718
      %v10815 = vunpack.c.l.b16 %v10719
      %v10816 = vunpack.c.l.b16 %v10720
      %v10817 = vpack.c.b16 %v10802, %v10801
      %v10818 = vpack.c.b16 %v10804, %v10803
      %v10819 = vpack.c.b16 %v10806, %v10805
      %v10820 = vpack.c.b16 %v10808, %v10807
      %v10821 = vpack.c.b16 %v10810, %v10809
      %v10822 = vpack.c.b16 %v10812, %v10811
      %v10823 = vpack.c.b16 %v10814, %v10813
      %v10824 = vpack.c.b16 %v10816, %v10815
      %10833 = vmatprep.subr.bf16.mxu0 0
      %10834 = vmatpush1.bf16.msra.mxu0 %v10824
      %10835 = vmatprep.subr.bf16.mxu0 0
      %10836 = vmatpush1.bf16.msra.mxu0 %v10823
      %10837 = vmatprep.subr.bf16.mxu0 0
      %10838 = vmatpush1.bf16.msra.mxu0 %v10822
      %10839 = vmatprep.subr.bf16.mxu0 0
      %10840 = vmatpush1.bf16.msra.mxu0 %v10821
      %10841 = vmatprep.subr.bf16.mxu0 0
      %10842 = vmatpush1.bf16.msra.mxu0 %v10820
      %10843 = vmatprep.subr.bf16.mxu0 0
      %10844 = vmatpush1.bf16.msra.mxu0 %v10819
      %10845 = vmatprep.subr.bf16.mxu0 0
      %10846 = vmatpush1.bf16.msra.mxu0 %v10818
      %10847 = vmatprep.subr.bf16.mxu0 0
      %10848 = vmatpush1.bf16.msra.mxu0 %v10817
      %10849 = vmatprep.subr.bf16.mxu0 0
      %10850 = vmatpush2.bf16.msra.mxu0 0
      %10851 = vmatprep.subr.bf16.mxu0 0
      %10852 = vmatpush2.bf16.msra.mxu0 0
      %10853 = vmatprep.subr.bf16.mxu0 0
      %10854 = vmatpush2.bf16.msra.mxu0 0
      %10855 = vmatprep.subr.bf16.mxu0 0
      %10856 = vmatpush2.bf16.msra.mxu0 0
      %10857 = vmatprep.subr.bf16.mxu0 0
      %10858 = vmatpush2.bf16.msra.mxu0 0
      %10859 = vmatprep.subr.bf16.mxu0 0
      %10860 = vmatpush2.bf16.msra.mxu0 0
      %10861 = vmatprep.subr.bf16.mxu0 0
      %10862 = vmatpush2.bf16.msra.mxu0 0
      %10863 = vmatprep.subr.bf16.mxu0 0
      %10864 = vmatpush2.bf16.msra.mxu0 0
      %10865 = vmatprep.mubr.bf16.mxu0 0
      %10866 = vmatmul.mubr.bf16.gmra.mxu0 %v10753
      %v10867 = vpop.f32.mrf.mxu0
      %v10868 = vadd.f32 0.0, %v10867
      %v10869 = vpop.f32.mrf.mxu0
      %v10870 = vpop.f32.mrf.mxu0
      %v10871 = vadd.f32 0.0, %v10870
      %v10872 = vpop.f32.mrf.mxu0
      %10873 = vmatprep.mubr.bf16.mxu0 0
      %10874 = vmatmul.mubr.bf16.gmra.mxu0 %v10754
      %v10875 = vpop.f32.mrf.mxu0
      %v10876 = vadd.f32 0.0, %v10875
      %v10877 = vpop.f32.mrf.mxu0
      %v10878 = vpop.f32.mrf.mxu0
      %v10879 = vadd.f32 0.0, %v10878
      %v10880 = vpop.f32.mrf.mxu0
      %10881 = vmatprep.mubr.bf16.mxu0 0
      %10882 = vmatmul.mubr.bf16.gmra.mxu0 %v10755
      %v10883 = vpop.f32.mrf.mxu0
      %v10884 = vadd.f32 0.0, %v10883
      %v10885 = vpop.f32.mrf.mxu0
      %v10886 = vpop.f32.mrf.mxu0
      %v10887 = vadd.f32 0.0, %v10886
      %v10888 = vpop.f32.mrf.mxu0
      %10889 = vmatprep.mubr.bf16.mxu0 0
      %10890 = vmatmul.mubr.bf16.gmra.mxu0 %v10756
      %v10891 = vpop.f32.mrf.mxu0
      %v10892 = vadd.f32 0.0, %v10891
      %v10893 = vpop.f32.mrf.mxu0
      %v10894 = vpop.f32.mrf.mxu0
      %v10895 = vadd.f32 0.0, %v10894
      %v10896 = vpop.f32.mrf.mxu0
      %10897 = vmatprep.mubr.bf16.mxu0 0
      %10898 = vmatmul.mubr.bf16.gmra.mxu0 %v10757
      %v10899 = vpop.f32.mrf.mxu0
      %v10900 = vadd.f32 0.0, %v10899
      %v10901 = vpop.f32.mrf.mxu0
      %v10902 = vpop.f32.mrf.mxu0
      %v10903 = vadd.f32 0.0, %v10902
      %v10904 = vpop.f32.mrf.mxu0
      %10905 = vmatprep.mubr.bf16.mxu0 0
      %10906 = vmatmul.mubr.bf16.gmra.mxu0 %v10758
      %v10907 = vpop.f32.mrf.mxu0
      %v10908 = vadd.f32 0.0, %v10907
      %v10909 = vpop.f32.mrf.mxu0
      %v10910 = vpop.f32.mrf.mxu0
      %v10911 = vadd.f32 0.0, %v10910
      %v10912 = vpop.f32.mrf.mxu0
      %10913 = vmatprep.mubr.bf16.mxu0 0
      %10914 = vmatmul.mubr.bf16.gmra.mxu0 %v10759
      %v10915 = vpop.f32.mrf.mxu0
      %v10916 = vadd.f32 0.0, %v10915
      %v10917 = vpop.f32.mrf.mxu0
      %v10918 = vpop.f32.mrf.mxu0
      %v10919 = vadd.f32 0.0, %v10918
      %v10920 = vpop.f32.mrf.mxu0
      %10921 = vmatprep.mubr.bf16.mxu0 0
      %10922 = vmatmul.mubr.bf16.gmra.mxu0 %v10760
      %v10923 = vpop.f32.mrf.mxu0
      %v10924 = vadd.f32 0.0, %v10923
      %v10925 = vpop.f32.mrf.mxu0
      %v10926 = vpop.f32.mrf.mxu0
      %v10927 = vadd.f32 0.0, %v10926
      %v10928 = vpop.f32.mrf.mxu0
      %10929 = vmatprep.mubr.bf16.mxu0 0
      %10930 = vmatmul.mubr.bf16.gmra.mxu0 %v10761
      %v10931 = vpop.f32.mrf.mxu0
      %v10932 = vadd.f32 0.0, %v10931
      %v10933 = vpop.f32.mrf.mxu0
      %v10934 = vpop.f32.mrf.mxu0
      %v10935 = vadd.f32 0.0, %v10934
      %v10936 = vpop.f32.mrf.mxu0
      %10937 = vmatprep.mubr.bf16.mxu0 0
      %10938 = vmatmul.mubr.bf16.gmra.mxu0 %v10762
      %v10939 = vpop.f32.mrf.mxu0
      %v10940 = vadd.f32 0.0, %v10939
      %v10941 = vpop.f32.mrf.mxu0
      %v10942 = vpop.f32.mrf.mxu0
      %v10943 = vadd.f32 0.0, %v10942
      %v10944 = vpop.f32.mrf.mxu0
      %10945 = vmatprep.mubr.bf16.mxu0 0
      %10946 = vmatmul.mubr.bf16.gmra.mxu0 %v10763
      %v10947 = vpop.f32.mrf.mxu0
      %v10948 = vadd.f32 0.0, %v10947
      %v10949 = vpop.f32.mrf.mxu0
      %v10950 = vpop.f32.mrf.mxu0
      %v10951 = vadd.f32 0.0, %v10950
      %v10952 = vpop.f32.mrf.mxu0
      %10953 = vmatprep.mubr.bf16.mxu0 0
      %10954 = vmatmul.mubr.bf16.gmra.mxu0 %v10764
      %v10955 = vpop.f32.mrf.mxu0
      %v10956 = vadd.f32 0.0, %v10955
      %v10957 = vpop.f32.mrf.mxu0
      %v10958 = vpop.f32.mrf.mxu0
      %v10959 = vadd.f32 0.0, %v10958
      %v10960 = vpop.f32.mrf.mxu0
      %10961 = vmatprep.mubr.bf16.mxu0 0
      %10962 = vmatmul.mubr.bf16.gmra.mxu0 %v10765
      %v10963 = vpop.f32.mrf.mxu0
      %v10964 = vadd.f32 0.0, %v10963
      %v10965 = vpop.f32.mrf.mxu0
      %v10966 = vpop.f32.mrf.mxu0
      %v10967 = vadd.f32 0.0, %v10966
      %v10968 = vpop.f32.mrf.mxu0
      %10969 = vmatprep.mubr.bf16.mxu0 0
      %10970 = vmatmul.mubr.bf16.gmra.mxu0 %v10766
      %v10971 = vpop.f32.mrf.mxu0
      %v10972 = vadd.f32 0.0, %v10971
      %v10973 = vpop.f32.mrf.mxu0
      %v10974 = vpop.f32.mrf.mxu0
      %v10975 = vadd.f32 0.0, %v10974
      %v10976 = vpop.f32.mrf.mxu0
      %10977 = vmatprep.mubr.bf16.mxu0 0
      %10978 = vmatmul.mubr.bf16.gmra.mxu0 %v10767
      %v10979 = vpop.f32.mrf.mxu0
      %v10980 = vadd.f32 0.0, %v10979
      %v10981 = vpop.f32.mrf.mxu0
      %v10982 = vpop.f32.mrf.mxu0
      %v10983 = vadd.f32 0.0, %v10982
      %v10984 = vpop.f32.mrf.mxu0
      %10985 = vmatprep.mubr.bf16.mxu0 0
      %10986 = vmatmul.mubr.bf16.gmra.mxu0 %v10768
      %v10987 = vpop.f32.mrf.mxu0
      %v10988 = vadd.f32 0.0, %v10987
      %v10989 = vpop.f32.mrf.mxu0
      %v10990 = vpop.f32.mrf.mxu0
      %v10991 = vadd.f32 0.0, %v10990
      %v10992 = vpop.f32.mrf.mxu0
      %10993 = vdwg.mxu0
      %v10994 = vadd.f32 %v10496, %v10868
      %v10995 = vadd.f32 %v10497, %v10871
      %v10996 = vadd.f32 %v10498, %v10876
      %v10997 = vadd.f32 %v10499, %v10879
      %v10998 = vadd.f32 %v10500, %v10884
      %v10999 = vadd.f32 %v10501, %v10887
      %v11000 = vadd.f32 %v10502, %v10892
      %v11001 = vadd.f32 %v10503, %v10895
      %v11002 = vadd.f32 %v10504, %v10900
      %v11003 = vadd.f32 %v10505, %v10903
      %v11004 = vadd.f32 %v10506, %v10908
      %v11005 = vadd.f32 %v10507, %v10911
      %v11006 = vadd.f32 %v10508, %v10916
      %v11007 = vadd.f32 %v10509, %v10919
      %v11008 = vadd.f32 %v10510, %v10924
      %v11009 = vadd.f32 %v10511, %v10927
      %v11010 = vadd.f32 %v10512, %v10932
      %v11011 = vadd.f32 %v10513, %v10935
      %v11012 = vadd.f32 %v10514, %v10940
      %v11013 = vadd.f32 %v10515, %v10943
      %v11014 = vadd.f32 %v10516, %v10948
      %v11015 = vadd.f32 %v10517, %v10951
      %v11016 = vadd.f32 %v10518, %v10956
      %v11017 = vadd.f32 %v10519, %v10959
      %v11018 = vadd.f32 %v10520, %v10964
      %v11019 = vadd.f32 %v10521, %v10967
      %v11020 = vadd.f32 %v10522, %v10972
      %v11021 = vadd.f32 %v10523, %v10975
      %v11022 = vadd.f32 %v10524, %v10980
      %v11023 = vadd.f32 %v10525, %v10983
      %v11024 = vadd.f32 %v10526, %v10988
      %v11025 = vadd.f32 %v10527, %v10991
      %v11026 = vld [vmem:[%s5] sm:$0x1]
      %v11028 = vlaneseq
      %v11029 = vshrl.u32 %v11028, 7
      %v11030 = vsub.s32 0, %v11029
      %v11031 = vrot.slane %v11026, %v11030
      %v11033 = vmul.f32 %v10994, %v11031
      %v11034 = vmul.f32 %v10995, %v11031
      %v11035 = vmul.f32 %v10996, %v11031
      %v11036 = vmul.f32 %v10997, %v11031
      %v11037 = vmul.f32 %v10998, %v11031
      %v11038 = vmul.f32 %v10999, %v11031
      %v11039 = vmul.f32 %v11000, %v11031
      %v11040 = vmul.f32 %v11001, %v11031
      %v11041 = vmul.f32 %v11002, %v11031
      %v11042 = vmul.f32 %v11003, %v11031
      %v11043 = vmul.f32 %v11004, %v11031
      %v11044 = vmul.f32 %v11005, %v11031
      %v11045 = vmul.f32 %v11006, %v11031
      %v11046 = vmul.f32 %v11007, %v11031
      %v11047 = vmul.f32 %v11008, %v11031
      %v11048 = vmul.f32 %v11009, %v11031
      %v11049 = vmul.f32 %v11010, %v11031
      %v11050 = vmul.f32 %v11011, %v11031
      %v11051 = vmul.f32 %v11012, %v11031
      %v11052 = vmul.f32 %v11013, %v11031
      %v11053 = vmul.f32 %v11014, %v11031
      %v11054 = vmul.f32 %v11015, %v11031
      %v11055 = vmul.f32 %v11016, %v11031
      %v11056 = vmul.f32 %v11017, %v11031
      %v11057 = vmul.f32 %v11018, %v11031
      %v11058 = vmul.f32 %v11019, %v11031
      %v11059 = vmul.f32 %v11020, %v11031
      %v11060 = vmul.f32 %v11021, %v11031
      %v11061 = vmul.f32 %v11022, %v11031
      %v11062 = vmul.f32 %v11023, %v11031
      %v11063 = vmul.f32 %v11024, %v11031
      %v11064 = vmul.f32 %v11025, %v11031
      %v11065 = vld [vmem:[%s6] sm:$0x1]
      %v11067 = vlaneseq
      %v11068 = vshrl.u32 %v11067, 7
      %v11069 = vsub.s32 0, %v11068
      %v11070 = vrot.slane %v11065, %v11069
      %v11072 = vadd.f32 %v11033, %v11070
      %v11073 = vadd.f32 %v11034, %v11070
      %v11074 = vadd.f32 %v11035, %v11070
      %v11075 = vadd.f32 %v11036, %v11070
      %v11076 = vadd.f32 %v11037, %v11070
      %v11077 = vadd.f32 %v11038, %v11070
      %v11078 = vadd.f32 %v11039, %v11070
      %v11079 = vadd.f32 %v11040, %v11070
      %v11080 = vadd.f32 %v11041, %v11070
      %v11081 = vadd.f32 %v11042, %v11070
      %v11082 = vadd.f32 %v11043, %v11070
      %v11083 = vadd.f32 %v11044, %v11070
      %v11084 = vadd.f32 %v11045, %v11070
      %v11085 = vadd.f32 %v11046, %v11070
      %v11086 = vadd.f32 %v11047, %v11070
      %v11087 = vadd.f32 %v11048, %v11070
      %v11088 = vadd.f32 %v11049, %v11070
      %v11089 = vadd.f32 %v11050, %v11070
      %v11090 = vadd.f32 %v11051, %v11070
      %v11091 = vadd.f32 %v11052, %v11070
      %v11092 = vadd.f32 %v11053, %v11070
      %v11093 = vadd.f32 %v11054, %v11070
      %v11094 = vadd.f32 %v11055, %v11070
      %v11095 = vadd.f32 %v11056, %v11070
      %v11096 = vadd.f32 %v11057, %v11070
      %v11097 = vadd.f32 %v11058, %v11070
      %v11098 = vadd.f32 %v11059, %v11070
      %v11099 = vadd.f32 %v11060, %v11070
      %v11100 = vadd.f32 %v11061, %v11070
      %v11101 = vadd.f32 %v11062, %v11070
      %v11102 = vadd.f32 %v11063, %v11070
      %v11103 = vadd.f32 %v11064, %v11070
      %vm11104 = vcmp.gt.f32.partialorder %v11072, 0.0
      %vm11105 = vcmp.gt.f32.partialorder %v11073, 0.0
      %vm11106 = vcmp.gt.f32.partialorder %v11074, 0.0
      %vm11107 = vcmp.gt.f32.partialorder %v11075, 0.0
      %vm11108 = vcmp.gt.f32.partialorder %v11076, 0.0
      %vm11109 = vcmp.gt.f32.partialorder %v11077, 0.0
      %vm11110 = vcmp.gt.f32.partialorder %v11078, 0.0
      %vm11111 = vcmp.gt.f32.partialorder %v11079, 0.0
      %vm11112 = vcmp.gt.f32.partialorder %v11080, 0.0
      %vm11113 = vcmp.gt.f32.partialorder %v11081, 0.0
      %vm11114 = vcmp.gt.f32.partialorder %v11082, 0.0
      %vm11115 = vcmp.gt.f32.partialorder %v11083, 0.0
      %vm11116 = vcmp.gt.f32.partialorder %v11084, 0.0
      %vm11117 = vcmp.gt.f32.partialorder %v11085, 0.0
      %vm11118 = vcmp.gt.f32.partialorder %v11086, 0.0
      %vm11119 = vcmp.gt.f32.partialorder %v11087, 0.0
      %vm11120 = vcmp.gt.f32.partialorder %v11088, 0.0
      %vm11121 = vcmp.gt.f32.partialorder %v11089, 0.0
      %vm11122 = vcmp.gt.f32.partialorder %v11090, 0.0
      %vm11123 = vcmp.gt.f32.partialorder %v11091, 0.0
      %vm11124 = vcmp.gt.f32.partialorder %v11092, 0.0
      %vm11125 = vcmp.gt.f32.partialorder %v11093, 0.0
      %vm11126 = vcmp.gt.f32.partialorder %v11094, 0.0
      %vm11127 = vcmp.gt.f32.partialorder %v11095, 0.0
      %vm11128 = vcmp.gt.f32.partialorder %v11096, 0.0
      %vm11129 = vcmp.gt.f32.partialorder %v11097, 0.0
      %vm11130 = vcmp.gt.f32.partialorder %v11098, 0.0
      %vm11131 = vcmp.gt.f32.partialorder %v11099, 0.0
      %vm11132 = vcmp.gt.f32.partialorder %v11100, 0.0
      %vm11133 = vcmp.gt.f32.partialorder %v11101, 0.0
      %vm11134 = vcmp.gt.f32.partialorder %v11102, 0.0
      %vm11135 = vcmp.gt.f32.partialorder %v11103, 0.0
      %v11136 = vmul.f32 %v11072, 0.01
      %v11137 = vmul.f32 %v11073, 0.01
      %v11138 = vmul.f32 %v11074, 0.01
      %v11139 = vmul.f32 %v11075, 0.01
      %v11140 = vmul.f32 %v11076, 0.01
      %v11141 = vmul.f32 %v11077, 0.01
      %v11142 = vmul.f32 %v11078, 0.01
      %v11143 = vmul.f32 %v11079, 0.01
      %v11144 = vmul.f32 %v11080, 0.01
      %v11145 = vmul.f32 %v11081, 0.01
      %v11146 = vmul.f32 %v11082, 0.01
      %v11147 = vmul.f32 %v11083, 0.01
      %v11148 = vmul.f32 %v11084, 0.01
      %v11149 = vmul.f32 %v11085, 0.01
      %v11150 = vmul.f32 %v11086, 0.01
      %v11151 = vmul.f32 %v11087, 0.01
      %v11152 = vmul.f32 %v11088, 0.01
      %v11153 = vmul.f32 %v11089, 0.01
      %v11154 = vmul.f32 %v11090, 0.01
      %v11155 = vmul.f32 %v11091, 0.01
      %v11156 = vmul.f32 %v11092, 0.01
      %v11157 = vmul.f32 %v11093, 0.01
      %v11158 = vmul.f32 %v11094, 0.01
      %v11159 = vmul.f32 %v11095, 0.01
      %v11160 = vmul.f32 %v11096, 0.01
      %v11161 = vmul.f32 %v11097, 0.01
      %v11162 = vmul.f32 %v11098, 0.01
      %v11163 = vmul.f32 %v11099, 0.01
      %v11164 = vmul.f32 %v11100, 0.01
      %v11165 = vmul.f32 %v11101, 0.01
      %v11166 = vmul.f32 %v11102, 0.01
      %v11167 = vmul.f32 %v11103, 0.01
      %v11168 = vsel %vm11104, %v11072, %v11136
      %v11169 = vsel %vm11105, %v11073, %v11137
      %v11170 = vsel %vm11106, %v11074, %v11138
      %v11171 = vsel %vm11107, %v11075, %v11139
      %v11172 = vsel %vm11108, %v11076, %v11140
      %v11173 = vsel %vm11109, %v11077, %v11141
      %v11174 = vsel %vm11110, %v11078, %v11142
      %v11175 = vsel %vm11111, %v11079, %v11143
      %v11176 = vsel %vm11112, %v11080, %v11144
      %v11177 = vsel %vm11113, %v11081, %v11145
      %v11178 = vsel %vm11114, %v11082, %v11146
      %v11179 = vsel %vm11115, %v11083, %v11147
      %v11180 = vsel %vm11116, %v11084, %v11148
      %v11181 = vsel %vm11117, %v11085, %v11149
      %v11182 = vsel %vm11118, %v11086, %v11150
      %v11183 = vsel %vm11119, %v11087, %v11151
      %v11184 = vsel %vm11120, %v11088, %v11152
      %v11185 = vsel %vm11121, %v11089, %v11153
      %v11186 = vsel %vm11122, %v11090, %v11154
      %v11187 = vsel %vm11123, %v11091, %v11155
      %v11188 = vsel %vm11124, %v11092, %v11156
      %v11189 = vsel %vm11125, %v11093, %v11157
      %v11190 = vsel %vm11126, %v11094, %v11158
      %v11191 = vsel %vm11127, %v11095, %v11159
      %v11192 = vsel %vm11128, %v11096, %v11160
      %v11193 = vsel %vm11129, %v11097, %v11161
      %v11194 = vsel %vm11130, %v11098, %v11162
      %v11195 = vsel %vm11131, %v11099, %v11163
      %v11196 = vsel %vm11132, %v11100, %v11164
      %v11197 = vsel %vm11133, %v11101, %v11165
      %v11198 = vsel %vm11134, %v11102, %v11166
      %v11199 = vsel %vm11135, %v11103, %v11167
      %v11232 = vcombine.high %v11168, %v11168
      %v11234 = vunpack.c.l.s4 1983009808
      %v11235 = vunpack.c.0.s8 %v11234
      %v11236 = vlaneseq
      %v11237 = vshrl.u32 %v11236, 7
      %v11238 = vsub.s32 %v11235, %v11237
      %v11239 = vrot.slane %v11168, %v11238
      %v11241 = vunpack.c.l.s4 1983009808
      %v11242 = vunpack.c.0.s8 %v11241
      %v11243 = vlaneseq
      %v11244 = vshrl.u32 %v11243, 7
      %v11245 = vsub.s32 %v11242, %v11244
      %v11246 = vrot.slane %v11232, %v11245
      %v11247 = vcombine.high %v11239, %v11239
      %v11248 = vcombine.high %v11246, %v11246
      %v11249 = vcombine.high %v11169, %v11169
      %v11251 = vunpack.c.l.s4 1983009808
      %v11252 = vunpack.c.0.s8 %v11251
      %v11253 = vlaneseq
      %v11254 = vshrl.u32 %v11253, 7
      %v11255 = vsub.s32 %v11252, %v11254
      %v11256 = vrot.slane %v11169, %v11255
      %v11258 = vunpack.c.l.s4 1983009808
      %v11259 = vunpack.c.0.s8 %v11258
      %v11260 = vlaneseq
      %v11261 = vshrl.u32 %v11260, 7
      %v11262 = vsub.s32 %v11259, %v11261
      %v11263 = vrot.slane %v11249, %v11262
      %v11264 = vcombine.high %v11256, %v11256
      %v11265 = vcombine.high %v11263, %v11263
      %v11266 = vcombine.high %v11170, %v11170
      %v11268 = vunpack.c.l.s4 1983009808
      %v11269 = vunpack.c.0.s8 %v11268
      %v11270 = vlaneseq
      %v11271 = vshrl.u32 %v11270, 7
      %v11272 = vsub.s32 %v11269, %v11271
      %v11273 = vrot.slane %v11170, %v11272
      %v11275 = vunpack.c.l.s4 1983009808
      %v11276 = vunpack.c.0.s8 %v11275
      %v11277 = vlaneseq
      %v11278 = vshrl.u32 %v11277, 7
      %v11279 = vsub.s32 %v11276, %v11278
      %v11280 = vrot.slane %v11266, %v11279
      %v11281 = vcombine.high %v11273, %v11273
      %v11282 = vcombine.high %v11280, %v11280
      %v11283 = vcombine.high %v11171, %v11171
      %v11285 = vunpack.c.l.s4 1983009808
      %v11286 = vunpack.c.0.s8 %v11285
      %v11287 = vlaneseq
      %v11288 = vshrl.u32 %v11287, 7
      %v11289 = vsub.s32 %v11286, %v11288
      %v11290 = vrot.slane %v11171, %v11289
      %v11292 = vunpack.c.l.s4 1983009808
      %v11293 = vunpack.c.0.s8 %v11292
      %v11294 = vlaneseq
      %v11295 = vshrl.u32 %v11294, 7
      %v11296 = vsub.s32 %v11293, %v11295
      %v11297 = vrot.slane %v11283, %v11296
      %v11298 = vcombine.high %v11290, %v11290
      %v11299 = vcombine.high %v11297, %v11297
      %v11300 = vcombine.high %v11172, %v11172
      %v11302 = vunpack.c.l.s4 1983009808
      %v11303 = vunpack.c.0.s8 %v11302
      %v11304 = vlaneseq
      %v11305 = vshrl.u32 %v11304, 7
      %v11306 = vsub.s32 %v11303, %v11305
      %v11307 = vrot.slane %v11172, %v11306
      %v11309 = vunpack.c.l.s4 1983009808
      %v11310 = vunpack.c.0.s8 %v11309
      %v11311 = vlaneseq
      %v11312 = vshrl.u32 %v11311, 7
      %v11313 = vsub.s32 %v11310, %v11312
      %v11314 = vrot.slane %v11300, %v11313
      %v11315 = vcombine.high %v11307, %v11307
      %v11316 = vcombine.high %v11314, %v11314
      %v11317 = vcombine.high %v11173, %v11173
      %v11319 = vunpack.c.l.s4 1983009808
      %v11320 = vunpack.c.0.s8 %v11319
      %v11321 = vlaneseq
      %v11322 = vshrl.u32 %v11321, 7
      %v11323 = vsub.s32 %v11320, %v11322
      %v11324 = vrot.slane %v11173, %v11323
      %v11326 = vunpack.c.l.s4 1983009808
      %v11327 = vunpack.c.0.s8 %v11326
      %v11328 = vlaneseq
      %v11329 = vshrl.u32 %v11328, 7
      %v11330 = vsub.s32 %v11327, %v11329
      %v11331 = vrot.slane %v11317, %v11330
      %v11332 = vcombine.high %v11324, %v11324
      %v11333 = vcombine.high %v11331, %v11331
      %v11334 = vcombine.high %v11174, %v11174
      %v11336 = vunpack.c.l.s4 1983009808
      %v11337 = vunpack.c.0.s8 %v11336
      %v11338 = vlaneseq
      %v11339 = vshrl.u32 %v11338, 7
      %v11340 = vsub.s32 %v11337, %v11339
      %v11341 = vrot.slane %v11174, %v11340
      %v11343 = vunpack.c.l.s4 1983009808
      %v11344 = vunpack.c.0.s8 %v11343
      %v11345 = vlaneseq
      %v11346 = vshrl.u32 %v11345, 7
      %v11347 = vsub.s32 %v11344, %v11346
      %v11348 = vrot.slane %v11334, %v11347
      %v11349 = vcombine.high %v11341, %v11341
      %v11350 = vcombine.high %v11348, %v11348
      %v11351 = vcombine.high %v11175, %v11175
      %v11353 = vunpack.c.l.s4 1983009808
      %v11354 = vunpack.c.0.s8 %v11353
      %v11355 = vlaneseq
      %v11356 = vshrl.u32 %v11355, 7
      %v11357 = vsub.s32 %v11354, %v11356
      %v11358 = vrot.slane %v11175, %v11357
      %v11360 = vunpack.c.l.s4 1983009808
      %v11361 = vunpack.c.0.s8 %v11360
      %v11362 = vlaneseq
      %v11363 = vshrl.u32 %v11362, 7
      %v11364 = vsub.s32 %v11361, %v11363
      %v11365 = vrot.slane %v11351, %v11364
      %v11366 = vcombine.high %v11358, %v11358
      %v11367 = vcombine.high %v11365, %v11365
      %v11368 = vcombine.high %v11176, %v11176
      %v11370 = vunpack.c.l.s4 1983009808
      %v11371 = vunpack.c.0.s8 %v11370
      %v11372 = vlaneseq
      %v11373 = vshrl.u32 %v11372, 7
      %v11374 = vsub.s32 %v11371, %v11373
      %v11375 = vrot.slane %v11176, %v11374
      %v11377 = vunpack.c.l.s4 1983009808
      %v11378 = vunpack.c.0.s8 %v11377
      %v11379 = vlaneseq
      %v11380 = vshrl.u32 %v11379, 7
      %v11381 = vsub.s32 %v11378, %v11380
      %v11382 = vrot.slane %v11368, %v11381
      %v11383 = vcombine.high %v11375, %v11375
      %v11384 = vcombine.high %v11382, %v11382
      %v11385 = vcombine.high %v11177, %v11177
      %v11387 = vunpack.c.l.s4 1983009808
      %v11388 = vunpack.c.0.s8 %v11387
      %v11389 = vlaneseq
      %v11390 = vshrl.u32 %v11389, 7
      %v11391 = vsub.s32 %v11388, %v11390
      %v11392 = vrot.slane %v11177, %v11391
      %v11394 = vunpack.c.l.s4 1983009808
      %v11395 = vunpack.c.0.s8 %v11394
      %v11396 = vlaneseq
      %v11397 = vshrl.u32 %v11396, 7
      %v11398 = vsub.s32 %v11395, %v11397
      %v11399 = vrot.slane %v11385, %v11398
      %v11400 = vcombine.high %v11392, %v11392
      %v11401 = vcombine.high %v11399, %v11399
      %v11402 = vcombine.high %v11178, %v11178
      %v11404 = vunpack.c.l.s4 1983009808
      %v11405 = vunpack.c.0.s8 %v11404
      %v11406 = vlaneseq
      %v11407 = vshrl.u32 %v11406, 7
      %v11408 = vsub.s32 %v11405, %v11407
      %v11409 = vrot.slane %v11178, %v11408
      %v11411 = vunpack.c.l.s4 1983009808
      %v11412 = vunpack.c.0.s8 %v11411
      %v11413 = vlaneseq
      %v11414 = vshrl.u32 %v11413, 7
      %v11415 = vsub.s32 %v11412, %v11414
      %v11416 = vrot.slane %v11402, %v11415
      %v11417 = vcombine.high %v11409, %v11409
      %v11418 = vcombine.high %v11416, %v11416
      %v11419 = vcombine.high %v11179, %v11179
      %v11421 = vunpack.c.l.s4 1983009808
      %v11422 = vunpack.c.0.s8 %v11421
      %v11423 = vlaneseq
      %v11424 = vshrl.u32 %v11423, 7
      %v11425 = vsub.s32 %v11422, %v11424
      %v11426 = vrot.slane %v11179, %v11425
      %v11428 = vunpack.c.l.s4 1983009808
      %v11429 = vunpack.c.0.s8 %v11428
      %v11430 = vlaneseq
      %v11431 = vshrl.u32 %v11430, 7
      %v11432 = vsub.s32 %v11429, %v11431
      %v11433 = vrot.slane %v11419, %v11432
      %v11434 = vcombine.high %v11426, %v11426
      %v11435 = vcombine.high %v11433, %v11433
      %v11436 = vcombine.high %v11180, %v11180
      %v11438 = vunpack.c.l.s4 1983009808
      %v11439 = vunpack.c.0.s8 %v11438
      %v11440 = vlaneseq
      %v11441 = vshrl.u32 %v11440, 7
      %v11442 = vsub.s32 %v11439, %v11441
      %v11443 = vrot.slane %v11180, %v11442
      %v11445 = vunpack.c.l.s4 1983009808
      %v11446 = vunpack.c.0.s8 %v11445
      %v11447 = vlaneseq
      %v11448 = vshrl.u32 %v11447, 7
      %v11449 = vsub.s32 %v11446, %v11448
      %v11450 = vrot.slane %v11436, %v11449
      %v11451 = vcombine.high %v11443, %v11443
      %v11452 = vcombine.high %v11450, %v11450
      %v11453 = vcombine.high %v11181, %v11181
      %v11455 = vunpack.c.l.s4 1983009808
      %v11456 = vunpack.c.0.s8 %v11455
      %v11457 = vlaneseq
      %v11458 = vshrl.u32 %v11457, 7
      %v11459 = vsub.s32 %v11456, %v11458
      %v11460 = vrot.slane %v11181, %v11459
      %v11462 = vunpack.c.l.s4 1983009808
      %v11463 = vunpack.c.0.s8 %v11462
      %v11464 = vlaneseq
      %v11465 = vshrl.u32 %v11464, 7
      %v11466 = vsub.s32 %v11463, %v11465
      %v11467 = vrot.slane %v11453, %v11466
      %v11468 = vcombine.high %v11460, %v11460
      %v11469 = vcombine.high %v11467, %v11467
      %v11470 = vcombine.high %v11182, %v11182
      %v11472 = vunpack.c.l.s4 1983009808
      %v11473 = vunpack.c.0.s8 %v11472
      %v11474 = vlaneseq
      %v11475 = vshrl.u32 %v11474, 7
      %v11476 = vsub.s32 %v11473, %v11475
      %v11477 = vrot.slane %v11182, %v11476
      %v11479 = vunpack.c.l.s4 1983009808
      %v11480 = vunpack.c.0.s8 %v11479
      %v11481 = vlaneseq
      %v11482 = vshrl.u32 %v11481, 7
      %v11483 = vsub.s32 %v11480, %v11482
      %v11484 = vrot.slane %v11470, %v11483
      %v11485 = vcombine.high %v11477, %v11477
      %v11486 = vcombine.high %v11484, %v11484
      %v11487 = vcombine.high %v11183, %v11183
      %v11489 = vunpack.c.l.s4 1983009808
      %v11490 = vunpack.c.0.s8 %v11489
      %v11491 = vlaneseq
      %v11492 = vshrl.u32 %v11491, 7
      %v11493 = vsub.s32 %v11490, %v11492
      %v11494 = vrot.slane %v11183, %v11493
      %v11496 = vunpack.c.l.s4 1983009808
      %v11497 = vunpack.c.0.s8 %v11496
      %v11498 = vlaneseq
      %v11499 = vshrl.u32 %v11498, 7
      %v11500 = vsub.s32 %v11497, %v11499
      %v11501 = vrot.slane %v11487, %v11500
      %v11502 = vcombine.high %v11494, %v11494
      %v11503 = vcombine.high %v11501, %v11501
      %v11504 = vcombine.high %v11184, %v11184
      %v11506 = vunpack.c.l.s4 1983009808
      %v11507 = vunpack.c.0.s8 %v11506
      %v11508 = vlaneseq
      %v11509 = vshrl.u32 %v11508, 7
      %v11510 = vsub.s32 %v11507, %v11509
      %v11511 = vrot.slane %v11184, %v11510
      %v11513 = vunpack.c.l.s4 1983009808
      %v11514 = vunpack.c.0.s8 %v11513
      %v11515 = vlaneseq
      %v11516 = vshrl.u32 %v11515, 7
      %v11517 = vsub.s32 %v11514, %v11516
      %v11518 = vrot.slane %v11504, %v11517
      %v11519 = vcombine.high %v11511, %v11511
      %v11520 = vcombine.high %v11518, %v11518
      %v11521 = vcombine.high %v11185, %v11185
      %v11523 = vunpack.c.l.s4 1983009808
      %v11524 = vunpack.c.0.s8 %v11523
      %v11525 = vlaneseq
      %v11526 = vshrl.u32 %v11525, 7
      %v11527 = vsub.s32 %v11524, %v11526
      %v11528 = vrot.slane %v11185, %v11527
      %v11530 = vunpack.c.l.s4 1983009808
      %v11531 = vunpack.c.0.s8 %v11530
      %v11532 = vlaneseq
      %v11533 = vshrl.u32 %v11532, 7
      %v11534 = vsub.s32 %v11531, %v11533
      %v11535 = vrot.slane %v11521, %v11534
      %v11536 = vcombine.high %v11528, %v11528
      %v11537 = vcombine.high %v11535, %v11535
      %v11538 = vcombine.high %v11186, %v11186
      %v11540 = vunpack.c.l.s4 1983009808
      %v11541 = vunpack.c.0.s8 %v11540
      %v11542 = vlaneseq
      %v11543 = vshrl.u32 %v11542, 7
      %v11544 = vsub.s32 %v11541, %v11543
      %v11545 = vrot.slane %v11186, %v11544
      %v11547 = vunpack.c.l.s4 1983009808
      %v11548 = vunpack.c.0.s8 %v11547
      %v11549 = vlaneseq
      %v11550 = vshrl.u32 %v11549, 7
      %v11551 = vsub.s32 %v11548, %v11550
      %v11552 = vrot.slane %v11538, %v11551
      %v11553 = vcombine.high %v11545, %v11545
      %v11554 = vcombine.high %v11552, %v11552
      %v11555 = vcombine.high %v11187, %v11187
      %v11557 = vunpack.c.l.s4 1983009808
      %v11558 = vunpack.c.0.s8 %v11557
      %v11559 = vlaneseq
      %v11560 = vshrl.u32 %v11559, 7
      %v11561 = vsub.s32 %v11558, %v11560
      %v11562 = vrot.slane %v11187, %v11561
      %v11564 = vunpack.c.l.s4 1983009808
      %v11565 = vunpack.c.0.s8 %v11564
      %v11566 = vlaneseq
      %v11567 = vshrl.u32 %v11566, 7
      %v11568 = vsub.s32 %v11565, %v11567
      %v11569 = vrot.slane %v11555, %v11568
      %v11570 = vcombine.high %v11562, %v11562
      %v11571 = vcombine.high %v11569, %v11569
      %v11572 = vcombine.high %v11188, %v11188
      %v11574 = vunpack.c.l.s4 1983009808
      %v11575 = vunpack.c.0.s8 %v11574
      %v11576 = vlaneseq
      %v11577 = vshrl.u32 %v11576, 7
      %v11578 = vsub.s32 %v11575, %v11577
      %v11579 = vrot.slane %v11188, %v11578
      %v11581 = vunpack.c.l.s4 1983009808
      %v11582 = vunpack.c.0.s8 %v11581
      %v11583 = vlaneseq
      %v11584 = vshrl.u32 %v11583, 7
      %v11585 = vsub.s32 %v11582, %v11584
      %v11586 = vrot.slane %v11572, %v11585
      %v11587 = vcombine.high %v11579, %v11579
      %v11588 = vcombine.high %v11586, %v11586
      %v11589 = vcombine.high %v11189, %v11189
      %v11591 = vunpack.c.l.s4 1983009808
      %v11592 = vunpack.c.0.s8 %v11591
      %v11593 = vlaneseq
      %v11594 = vshrl.u32 %v11593, 7
      %v11595 = vsub.s32 %v11592, %v11594
      %v11596 = vrot.slane %v11189, %v11595
      %v11598 = vunpack.c.l.s4 1983009808
      %v11599 = vunpack.c.0.s8 %v11598
      %v11600 = vlaneseq
      %v11601 = vshrl.u32 %v11600, 7
      %v11602 = vsub.s32 %v11599, %v11601
      %v11603 = vrot.slane %v11589, %v11602
      %v11604 = vcombine.high %v11596, %v11596
      %v11605 = vcombine.high %v11603, %v11603
      %v11606 = vcombine.high %v11190, %v11190
      %v11608 = vunpack.c.l.s4 1983009808
      %v11609 = vunpack.c.0.s8 %v11608
      %v11610 = vlaneseq
      %v11611 = vshrl.u32 %v11610, 7
      %v11612 = vsub.s32 %v11609, %v11611
      %v11613 = vrot.slane %v11190, %v11612
      %v11615 = vunpack.c.l.s4 1983009808
      %v11616 = vunpack.c.0.s8 %v11615
      %v11617 = vlaneseq
      %v11618 = vshrl.u32 %v11617, 7
      %v11619 = vsub.s32 %v11616, %v11618
      %v11620 = vrot.slane %v11606, %v11619
      %v11621 = vcombine.high %v11613, %v11613
      %v11622 = vcombine.high %v11620, %v11620
      %v11623 = vcombine.high %v11191, %v11191
      %v11625 = vunpack.c.l.s4 1983009808
      %v11626 = vunpack.c.0.s8 %v11625
      %v11627 = vlaneseq
      %v11628 = vshrl.u32 %v11627, 7
      %v11629 = vsub.s32 %v11626, %v11628
      %v11630 = vrot.slane %v11191, %v11629
      %v11632 = vunpack.c.l.s4 1983009808
      %v11633 = vunpack.c.0.s8 %v11632
      %v11634 = vlaneseq
      %v11635 = vshrl.u32 %v11634, 7
      %v11636 = vsub.s32 %v11633, %v11635
      %v11637 = vrot.slane %v11623, %v11636
      %v11638 = vcombine.high %v11630, %v11630
      %v11639 = vcombine.high %v11637, %v11637
      %v11640 = vcombine.high %v11192, %v11192
      %v11642 = vunpack.c.l.s4 1983009808
      %v11643 = vunpack.c.0.s8 %v11642
      %v11644 = vlaneseq
      %v11645 = vshrl.u32 %v11644, 7
      %v11646 = vsub.s32 %v11643, %v11645
      %v11647 = vrot.slane %v11192, %v11646
      %v11649 = vunpack.c.l.s4 1983009808
      %v11650 = vunpack.c.0.s8 %v11649
      %v11651 = vlaneseq
      %v11652 = vshrl.u32 %v11651, 7
      %v11653 = vsub.s32 %v11650, %v11652
      %v11654 = vrot.slane %v11640, %v11653
      %v11655 = vcombine.high %v11647, %v11647
      %v11656 = vcombine.high %v11654, %v11654
      %v11657 = vcombine.high %v11193, %v11193
      %v11659 = vunpack.c.l.s4 1983009808
      %v11660 = vunpack.c.0.s8 %v11659
      %v11661 = vlaneseq
      %v11662 = vshrl.u32 %v11661, 7
      %v11663 = vsub.s32 %v11660, %v11662
      %v11664 = vrot.slane %v11193, %v11663
      %v11666 = vunpack.c.l.s4 1983009808
      %v11667 = vunpack.c.0.s8 %v11666
      %v11668 = vlaneseq
      %v11669 = vshrl.u32 %v11668, 7
      %v11670 = vsub.s32 %v11667, %v11669
      %v11671 = vrot.slane %v11657, %v11670
      %v11672 = vcombine.high %v11664, %v11664
      %v11673 = vcombine.high %v11671, %v11671
      %v11674 = vcombine.high %v11194, %v11194
      %v11676 = vunpack.c.l.s4 1983009808
      %v11677 = vunpack.c.0.s8 %v11676
      %v11678 = vlaneseq
      %v11679 = vshrl.u32 %v11678, 7
      %v11680 = vsub.s32 %v11677, %v11679
      %v11681 = vrot.slane %v11194, %v11680
      %v11683 = vunpack.c.l.s4 1983009808
      %v11684 = vunpack.c.0.s8 %v11683
      %v11685 = vlaneseq
      %v11686 = vshrl.u32 %v11685, 7
      %v11687 = vsub.s32 %v11684, %v11686
      %v11688 = vrot.slane %v11674, %v11687
      %v11689 = vcombine.high %v11681, %v11681
      %v11690 = vcombine.high %v11688, %v11688
      %v11691 = vcombine.high %v11195, %v11195
      %v11693 = vunpack.c.l.s4 1983009808
      %v11694 = vunpack.c.0.s8 %v11693
      %v11695 = vlaneseq
      %v11696 = vshrl.u32 %v11695, 7
      %v11697 = vsub.s32 %v11694, %v11696
      %v11698 = vrot.slane %v11195, %v11697
      %v11700 = vunpack.c.l.s4 1983009808
      %v11701 = vunpack.c.0.s8 %v11700
      %v11702 = vlaneseq
      %v11703 = vshrl.u32 %v11702, 7
      %v11704 = vsub.s32 %v11701, %v11703
      %v11705 = vrot.slane %v11691, %v11704
      %v11706 = vcombine.high %v11698, %v11698
      %v11707 = vcombine.high %v11705, %v11705
      %v11708 = vcombine.high %v11196, %v11196
      %v11710 = vunpack.c.l.s4 1983009808
      %v11711 = vunpack.c.0.s8 %v11710
      %v11712 = vlaneseq
      %v11713 = vshrl.u32 %v11712, 7
      %v11714 = vsub.s32 %v11711, %v11713
      %v11715 = vrot.slane %v11196, %v11714
      %v11717 = vunpack.c.l.s4 1983009808
      %v11718 = vunpack.c.0.s8 %v11717
      %v11719 = vlaneseq
      %v11720 = vshrl.u32 %v11719, 7
      %v11721 = vsub.s32 %v11718, %v11720
      %v11722 = vrot.slane %v11708, %v11721
      %v11723 = vcombine.high %v11715, %v11715
      %v11724 = vcombine.high %v11722, %v11722
      %v11725 = vcombine.high %v11197, %v11197
      %v11727 = vunpack.c.l.s4 1983009808
      %v11728 = vunpack.c.0.s8 %v11727
      %v11729 = vlaneseq
      %v11730 = vshrl.u32 %v11729, 7
      %v11731 = vsub.s32 %v11728, %v11730
      %v11732 = vrot.slane %v11197, %v11731
      %v11734 = vunpack.c.l.s4 1983009808
      %v11735 = vunpack.c.0.s8 %v11734
      %v11736 = vlaneseq
      %v11737 = vshrl.u32 %v11736, 7
      %v11738 = vsub.s32 %v11735, %v11737
      %v11739 = vrot.slane %v11725, %v11738
      %v11740 = vcombine.high %v11732, %v11732
      %v11741 = vcombine.high %v11739, %v11739
      %v11742 = vcombine.high %v11198, %v11198
      %v11744 = vunpack.c.l.s4 1983009808
      %v11745 = vunpack.c.0.s8 %v11744
      %v11746 = vlaneseq
      %v11747 = vshrl.u32 %v11746, 7
      %v11748 = vsub.s32 %v11745, %v11747
      %v11749 = vrot.slane %v11198, %v11748
      %v11751 = vunpack.c.l.s4 1983009808
      %v11752 = vunpack.c.0.s8 %v11751
      %v11753 = vlaneseq
      %v11754 = vshrl.u32 %v11753, 7
      %v11755 = vsub.s32 %v11752, %v11754
      %v11756 = vrot.slane %v11742, %v11755
      %v11757 = vcombine.high %v11749, %v11749
      %v11758 = vcombine.high %v11756, %v11756
      %v11759 = vcombine.high %v11199, %v11199
      %v11761 = vunpack.c.l.s4 1983009808
      %v11762 = vunpack.c.0.s8 %v11761
      %v11763 = vlaneseq
      %v11764 = vshrl.u32 %v11763, 7
      %v11765 = vsub.s32 %v11762, %v11764
      %v11766 = vrot.slane %v11199, %v11765
      %v11768 = vunpack.c.l.s4 1983009808
      %v11769 = vunpack.c.0.s8 %v11768
      %v11770 = vlaneseq
      %v11771 = vshrl.u32 %v11770, 7
      %v11772 = vsub.s32 %v11769, %v11771
      %v11773 = vrot.slane %v11759, %v11772
      %v11774 = vcombine.high %v11766, %v11766
      %v11775 = vcombine.high %v11773, %v11773
      %v11904 = vrot.slane %v11239, 7
      %v11905 = vrot.slane %v11904, 2
      %v11906 = vrot.slane %v11247, 7
      %v11907 = vrot.slane %v11906, 2
      %v11908 = vrot.slane %v11246, 7
      %v11909 = vrot.slane %v11908, 2
      %v11910 = vrot.slane %v11248, 7
      %v11911 = vrot.slane %v11910, 2
      %v11912 = vrot.slane %v11256, 7
      %v11913 = vrot.slane %v11912, 2
      %v11914 = vrot.slane %v11264, 7
      %v11915 = vrot.slane %v11914, 2
      %v11916 = vrot.slane %v11263, 7
      %v11917 = vrot.slane %v11916, 2
      %v11918 = vrot.slane %v11265, 7
      %v11919 = vrot.slane %v11918, 2
      %v11920 = vrot.slane %v11273, 7
      %v11921 = vrot.slane %v11920, 2
      %v11922 = vrot.slane %v11281, 7
      %v11923 = vrot.slane %v11922, 2
      %v11924 = vrot.slane %v11280, 7
      %v11925 = vrot.slane %v11924, 2
      %v11926 = vrot.slane %v11282, 7
      %v11927 = vrot.slane %v11926, 2
      %v11928 = vrot.slane %v11290, 7
      %v11929 = vrot.slane %v11928, 2
      %v11930 = vrot.slane %v11298, 7
      %v11931 = vrot.slane %v11930, 2
      %v11932 = vrot.slane %v11297, 7
      %v11933 = vrot.slane %v11932, 2
      %v11934 = vrot.slane %v11299, 7
      %v11935 = vrot.slane %v11934, 2
      %v11936 = vrot.slane %v11307, 7
      %v11937 = vrot.slane %v11936, 2
      %v11938 = vrot.slane %v11315, 7
      %v11939 = vrot.slane %v11938, 2
      %v11940 = vrot.slane %v11314, 7
      %v11941 = vrot.slane %v11940, 2
      %v11942 = vrot.slane %v11316, 7
      %v11943 = vrot.slane %v11942, 2
      %v11944 = vrot.slane %v11324, 7
      %v11945 = vrot.slane %v11944, 2
      %v11946 = vrot.slane %v11332, 7
      %v11947 = vrot.slane %v11946, 2
      %v11948 = vrot.slane %v11331, 7
      %v11949 = vrot.slane %v11948, 2
      %v11950 = vrot.slane %v11333, 7
      %v11951 = vrot.slane %v11950, 2
      %v11952 = vrot.slane %v11341, 7
      %v11953 = vrot.slane %v11952, 2
      %v11954 = vrot.slane %v11349, 7
      %v11955 = vrot.slane %v11954, 2
      %v11956 = vrot.slane %v11348, 7
      %v11957 = vrot.slane %v11956, 2
      %v11958 = vrot.slane %v11350, 7
      %v11959 = vrot.slane %v11958, 2
      %v11960 = vrot.slane %v11358, 7
      %v11961 = vrot.slane %v11960, 2
      %v11962 = vrot.slane %v11366, 7
      %v11963 = vrot.slane %v11962, 2
      %v11964 = vrot.slane %v11365, 7
      %v11965 = vrot.slane %v11964, 2
      %v11966 = vrot.slane %v11367, 7
      %v11967 = vrot.slane %v11966, 2
      %v11968 = vrot.slane %v11375, 7
      %v11969 = vrot.slane %v11968, 2
      %v11970 = vrot.slane %v11383, 7
      %v11971 = vrot.slane %v11970, 2
      %v11972 = vrot.slane %v11382, 7
      %v11973 = vrot.slane %v11972, 2
      %v11974 = vrot.slane %v11384, 7
      %v11975 = vrot.slane %v11974, 2
      %v11976 = vrot.slane %v11392, 7
      %v11977 = vrot.slane %v11976, 2
      %v11978 = vrot.slane %v11400, 7
      %v11979 = vrot.slane %v11978, 2
      %v11980 = vrot.slane %v11399, 7
      %v11981 = vrot.slane %v11980, 2
      %v11982 = vrot.slane %v11401, 7
      %v11983 = vrot.slane %v11982, 2
      %v11984 = vrot.slane %v11409, 7
      %v11985 = vrot.slane %v11984, 2
      %v11986 = vrot.slane %v11417, 7
      %v11987 = vrot.slane %v11986, 2
      %v11988 = vrot.slane %v11416, 7
      %v11989 = vrot.slane %v11988, 2
      %v11990 = vrot.slane %v11418, 7
      %v11991 = vrot.slane %v11990, 2
      %v11992 = vrot.slane %v11426, 7
      %v11993 = vrot.slane %v11992, 2
      %v11994 = vrot.slane %v11434, 7
      %v11995 = vrot.slane %v11994, 2
      %v11996 = vrot.slane %v11433, 7
      %v11997 = vrot.slane %v11996, 2
      %v11998 = vrot.slane %v11435, 7
      %v11999 = vrot.slane %v11998, 2
      %v12000 = vrot.slane %v11443, 7
      %v12001 = vrot.slane %v12000, 2
      %v12002 = vrot.slane %v11451, 7
      %v12003 = vrot.slane %v12002, 2
      %v12004 = vrot.slane %v11450, 7
      %v12005 = vrot.slane %v12004, 2
      %v12006 = vrot.slane %v11452, 7
      %v12007 = vrot.slane %v12006, 2
      %v12008 = vrot.slane %v11460, 7
      %v12009 = vrot.slane %v12008, 2
      %v12010 = vrot.slane %v11468, 7
      %v12011 = vrot.slane %v12010, 2
      %v12012 = vrot.slane %v11467, 7
      %v12013 = vrot.slane %v12012, 2
      %v12014 = vrot.slane %v11469, 7
      %v12015 = vrot.slane %v12014, 2
      %v12016 = vrot.slane %v11477, 7
      %v12017 = vrot.slane %v12016, 2
      %v12018 = vrot.slane %v11485, 7
      %v12019 = vrot.slane %v12018, 2
      %v12020 = vrot.slane %v11484, 7
      %v12021 = vrot.slane %v12020, 2
      %v12022 = vrot.slane %v11486, 7
      %v12023 = vrot.slane %v12022, 2
      %v12024 = vrot.slane %v11494, 7
      %v12025 = vrot.slane %v12024, 2
      %v12026 = vrot.slane %v11502, 7
      %v12027 = vrot.slane %v12026, 2
      %v12028 = vrot.slane %v11501, 7
      %v12029 = vrot.slane %v12028, 2
      %v12030 = vrot.slane %v11503, 7
      %v12031 = vrot.slane %v12030, 2
      %v12032 = vrot.slane %v11511, 7
      %v12033 = vrot.slane %v12032, 2
      %v12034 = vrot.slane %v11519, 7
      %v12035 = vrot.slane %v12034, 2
      %v12036 = vrot.slane %v11518, 7
      %v12037 = vrot.slane %v12036, 2
      %v12038 = vrot.slane %v11520, 7
      %v12039 = vrot.slane %v12038, 2
      %v12040 = vrot.slane %v11528, 7
      %v12041 = vrot.slane %v12040, 2
      %v12042 = vrot.slane %v11536, 7
      %v12043 = vrot.slane %v12042, 2
      %v12044 = vrot.slane %v11535, 7
      %v12045 = vrot.slane %v12044, 2
      %v12046 = vrot.slane %v11537, 7
      %v12047 = vrot.slane %v12046, 2
      %v12048 = vrot.slane %v11545, 7
      %v12049 = vrot.slane %v12048, 2
      %v12050 = vrot.slane %v11553, 7
      %v12051 = vrot.slane %v12050, 2
      %v12052 = vrot.slane %v11552, 7
      %v12053 = vrot.slane %v12052, 2
      %v12054 = vrot.slane %v11554, 7
      %v12055 = vrot.slane %v12054, 2
      %v12056 = vrot.slane %v11562, 7
      %v12057 = vrot.slane %v12056, 2
      %v12058 = vrot.slane %v11570, 7
      %v12059 = vrot.slane %v12058, 2
      %v12060 = vrot.slane %v11569, 7
      %v12061 = vrot.slane %v12060, 2
      %v12062 = vrot.slane %v11571, 7
      %v12063 = vrot.slane %v12062, 2
      %v12064 = vrot.slane %v11579, 7
      %v12065 = vrot.slane %v12064, 2
      %v12066 = vrot.slane %v11587, 7
      %v12067 = vrot.slane %v12066, 2
      %v12068 = vrot.slane %v11586, 7
      %v12069 = vrot.slane %v12068, 2
      %v12070 = vrot.slane %v11588, 7
      %v12071 = vrot.slane %v12070, 2
      %v12072 = vrot.slane %v11596, 7
      %v12073 = vrot.slane %v12072, 2
      %v12074 = vrot.slane %v11604, 7
      %v12075 = vrot.slane %v12074, 2
      %v12076 = vrot.slane %v11603, 7
      %v12077 = vrot.slane %v12076, 2
      %v12078 = vrot.slane %v11605, 7
      %v12079 = vrot.slane %v12078, 2
      %v12080 = vrot.slane %v11613, 7
      %v12081 = vrot.slane %v12080, 2
      %v12082 = vrot.slane %v11621, 7
      %v12083 = vrot.slane %v12082, 2
      %v12084 = vrot.slane %v11620, 7
      %v12085 = vrot.slane %v12084, 2
      %v12086 = vrot.slane %v11622, 7
      %v12087 = vrot.slane %v12086, 2
      %v12088 = vrot.slane %v11630, 7
      %v12089 = vrot.slane %v12088, 2
      %v12090 = vrot.slane %v11638, 7
      %v12091 = vrot.slane %v12090, 2
      %v12092 = vrot.slane %v11637, 7
      %v12093 = vrot.slane %v12092, 2
      %v12094 = vrot.slane %v11639, 7
      %v12095 = vrot.slane %v12094, 2
      %v12096 = vrot.slane %v11647, 7
      %v12097 = vrot.slane %v12096, 2
      %v12098 = vrot.slane %v11655, 7
      %v12099 = vrot.slane %v12098, 2
      %v12100 = vrot.slane %v11654, 7
      %v12101 = vrot.slane %v12100, 2
      %v12102 = vrot.slane %v11656, 7
      %v12103 = vrot.slane %v12102, 2
      %v12104 = vrot.slane %v11664, 7
      %v12105 = vrot.slane %v12104, 2
      %v12106 = vrot.slane %v11672, 7
      %v12107 = vrot.slane %v12106, 2
      %v12108 = vrot.slane %v11671, 7
      %v12109 = vrot.slane %v12108, 2
      %v12110 = vrot.slane %v11673, 7
      %v12111 = vrot.slane %v12110, 2
      %v12112 = vrot.slane %v11681, 7
      %v12113 = vrot.slane %v12112, 2
      %v12114 = vrot.slane %v11689, 7
      %v12115 = vrot.slane %v12114, 2
      %v12116 = vrot.slane %v11688, 7
      %v12117 = vrot.slane %v12116, 2
      %v12118 = vrot.slane %v11690, 7
      %v12119 = vrot.slane %v12118, 2
      %v12120 = vrot.slane %v11698, 7
      %v12121 = vrot.slane %v12120, 2
      %v12122 = vrot.slane %v11706, 7
      %v12123 = vrot.slane %v12122, 2
      %v12124 = vrot.slane %v11705, 7
      %v12125 = vrot.slane %v12124, 2
      %v12126 = vrot.slane %v11707, 7
      %v12127 = vrot.slane %v12126, 2
      %v12128 = vrot.slane %v11715, 7
      %v12129 = vrot.slane %v12128, 2
      %v12130 = vrot.slane %v11723, 7
      %v12131 = vrot.slane %v12130, 2
      %v12132 = vrot.slane %v11722, 7
      %v12133 = vrot.slane %v12132, 2
      %v12134 = vrot.slane %v11724, 7
      %v12135 = vrot.slane %v12134, 2
      %v12136 = vrot.slane %v11732, 7
      %v12137 = vrot.slane %v12136, 2
      %v12138 = vrot.slane %v11740, 7
      %v12139 = vrot.slane %v12138, 2
      %v12140 = vrot.slane %v11739, 7
      %v12141 = vrot.slane %v12140, 2
      %v12142 = vrot.slane %v11741, 7
      %v12143 = vrot.slane %v12142, 2
      %v12144 = vrot.slane %v11749, 7
      %v12145 = vrot.slane %v12144, 2
      %v12146 = vrot.slane %v11757, 7
      %v12147 = vrot.slane %v12146, 2
      %v12148 = vrot.slane %v11756, 7
      %v12149 = vrot.slane %v12148, 2
      %v12150 = vrot.slane %v11758, 7
      %v12151 = vrot.slane %v12150, 2
      %v12152 = vrot.slane %v11766, 7
      %v12153 = vrot.slane %v12152, 2
      %v12154 = vrot.slane %v11774, 7
      %v12155 = vrot.slane %v12154, 2
      %v12156 = vrot.slane %v11773, 7
      %v12157 = vrot.slane %v12156, 2
      %v12158 = vrot.slane %v11775, 7
      %v12159 = vrot.slane %v12158, 2
      %v12288 = vmax.f32 %v11239, %v11905
      %v12289 = vmax.f32 %v11247, %v11907
      %v12290 = vmax.f32 %v11246, %v11909
      %v12291 = vmax.f32 %v11248, %v11911
      %v12292 = vmax.f32 %v11256, %v11913
      %v12293 = vmax.f32 %v11264, %v11915
      %v12294 = vmax.f32 %v11263, %v11917
      %v12295 = vmax.f32 %v11265, %v11919
      %v12296 = vmax.f32 %v11273, %v11921
      %v12297 = vmax.f32 %v11281, %v11923
      %v12298 = vmax.f32 %v11280, %v11925
      %v12299 = vmax.f32 %v11282, %v11927
      %v12300 = vmax.f32 %v11290, %v11929
      %v12301 = vmax.f32 %v11298, %v11931
      %v12302 = vmax.f32 %v11297, %v11933
      %v12303 = vmax.f32 %v11299, %v11935
      %v12304 = vmax.f32 %v11307, %v11937
      %v12305 = vmax.f32 %v11315, %v11939
      %v12306 = vmax.f32 %v11314, %v11941
      %v12307 = vmax.f32 %v11316, %v11943
      %v12308 = vmax.f32 %v11324, %v11945
      %v12309 = vmax.f32 %v11332, %v11947
      %v12310 = vmax.f32 %v11331, %v11949
      %v12311 = vmax.f32 %v11333, %v11951
      %v12312 = vmax.f32 %v11341, %v11953
      %v12313 = vmax.f32 %v11349, %v11955
      %v12314 = vmax.f32 %v11348, %v11957
      %v12315 = vmax.f32 %v11350, %v11959
      %v12316 = vmax.f32 %v11358, %v11961
      %v12317 = vmax.f32 %v11366, %v11963
      %v12318 = vmax.f32 %v11365, %v11965
      %v12319 = vmax.f32 %v11367, %v11967
      %v12320 = vmax.f32 %v11375, %v11969
      %v12321 = vmax.f32 %v11383, %v11971
      %v12322 = vmax.f32 %v11382, %v11973
      %v12323 = vmax.f32 %v11384, %v11975
      %v12324 = vmax.f32 %v11392, %v11977
      %v12325 = vmax.f32 %v11400, %v11979
      %v12326 = vmax.f32 %v11399, %v11981
      %v12327 = vmax.f32 %v11401, %v11983
      %v12328 = vmax.f32 %v11409, %v11985
      %v12329 = vmax.f32 %v11417, %v11987
      %v12330 = vmax.f32 %v11416, %v11989
      %v12331 = vmax.f32 %v11418, %v11991
      %v12332 = vmax.f32 %v11426, %v11993
      %v12333 = vmax.f32 %v11434, %v11995
      %v12334 = vmax.f32 %v11433, %v11997
      %v12335 = vmax.f32 %v11435, %v11999
      %v12336 = vmax.f32 %v11443, %v12001
      %v12337 = vmax.f32 %v11451, %v12003
      %v12338 = vmax.f32 %v11450, %v12005
      %v12339 = vmax.f32 %v11452, %v12007
      %v12340 = vmax.f32 %v11460, %v12009
      %v12341 = vmax.f32 %v11468, %v12011
      %v12342 = vmax.f32 %v11467, %v12013
      %v12343 = vmax.f32 %v11469, %v12015
      %v12344 = vmax.f32 %v11477, %v12017
      %v12345 = vmax.f32 %v11485, %v12019
      %v12346 = vmax.f32 %v11484, %v12021
      %v12347 = vmax.f32 %v11486, %v12023
      %v12348 = vmax.f32 %v11494, %v12025
      %v12349 = vmax.f32 %v11502, %v12027
      %v12350 = vmax.f32 %v11501, %v12029
      %v12351 = vmax.f32 %v11503, %v12031
      %v12352 = vmax.f32 %v11511, %v12033
      %v12353 = vmax.f32 %v11519, %v12035
      %v12354 = vmax.f32 %v11518, %v12037
      %v12355 = vmax.f32 %v11520, %v12039
      %v12356 = vmax.f32 %v11528, %v12041
      %v12357 = vmax.f32 %v11536, %v12043
      %v12358 = vmax.f32 %v11535, %v12045
      %v12359 = vmax.f32 %v11537, %v12047
      %v12360 = vmax.f32 %v11545, %v12049
      %v12361 = vmax.f32 %v11553, %v12051
      %v12362 = vmax.f32 %v11552, %v12053
      %v12363 = vmax.f32 %v11554, %v12055
      %v12364 = vmax.f32 %v11562, %v12057
      %v12365 = vmax.f32 %v11570, %v12059
      %v12366 = vmax.f32 %v11569, %v12061
      %v12367 = vmax.f32 %v11571, %v12063
      %v12368 = vmax.f32 %v11579, %v12065
      %v12369 = vmax.f32 %v11587, %v12067
      %v12370 = vmax.f32 %v11586, %v12069
      %v12371 = vmax.f32 %v11588, %v12071
      %v12372 = vmax.f32 %v11596, %v12073
      %v12373 = vmax.f32 %v11604, %v12075
      %v12374 = vmax.f32 %v11603, %v12077
      %v12375 = vmax.f32 %v11605, %v12079
      %v12376 = vmax.f32 %v11613, %v12081
      %v12377 = vmax.f32 %v11621, %v12083
      %v12378 = vmax.f32 %v11620, %v12085
      %v12379 = vmax.f32 %v11622, %v12087
      %v12380 = vmax.f32 %v11630, %v12089
      %v12381 = vmax.f32 %v11638, %v12091
      %v12382 = vmax.f32 %v11637, %v12093
      %v12383 = vmax.f32 %v11639, %v12095
      %v12384 = vmax.f32 %v11647, %v12097
      %v12385 = vmax.f32 %v11655, %v12099
      %v12386 = vmax.f32 %v11654, %v12101
      %v12387 = vmax.f32 %v11656, %v12103
      %v12388 = vmax.f32 %v11664, %v12105
      %v12389 = vmax.f32 %v11672, %v12107
      %v12390 = vmax.f32 %v11671, %v12109
      %v12391 = vmax.f32 %v11673, %v12111
      %v12392 = vmax.f32 %v11681, %v12113
      %v12393 = vmax.f32 %v11689, %v12115
      %v12394 = vmax.f32 %v11688, %v12117
      %v12395 = vmax.f32 %v11690, %v12119
      %v12396 = vmax.f32 %v11698, %v12121
      %v12397 = vmax.f32 %v11706, %v12123
      %v12398 = vmax.f32 %v11705, %v12125
      %v12399 = vmax.f32 %v11707, %v12127
      %v12400 = vmax.f32 %v11715, %v12129
      %v12401 = vmax.f32 %v11723, %v12131
      %v12402 = vmax.f32 %v11722, %v12133
      %v12403 = vmax.f32 %v11724, %v12135
      %v12404 = vmax.f32 %v11732, %v12137
      %v12405 = vmax.f32 %v11740, %v12139
      %v12406 = vmax.f32 %v11739, %v12141
      %v12407 = vmax.f32 %v11741, %v12143
      %v12408 = vmax.f32 %v11749, %v12145
      %v12409 = vmax.f32 %v11757, %v12147
      %v12410 = vmax.f32 %v11756, %v12149
      %v12411 = vmax.f32 %v11758, %v12151
      %v12412 = vmax.f32 %v11766, %v12153
      %v12413 = vmax.f32 %v11774, %v12155
      %v12414 = vmax.f32 %v11773, %v12157
      %v12415 = vmax.f32 %v11775, %v12159
      %v12416 = vmax.f32 %v12288, %v12296
      %v12417 = vmax.f32 %v12289, %v12297
      %v12418 = vmax.f32 %v12290, %v12298
      %v12419 = vmax.f32 %v12291, %v12299
      %v12420 = vmax.f32 %v12292, %v12300
      %v12421 = vmax.f32 %v12293, %v12301
      %v12422 = vmax.f32 %v12294, %v12302
      %v12423 = vmax.f32 %v12295, %v12303
      %v12424 = vmax.f32 %v12304, %v12312
      %v12425 = vmax.f32 %v12305, %v12313
      %v12426 = vmax.f32 %v12306, %v12314
      %v12427 = vmax.f32 %v12307, %v12315
      %v12428 = vmax.f32 %v12308, %v12316
      %v12429 = vmax.f32 %v12309, %v12317
      %v12430 = vmax.f32 %v12310, %v12318
      %v12431 = vmax.f32 %v12311, %v12319
      %v12432 = vmax.f32 %v12320, %v12328
      %v12433 = vmax.f32 %v12321, %v12329
      %v12434 = vmax.f32 %v12322, %v12330
      %v12435 = vmax.f32 %v12323, %v12331
      %v12436 = vmax.f32 %v12324, %v12332
      %v12437 = vmax.f32 %v12325, %v12333
      %v12438 = vmax.f32 %v12326, %v12334
      %v12439 = vmax.f32 %v12327, %v12335
      %v12440 = vmax.f32 %v12336, %v12344
      %v12441 = vmax.f32 %v12337, %v12345
      %v12442 = vmax.f32 %v12338, %v12346
      %v12443 = vmax.f32 %v12339, %v12347
      %v12444 = vmax.f32 %v12340, %v12348
      %v12445 = vmax.f32 %v12341, %v12349
      %v12446 = vmax.f32 %v12342, %v12350
      %v12447 = vmax.f32 %v12343, %v12351
      %v12448 = vmax.f32 %v12352, %v12360
      %v12449 = vmax.f32 %v12353, %v12361
      %v12450 = vmax.f32 %v12354, %v12362
      %v12451 = vmax.f32 %v12355, %v12363
      %v12452 = vmax.f32 %v12356, %v12364
      %v12453 = vmax.f32 %v12357, %v12365
      %v12454 = vmax.f32 %v12358, %v12366
      %v12455 = vmax.f32 %v12359, %v12367
      %v12456 = vmax.f32 %v12368, %v12376
      %v12457 = vmax.f32 %v12369, %v12377
      %v12458 = vmax.f32 %v12370, %v12378
      %v12459 = vmax.f32 %v12371, %v12379
      %v12460 = vmax.f32 %v12372, %v12380
      %v12461 = vmax.f32 %v12373, %v12381
      %v12462 = vmax.f32 %v12374, %v12382
      %v12463 = vmax.f32 %v12375, %v12383
      %v12464 = vmax.f32 %v12384, %v12392
      %v12465 = vmax.f32 %v12385, %v12393
      %v12466 = vmax.f32 %v12386, %v12394
      %v12467 = vmax.f32 %v12387, %v12395
      %v12468 = vmax.f32 %v12388, %v12396
      %v12469 = vmax.f32 %v12389, %v12397
      %v12470 = vmax.f32 %v12390, %v12398
      %v12471 = vmax.f32 %v12391, %v12399
      %v12472 = vmax.f32 %v12400, %v12408
      %v12473 = vmax.f32 %v12401, %v12409
      %v12474 = vmax.f32 %v12402, %v12410
      %v12475 = vmax.f32 %v12403, %v12411
      %v12476 = vmax.f32 %v12404, %v12412
      %v12477 = vmax.f32 %v12405, %v12413
      %v12478 = vmax.f32 %v12406, %v12414
      %v12479 = vmax.f32 %v12407, %v12415
      %v12544 = vlaneseq
      %v12545 = vshrl.u32 %v12544, 7
      %v12546 = vsub.s32 0, %v12545
      %v12547 = vrot.slane %v12416, %v12546
      %v12548 = vlaneseq
      %v12549 = vshrl.u32 %v12548, 7
      %v12550 = vsub.s32 0, %v12549
      %v12551 = vrot.slane %v12417, %v12550
      %v12552 = vlaneseq
      %v12553 = vshrl.u32 %v12552, 7
      %v12554 = vsub.s32 0, %v12553
      %v12555 = vrot.slane %v12418, %v12554
      %v12556 = vlaneseq
      %v12557 = vshrl.u32 %v12556, 7
      %v12558 = vsub.s32 0, %v12557
      %v12559 = vrot.slane %v12419, %v12558
      %v12560 = vlaneseq
      %v12561 = vshrl.u32 %v12560, 7
      %v12562 = vsub.s32 0, %v12561
      %v12563 = vrot.slane %v12420, %v12562
      %v12564 = vlaneseq
      %v12565 = vshrl.u32 %v12564, 7
      %v12566 = vsub.s32 0, %v12565
      %v12567 = vrot.slane %v12421, %v12566
      %v12568 = vlaneseq
      %v12569 = vshrl.u32 %v12568, 7
      %v12570 = vsub.s32 0, %v12569
      %v12571 = vrot.slane %v12422, %v12570
      %v12572 = vlaneseq
      %v12573 = vshrl.u32 %v12572, 7
      %v12574 = vsub.s32 0, %v12573
      %v12575 = vrot.slane %v12423, %v12574
      %v12576 = vlaneseq
      %v12577 = vshrl.u32 %v12576, 7
      %v12578 = vsub.s32 0, %v12577
      %v12579 = vrot.slane %v12424, %v12578
      %v12580 = vlaneseq
      %v12581 = vshrl.u32 %v12580, 7
      %v12582 = vsub.s32 0, %v12581
      %v12583 = vrot.slane %v12425, %v12582
      %v12584 = vlaneseq
      %v12585 = vshrl.u32 %v12584, 7
      %v12586 = vsub.s32 0, %v12585
      %v12587 = vrot.slane %v12426, %v12586
      %v12588 = vlaneseq
      %v12589 = vshrl.u32 %v12588, 7
      %v12590 = vsub.s32 0, %v12589
      %v12591 = vrot.slane %v12427, %v12590
      %v12592 = vlaneseq
      %v12593 = vshrl.u32 %v12592, 7
      %v12594 = vsub.s32 0, %v12593
      %v12595 = vrot.slane %v12428, %v12594
      %v12596 = vlaneseq
      %v12597 = vshrl.u32 %v12596, 7
      %v12598 = vsub.s32 0, %v12597
      %v12599 = vrot.slane %v12429, %v12598
      %v12600 = vlaneseq
      %v12601 = vshrl.u32 %v12600, 7
      %v12602 = vsub.s32 0, %v12601
      %v12603 = vrot.slane %v12430, %v12602
      %v12604 = vlaneseq
      %v12605 = vshrl.u32 %v12604, 7
      %v12606 = vsub.s32 0, %v12605
      %v12607 = vrot.slane %v12431, %v12606
      %v12608 = vlaneseq
      %v12609 = vshrl.u32 %v12608, 7
      %v12610 = vsub.s32 0, %v12609
      %v12611 = vrot.slane %v12432, %v12610
      %v12612 = vlaneseq
      %v12613 = vshrl.u32 %v12612, 7
      %v12614 = vsub.s32 0, %v12613
      %v12615 = vrot.slane %v12433, %v12614
      %v12616 = vlaneseq
      %v12617 = vshrl.u32 %v12616, 7
      %v12618 = vsub.s32 0, %v12617
      %v12619 = vrot.slane %v12434, %v12618
      %v12620 = vlaneseq
      %v12621 = vshrl.u32 %v12620, 7
      %v12622 = vsub.s32 0, %v12621
      %v12623 = vrot.slane %v12435, %v12622
      %v12624 = vlaneseq
      %v12625 = vshrl.u32 %v12624, 7
      %v12626 = vsub.s32 0, %v12625
      %v12627 = vrot.slane %v12436, %v12626
      %v12628 = vlaneseq
      %v12629 = vshrl.u32 %v12628, 7
      %v12630 = vsub.s32 0, %v12629
      %v12631 = vrot.slane %v12437, %v12630
      %v12632 = vlaneseq
      %v12633 = vshrl.u32 %v12632, 7
      %v12634 = vsub.s32 0, %v12633
      %v12635 = vrot.slane %v12438, %v12634
      %v12636 = vlaneseq
      %v12637 = vshrl.u32 %v12636, 7
      %v12638 = vsub.s32 0, %v12637
      %v12639 = vrot.slane %v12439, %v12638
      %v12640 = vlaneseq
      %v12641 = vshrl.u32 %v12640, 7
      %v12642 = vsub.s32 0, %v12641
      %v12643 = vrot.slane %v12440, %v12642
      %v12644 = vlaneseq
      %v12645 = vshrl.u32 %v12644, 7
      %v12646 = vsub.s32 0, %v12645
      %v12647 = vrot.slane %v12441, %v12646
      %v12648 = vlaneseq
      %v12649 = vshrl.u32 %v12648, 7
      %v12650 = vsub.s32 0, %v12649
      %v12651 = vrot.slane %v12442, %v12650
      %v12652 = vlaneseq
      %v12653 = vshrl.u32 %v12652, 7
      %v12654 = vsub.s32 0, %v12653
      %v12655 = vrot.slane %v12443, %v12654
      %v12656 = vlaneseq
      %v12657 = vshrl.u32 %v12656, 7
      %v12658 = vsub.s32 0, %v12657
      %v12659 = vrot.slane %v12444, %v12658
      %v12660 = vlaneseq
      %v12661 = vshrl.u32 %v12660, 7
      %v12662 = vsub.s32 0, %v12661
      %v12663 = vrot.slane %v12445, %v12662
      %v12664 = vlaneseq
      %v12665 = vshrl.u32 %v12664, 7
      %v12666 = vsub.s32 0, %v12665
      %v12667 = vrot.slane %v12446, %v12666
      %v12668 = vlaneseq
      %v12669 = vshrl.u32 %v12668, 7
      %v12670 = vsub.s32 0, %v12669
      %v12671 = vrot.slane %v12447, %v12670
      %v12672 = vlaneseq
      %v12673 = vshrl.u32 %v12672, 7
      %v12674 = vsub.s32 0, %v12673
      %v12675 = vrot.slane %v12448, %v12674
      %v12676 = vlaneseq
      %v12677 = vshrl.u32 %v12676, 7
      %v12678 = vsub.s32 0, %v12677
      %v12679 = vrot.slane %v12449, %v12678
      %v12680 = vlaneseq
      %v12681 = vshrl.u32 %v12680, 7
      %v12682 = vsub.s32 0, %v12681
      %v12683 = vrot.slane %v12450, %v12682
      %v12684 = vlaneseq
      %v12685 = vshrl.u32 %v12684, 7
      %v12686 = vsub.s32 0, %v12685
      %v12687 = vrot.slane %v12451, %v12686
      %v12688 = vlaneseq
      %v12689 = vshrl.u32 %v12688, 7
      %v12690 = vsub.s32 0, %v12689
      %v12691 = vrot.slane %v12452, %v12690
      %v12692 = vlaneseq
      %v12693 = vshrl.u32 %v12692, 7
      %v12694 = vsub.s32 0, %v12693
      %v12695 = vrot.slane %v12453, %v12694
      %v12696 = vlaneseq
      %v12697 = vshrl.u32 %v12696, 7
      %v12698 = vsub.s32 0, %v12697
      %v12699 = vrot.slane %v12454, %v12698
      %v12700 = vlaneseq
      %v12701 = vshrl.u32 %v12700, 7
      %v12702 = vsub.s32 0, %v12701
      %v12703 = vrot.slane %v12455, %v12702
      %v12704 = vlaneseq
      %v12705 = vshrl.u32 %v12704, 7
      %v12706 = vsub.s32 0, %v12705
      %v12707 = vrot.slane %v12456, %v12706
      %v12708 = vlaneseq
      %v12709 = vshrl.u32 %v12708, 7
      %v12710 = vsub.s32 0, %v12709
      %v12711 = vrot.slane %v12457, %v12710
      %v12712 = vlaneseq
      %v12713 = vshrl.u32 %v12712, 7
      %v12714 = vsub.s32 0, %v12713
      %v12715 = vrot.slane %v12458, %v12714
      %v12716 = vlaneseq
      %v12717 = vshrl.u32 %v12716, 7
      %v12718 = vsub.s32 0, %v12717
      %v12719 = vrot.slane %v12459, %v12718
      %v12720 = vlaneseq
      %v12721 = vshrl.u32 %v12720, 7
      %v12722 = vsub.s32 0, %v12721
      %v12723 = vrot.slane %v12460, %v12722
      %v12724 = vlaneseq
      %v12725 = vshrl.u32 %v12724, 7
      %v12726 = vsub.s32 0, %v12725
      %v12727 = vrot.slane %v12461, %v12726
      %v12728 = vlaneseq
      %v12729 = vshrl.u32 %v12728, 7
      %v12730 = vsub.s32 0, %v12729
      %v12731 = vrot.slane %v12462, %v12730
      %v12732 = vlaneseq
      %v12733 = vshrl.u32 %v12732, 7
      %v12734 = vsub.s32 0, %v12733
      %v12735 = vrot.slane %v12463, %v12734
      %v12736 = vlaneseq
      %v12737 = vshrl.u32 %v12736, 7
      %v12738 = vsub.s32 0, %v12737
      %v12739 = vrot.slane %v12464, %v12738
      %v12740 = vlaneseq
      %v12741 = vshrl.u32 %v12740, 7
      %v12742 = vsub.s32 0, %v12741
      %v12743 = vrot.slane %v12465, %v12742
      %v12744 = vlaneseq
      %v12745 = vshrl.u32 %v12744, 7
      %v12746 = vsub.s32 0, %v12745
      %v12747 = vrot.slane %v12466, %v12746
      %v12748 = vlaneseq
      %v12749 = vshrl.u32 %v12748, 7
      %v12750 = vsub.s32 0, %v12749
      %v12751 = vrot.slane %v12467, %v12750
      %v12752 = vlaneseq
      %v12753 = vshrl.u32 %v12752, 7
      %v12754 = vsub.s32 0, %v12753
      %v12755 = vrot.slane %v12468, %v12754
      %v12756 = vlaneseq
      %v12757 = vshrl.u32 %v12756, 7
      %v12758 = vsub.s32 0, %v12757
      %v12759 = vrot.slane %v12469, %v12758
      %v12760 = vlaneseq
      %v12761 = vshrl.u32 %v12760, 7
      %v12762 = vsub.s32 0, %v12761
      %v12763 = vrot.slane %v12470, %v12762
      %v12764 = vlaneseq
      %v12765 = vshrl.u32 %v12764, 7
      %v12766 = vsub.s32 0, %v12765
      %v12767 = vrot.slane %v12471, %v12766
      %v12768 = vlaneseq
      %v12769 = vshrl.u32 %v12768, 7
      %v12770 = vsub.s32 0, %v12769
      %v12771 = vrot.slane %v12472, %v12770
      %v12772 = vlaneseq
      %v12773 = vshrl.u32 %v12772, 7
      %v12774 = vsub.s32 0, %v12773
      %v12775 = vrot.slane %v12473, %v12774
      %v12776 = vlaneseq
      %v12777 = vshrl.u32 %v12776, 7
      %v12778 = vsub.s32 0, %v12777
      %v12779 = vrot.slane %v12474, %v12778
      %v12780 = vlaneseq
      %v12781 = vshrl.u32 %v12780, 7
      %v12782 = vsub.s32 0, %v12781
      %v12783 = vrot.slane %v12475, %v12782
      %v12784 = vlaneseq
      %v12785 = vshrl.u32 %v12784, 7
      %v12786 = vsub.s32 0, %v12785
      %v12787 = vrot.slane %v12476, %v12786
      %v12788 = vlaneseq
      %v12789 = vshrl.u32 %v12788, 7
      %v12790 = vsub.s32 0, %v12789
      %v12791 = vrot.slane %v12477, %v12790
      %v12792 = vlaneseq
      %v12793 = vshrl.u32 %v12792, 7
      %v12794 = vsub.s32 0, %v12793
      %v12795 = vrot.slane %v12478, %v12794
      %v12796 = vlaneseq
      %v12797 = vshrl.u32 %v12796, 7
      %v12798 = vsub.s32 0, %v12797
      %v12799 = vrot.slane %v12479, %v12798
      %vm12800 = vcmask 1041409
      %v12801 = vsel %vm12800, %v12551, %v12547
      %vm12802 = vcmask 1042434
      %v12803 = vsel %vm12802, %v12555, %v12801
      %vm12804 = vcmask 1043459
      %v12805 = vsel %vm12804, %v12559, %v12803
      %vm12806 = vcmask 1044484
      %v12807 = vsel %vm12806, %v12563, %v12805
      %vm12808 = vcmask 1045509
      %v12809 = vsel %vm12808, %v12567, %v12807
      %vm12810 = vcmask 1046534
      %v12811 = vsel %vm12810, %v12571, %v12809
      %vm12812 = vcmask 1047559
      %v12813 = vsel %vm12812, %v12575, %v12811
      %v12814 = vsel %vm12800, %v12583, %v12579
      %v12815 = vsel %vm12802, %v12587, %v12814
      %v12816 = vsel %vm12804, %v12591, %v12815
      %v12817 = vsel %vm12806, %v12595, %v12816
      %v12818 = vsel %vm12808, %v12599, %v12817
      %v12819 = vsel %vm12810, %v12603, %v12818
      %v12820 = vsel %vm12812, %v12607, %v12819
      %v12821 = vsel %vm12800, %v12615, %v12611
      %v12822 = vsel %vm12802, %v12619, %v12821
      %v12823 = vsel %vm12804, %v12623, %v12822
      %v12824 = vsel %vm12806, %v12627, %v12823
      %v12825 = vsel %vm12808, %v12631, %v12824
      %v12826 = vsel %vm12810, %v12635, %v12825
      %v12827 = vsel %vm12812, %v12639, %v12826
      %v12828 = vsel %vm12800, %v12647, %v12643
      %v12829 = vsel %vm12802, %v12651, %v12828
      %v12830 = vsel %vm12804, %v12655, %v12829
      %v12831 = vsel %vm12806, %v12659, %v12830
      %v12832 = vsel %vm12808, %v12663, %v12831
      %v12833 = vsel %vm12810, %v12667, %v12832
      %v12834 = vsel %vm12812, %v12671, %v12833
      %v12835 = vsel %vm12800, %v12679, %v12675
      %v12836 = vsel %vm12802, %v12683, %v12835
      %v12837 = vsel %vm12804, %v12687, %v12836
      %v12838 = vsel %vm12806, %v12691, %v12837
      %v12839 = vsel %vm12808, %v12695, %v12838
      %v12840 = vsel %vm12810, %v12699, %v12839
      %v12841 = vsel %vm12812, %v12703, %v12840
      %v12842 = vsel %vm12800, %v12711, %v12707
      %v12843 = vsel %vm12802, %v12715, %v12842
      %v12844 = vsel %vm12804, %v12719, %v12843
      %v12845 = vsel %vm12806, %v12723, %v12844
      %v12846 = vsel %vm12808, %v12727, %v12845
      %v12847 = vsel %vm12810, %v12731, %v12846
      %v12848 = vsel %vm12812, %v12735, %v12847
      %v12849 = vsel %vm12800, %v12743, %v12739
      %v12850 = vsel %vm12802, %v12747, %v12849
      %v12851 = vsel %vm12804, %v12751, %v12850
      %v12852 = vsel %vm12806, %v12755, %v12851
      %v12853 = vsel %vm12808, %v12759, %v12852
      %v12854 = vsel %vm12810, %v12763, %v12853
      %v12855 = vsel %vm12812, %v12767, %v12854
      %v12856 = vsel %vm12800, %v12775, %v12771
      %v12857 = vsel %vm12802, %v12779, %v12856
      %v12858 = vsel %vm12804, %v12783, %v12857
      %v12859 = vsel %vm12806, %v12787, %v12858
      %v12860 = vsel %vm12808, %v12791, %v12859
      %v12861 = vsel %vm12810, %v12795, %v12860
      %v12862 = vsel %vm12812, %v12799, %v12861
      %12871 = vst [vmem:[%s278] sm:$0xff] %v12813
      %12872 = vst [vmem:[%s278 + $0x8] sm:$0xff] %v12820
      %12873 = vst [vmem:[%s278 + $0x10] sm:$0xff] %v12827
      %12874 = vst [vmem:[%s278 + $0x18] sm:$0xff] %v12834
      %12875 = vst [vmem:[%s278 + $0x20] sm:$0xff] %v12841
      %12876 = vst [vmem:[%s278 + $0x28] sm:$0xff] %v12848
      %12877 = vst [vmem:[%s278 + $0x30] sm:$0xff] %v12855
      %12878 = vst [vmem:[%s278 + $0x38] sm:$0xff] %v12862
      %p12879 = scmp.lt.s32.totalorder %s18, 1
      %s12880 = scalar_select %p12879, %s18, 1
      %s12881 = smul.addr %s12880, 8
      %s12882 = smul.addr %s12881, 8
      %s12883 = scalar_lea.vmem %s7, %s12882
      // Predicated region
      $region49: #{convpool_forward.1} parent=47 // pred_check
        %p12884 = pneg %p188
      $region50: #{convpool_forward.1} parent=47 // pred_check_branch
        %12886 = sbr.rel (%p12884) target = $region52
      $region51: #{convpool_forward.1} parent=47 // pred_region
        _
      $region52: #{convpool_forward.1} parent=47 // pred_fallthru
        _
    $region48: #{convpool_forward.1} parent=5 // pred_fallthru
      _
    %p12887 = scmp.le.s32.totalorder 2, %s13
    // Predicated region
    $region53: #{convpool_forward.1} parent=5 // pred_check
      %p12888 = pneg %p12887
    $region54: #{convpool_forward.1} parent=5 // pred_check_branch
      %12890 = sbr.rel (%p12888) target = $region56
    $region55: #{convpool_forward.1} parent=5 // pred_region
      %s12891 = ssub.s32 %s13, 2
      // Predicated region
      $region57: #{convpool_forward.1} parent=55 // pred_check
        %p12892 = pneg %p194
      $region58: #{convpool_forward.1} parent=55 // pred_check_branch
        %12894 = sbr.rel (%p12892) target = $region60
      $region59: #{convpool_forward.1} parent=55 // pred_region
        %p12895 = scmp.lt.s32.totalorder %s19, 1
        %s12896 = scalar_select %p12895, %s19, 1
        %s12897 = smul.addr %s12896, 8
        %s12898 = smul.addr %s12897, 8
        %s12899 = scalar_lea.vmem %s7, %s12898
      $region60: #{convpool_forward.1} parent=55 // pred_fallthru
        _
    $region56: #{convpool_forward.1} parent=5 // pred_fallthru
      _
  $region6: #{convpool_forward.1} parent=0 // loop_footer
    %s17 = sadd.s32 1, %s13
  $region7: #{convpool_forward.1} parent=0 // loop_footer_branch
    %12 = sbr.rel target = $region3
  $region8: #{convpool_forward.1} parent=0 // loop_exit
    _

</llo_original>
